<compile_context>
chip_gen: v7x
topology: tpu7x:2x2x1
jax: 0.10.0
libtpu: 0.0.40
codegen_flags: <defaults>
</compile_context>

<pallas_src>
import functools

import jax
import jax.numpy as jnp
from jax.experimental import pallas as pl
from jax.experimental.pallas import tpu as pltpu

PAD_IDX, START_IDX, END_IDX = 0, 1, 2
_LANE = 128
_VMEM_LIMIT = 64 * 1024 * 1024


def _round_up(n, m):
    return ((n + m - 1) // m) * m


def _pad_to(x, shape):
    return jnp.pad(x, [(0, t - s) for s, t in zip(x.shape, shape)])


def _pad_gate_cols(w, h, hp):
    """Pad each of the 4 LSTM gate blocks (i,f,g,o) from width h to hp."""
    parts = [_pad_to(w[..., g * h:(g + 1) * h], w.shape[:-1] + (hp,))
             for g in range(4)]
    return jnp.concatenate(parts, axis=-1)


def _pick_tile(dim, cap=512):
    """Largest multiple of 128 <= cap dividing dim (dim is a multiple of 128)."""
    t = min(dim, cap)
    while dim % t:
        t -= _LANE
    return t


# ----------------------------------------------------------------------------
# Generic tiled GEMM + bias kernel (bf16 operands, f32 accumulate).
# Used for: hoisted visual_fc(features), pre-computed word-LSTM input
# projections (embeddings @ W_ih + b), and the batched word_fc logits.
# ----------------------------------------------------------------------------
def _matmul_bias_kernel(x_ref, w_ref, b_ref, o_ref, acc_ref):
    @pl.when(pl.program_id(2) == 0)
    def _():
        acc_ref[...] = jnp.zeros_like(acc_ref)

    acc_ref[...] += jnp.dot(x_ref[...], w_ref[...],
                            preferred_element_type=jnp.float32)

    @pl.when(pl.program_id(2) == pl.num_programs(2) - 1)
    def _():
        o_ref[...] = (acc_ref[...] + b_ref[...]).astype(o_ref.dtype)


def _tiled_matmul_bias(x, w, b, out_dtype=jnp.float32,
                       tm_cap=256, tn_cap=512, tk_cap=512):
    m, k = x.shape
    _, n = w.shape
    tm = min(tm_cap, _round_up(m, 8))
    mp = _round_up(m, tm)
    tn = _pick_tile(n, tn_cap)
    tk = _pick_tile(k, tk_cap)
    x_p = _pad_to(x, (mp, k))
    cost = pl.CostEstimate(
        flops=int(2 * mp * k * n),
        transcendentals=0,
        bytes_accessed=int(mp * k * x.dtype.itemsize + k * n * w.dtype.itemsize
                           + mp * n * jnp.dtype(out_dtype).itemsize))
    out = pl.pallas_call(
        _matmul_bias_kernel,
        out_shape=jax.ShapeDtypeStruct((mp, n), out_dtype),
        grid_spec=pltpu.PrefetchScalarGridSpec(
            num_scalar_prefetch=0,
            grid=(mp // tm, n // tn, k // tk),
            in_specs=[
                pl.BlockSpec((tm, tk), lambda i, j, kk: (i, kk)),
                pl.BlockSpec((tk, tn), lambda i, j, kk: (kk, j)),
                pl.BlockSpec((1, tn), lambda i, j, kk: (0, j)),
            ],
            out_specs=pl.BlockSpec((tm, tn), lambda i, j, kk: (i, j)),
            scratch_shapes=[pltpu.VMEM((tm, tn), jnp.float32)],
        ),
        compiler_params=pltpu.CompilerParams(
            dimension_semantics=("parallel", "parallel", "arbitrary"),
            vmem_limit_bytes=_VMEM_LIMIT),
        cost_estimate=cost,
    )(x_p, w, b)
    return out[:m]


# ----------------------------------------------------------------------------
# Kernel 1: fused sentence + word recurrence, grid=(batch_tiles, n_sentences).
# Weights / features / pre-projected inputs use constant (per batch tile)
# index_maps and stay resident in VMEM across the sentence axis.
# ----------------------------------------------------------------------------
def fused_recurrence_kernel(
        pregate_ref, visual_ref, feats_ref, att_ws_ref, att_wout_ref,
        sent_wih_ref, sent_whh_ref, sent_b_ref, stop_w_ref, stop_b_ref,
        word_whh_ref,
        hid_ref, stop_ref, scores_ref,
        h_ref, c_ref, x_ref,
        *, n_words, n_pos, b_tile, hidden_pad, unroll):
    s = pl.program_id(1)
    n_pos_pad = visual_ref.shape[1]
    hp = hidden_pad
    bf16 = jnp.bfloat16

    def gates_to_state(gates, c):
        i = jax.nn.sigmoid(gates[:, 0 * hp:1 * hp])
        f = jax.nn.sigmoid(gates[:, 1 * hp:2 * hp])
        g = jnp.tanh(gates[:, 2 * hp:3 * hp])
        o = jax.nn.sigmoid(gates[:, 3 * hp:4 * hp])
        c_new = f * c + i * g
        h_new = o * jnp.tanh(c_new)
        return h_new, c_new

    def attend(h):
        # state_fc(h); the visual_fc / state_fc biases were folded into visual.
        state = jnp.dot(h.astype(bf16), att_ws_ref[...],
                        preferred_element_type=jnp.float32)
        # TODO(synk): if att_internal << 128 the lane padding of Ip inflates
        # this tanh; a (positions-on-lanes) re-layout would trim the EUP work.
        e = jnp.tanh(visual_ref[...] + state[:, None, :])            # (Bt,Pp,Ip)
        logits = jnp.sum(e * att_wout_ref[...][None, :, :], axis=-1)  # (Bt,Pp)
        if n_pos < n_pos_pad:                                         # static
            pos = jax.lax.broadcasted_iota(jnp.int32, (b_tile, n_pos_pad), 1)
            logits = jnp.where(pos < n_pos, logits, -1e30)
        m = jnp.max(logits, axis=-1, keepdims=True)
        p = jnp.exp(logits - m)
        denom = jnp.sum(p, axis=-1, keepdims=True)
        return p * pl.reciprocal(denom, approx=True)                  # (Bt,Pp)

    def context(scores):
        return jnp.sum(feats_ref[...] * scores[:, :, None], axis=1)   # (Bt,Fp)

    # ---- first sentence of this batch tile: zero state, attention over h=0 --
    @pl.when(s == 0)
    def _():
        zeros_h = jnp.zeros((b_tile, hp), jnp.float32)
        h_ref[...] = zeros_h
        c_ref[...] = zeros_h
        x_ref[...] = context(attend(zeros_h))

    # ---- sentence LSTM + stop control ---------------------------------------
    x = x_ref[...]
    h_prev = h_ref[...]
    gates = (jnp.dot(x.astype(bf16), sent_wih_ref[...],
                     preferred_element_type=jnp.float32)
             + jnp.dot(h_prev.astype(bf16), sent_whh_ref[...],
                       preferred_element_type=jnp.float32)
             + sent_b_ref[...])
    h_new, c_new = gates_to_state(gates, c_ref[...])
    h_ref[...] = h_new
    c_ref[...] = c_new
    stop_ref[0] = jax.nn.sigmoid(
        jnp.dot(h_new, stop_w_ref[...], preferred_element_type=jnp.float32)
        + stop_b_ref[...])                                            # (Bt,128)

    # ---- word LSTM (teacher forcing). Input projections are precomputed, so
    # the serial loop is just h @ W_hh plus elementwise gate math. -----------
    def word_body(j, carry):
        wh, wc = carry
        pre = pregate_ref[0, j]                                       # (Bt,4Hp)
        rec = jnp.dot(wh.astype(bf16), word_whh_ref[...],
                      preferred_element_type=jnp.float32)
        wh, wc = gates_to_state(pre + rec, wc)
        hid_ref[0, pl.ds(j, 1)] = wh.astype(hid_ref.dtype)[None]
        return wh, wc

    jax.lax.fori_loop(0, n_words, word_body,
                      (h_new, jnp.zeros_like(h_new)), unroll=unroll)

    # ---- attention after the sentence update: scores are recorded (exactly
    # what the PyTorch module stores: attend(h_t) after the LSTM, the h=0
    # scores are discarded); the context is only needed for sentence s+1. ----
    scores = attend(h_new)
    scores_ref[0] = scores

    @pl.when(s + 1 < pl.num_programs(1))
    def _():
        x_ref[...] = context(scores)


# ----------------------------------------------------------------------------
# Full forward pass (free=False, teacher forcing), mirroring the PyTorch code.
# ----------------------------------------------------------------------------
def hierarchical_decoder_forward(features_nchw, reports, params, hidden_size):
    f32, bf16 = jnp.float32, jnp.bfloat16
    B, C, Hsp, Wsp = features_nchw.shape
    P = Hsp * Wsp
    S, W = reports.shape[1], reports.shape[2]
    H = hidden_size
    V, E = params['word_emb'].shape
    I = params['att_ws'].shape[1]
    F = C

    # padded dims: lanes -> 128, sublanes/batch -> 8
    Bp = _round_up(max(B, 8), 8)
    Pp = _round_up(P, 8)
    Fp = _round_up(F, _LANE)
    Hp = _round_up(H, _LANE)
    Ip = _round_up(I, _LANE)
    Ep = _round_up(E, _LANE)
    Vp = _round_up(V, _LANE)
    G4 = 4 * Hp

    # Batch tiling (lets v7x's two TensorCores split the recurrence); a single
    # tile for small batches so v5e/v6e do not pay extra serial grid steps.
    b_tile = Bp // 2 if (Bp >= 32 and Bp % 16 == 0) else Bp
    n_btiles = Bp // b_tile

    # ---- features: NCHW -> (B, P, C) with channels on the lane axis ---------
    feats = jnp.transpose(features_nchw, (0, 2, 3, 1)).reshape(B, P, C)
    feats_p = _pad_to(feats.astype(f32), (Bp, Pp, Fp))

    # ---- padded parameters (bf16 for MXU operands, f32 for biases) ----------
    att_wv = _pad_to(params['att_wv'].astype(f32), (Fp, Ip)).astype(bf16)
    att_bias = _pad_to((params['att_bv'] + params['att_bs']).astype(f32), (1, Ip))
    att_ws = _pad_to(params['att_ws'].astype(f32), (Hp, Ip)).astype(bf16)
    att_wout = _pad_to(params['att_wout'].astype(f32), (1, Ip))

    sent_wih = _pad_to(_pad_gate_cols(params['sent_wih'].astype(f32), H, Hp),
                       (Fp, G4)).astype(bf16)
    sent_whh = _pad_to(_pad_gate_cols(params['sent_whh'].astype(f32), H, Hp),
                       (Hp, G4)).astype(bf16)
    sent_b = _pad_gate_cols(params['sent_b'].astype(f32), H, Hp)

    stop_w = _pad_to(params['stop_w'].astype(f32), (Hp, _LANE))
    stop_b = _pad_to(params['stop_b'].astype(f32), (1, _LANE))

    word_wih = _pad_to(_pad_gate_cols(params['word_wih'].astype(f32), H, Hp),
                       (Ep, G4)).astype(bf16)
    word_whh = _pad_to(_pad_gate_cols(params['word_whh'].astype(f32), H, Hp),
                       (Hp, G4)).astype(bf16)
    word_b = _pad_gate_cols(params['word_b'].astype(f32), H, Hp)

    wordfc_w = _pad_to(params['wordfc_w'].astype(f32), (Hp, Vp)).astype(bf16)
    wordfc_b = _pad_to(params['wordfc_b'].astype(f32), (1, Vp))

    # ---- hoisted visual_fc(features) + folded attention biases (tiled GEMM) -
    visual_flat = _tiled_matmul_bias(
        feats_p.reshape(Bp * Pp, Fp).astype(bf16), att_wv, att_bias, f32)
    visual_p = visual_flat.reshape(Bp, Pp, Ip)

    # ---- teacher forcing: pre-gather embeddings, pre-compute x@W_ih + b -----
    # word j consumes embedding(reports[:, s, j-1]); word 0 consumes <START>.
    tokens_in = jnp.concatenate(
        [jnp.full((B, S, 1), START_IDX, jnp.int32),
         reports[:, :, :W - 1].astype(jnp.int32)], axis=2)            # (B,S,W)
    emb_in = jnp.take(params['word_emb'].astype(f32), tokens_in, axis=0)
    emb_in = jnp.transpose(emb_in, (1, 2, 0, 3))                       # (S,W,B,E)
    emb_in = _pad_to(emb_in, (S, W, Bp, Ep)).astype(bf16)
    pregate = _tiled_matmul_bias(
        emb_in.reshape(S * W * Bp, Ep), word_wih, word_b, f32)
    pregate = pregate.reshape(S, W, Bp, G4)

    # ---- kernel 1: fused sentence + word recurrence --------------------------
    kernel = functools.partial(
        fused_recurrence_kernel, n_words=W, n_pos=P, b_tile=b_tile,
        hidden_pad=Hp, unroll=(W <= 8))

    steps = n_btiles * S
    flops_k1 = int(steps * b_tile * (
        2 * (Fp + Hp) * G4 + 2 * Hp * _LANE + W * 2 * Hp * G4
        + 2 * Hp * Ip + 2 * Pp * Ip + 2 * Pp * Fp))
    trans_k1 = int(steps * b_tile * (5 * Hp * (1 + W) + Pp * Ip + 2 * Pp))
    k1_inputs = (pregate, visual_p, feats_p, att_ws, att_wout, sent_wih,
                 sent_whh, sent_b, stop_w, stop_b, word_whh)
    bytes_k1 = int(sum(a.size * a.dtype.itemsize for a in k1_inputs)
                   + S * W * Bp * Hp * 2 + S * Bp * _LANE * 4 + S * Bp * Pp * 4)

    grid_spec = pltpu.PrefetchScalarGridSpec(
        num_scalar_prefetch=0,
        grid=(n_btiles, S),
        in_specs=[
            pl.BlockSpec((1, W, b_tile, G4), lambda bt, s: (s, 0, bt, 0)),   # pre-gates
            pl.BlockSpec((b_tile, Pp, Ip), lambda bt, s: (bt, 0, 0)),        # visual
            pl.BlockSpec((b_tile, Pp, Fp), lambda bt, s: (bt, 0, 0)),        # feats
            pl.BlockSpec((Hp, Ip), lambda bt, s: (0, 0)),                    # att_ws
            pl.BlockSpec((1, Ip), lambda bt, s: (0, 0)),                     # att_wout
            pl.BlockSpec((Fp, G4), lambda bt, s: (0, 0)),                    # sent_wih
            pl.BlockSpec((Hp, G4), lambda bt, s: (0, 0)),                    # sent_whh
            pl.BlockSpec((1, G4), lambda bt, s: (0, 0)),                     # sent_b
            pl.BlockSpec((Hp, _LANE), lambda bt, s: (0, 0)),                 # stop_w
            pl.BlockSpec((1, _LANE), lambda bt, s: (0, 0)),                  # stop_b
            pl.BlockSpec((Hp, G4), lambda bt, s: (0, 0)),                    # word_whh
        ],
        out_specs=[
            pl.BlockSpec((1, W, b_tile, Hp), lambda bt, s: (s, 0, bt, 0)),   # word hiddens
            pl.BlockSpec((1, b_tile, _LANE), lambda bt, s: (s, bt, 0)),      # stops
            pl.BlockSpec((1, b_tile, Pp), lambda bt, s: (s, bt, 0)),         # att scores
        ],
        scratch_shapes=[
            pltpu.VMEM((b_tile, Hp), f32),   # sentence h
            pltpu.VMEM((b_tile, Hp), f32),   # sentence c
            pltpu.VMEM((b_tile, Fp), f32),   # attention context (next input)
        ],
    )
    hid, stops_raw, scores_raw = pl.pallas_call(
        kernel,
        grid_spec=grid_spec,
        out_shape=(
            jax.ShapeDtypeStruct((S, W, Bp, Hp), bf16),
            jax.ShapeDtypeStruct((S, Bp, _LANE), f32),
            jax.ShapeDtypeStruct((S, Bp, Pp), f32),
        ),
        compiler_params=pltpu.CompilerParams(
            dimension_semantics=("parallel", "arbitrary"),
            vmem_limit_bytes=_VMEM_LIMIT),
        cost_estimate=pl.CostEstimate(flops=flops_k1, transcendentals=trans_k1,
                                      bytes_accessed=bytes_k1),
    )(pregate, visual_p, feats_p, att_ws, att_wout,
      sent_wih, sent_whh, sent_b, stop_w, stop_b, word_whh)

    # ---- kernel 2: batched word_fc GEMM over all word hidden states ---------
    # Batch-major rows so the big logits tensor already comes out in
    # (B, S, W, V) order (only the much smaller hid tensor gets transposed).
    hid_bm = jnp.transpose(hid, (2, 0, 1, 3)).reshape(Bp * S * W, Hp)
    logits = _tiled_matmul_bias(hid_bm, wordfc_w, wordfc_b, f32)
    seq = logits.reshape(Bp, S, W, Vp)[:B, :, :, :V]

    stops = stops_raw[:, :B, 0].T                                     # (B, S)
    scores = scores_raw[:, :B, :P].transpose(1, 0, 2).reshape(B, S, Hsp, Wsp)
    return seq, stops, scores


# ----------------------------------------------------------------------------
# Deterministic parameter init (shapes from the module __init__)
# ----------------------------------------------------------------------------
def init_params(key, vocab_size, embedding_size, hidden_size, features_size,
                att_internal):
    ks = jax.random.split(key, 16)

    def w(k, shape, scale=0.1):
        return (scale * jax.random.normal(k, shape)).astype(jnp.float32)

    emb = w(ks[10], (vocab_size, embedding_size)).at[PAD_IDX].set(0.0)
    return dict(
        # AttentionTwoLayers
        att_wv=w(ks[0], (features_size, att_internal)),
        att_bv=w(ks[1], (1, att_internal)),
        att_ws=w(ks[2], (hidden_size, att_internal)),
        att_bs=w(ks[3], (1, att_internal)),
        att_wout=w(ks[4], (1, att_internal)),
        # sentence LSTMCell(features_size, hidden) (weights stored transposed,
        # bias = bias_ih + bias_hh folded together)
        sent_wih=w(ks[5], (features_size, 4 * hidden_size)),
        sent_whh=w(ks[6], (hidden_size, 4 * hidden_size)),
        sent_b=w(ks[7], (1, 4 * hidden_size)),
        # stop_control Linear(hidden, 1)
        stop_w=w(ks[8], (hidden_size, 1)),
        stop_b=w(ks[9], (1, 1)),
        # word embedding (padding_idx row zeroed)
        word_emb=emb,
        # word LSTMCell(embedding, hidden)
        word_wih=w(ks[11], (embedding_size, 4 * hidden_size)),
        word_whh=w(ks[12], (hidden_size, 4 * hidden_size)),
        word_b=w(ks[13], (1, 4 * hidden_size)),
        # word_fc Linear(hidden, vocab)
        wordfc_w=w(ks[14], (hidden_size, vocab_size)),
        wordfc_b=w(ks[15], (1, vocab_size)),
    )


if __name__ == "__main__":
    key = jax.random.PRNGKey(0)
    B, C, Hsp, Wsp = 2, 8, 4, 4           # features: (batch, features_size, h, w)
    vocab, emb_size, hidden = 40, 16, 32
    n_sentences, n_words = 3, 5
    att_internal = 16

    kf, kr, kp = jax.random.split(key, 3)
    features = jax.random.normal(kf, (B, C, Hsp, Wsp), dtype=jnp.float32)
    reports = jax.random.randint(kr, (B, n_sentences, n_words), 3, vocab,
                                 dtype=jnp.int32)
    params = init_params(kp, vocab, emb_size, hidden, C, att_internal)

    fwd = jax.jit(hierarchical_decoder_forward, static_argnames=("hidden_size",))
    seq, stops, scores = fwd(features, reports, params, hidden_size=hidden)
    jax.block_until_ready((seq, stops, scores))

    assert seq.shape == (B, n_sentences, n_words, vocab)
    assert stops.shape == (B, n_sentences)
    assert scores.shape == (B, n_sentences, Hsp, Wsp)
    # TODO(synk): the `free=True` early-stop generation path (break on
    # stop_threshold / END-token argmax feedback) is a data-dependent loop
    # exit and is not implemented here.
    print("KERNEL_OK")
</pallas_src>

<mosaic_0001>
module attributes {stable_mosaic.version = 11 : i64} {
  func.func @_matmul_bias_kernel(%arg0: i32, %arg1: i32, %arg2: i32, %arg3: memref<120x128xbf16, #tpu.memory_space<vmem>>, %arg4: memref<128x512xbf16, #tpu.memory_space<vmem>>, %arg5: memref<1x512xf32, #tpu.memory_space<vmem>>, %arg6: memref<120x512xf32, #tpu.memory_space<vmem>>, %arg7: memref<120x512xf32, #tpu.memory_space<vmem>>) attributes {dimension_semantics = [#tpu.dimension_semantics<parallel>, #tpu.dimension_semantics<parallel>, #tpu.dimension_semantics<arbitrary>], iteration_bounds = array<i64: 1, 1, 1>, scalar_prefetch = 0 : i64, scratch_operands = 1 : i64, tpu.core_type = #tpu.core_type<tc>, window_params = [{transform_indices = @transform_0, window_bounds = array<i64: 120, 128>}, {transform_indices = @transform_1, window_bounds = array<i64: 128, 512>}, {transform_indices = @transform_2, window_bounds = array<i64: 1, 512>}, {transform_indices = @transform_3, window_bounds = array<i64: 120, 512>}]} {
    %c0_i32 = arith.constant 0 : i32
    %0 = arith.cmpi eq, %arg2, %c0_i32 : i32
    %1 = arith.extui %0 : i1 to i32
    %c0_i32_0 = arith.constant 0 : i32
    %2 = arith.cmpi ne, %1, %c0_i32_0 : i32
    scf.if %2 {
      %cst_10 = arith.constant 0.000000e+00 : f32
      %12 = vector.broadcast %cst_10 : f32 to vector<120x512xf32>
      %c0_11 = arith.constant 0 : index
      %c0_12 = arith.constant 0 : index
      %13 = vector.load %arg7[%c0_11, %c0_12] : memref<120x512xf32, #tpu.memory_space<vmem>>, vector<120x512xf32>
      tpu.vector_store %arg7[%c0_11, %c0_12], %12 {strides = array<i32>} : memref<120x512xf32, #tpu.memory_space<vmem>>, vector<120x512xf32>,
    } else {
    }
    %c0 = arith.constant 0 : index
    %c0_1 = arith.constant 0 : index
    %3 = vector.load %arg7[%c0, %c0_1] : memref<120x512xf32, #tpu.memory_space<vmem>>, vector<120x512xf32>
    %c0_2 = arith.constant 0 : index
    %c0_3 = arith.constant 0 : index
    %4 = vector.load %arg3[%c0_2, %c0_3] : memref<120x128xbf16, #tpu.memory_space<vmem>>, vector<120x128xbf16>
    %c0_4 = arith.constant 0 : index
    %c0_5 = arith.constant 0 : index
    %5 = vector.load %arg4[%c0_4, %c0_5] : memref<128x512xbf16, #tpu.memory_space<vmem>>, vector<128x512xbf16>
    %cst = arith.constant dense<0.000000e+00> : vector<120x512xf32>
    %6 = tpu.matmul %4, %5, %cst {dimension_numbers = #tpu.dot_dimension_numbers<[1], [0], [0], [1], [0, 0, 1, 1], [], []>} : vector<120x128xbf16>, vector<128x512xbf16>, vector<120x512xf32> -> vector<120x512xf32>
    %7 = arith.addf %3, %6 : vector<120x512xf32>
    %c0_6 = arith.constant 0 : index
    %c0_7 = arith.constant 0 : index
    %8 = vector.load %arg7[%c0_6, %c0_7] : memref<120x512xf32, #tpu.memory_space<vmem>>, vector<120x512xf32>
    tpu.vector_store %arg7[%c0_6, %c0_7], %7 {strides = array<i32>} : memref<120x512xf32, #tpu.memory_space<vmem>>, vector<120x512xf32>,
    %c0_i32_8 = arith.constant 0 : i32
    %9 = arith.cmpi eq, %arg2, %c0_i32_8 : i32
    %10 = arith.extui %9 : i1 to i32
    %c0_i32_9 = arith.constant 0 : i32
    %11 = arith.cmpi ne, %10, %c0_i32_9 : i32
    scf.if %11 {
      %c0_10 = arith.constant 0 : index
      %c0_11 = arith.constant 0 : index
      %12 = vector.load %arg7[%c0_10, %c0_11] : memref<120x512xf32, #tpu.memory_space<vmem>>, vector<120x512xf32>
      %c0_12 = arith.constant 0 : index
      %c0_13 = arith.constant 0 : index
      %13 = vector.load %arg5[%c0_12, %c0_13] : memref<1x512xf32, #tpu.memory_space<vmem>>, vector<1x512xf32>
      %14 = vector.broadcast %13 : vector<1x512xf32> to vector<120x512xf32>
      %15 = arith.addf %12, %14 : vector<120x512xf32>
      %c0_14 = arith.constant 0 : index
      %c0_15 = arith.constant 0 : index
      %16 = vector.load %arg6[%c0_14, %c0_15] : memref<120x512xf32, #tpu.memory_space<vmem>>, vector<120x512xf32>
      tpu.vector_store %arg6[%c0_14, %c0_15], %15 {strides = array<i32>} : memref<120x512xf32, #tpu.memory_space<vmem>>, vector<120x512xf32>,
    } else {
    }
    return
  }
  func.func @transform_0(%arg0: i32, %arg1: i32, %arg2: i32) -> (i32, i32) {
    %c0_i32 = arith.constant 0 : i32
    return %arg0, %arg2 : i32, i32
  }
  func.func @transform_1(%arg0: i32, %arg1: i32, %arg2: i32) -> (i32, i32) {
    %c0_i32 = arith.constant 0 : i32
    return %arg2, %arg1 : i32, i32
  }
  func.func @transform_2(%arg0: i32, %arg1: i32, %arg2: i32) -> (i32, i32) {
    %c0_i32 = arith.constant 0 : i32
    %c0_i32_0 = arith.constant 0 : i32
    return %c0_i32, %arg1 : i32, i32
  }
  func.func @transform_3(%arg0: i32, %arg1: i32, %arg2: i32) -> (i32, i32) {
    %c0_i32 = arith.constant 0 : i32
    return %arg0, %arg1 : i32, i32
  }
}

module attributes {stable_mosaic.version = 11 : i64} {
  func.func @_matmul_bias_kernel(%arg0: i32, %arg1: i32, %arg2: i32, %arg3: memref<128x128xbf16, #tpu.memory_space<vmem>>, %arg4: memref<128x128xbf16, #tpu.memory_space<vmem>>, %arg5: memref<1x128xf32, #tpu.memory_space<vmem>>, %arg6: memref<128x128xf32, #tpu.memory_space<vmem>>, %arg7: memref<128x128xf32, #tpu.memory_space<vmem>>) attributes {dimension_semantics = [#tpu.dimension_semantics<parallel>, #tpu.dimension_semantics<parallel>, #tpu.dimension_semantics<arbitrary>], iteration_bounds = array<i64: 1, 1, 1>, scalar_prefetch = 0 : i64, scratch_operands = 1 : i64, tpu.core_type = #tpu.core_type<tc>, window_params = [{transform_indices = @transform_0, window_bounds = array<i64: 128, 128>}, {transform_indices = @transform_1, window_bounds = array<i64: 128, 128>}, {transform_indices = @transform_2, window_bounds = array<i64: 1, 128>}, {transform_indices = @transform_3, window_bounds = array<i64: 128, 128>}]} {
    %c0_i32 = arith.constant 0 : i32
    %0 = arith.cmpi eq, %arg2, %c0_i32 : i32
    %1 = arith.extui %0 : i1 to i32
    %c0_i32_0 = arith.constant 0 : i32
    %2 = arith.cmpi ne, %1, %c0_i32_0 : i32
    scf.if %2 {
      %cst_10 = arith.constant 0.000000e+00 : f32
      %12 = vector.broadcast %cst_10 : f32 to vector<128x128xf32>
      %c0_11 = arith.constant 0 : index
      %c0_12 = arith.constant 0 : index
      %13 = vector.load %arg7[%c0_11, %c0_12] : memref<128x128xf32, #tpu.memory_space<vmem>>, vector<128x128xf32>
      tpu.vector_store %arg7[%c0_11, %c0_12], %12 {strides = array<i32>} : memref<128x128xf32, #tpu.memory_space<vmem>>, vector<128x128xf32>,
    } else {
    }
    %c0 = arith.constant 0 : index
    %c0_1 = arith.constant 0 : index
    %3 = vector.load %arg7[%c0, %c0_1] : memref<128x128xf32, #tpu.memory_space<vmem>>, vector<128x128xf32>
    %c0_2 = arith.constant 0 : index
    %c0_3 = arith.constant 0 : index
    %4 = vector.load %arg3[%c0_2, %c0_3] : memref<128x128xbf16, #tpu.memory_space<vmem>>, vector<128x128xbf16>
    %c0_4 = arith.constant 0 : index
    %c0_5 = arith.constant 0 : index
    %5 = vector.load %arg4[%c0_4, %c0_5] : memref<128x128xbf16, #tpu.memory_space<vmem>>, vector<128x128xbf16>
    %cst = arith.constant dense<0.000000e+00> : vector<128x128xf32>
    %6 = tpu.matmul %4, %5, %cst {dimension_numbers = #tpu.dot_dimension_numbers<[1], [0], [0], [1], [0, 0, 1, 1], [], []>} : vector<128x128xbf16>, vector<128x128xbf16>, vector<128x128xf32> -> vector<128x128xf32>
    %7 = arith.addf %3, %6 : vector<128x128xf32>
    %c0_6 = arith.constant 0 : index
    %c0_7 = arith.constant 0 : index
    %8 = vector.load %arg7[%c0_6, %c0_7] : memref<128x128xf32, #tpu.memory_space<vmem>>, vector<128x128xf32>
    tpu.vector_store %arg7[%c0_6, %c0_7], %7 {strides = array<i32>} : memref<128x128xf32, #tpu.memory_space<vmem>>, vector<128x128xf32>,
    %c0_i32_8 = arith.constant 0 : i32
    %9 = arith.cmpi eq, %arg2, %c0_i32_8 : i32
    %10 = arith.extui %9 : i1 to i32
    %c0_i32_9 = arith.constant 0 : i32
    %11 = arith.cmpi ne, %10, %c0_i32_9 : i32
    scf.if %11 {
      %c0_10 = arith.constant 0 : index
      %c0_11 = arith.constant 0 : index
      %12 = vector.load %arg7[%c0_10, %c0_11] : memref<128x128xf32, #tpu.memory_space<vmem>>, vector<128x128xf32>
      %c0_12 = arith.constant 0 : index
      %c0_13 = arith.constant 0 : index
      %13 = vector.load %arg5[%c0_12, %c0_13] : memref<1x128xf32, #tpu.memory_space<vmem>>, vector<1x128xf32>
      %14 = vector.broadcast %13 : vector<1x128xf32> to vector<128x128xf32>
      %15 = arith.addf %12, %14 : vector<128x128xf32>
      %c0_14 = arith.constant 0 : index
      %c0_15 = arith.constant 0 : index
      %16 = vector.load %arg6[%c0_14, %c0_15] : memref<128x128xf32, #tpu.memory_space<vmem>>, vector<128x128xf32>
      tpu.vector_store %arg6[%c0_14, %c0_15], %15 {strides = array<i32>} : memref<128x128xf32, #tpu.memory_space<vmem>>, vector<128x128xf32>,
    } else {
    }
    return
  }
  func.func @transform_0(%arg0: i32, %arg1: i32, %arg2: i32) -> (i32, i32) {
    %c0_i32 = arith.constant 0 : i32
    return %arg0, %arg2 : i32, i32
  }
  func.func @transform_1(%arg0: i32, %arg1: i32, %arg2: i32) -> (i32, i32) {
    %c0_i32 = arith.constant 0 : i32
    return %arg2, %arg1 : i32, i32
  }
  func.func @transform_2(%arg0: i32, %arg1: i32, %arg2: i32) -> (i32, i32) {
    %c0_i32 = arith.constant 0 : i32
    %c0_i32_0 = arith.constant 0 : i32
    return %c0_i32, %arg1 : i32, i32
  }
  func.func @transform_3(%arg0: i32, %arg1: i32, %arg2: i32) -> (i32, i32) {
    %c0_i32 = arith.constant 0 : i32
    return %arg0, %arg1 : i32, i32
  }
}

module attributes {stable_mosaic.version = 11 : i64} {
  func.func @fused_recurrence_kernel(%arg0: i32, %arg1: i32, %arg2: memref<1x5x8x512xf32, #tpu.memory_space<vmem>>, %arg3: memref<8x16x128xf32, #tpu.memory_space<vmem>>, %arg4: memref<8x16x128xf32, #tpu.memory_space<vmem>>, %arg5: memref<128x128xbf16, #tpu.memory_space<vmem>>, %arg6: memref<1x128xf32, #tpu.memory_space<vmem>>, %arg7: memref<128x512xbf16, #tpu.memory_space<vmem>>, %arg8: memref<128x512xbf16, #tpu.memory_space<vmem>>, %arg9: memref<1x512xf32, #tpu.memory_space<vmem>>, %arg10: memref<128x128xf32, #tpu.memory_space<vmem>>, %arg11: memref<1x128xf32, #tpu.memory_space<vmem>>, %arg12: memref<128x512xbf16, #tpu.memory_space<vmem>>, %arg13: memref<1x5x8x128xbf16, #tpu.memory_space<vmem>>, %arg14: memref<1x8x128xf32, #tpu.memory_space<vmem>>, %arg15: memref<1x8x16xf32, #tpu.memory_space<vmem>>, %arg16: memref<8x128xf32, #tpu.memory_space<vmem>>, %arg17: memref<8x128xf32, #tpu.memory_space<vmem>>, %arg18: memref<8x128xf32, #tpu.memory_space<vmem>>) attributes {dimension_semantics = [#tpu.dimension_semantics<parallel>, #tpu.dimension_semantics<arbitrary>], iteration_bounds = array<i64: 1, 3>, scalar_prefetch = 0 : i64, scratch_operands = 3 : i64, tpu.core_type = #tpu.core_type<tc>, window_params = [{transform_indices = @transform_0, window_bounds = array<i64: 1, 5, 8, 512>}, {transform_indices = @transform_1, window_bounds = array<i64: 8, 16, 128>}, {transform_indices = @transform_2, window_bounds = array<i64: 8, 16, 128>}, {pipeline_mode = #tpu.pipeline_mode<synchronous>, transform_indices = @transform_3, window_bounds = array<i64: 128, 128>}, {pipeline_mode = #tpu.pipeline_mode<synchronous>, transform_indices = @transform_4, window_bounds = array<i64: 1, 128>}, {pipeline_mode = #tpu.pipeline_mode<synchronous>, transform_indices = @transform_5, window_bounds = array<i64: 128, 512>}, {pipeline_mode = #tpu.pipeline_mode<synchronous>, transform_indices = @transform_6, window_bounds = array<i64: 128, 512>}, {pipeline_mode = #tpu.pipeline_mode<synchronous>, transform_indices = @transform_7, window_bounds = array<i64: 1, 512>}, {pipeline_mode = #tpu.pipeline_mode<synchronous>, transform_indices = @transform_8, window_bounds = array<i64: 128, 128>}, {pipeline_mode = #tpu.pipeline_mode<synchronous>, transform_indices = @transform_9, window_bounds = array<i64: 1, 128>}, {pipeline_mode = #tpu.pipeline_mode<synchronous>, transform_indices = @transform_10, window_bounds = array<i64: 128, 512>}, {transform_indices = @transform_11, window_bounds = array<i64: 1, 5, 8, 128>}, {transform_indices = @transform_12, window_bounds = array<i64: 1, 8, 128>}, {transform_indices = @transform_13, window_bounds = array<i64: 1, 8, 16>}]} {
    %c0_i32 = arith.constant 0 : i32
    %0 = arith.cmpi eq, %arg1, %c0_i32 : i32
    %1 = arith.extui %0 : i1 to i32
    %c0_i32_0 = arith.constant 0 : i32
    %2 = arith.cmpi ne, %1, %c0_i32_0 : i32
    scf.if %2 {
      %cst_108 = arith.constant 0.000000e+00 : f32
      %277 = vector.broadcast %cst_108 : f32 to vector<8x128xf32>
      %c0_109 = arith.constant 0 : index
      %c0_110 = arith.constant 0 : index
      %278 = vector.load %arg16[%c0_109, %c0_110] : memref<8x128xf32, #tpu.memory_space<vmem>>, vector<8x128xf32>
      tpu.vector_store %arg16[%c0_109, %c0_110], %277 {strides = array<i32>} : memref<8x128xf32, #tpu.memory_space<vmem>>, vector<8x128xf32>,
      %c0_111 = arith.constant 0 : index
      %c0_112 = arith.constant 0 : index
      %279 = vector.load %arg17[%c0_111, %c0_112] : memref<8x128xf32, #tpu.memory_space<vmem>>, vector<8x128xf32>
      tpu.vector_store %arg17[%c0_111, %c0_112], %277 {strides = array<i32>} : memref<8x128xf32, #tpu.memory_space<vmem>>, vector<8x128xf32>,
      %280 = arith.truncf %277 : vector<8x128xf32> to vector<8x128xbf16>
      %c0_113 = arith.constant 0 : index
      %c0_114 = arith.constant 0 : index
      %281 = vector.load %arg5[%c0_113, %c0_114] : memref<128x128xbf16, #tpu.memory_space<vmem>>, vector<128x128xbf16>
      %cst_115 = arith.constant dense<0.000000e+00> : vector<8x128xf32>
      %282 = tpu.matmul %280, %281, %cst_115 {dimension_numbers = #tpu.dot_dimension_numbers<[1], [0], [0], [1], [0, 0, 1, 1], [], []>} : vector<8x128xbf16>, vector<128x128xbf16>, vector<8x128xf32> -> vector<8x128xf32>
      %c0_116 = arith.constant 0 : index
      %c0_117 = arith.constant 0 : index
      %c0_118 = arith.constant 0 : index
      %283 = vector.load %arg3[%c0_116, %c0_117, %c0_118] : memref<8x16x128xf32, #tpu.memory_space<vmem>>, vector<8x16x128xf32>
      %284 = vector.shape_cast %282 : vector<8x128xf32> to vector<8x1x128xf32>
      %285 = vector.broadcast %284 : vector<8x1x128xf32> to vector<8x16x128xf32>
      %286 = arith.addf %283, %285 : vector<8x16x128xf32>
      %287 = math.tanh %286 : vector<8x16x128xf32>
      %c0_119 = arith.constant 0 : index
      %c0_120 = arith.constant 0 : index
      %288 = vector.load %arg6[%c0_119, %c0_120] : memref<1x128xf32, #tpu.memory_space<vmem>>, vector<1x128xf32>
      %289 = vector.shape_cast %288 : vector<1x128xf32> to vector<1x1x128xf32>
      %290 = vector.broadcast %289 : vector<1x1x128xf32> to vector<8x16x128xf32>
      %291 = arith.mulf %287, %290 : vector<8x16x128xf32>
      %cst_121 = arith.constant dense<0.000000e+00> : vector<8x16xf32>
      %292 = vector.multi_reduction <add>, %291, %cst_121 [2] : vector<8x16x128xf32> to vector<8x16xf32>
      %cst_122 = arith.constant dense<0xFF800000> : vector<8xf32>
      %293 = vector.multi_reduction <maximumf>, %292, %cst_122 [1] : vector<8x16xf32> to vector<8xf32>
      %294 = vector.shape_cast %293 : vector<8xf32> to vector<8x1xf32>
      %295 = vector.broadcast %294 : vector<8x1xf32> to vector<8x16xf32>
      %296 = arith.subf %292, %295 : vector<8x16xf32>
      %297 = math.exp %296 : vector<8x16xf32>
      %cst_123 = arith.constant dense<0.000000e+00> : vector<8xf32>
      %298 = vector.multi_reduction <add>, %297, %cst_123 [1] : vector<8x16xf32> to vector<8xf32>
      %299 = vector.shape_cast %298 : vector<8xf32> to vector<8x1xf32>
      %300 = tpu.reciprocal %299 {approx = true} : vector<8x1xf32> -> vector<8x1xf32>
      %301 = vector.broadcast %300 : vector<8x1xf32> to vector<8x16xf32>
      %302 = arith.mulf %297, %301 : vector<8x16xf32>
      %c0_124 = arith.constant 0 : index
      %c0_125 = arith.constant 0 : index
      %c0_126 = arith.constant 0 : index
      %303 = vector.load %arg4[%c0_124, %c0_125, %c0_126] : memref<8x16x128xf32, #tpu.memory_space<vmem>>, vector<8x16x128xf32>
      %304 = vector.shape_cast %302 : vector<8x16xf32> to vector<8x16x1xf32>
      %305 = vector.broadcast %304 : vector<8x16x1xf32> to vector<8x16x128xf32>
      %306 = arith.mulf %303, %305 : vector<8x16x128xf32>
      %cst_127 = arith.constant dense<0.000000e+00> : vector<8x128xf32>
      %307 = vector.multi_reduction <add>, %306, %cst_127 [1] : vector<8x16x128xf32> to vector<8x128xf32>
      %c0_128 = arith.constant 0 : index
      %c0_129 = arith.constant 0 : index
      %308 = vector.load %arg18[%c0_128, %c0_129] : memref<8x128xf32, #tpu.memory_space<vmem>>, vector<8x128xf32>
      tpu.vector_store %arg18[%c0_128, %c0_129], %307 {strides = array<i32>} : memref<8x128xf32, #tpu.memory_space<vmem>>, vector<8x128xf32>,
    } else {
    }
    %c0 = arith.constant 0 : index
    %c0_1 = arith.constant 0 : index
    %3 = vector.load %arg18[%c0, %c0_1] : memref<8x128xf32, #tpu.memory_space<vmem>>, vector<8x128xf32>
    %c0_2 = arith.constant 0 : index
    %c0_3 = arith.constant 0 : index
    %4 = vector.load %arg16[%c0_2, %c0_3] : memref<8x128xf32, #tpu.memory_space<vmem>>, vector<8x128xf32>
    %5 = arith.truncf %3 : vector<8x128xf32> to vector<8x128xbf16>
    %c0_4 = arith.constant 0 : index
    %c0_5 = arith.constant 0 : index
    %6 = vector.load %arg7[%c0_4, %c0_5] : memref<128x512xbf16, #tpu.memory_space<vmem>>, vector<128x512xbf16>
    %cst = arith.constant dense<0.000000e+00> : vector<8x512xf32>
    %7 = tpu.matmul %5, %6, %cst {dimension_numbers = #tpu.dot_dimension_numbers<[1], [0], [0], [1], [0, 0, 1, 1], [], []>} : vector<8x128xbf16>, vector<128x512xbf16>, vector<8x512xf32> -> vector<8x512xf32>
    %8 = arith.truncf %4 : vector<8x128xf32> to vector<8x128xbf16>
    %c0_6 = arith.constant 0 : index
    %c0_7 = arith.constant 0 : index
    %9 = vector.load %arg8[%c0_6, %c0_7] : memref<128x512xbf16, #tpu.memory_space<vmem>>, vector<128x512xbf16>
    %cst_8 = arith.constant dense<0.000000e+00> : vector<8x512xf32>
    %10 = tpu.matmul %8, %9, %cst_8 {dimension_numbers = #tpu.dot_dimension_numbers<[1], [0], [0], [1], [0, 0, 1, 1], [], []>} : vector<8x128xbf16>, vector<128x512xbf16>, vector<8x512xf32> -> vector<8x512xf32>
    %11 = arith.addf %7, %10 : vector<8x512xf32>
    %c0_9 = arith.constant 0 : index
    %c0_10 = arith.constant 0 : index
    %12 = vector.load %arg9[%c0_9, %c0_10] : memref<1x512xf32, #tpu.memory_space<vmem>>, vector<1x512xf32>
    %13 = vector.broadcast %12 : vector<1x512xf32> to vector<8x512xf32>
    %14 = arith.addf %11, %13 : vector<8x512xf32>
    %c0_11 = arith.constant 0 : index
    %c0_12 = arith.constant 0 : index
    %15 = vector.load %arg17[%c0_11, %c0_12] : memref<8x128xf32, #tpu.memory_space<vmem>>, vector<8x128xf32>
    %16 = vector.extract_strided_slice %14 {offsets = [0, 0], sizes = [8, 128], strides = [1, 1]} : vector<8x512xf32> to vector<8x128xf32>
    %17 = arith.negf %16 : vector<8x128xf32>
    %18 = math.exp %17 : vector<8x128xf32>
    %cst_13 = arith.constant 1.000000e+00 : f32
    %19 = vector.broadcast %cst_13 : f32 to vector<8x128xf32>
    %20 = arith.addf %19, %18 : vector<8x128xf32>
    %21 = arith.divf %19, %20 : vector<8x128xf32>
    %22 = vector.extract_strided_slice %14 {offsets = [0, 128], sizes = [8, 128], strides = [1, 1]} : vector<8x512xf32> to vector<8x128xf32>
    %23 = arith.negf %22 : vector<8x128xf32>
    %24 = math.exp %23 : vector<8x128xf32>
    %cst_14 = arith.constant 1.000000e+00 : f32
    %25 = vector.broadcast %cst_14 : f32 to vector<8x128xf32>
    %26 = arith.addf %25, %24 : vector<8x128xf32>
    %27 = arith.divf %25, %26 : vector<8x128xf32>
    %28 = vector.extract_strided_slice %14 {offsets = [0, 256], sizes = [8, 128], strides = [1, 1]} : vector<8x512xf32> to vector<8x128xf32>
    %29 = math.tanh %28 : vector<8x128xf32>
    %30 = vector.extract_strided_slice %14 {offsets = [0, 384], sizes = [8, 128], strides = [1, 1]} : vector<8x512xf32> to vector<8x128xf32>
    %31 = arith.negf %30 : vector<8x128xf32>
    %32 = math.exp %31 : vector<8x128xf32>
    %cst_15 = arith.constant 1.000000e+00 : f32
    %33 = vector.broadcast %cst_15 : f32 to vector<8x128xf32>
    %34 = arith.addf %33, %32 : vector<8x128xf32>
    %35 = arith.divf %33, %34 : vector<8x128xf32>
    %36 = arith.mulf %27, %15 : vector<8x128xf32>
    %37 = arith.mulf %21, %29 : vector<8x128xf32>
    %38 = arith.addf %36, %37 : vector<8x128xf32>
    %39 = math.tanh %38 : vector<8x128xf32>
    %40 = arith.mulf %35, %39 : vector<8x128xf32>
    %c0_16 = arith.constant 0 : index
    %c0_17 = arith.constant 0 : index
    %41 = vector.load %arg16[%c0_16, %c0_17] : memref<8x128xf32, #tpu.memory_space<vmem>>, vector<8x128xf32>
    tpu.vector_store %arg16[%c0_16, %c0_17], %40 {strides = array<i32>} : memref<8x128xf32, #tpu.memory_space<vmem>>, vector<8x128xf32>,
    %c0_18 = arith.constant 0 : index
    %c0_19 = arith.constant 0 : index
    %42 = vector.load %arg17[%c0_18, %c0_19] : memref<8x128xf32, #tpu.memory_space<vmem>>, vector<8x128xf32>
    tpu.vector_store %arg17[%c0_18, %c0_19], %38 {strides = array<i32>} : memref<8x128xf32, #tpu.memory_space<vmem>>, vector<8x128xf32>,
    %c0_20 = arith.constant 0 : index
    %c0_21 = arith.constant 0 : index
    %43 = vector.load %arg10[%c0_20, %c0_21] : memref<128x128xf32, #tpu.memory_space<vmem>>, vector<128x128xf32>
    %cst_22 = arith.constant dense<0.000000e+00> : vector<8x128xf32>
    %44 = tpu.matmul %40, %43, %cst_22 {dimension_numbers = #tpu.dot_dimension_numbers<[1], [0], [0], [1], [0, 0, 1, 1], [], []>} : vector<8x128xf32>, vector<128x128xf32>, vector<8x128xf32> -> vector<8x128xf32>
    %c0_23 = arith.constant 0 : index
    %c0_24 = arith.constant 0 : index
    %45 = vector.load %arg11[%c0_23, %c0_24] : memref<1x128xf32, #tpu.memory_space<vmem>>, vector<1x128xf32>
    %46 = vector.broadcast %45 : vector<1x128xf32> to vector<8x128xf32>
    %47 = arith.addf %44, %46 : vector<8x128xf32>
    %48 = arith.negf %47 : vector<8x128xf32>
    %49 = math.exp %48 : vector<8x128xf32>
    %cst_25 = arith.constant 1.000000e+00 : f32
    %50 = vector.broadcast %cst_25 : f32 to vector<8x128xf32>
    %51 = arith.addf %50, %49 : vector<8x128xf32>
    %52 = arith.divf %50, %51 : vector<8x128xf32>
    %c0_26 = arith.constant 0 : index
    %c0_27 = arith.constant 0 : index
    %c0_28 = arith.constant 0 : index
    %53 = vector.load %arg14[%c0_26, %c0_27, %c0_28] : memref<1x8x128xf32, #tpu.memory_space<vmem>>, vector<1x8x128xf32>
    %54 = vector.shape_cast %53 : vector<1x8x128xf32> to vector<8x128xf32>
    %55 = vector.shape_cast %52 : vector<8x128xf32> to vector<1x8x128xf32>
    tpu.vector_store %arg14[%c0_26, %c0_27, %c0_28], %55 {strides = array<i32>} : memref<1x8x128xf32, #tpu.memory_space<vmem>>, vector<1x8x128xf32>,
    %cst_29 = arith.constant 0.000000e+00 : f32
    %56 = vector.broadcast %cst_29 : f32 to vector<8x128xf32>
    %c0_i32_30 = arith.constant 0 : i32
    %c0_31 = arith.constant 0 : index
    %57 = arith.index_cast %c0_i32_30 : i32 to index
    %c0_32 = arith.constant 0 : index
    %c0_33 = arith.constant 0 : index
    %58 = vector.load %arg2[%c0_31, %57, %c0_32, %c0_33] : memref<1x5x8x512xf32, #tpu.memory_space<vmem>>, vector<1x1x8x512xf32>
    %59 = vector.shape_cast %58 : vector<1x1x8x512xf32> to vector<8x512xf32>
    %60 = arith.truncf %40 : vector<8x128xf32> to vector<8x128xbf16>
    %c0_34 = arith.constant 0 : index
    %c0_35 = arith.constant 0 : index
    %61 = vector.load %arg12[%c0_34, %c0_35] : memref<128x512xbf16, #tpu.memory_space<vmem>>, vector<128x512xbf16>
    %cst_36 = arith.constant dense<0.000000e+00> : vector<8x512xf32>
    %62 = tpu.matmul %60, %61, %cst_36 {dimension_numbers = #tpu.dot_dimension_numbers<[1], [0], [0], [1], [0, 0, 1, 1], [], []>} : vector<8x128xbf16>, vector<128x512xbf16>, vector<8x512xf32> -> vector<8x512xf32>
    %63 = arith.addf %59, %62 : vector<8x512xf32>
    %64 = vector.extract_strided_slice %63 {offsets = [0, 0], sizes = [8, 128], strides = [1, 1]} : vector<8x512xf32> to vector<8x128xf32>
    %65 = arith.negf %64 : vector<8x128xf32>
    %66 = math.exp %65 : vector<8x128xf32>
    %cst_37 = arith.constant 1.000000e+00 : f32
    %67 = vector.broadcast %cst_37 : f32 to vector<8x128xf32>
    %68 = arith.addf %67, %66 : vector<8x128xf32>
    %69 = arith.divf %67, %68 : vector<8x128xf32>
    %70 = vector.extract_strided_slice %63 {offsets = [0, 128], sizes = [8, 128], strides = [1, 1]} : vector<8x512xf32> to vector<8x128xf32>
    %71 = arith.negf %70 : vector<8x128xf32>
    %72 = math.exp %71 : vector<8x128xf32>
    %cst_38 = arith.constant 1.000000e+00 : f32
    %73 = vector.broadcast %cst_38 : f32 to vector<8x128xf32>
    %74 = arith.addf %73, %72 : vector<8x128xf32>
    %75 = arith.divf %73, %74 : vector<8x128xf32>
    %76 = vector.extract_strided_slice %63 {offsets = [0, 256], sizes = [8, 128], strides = [1, 1]} : vector<8x512xf32> to vector<8x128xf32>
    %77 = math.tanh %76 : vector<8x128xf32>
    %78 = vector.extract_strided_slice %63 {offsets = [0, 384], sizes = [8, 128], strides = [1, 1]} : vector<8x512xf32> to vector<8x128xf32>
    %79 = arith.negf %78 : vector<8x128xf32>
    %80 = math.exp %79 : vector<8x128xf32>
    %cst_39 = arith.constant 1.000000e+00 : f32
    %81 = vector.broadcast %cst_39 : f32 to vector<8x128xf32>
    %82 = arith.addf %81, %80 : vector<8x128xf32>
    %83 = arith.divf %81, %82 : vector<8x128xf32>
    %84 = arith.mulf %75, %56 : vector<8x128xf32>
    %85 = arith.mulf %69, %77 : vector<8x128xf32>
    %86 = arith.addf %84, %85 : vector<8x128xf32>
    %87 = math.tanh %86 : vector<8x128xf32>
    %88 = arith.mulf %83, %87 : vector<8x128xf32>
    %89 = arith.truncf %88 : vector<8x128xf32> to vector<8x128xbf16>
    %90 = vector.shape_cast %89 : vector<8x128xbf16> to vector<1x8x128xbf16>
    %c0_40 = arith.constant 0 : index
    %91 = arith.index_cast %c0_i32_30 : i32 to index
    %c0_41 = arith.constant 0 : index
    %c0_42 = arith.constant 0 : index
    %92 = vector.load %arg13[%c0_40, %91, %c0_41, %c0_42] : memref<1x5x8x128xbf16, #tpu.memory_space<vmem>>, vector<1x1x8x128xbf16>
    %93 = vector.shape_cast %92 : vector<1x1x8x128xbf16> to vector<1x8x128xbf16>
    %94 = vector.shape_cast %90 : vector<1x8x128xbf16> to vector<1x1x8x128xbf16>
    tpu.vector_store %arg13[%c0_40, %91, %c0_41, %c0_42], %94 {strides = array<i32>} : memref<1x5x8x128xbf16, #tpu.memory_space<vmem>>, vector<1x1x8x128xbf16>,
    %c1_i32 = arith.constant 1 : i32
    %c0_43 = arith.constant 0 : index
    %95 = arith.index_cast %c1_i32 : i32 to index
    %c0_44 = arith.constant 0 : index
    %c0_45 = arith.constant 0 : index
    %96 = vector.load %arg2[%c0_43, %95, %c0_44, %c0_45] : memref<1x5x8x512xf32, #tpu.memory_space<vmem>>, vector<1x1x8x512xf32>
    %97 = vector.shape_cast %96 : vector<1x1x8x512xf32> to vector<8x512xf32>
    %98 = arith.truncf %88 : vector<8x128xf32> to vector<8x128xbf16>
    %c0_46 = arith.constant 0 : index
    %c0_47 = arith.constant 0 : index
    %99 = vector.load %arg12[%c0_46, %c0_47] : memref<128x512xbf16, #tpu.memory_space<vmem>>, vector<128x512xbf16>
    %cst_48 = arith.constant dense<0.000000e+00> : vector<8x512xf32>
    %100 = tpu.matmul %98, %99, %cst_48 {dimension_numbers = #tpu.dot_dimension_numbers<[1], [0], [0], [1], [0, 0, 1, 1], [], []>} : vector<8x128xbf16>, vector<128x512xbf16>, vector<8x512xf32> -> vector<8x512xf32>
    %101 = arith.addf %97, %100 : vector<8x512xf32>
    %102 = vector.extract_strided_slice %101 {offsets = [0, 0], sizes = [8, 128], strides = [1, 1]} : vector<8x512xf32> to vector<8x128xf32>
    %103 = arith.negf %102 : vector<8x128xf32>
    %104 = math.exp %103 : vector<8x128xf32>
    %cst_49 = arith.constant 1.000000e+00 : f32
    %105 = vector.broadcast %cst_49 : f32 to vector<8x128xf32>
    %106 = arith.addf %105, %104 : vector<8x128xf32>
    %107 = arith.divf %105, %106 : vector<8x128xf32>
    %108 = vector.extract_strided_slice %101 {offsets = [0, 128], sizes = [8, 128], strides = [1, 1]} : vector<8x512xf32> to vector<8x128xf32>
    %109 = arith.negf %108 : vector<8x128xf32>
    %110 = math.exp %109 : vector<8x128xf32>
    %cst_50 = arith.constant 1.000000e+00 : f32
    %111 = vector.broadcast %cst_50 : f32 to vector<8x128xf32>
    %112 = arith.addf %111, %110 : vector<8x128xf32>
    %113 = arith.divf %111, %112 : vector<8x128xf32>
    %114 = vector.extract_strided_slice %101 {offsets = [0, 256], sizes = [8, 128], strides = [1, 1]} : vector<8x512xf32> to vector<8x128xf32>
    %115 = math.tanh %114 : vector<8x128xf32>
    %116 = vector.extract_strided_slice %101 {offsets = [0, 384], sizes = [8, 128], strides = [1, 1]} : vector<8x512xf32> to vector<8x128xf32>
    %117 = arith.negf %116 : vector<8x128xf32>
    %118 = math.exp %117 : vector<8x128xf32>
    %cst_51 = arith.constant 1.000000e+00 : f32
    %119 = vector.broadcast %cst_51 : f32 to vector<8x128xf32>
    %120 = arith.addf %119, %118 : vector<8x128xf32>
    %121 = arith.divf %119, %120 : vector<8x128xf32>
    %122 = arith.mulf %113, %86 : vector<8x128xf32>
    %123 = arith.mulf %107, %115 : vector<8x128xf32>
    %124 = arith.addf %122, %123 : vector<8x128xf32>
    %125 = math.tanh %124 : vector<8x128xf32>
    %126 = arith.mulf %121, %125 : vector<8x128xf32>
    %127 = arith.truncf %126 : vector<8x128xf32> to vector<8x128xbf16>
    %128 = vector.shape_cast %127 : vector<8x128xbf16> to vector<1x8x128xbf16>
    %c0_52 = arith.constant 0 : index
    %129 = arith.index_cast %c1_i32 : i32 to index
    %c0_53 = arith.constant 0 : index
    %c0_54 = arith.constant 0 : index
    %130 = vector.load %arg13[%c0_52, %129, %c0_53, %c0_54] : memref<1x5x8x128xbf16, #tpu.memory_space<vmem>>, vector<1x1x8x128xbf16>
    %131 = vector.shape_cast %130 : vector<1x1x8x128xbf16> to vector<1x8x128xbf16>
    %132 = vector.shape_cast %128 : vector<1x8x128xbf16> to vector<1x1x8x128xbf16>
    tpu.vector_store %arg13[%c0_52, %129, %c0_53, %c0_54], %132 {strides = array<i32>} : memref<1x5x8x128xbf16, #tpu.memory_space<vmem>>, vector<1x1x8x128xbf16>,
    %c2_i32 = arith.constant 2 : i32
    %c0_55 = arith.constant 0 : index
    %133 = arith.index_cast %c2_i32 : i32 to index
    %c0_56 = arith.constant 0 : index
    %c0_57 = arith.constant 0 : index
    %134 = vector.load %arg2[%c0_55, %133, %c0_56, %c0_57] : memref<1x5x8x512xf32, #tpu.memory_space<vmem>>, vector<1x1x8x512xf32>
    %135 = vector.shape_cast %134 : vector<1x1x8x512xf32> to vector<8x512xf32>
    %136 = arith.truncf %126 : vector<8x128xf32> to vector<8x128xbf16>
    %c0_58 = arith.constant 0 : index
    %c0_59 = arith.constant 0 : index
    %137 = vector.load %arg12[%c0_58, %c0_59] : memref<128x512xbf16, #tpu.memory_space<vmem>>, vector<128x512xbf16>
    %cst_60 = arith.constant dense<0.000000e+00> : vector<8x512xf32>
    %138 = tpu.matmul %136, %137, %cst_60 {dimension_numbers = #tpu.dot_dimension_numbers<[1], [0], [0], [1], [0, 0, 1, 1], [], []>} : vector<8x128xbf16>, vector<128x512xbf16>, vector<8x512xf32> -> vector<8x512xf32>
    %139 = arith.addf %135, %138 : vector<8x512xf32>
    %140 = vector.extract_strided_slice %139 {offsets = [0, 0], sizes = [8, 128], strides = [1, 1]} : vector<8x512xf32> to vector<8x128xf32>
    %141 = arith.negf %140 : vector<8x128xf32>
    %142 = math.exp %141 : vector<8x128xf32>
    %cst_61 = arith.constant 1.000000e+00 : f32
    %143 = vector.broadcast %cst_61 : f32 to vector<8x128xf32>
    %144 = arith.addf %143, %142 : vector<8x128xf32>
    %145 = arith.divf %143, %144 : vector<8x128xf32>
    %146 = vector.extract_strided_slice %139 {offsets = [0, 128], sizes = [8, 128], strides = [1, 1]} : vector<8x512xf32> to vector<8x128xf32>
    %147 = arith.negf %146 : vector<8x128xf32>
    %148 = math.exp %147 : vector<8x128xf32>
    %cst_62 = arith.constant 1.000000e+00 : f32
    %149 = vector.broadcast %cst_62 : f32 to vector<8x128xf32>
    %150 = arith.addf %149, %148 : vector<8x128xf32>
    %151 = arith.divf %149, %150 : vector<8x128xf32>
    %152 = vector.extract_strided_slice %139 {offsets = [0, 256], sizes = [8, 128], strides = [1, 1]} : vector<8x512xf32> to vector<8x128xf32>
    %153 = math.tanh %152 : vector<8x128xf32>
    %154 = vector.extract_strided_slice %139 {offsets = [0, 384], sizes = [8, 128], strides = [1, 1]} : vector<8x512xf32> to vector<8x128xf32>
    %155 = arith.negf %154 : vector<8x128xf32>
    %156 = math.exp %155 : vector<8x128xf32>
    %cst_63 = arith.constant 1.000000e+00 : f32
    %157 = vector.broadcast %cst_63 : f32 to vector<8x128xf32>
    %158 = arith.addf %157, %156 : vector<8x128xf32>
    %159 = arith.divf %157, %158 : vector<8x128xf32>
    %160 = arith.mulf %151, %124 : vector<8x128xf32>
    %161 = arith.mulf %145, %153 : vector<8x128xf32>
    %162 = arith.addf %160, %161 : vector<8x128xf32>
    %163 = math.tanh %162 : vector<8x128xf32>
    %164 = arith.mulf %159, %163 : vector<8x128xf32>
    %165 = arith.truncf %164 : vector<8x128xf32> to vector<8x128xbf16>
    %166 = vector.shape_cast %165 : vector<8x128xbf16> to vector<1x8x128xbf16>
    %c0_64 = arith.constant 0 : index
    %167 = arith.index_cast %c2_i32 : i32 to index
    %c0_65 = arith.constant 0 : index
    %c0_66 = arith.constant 0 : index
    %168 = vector.load %arg13[%c0_64, %167, %c0_65, %c0_66] : memref<1x5x8x128xbf16, #tpu.memory_space<vmem>>, vector<1x1x8x128xbf16>
    %169 = vector.shape_cast %168 : vector<1x1x8x128xbf16> to vector<1x8x128xbf16>
    %170 = vector.shape_cast %166 : vector<1x8x128xbf16> to vector<1x1x8x128xbf16>
    tpu.vector_store %arg13[%c0_64, %167, %c0_65, %c0_66], %170 {strides = array<i32>} : memref<1x5x8x128xbf16, #tpu.memory_space<vmem>>, vector<1x1x8x128xbf16>,
    %c3_i32 = arith.constant 3 : i32
    %c0_67 = arith.constant 0 : index
    %171 = arith.index_cast %c3_i32 : i32 to index
    %c0_68 = arith.constant 0 : index
    %c0_69 = arith.constant 0 : index
    %172 = vector.load %arg2[%c0_67, %171, %c0_68, %c0_69] : memref<1x5x8x512xf32, #tpu.memory_space<vmem>>, vector<1x1x8x512xf32>
    %173 = vector.shape_cast %172 : vector<1x1x8x512xf32> to vector<8x512xf32>
    %174 = arith.truncf %164 : vector<8x128xf32> to vector<8x128xbf16>
    %c0_70 = arith.constant 0 : index
    %c0_71 = arith.constant 0 : index
    %175 = vector.load %arg12[%c0_70, %c0_71] : memref<128x512xbf16, #tpu.memory_space<vmem>>, vector<128x512xbf16>
    %cst_72 = arith.constant dense<0.000000e+00> : vector<8x512xf32>
    %176 = tpu.matmul %174, %175, %cst_72 {dimension_numbers = #tpu.dot_dimension_numbers<[1], [0], [0], [1], [0, 0, 1, 1], [], []>} : vector<8x128xbf16>, vector<128x512xbf16>, vector<8x512xf32> -> vector<8x512xf32>
    %177 = arith.addf %173, %176 : vector<8x512xf32>
    %178 = vector.extract_strided_slice %177 {offsets = [0, 0], sizes = [8, 128], strides = [1, 1]} : vector<8x512xf32> to vector<8x128xf32>
    %179 = arith.negf %178 : vector<8x128xf32>
    %180 = math.exp %179 : vector<8x128xf32>
    %cst_73 = arith.constant 1.000000e+00 : f32
    %181 = vector.broadcast %cst_73 : f32 to vector<8x128xf32>
    %182 = arith.addf %181, %180 : vector<8x128xf32>
    %183 = arith.divf %181, %182 : vector<8x128xf32>
    %184 = vector.extract_strided_slice %177 {offsets = [0, 128], sizes = [8, 128], strides = [1, 1]} : vector<8x512xf32> to vector<8x128xf32>
    %185 = arith.negf %184 : vector<8x128xf32>
    %186 = math.exp %185 : vector<8x128xf32>
    %cst_74 = arith.constant 1.000000e+00 : f32
    %187 = vector.broadcast %cst_74 : f32 to vector<8x128xf32>
    %188 = arith.addf %187, %186 : vector<8x128xf32>
    %189 = arith.divf %187, %188 : vector<8x128xf32>
    %190 = vector.extract_strided_slice %177 {offsets = [0, 256], sizes = [8, 128], strides = [1, 1]} : vector<8x512xf32> to vector<8x128xf32>
    %191 = math.tanh %190 : vector<8x128xf32>
    %192 = vector.extract_strided_slice %177 {offsets = [0, 384], sizes = [8, 128], strides = [1, 1]} : vector<8x512xf32> to vector<8x128xf32>
    %193 = arith.negf %192 : vector<8x128xf32>
    %194 = math.exp %193 : vector<8x128xf32>
    %cst_75 = arith.constant 1.000000e+00 : f32
    %195 = vector.broadcast %cst_75 : f32 to vector<8x128xf32>
    %196 = arith.addf %195, %194 : vector<8x128xf32>
    %197 = arith.divf %195, %196 : vector<8x128xf32>
    %198 = arith.mulf %189, %162 : vector<8x128xf32>
    %199 = arith.mulf %183, %191 : vector<8x128xf32>
    %200 = arith.addf %198, %199 : vector<8x128xf32>
    %201 = math.tanh %200 : vector<8x128xf32>
    %202 = arith.mulf %197, %201 : vector<8x128xf32>
    %203 = arith.truncf %202 : vector<8x128xf32> to vector<8x128xbf16>
    %204 = vector.shape_cast %203 : vector<8x128xbf16> to vector<1x8x128xbf16>
    %c0_76 = arith.constant 0 : index
    %205 = arith.index_cast %c3_i32 : i32 to index
    %c0_77 = arith.constant 0 : index
    %c0_78 = arith.constant 0 : index
    %206 = vector.load %arg13[%c0_76, %205, %c0_77, %c0_78] : memref<1x5x8x128xbf16, #tpu.memory_space<vmem>>, vector<1x1x8x128xbf16>
    %207 = vector.shape_cast %206 : vector<1x1x8x128xbf16> to vector<1x8x128xbf16>
    %208 = vector.shape_cast %204 : vector<1x8x128xbf16> to vector<1x1x8x128xbf16>
    tpu.vector_store %arg13[%c0_76, %205, %c0_77, %c0_78], %208 {strides = array<i32>} : memref<1x5x8x128xbf16, #tpu.memory_space<vmem>>, vector<1x1x8x128xbf16>,
    %c4_i32 = arith.constant 4 : i32
    %c0_79 = arith.constant 0 : index
    %209 = arith.index_cast %c4_i32 : i32 to index
    %c0_80 = arith.constant 0 : index
    %c0_81 = arith.constant 0 : index
    %210 = vector.load %arg2[%c0_79, %209, %c0_80, %c0_81] : memref<1x5x8x512xf32, #tpu.memory_space<vmem>>, vector<1x1x8x512xf32>
    %211 = vector.shape_cast %210 : vector<1x1x8x512xf32> to vector<8x512xf32>
    %212 = arith.truncf %202 : vector<8x128xf32> to vector<8x128xbf16>
    %c0_82 = arith.constant 0 : index
    %c0_83 = arith.constant 0 : index
    %213 = vector.load %arg12[%c0_82, %c0_83] : memref<128x512xbf16, #tpu.memory_space<vmem>>, vector<128x512xbf16>
    %cst_84 = arith.constant dense<0.000000e+00> : vector<8x512xf32>
    %214 = tpu.matmul %212, %213, %cst_84 {dimension_numbers = #tpu.dot_dimension_numbers<[1], [0], [0], [1], [0, 0, 1, 1], [], []>} : vector<8x128xbf16>, vector<128x512xbf16>, vector<8x512xf32> -> vector<8x512xf32>
    %215 = arith.addf %211, %214 : vector<8x512xf32>
    %216 = vector.extract_strided_slice %215 {offsets = [0, 0], sizes = [8, 128], strides = [1, 1]} : vector<8x512xf32> to vector<8x128xf32>
    %217 = arith.negf %216 : vector<8x128xf32>
    %218 = math.exp %217 : vector<8x128xf32>
    %cst_85 = arith.constant 1.000000e+00 : f32
    %219 = vector.broadcast %cst_85 : f32 to vector<8x128xf32>
    %220 = arith.addf %219, %218 : vector<8x128xf32>
    %221 = arith.divf %219, %220 : vector<8x128xf32>
    %222 = vector.extract_strided_slice %215 {offsets = [0, 128], sizes = [8, 128], strides = [1, 1]} : vector<8x512xf32> to vector<8x128xf32>
    %223 = arith.negf %222 : vector<8x128xf32>
    %224 = math.exp %223 : vector<8x128xf32>
    %cst_86 = arith.constant 1.000000e+00 : f32
    %225 = vector.broadcast %cst_86 : f32 to vector<8x128xf32>
    %226 = arith.addf %225, %224 : vector<8x128xf32>
    %227 = arith.divf %225, %226 : vector<8x128xf32>
    %228 = vector.extract_strided_slice %215 {offsets = [0, 256], sizes = [8, 128], strides = [1, 1]} : vector<8x512xf32> to vector<8x128xf32>
    %229 = math.tanh %228 : vector<8x128xf32>
    %230 = vector.extract_strided_slice %215 {offsets = [0, 384], sizes = [8, 128], strides = [1, 1]} : vector<8x512xf32> to vector<8x128xf32>
    %231 = arith.negf %230 : vector<8x128xf32>
    %232 = math.exp %231 : vector<8x128xf32>
    %cst_87 = arith.constant 1.000000e+00 : f32
    %233 = vector.broadcast %cst_87 : f32 to vector<8x128xf32>
    %234 = arith.addf %233, %232 : vector<8x128xf32>
    %235 = arith.divf %233, %234 : vector<8x128xf32>
    %236 = arith.mulf %227, %200 : vector<8x128xf32>
    %237 = arith.mulf %221, %229 : vector<8x128xf32>
    %238 = arith.addf %236, %237 : vector<8x128xf32>
    %239 = math.tanh %238 : vector<8x128xf32>
    %240 = arith.mulf %235, %239 : vector<8x128xf32>
    %241 = arith.truncf %240 : vector<8x128xf32> to vector<8x128xbf16>
    %242 = vector.shape_cast %241 : vector<8x128xbf16> to vector<1x8x128xbf16>
    %c0_88 = arith.constant 0 : index
    %243 = arith.index_cast %c4_i32 : i32 to index
    %c0_89 = arith.constant 0 : index
    %c0_90 = arith.constant 0 : index
    %244 = vector.load %arg13[%c0_88, %243, %c0_89, %c0_90] : memref<1x5x8x128xbf16, #tpu.memory_space<vmem>>, vector<1x1x8x128xbf16>
    %245 = vector.shape_cast %244 : vector<1x1x8x128xbf16> to vector<1x8x128xbf16>
    %246 = vector.shape_cast %242 : vector<1x8x128xbf16> to vector<1x1x8x128xbf16>
    tpu.vector_store %arg13[%c0_88, %243, %c0_89, %c0_90], %246 {strides = array<i32>} : memref<1x5x8x128xbf16, #tpu.memory_space<vmem>>, vector<1x1x8x128xbf16>,
    %c5_i32 = arith.constant 5 : i32
    %247 = arith.truncf %40 : vector<8x128xf32> to vector<8x128xbf16>
    %c0_91 = arith.constant 0 : index
    %c0_92 = arith.constant 0 : index
    %248 = vector.load %arg5[%c0_91, %c0_92] : memref<128x128xbf16, #tpu.memory_space<vmem>>, vector<128x128xbf16>
    %cst_93 = arith.constant dense<0.000000e+00> : vector<8x128xf32>
    %249 = tpu.matmul %247, %248, %cst_93 {dimension_numbers = #tpu.dot_dimension_numbers<[1], [0], [0], [1], [0, 0, 1, 1], [], []>} : vector<8x128xbf16>, vector<128x128xbf16>, vector<8x128xf32> -> vector<8x128xf32>
    %c0_94 = arith.constant 0 : index
    %c0_95 = arith.constant 0 : index
    %c0_96 = arith.constant 0 : index
    %250 = vector.load %arg3[%c0_94, %c0_95, %c0_96] : memref<8x16x128xf32, #tpu.memory_space<vmem>>, vector<8x16x128xf32>
    %251 = vector.shape_cast %249 : vector<8x128xf32> to vector<8x1x128xf32>
    %252 = vector.broadcast %251 : vector<8x1x128xf32> to vector<8x16x128xf32>
    %253 = arith.addf %250, %252 : vector<8x16x128xf32>
    %254 = math.tanh %253 : vector<8x16x128xf32>
    %c0_97 = arith.constant 0 : index
    %c0_98 = arith.constant 0 : index
    %255 = vector.load %arg6[%c0_97, %c0_98] : memref<1x128xf32, #tpu.memory_space<vmem>>, vector<1x128xf32>
    %256 = vector.shape_cast %255 : vector<1x128xf32> to vector<1x1x128xf32>
    %257 = vector.broadcast %256 : vector<1x1x128xf32> to vector<8x16x128xf32>
    %258 = arith.mulf %254, %257 : vector<8x16x128xf32>
    %cst_99 = arith.constant dense<0.000000e+00> : vector<8x16xf32>
    %259 = vector.multi_reduction <add>, %258, %cst_99 [2] : vector<8x16x128xf32> to vector<8x16xf32>
    %cst_100 = arith.constant dense<0xFF800000> : vector<8xf32>
    %260 = vector.multi_reduction <maximumf>, %259, %cst_100 [1] : vector<8x16xf32> to vector<8xf32>
    %261 = vector.shape_cast %260 : vector<8xf32> to vector<8x1xf32>
    %262 = vector.broadcast %261 : vector<8x1xf32> to vector<8x16xf32>
    %263 = arith.subf %259, %262 : vector<8x16xf32>
    %264 = math.exp %263 : vector<8x16xf32>
    %cst_101 = arith.constant dense<0.000000e+00> : vector<8xf32>
    %265 = vector.multi_reduction <add>, %264, %cst_101 [1] : vector<8x16xf32> to vector<8xf32>
    %266 = vector.shape_cast %265 : vector<8xf32> to vector<8x1xf32>
    %267 = tpu.reciprocal %266 {approx = true} : vector<8x1xf32> -> vector<8x1xf32>
    %268 = vector.broadcast %267 : vector<8x1xf32> to vector<8x16xf32>
    %269 = arith.mulf %264, %268 : vector<8x16xf32>
    %c0_102 = arith.constant 0 : index
    %c0_103 = arith.constant 0 : index
    %c0_104 = arith.constant 0 : index
    %270 = vector.load %arg15[%c0_102, %c0_103, %c0_104] : memref<1x8x16xf32, #tpu.memory_space<vmem>>, vector<1x8x16xf32>
    %271 = vector.shape_cast %270 : vector<1x8x16xf32> to vector<8x16xf32>
    %272 = vector.shape_cast %269 : vector<8x16xf32> to vector<1x8x16xf32>
    tpu.vector_store %arg15[%c0_102, %c0_103, %c0_104], %272 {strides = array<i32>} : memref<1x8x16xf32, #tpu.memory_space<vmem>>, vector<1x8x16xf32>,
    %c1_i32_105 = arith.constant 1 : i32
    %273 = arith.addi %arg1, %c1_i32_105 : i32
    %c3_i32_106 = arith.constant 3 : i32
    %274 = arith.cmpi slt, %273, %c3_i32_106 : i32
    %275 = arith.extui %274 : i1 to i32
    %c0_i32_107 = arith.constant 0 : i32
    %276 = arith.cmpi ne, %275, %c0_i32_107 : i32
    scf.if %276 {
      %c0_108 = arith.constant 0 : index
      %c0_109 = arith.constant 0 : index
      %c0_110 = arith.constant 0 : index
      %277 = vector.load %arg4[%c0_108, %c0_109, %c0_110] : memref<8x16x128xf32, #tpu.memory_space<vmem>>, vector<8x16x128xf32>
      %278 = vector.shape_cast %269 : vector<8x16xf32> to vector<8x16x1xf32>
      %279 = vector.broadcast %278 : vector<8x16x1xf32> to vector<8x16x128xf32>
      %280 = arith.mulf %277, %279 : vector<8x16x128xf32>
      %cst_111 = arith.constant dense<0.000000e+00> : vector<8x128xf32>
      %281 = vector.multi_reduction <add>, %280, %cst_111 [1] : vector<8x16x128xf32> to vector<8x128xf32>
      %c0_112 = arith.constant 0 : index
      %c0_113 = arith.constant 0 : index
      %282 = vector.load %arg18[%c0_112, %c0_113] : memref<8x128xf32, #tpu.memory_space<vmem>>, vector<8x128xf32>
      tpu.vector_store %arg18[%c0_112, %c0_113], %281 {strides = array<i32>} : memref<8x128xf32, #tpu.memory_space<vmem>>, vector<8x128xf32>,
    } else {
    }
    return
  }
  func.func @transform_0(%arg0: i32, %arg1: i32) -> (i32, i32, i32, i32) {
    %c0_i32 = arith.constant 0 : i32
    %c0_i32_0 = arith.constant 0 : i32
    %c0_i32_1 = arith.constant 0 : i32
    return %arg1, %c0_i32, %arg0, %c0_i32_0 : i32, i32, i32, i32
  }
  func.func @transform_1(%arg0: i32, %arg1: i32) -> (i32, i32, i32) {
    %c0_i32 = arith.constant 0 : i32
    %c0_i32_0 = arith.constant 0 : i32
    %c0_i32_1 = arith.constant 0 : i32
    return %arg0, %c0_i32, %c0_i32_0 : i32, i32, i32
  }
  func.func @transform_2(%arg0: i32, %arg1: i32) -> (i32, i32, i32) {
    %c0_i32 = arith.constant 0 : i32
    %c0_i32_0 = arith.constant 0 : i32
    %c0_i32_1 = arith.constant 0 : i32
    return %arg0, %c0_i32, %c0_i32_0 : i32, i32, i32
  }
  func.func @transform_3(%arg0: i32, %arg1: i32) -> (i32, i32) {
    %c0_i32 = arith.constant 0 : i32
    %c0_i32_0 = arith.constant 0 : i32
    %c0_i32_1 = arith.constant 0 : i32
    return %c0_i32, %c0_i32_0 : i32, i32
  }
  func.func @transform_4(%arg0: i32, %arg1: i32) -> (i32, i32) {
    %c0_i32 = arith.constant 0 : i32
    %c0_i32_0 = arith.constant 0 : i32
    %c0_i32_1 = arith.constant 0 : i32
    return %c0_i32, %c0_i32_0 : i32, i32
  }
  func.func @transform_5(%arg0: i32, %arg1: i32) -> (i32, i32) {
    %c0_i32 = arith.constant 0 : i32
    %c0_i32_0 = arith.constant 0 : i32
    %c0_i32_1 = arith.constant 0 : i32
    return %c0_i32, %c0_i32_0 : i32, i32
  }
  func.func @transform_6(%arg0: i32, %arg1: i32) -> (i32, i32) {
    %c0_i32 = arith.constant 0 : i32
    %c0_i32_0 = arith.constant 0 : i32
    %c0_i32_1 = arith.constant 0 : i32
    return %c0_i32, %c0_i32_0 : i32, i32
  }
  func.func @transform_7(%arg0: i32, %arg1: i32) -> (i32, i32) {
    %c0_i32 = arith.constant 0 : i32
    %c0_i32_0 = arith.constant 0 : i32
    %c0_i32_1 = arith.constant 0 : i32
    return %c0_i32, %c0_i32_0 : i32, i32
  }
  func.func @transform_8(%arg0: i32, %arg1: i32) -> (i32, i32) {
    %c0_i32 = arith.constant 0 : i32
    %c0_i32_0 = arith.constant 0 : i32
    %c0_i32_1 = arith.constant 0 : i32
    return %c0_i32, %c0_i32_0 : i32, i32
  }
  func.func @transform_9(%arg0: i32, %arg1: i32) -> (i32, i32) {
    %c0_i32 = arith.constant 0 : i32
    %c0_i32_0 = arith.constant 0 : i32
    %c0_i32_1 = arith.constant 0 : i32
    return %c0_i32, %c0_i32_0 : i32, i32
  }
  func.func @transform_10(%arg0: i32, %arg1: i32) -> (i32, i32) {
    %c0_i32 = arith.constant 0 : i32
    %c0_i32_0 = arith.constant 0 : i32
    %c0_i32_1 = arith.constant 0 : i32
    return %c0_i32, %c0_i32_0 : i32, i32
  }
  func.func @transform_11(%arg0: i32, %arg1: i32) -> (i32, i32, i32, i32) {
    %c0_i32 = arith.constant 0 : i32
    %c0_i32_0 = arith.constant 0 : i32
    %c0_i32_1 = arith.constant 0 : i32
    return %arg1, %c0_i32, %arg0, %c0_i32_0 : i32, i32, i32, i32
  }
  func.func @transform_12(%arg0: i32, %arg1: i32) -> (i32, i32, i32) {
    %c0_i32 = arith.constant 0 : i32
    %c0_i32_0 = arith.constant 0 : i32
    return %arg1, %arg0, %c0_i32 : i32, i32, i32
  }
  func.func @transform_13(%arg0: i32, %arg1: i32) -> (i32, i32, i32) {
    %c0_i32 = arith.constant 0 : i32
    %c0_i32_0 = arith.constant 0 : i32
    return %arg1, %arg0, %c0_i32 : i32, i32, i32
  }
}

module attributes {stable_mosaic.version = 11 : i64} {
  func.func @_matmul_bias_kernel(%arg0: i32, %arg1: i32, %arg2: i32, %arg3: memref<120x128xbf16, #tpu.memory_space<vmem>>, %arg4: memref<128x128xbf16, #tpu.memory_space<vmem>>, %arg5: memref<1x128xf32, #tpu.memory_space<vmem>>, %arg6: memref<120x128xf32, #tpu.memory_space<vmem>>, %arg7: memref<120x128xf32, #tpu.memory_space<vmem>>) attributes {dimension_semantics = [#tpu.dimension_semantics<parallel>, #tpu.dimension_semantics<parallel>, #tpu.dimension_semantics<arbitrary>], iteration_bounds = array<i64: 1, 1, 1>, scalar_prefetch = 0 : i64, scratch_operands = 1 : i64, tpu.core_type = #tpu.core_type<tc>, window_params = [{transform_indices = @transform_0, window_bounds = array<i64: 120, 128>}, {transform_indices = @transform_1, window_bounds = array<i64: 128, 128>}, {transform_indices = @transform_2, window_bounds = array<i64: 1, 128>}, {transform_indices = @transform_3, window_bounds = array<i64: 120, 128>}]} {
    %c0_i32 = arith.constant 0 : i32
    %0 = arith.cmpi eq, %arg2, %c0_i32 : i32
    %1 = arith.extui %0 : i1 to i32
    %c0_i32_0 = arith.constant 0 : i32
    %2 = arith.cmpi ne, %1, %c0_i32_0 : i32
    scf.if %2 {
      %cst_10 = arith.constant 0.000000e+00 : f32
      %12 = vector.broadcast %cst_10 : f32 to vector<120x128xf32>
      %c0_11 = arith.constant 0 : index
      %c0_12 = arith.constant 0 : index
      %13 = vector.load %arg7[%c0_11, %c0_12] : memref<120x128xf32, #tpu.memory_space<vmem>>, vector<120x128xf32>
      tpu.vector_store %arg7[%c0_11, %c0_12], %12 {strides = array<i32>} : memref<120x128xf32, #tpu.memory_space<vmem>>, vector<120x128xf32>,
    } else {
    }
    %c0 = arith.constant 0 : index
    %c0_1 = arith.constant 0 : index
    %3 = vector.load %arg7[%c0, %c0_1] : memref<120x128xf32, #tpu.memory_space<vmem>>, vector<120x128xf32>
    %c0_2 = arith.constant 0 : index
    %c0_3 = arith.constant 0 : index
    %4 = vector.load %arg3[%c0_2, %c0_3] : memref<120x128xbf16, #tpu.memory_space<vmem>>, vector<120x128xbf16>
    %c0_4 = arith.constant 0 : index
    %c0_5 = arith.constant 0 : index
    %5 = vector.load %arg4[%c0_4, %c0_5] : memref<128x128xbf16, #tpu.memory_space<vmem>>, vector<128x128xbf16>
    %cst = arith.constant dense<0.000000e+00> : vector<120x128xf32>
    %6 = tpu.matmul %4, %5, %cst {dimension_numbers = #tpu.dot_dimension_numbers<[1], [0], [0], [1], [0, 0, 1, 1], [], []>} : vector<120x128xbf16>, vector<128x128xbf16>, vector<120x128xf32> -> vector<120x128xf32>
    %7 = arith.addf %3, %6 : vector<120x128xf32>
    %c0_6 = arith.constant 0 : index
    %c0_7 = arith.constant 0 : index
    %8 = vector.load %arg7[%c0_6, %c0_7] : memref<120x128xf32, #tpu.memory_space<vmem>>, vector<120x128xf32>
    tpu.vector_store %arg7[%c0_6, %c0_7], %7 {strides = array<i32>} : memref<120x128xf32, #tpu.memory_space<vmem>>, vector<120x128xf32>,
    %c0_i32_8 = arith.constant 0 : i32
    %9 = arith.cmpi eq, %arg2, %c0_i32_8 : i32
    %10 = arith.extui %9 : i1 to i32
    %c0_i32_9 = arith.constant 0 : i32
    %11 = arith.cmpi ne, %10, %c0_i32_9 : i32
    scf.if %11 {
      %c0_10 = arith.constant 0 : index
      %c0_11 = arith.constant 0 : index
      %12 = vector.load %arg7[%c0_10, %c0_11] : memref<120x128xf32, #tpu.memory_space<vmem>>, vector<120x128xf32>
      %c0_12 = arith.constant 0 : index
      %c0_13 = arith.constant 0 : index
      %13 = vector.load %arg5[%c0_12, %c0_13] : memref<1x128xf32, #tpu.memory_space<vmem>>, vector<1x128xf32>
      %14 = vector.broadcast %13 : vector<1x128xf32> to vector<120x128xf32>
      %15 = arith.addf %12, %14 : vector<120x128xf32>
      %c0_14 = arith.constant 0 : index
      %c0_15 = arith.constant 0 : index
      %16 = vector.load %arg6[%c0_14, %c0_15] : memref<120x128xf32, #tpu.memory_space<vmem>>, vector<120x128xf32>
      tpu.vector_store %arg6[%c0_14, %c0_15], %15 {strides = array<i32>} : memref<120x128xf32, #tpu.memory_space<vmem>>, vector<120x128xf32>,
    } else {
    }
    return
  }
  func.func @transform_0(%arg0: i32, %arg1: i32, %arg2: i32) -> (i32, i32) {
    %c0_i32 = arith.constant 0 : i32
    return %arg0, %arg2 : i32, i32
  }
  func.func @transform_1(%arg0: i32, %arg1: i32, %arg2: i32) -> (i32, i32) {
    %c0_i32 = arith.constant 0 : i32
    return %arg2, %arg1 : i32, i32
  }
  func.func @transform_2(%arg0: i32, %arg1: i32, %arg2: i32) -> (i32, i32) {
    %c0_i32 = arith.constant 0 : i32
    %c0_i32_0 = arith.constant 0 : i32
    return %c0_i32, %arg1 : i32, i32
  }
  func.func @transform_3(%arg0: i32, %arg1: i32, %arg2: i32) -> (i32, i32) {
    %c0_i32 = arith.constant 0 : i32
    return %arg0, %arg1 : i32, i32
  }
}

</mosaic_0001>

<llo_original>
// kernel: hierarchical_decoder_forward.4
$region0: #{hierarchical_decoder_forward.4}
  #allocation0 [shape = 'u32[]', space=smem, size = 0x4, offset = 0x4, fixed_abs, tag = 'smem constant byte address 0x4 - core index']
  #allocation1 [shape = 'u32[144,128]{1,0:T(1,128)}', space=vmem, size = 0x12000, scoped, tag = 'internal scratch']
  #allocation2 [shape = 'f32[128,128]{1,0:T(8,128)}', space=vmem, size = 0x10000, scoped, tag = 'scratch operand']
  %s0 = inlined_call_operand.hbm [shape: bf16[128,128], index: 0, kind: input, shape index: {}]
  %s1 = inlined_call_operand.hbm [shape: bf16[128,128], index: 1, kind: input, shape index: {}]
  %s2 = inlined_call_operand.hbm [shape: f32[1,128], index: 2, kind: input, shape index: {}]
  %s3 = inlined_call_operand.hbm [shape: f32[128,128], index: 3, kind: output, shape index: {}]
  %s4 = sld [smem:[#allocation0]]
  $region42: #{hierarchical_decoder_forward.4} parent=0
    _
  %s6 = ssub.s32 1, %s4
  %s7 = scalar_select 0, %s6, %s4
  $region1: #{hierarchical_decoder_forward.4} parent=0
    #allocation3 [shape = 'u8[32768]{0}', space=vmem, size = 0x8000, scoped, tag = 'input window, operand 0, single buffered']
    #allocation4 [shape = 's32[1]{0}', space=sflag, size = 0x4, scoped, tag = 'scoped memory for hierarchical_decoder_forward.4']
    #allocation5 [shape = 's32[1]{0}', space=sflag, size = 0x4, scoped, tag = 'scoped memory for hierarchical_decoder_forward.4']
    #allocation6 [shape = 'u8[32768]{0}', space=vmem, size = 0x8000, scoped, tag = 'input window, operand 1, single buffered']
    #allocation7 [shape = 's32[1]{0}', space=sflag, size = 0x4, scoped, tag = 'scoped memory for hierarchical_decoder_forward.4']
    #allocation8 [shape = 'u8[512]{0}', space=vmem, size = 0x400, scoped, tag = 'input window, operand 2, single buffered']
    #allocation9 [shape = 'u8[65536]{0}', space=vmem, size = 0x10000, scoped, tag = 'output window, operand 0, single buffered']
    %8 = vsyncpa [#allocation4], 0
    %9 = vsyncpa [#allocation7], 0
    %10 = vsyncpa [#allocation5], 0
    // Predicated region
    $region2: #{hierarchical_decoder_forward.4} parent=1 // pred_check
      _
    $region3: #{hierarchical_decoder_forward.4} parent=1 // pred_check_branch
      %12 = sbr.rel (0) target = $region5
    $region4: #{hierarchical_decoder_forward.4} parent=1 // pred_region
      %s14 = ssub.s32 1024, 1024
      %15 = vsyncadd [#allocation4], %s14
      %s16 = sshll.u32 [#allocation3], 4
      %s17 = int_to_ptr.vmem [resolvable:$true] %s16
      %22 = dma.hbm_to_vmem [thread:$0]  %s0, 1024, %s17, [#allocation4], 64, 64, 4
    $region5: #{hierarchical_decoder_forward.4} parent=1 // pred_fallthru
      _
    // Predicated region
    $region6: #{hierarchical_decoder_forward.4} parent=1 // pred_check
      _
    $region7: #{hierarchical_decoder_forward.4} parent=1 // pred_check_branch
      %24 = sbr.rel (0) target = $region9
    $region8: #{hierarchical_decoder_forward.4} parent=1 // pred_region
      %s26 = ssub.s32 1024, 1024
      %27 = vsyncadd [#allocation7], %s26
      %s28 = sshll.u32 [#allocation6], 4
      %s29 = int_to_ptr.vmem [resolvable:$true] %s28
      %34 = dma.hbm_to_vmem [thread:$0]  %s1, 1024, %s29, [#allocation7], 64, 64, 4
    $region9: #{hierarchical_decoder_forward.4} parent=1 // pred_fallthru
      _
    // Predicated region
    $region10: #{hierarchical_decoder_forward.4} parent=1 // pred_check
      _
    $region11: #{hierarchical_decoder_forward.4} parent=1 // pred_check_branch
      %36 = sbr.rel (0) target = $region13
    $region12: #{hierarchical_decoder_forward.4} parent=1 // pred_region
      %s38 = ssub.s32 16, 16
      %39 = vsyncadd [#allocation7], %s38
      %s41 = sshll.u32 [#allocation8], 4
      %s42 = int_to_ptr.vmem [resolvable:$true] %s41
      %44 = dma.hbm_to_vmem [thread:$0]  %s2, 16, %s42, [#allocation7]
    $region13: #{hierarchical_decoder_forward.4} parent=1 // pred_fallthru
      _
    // Predicated region
    $region14: #{hierarchical_decoder_forward.4} parent=1 // pred_check
      _
    $region15: #{hierarchical_decoder_forward.4} parent=1 // pred_check_branch
      %46 = sbr.rel (0) target = $region17
    $region16: #{hierarchical_decoder_forward.4} parent=1 // pred_region
      %47 = dma.done [#allocation4], 1024
    $region17: #{hierarchical_decoder_forward.4} parent=1 // pred_fallthru
      _
    // Predicated region
    $region18: #{hierarchical_decoder_forward.4} parent=1 // pred_check
      _
    $region19: #{hierarchical_decoder_forward.4} parent=1 // pred_check_branch
      %49 = sbr.rel (0) target = $region21
    $region20: #{hierarchical_decoder_forward.4} parent=1 // pred_region
      %50 = dma.done [#allocation7], 1024
    $region21: #{hierarchical_decoder_forward.4} parent=1 // pred_fallthru
      _
    // Predicated region
    $region22: #{hierarchical_decoder_forward.4} parent=1 // pred_check
      _
    $region23: #{hierarchical_decoder_forward.4} parent=1 // pred_check_branch
      %52 = sbr.rel (0) target = $region25
    $region24: #{hierarchical_decoder_forward.4} parent=1 // pred_region
      %53 = dma.done [#allocation7], 16
    $region25: #{hierarchical_decoder_forward.4} parent=1 // pred_fallthru
      _
    %p55 = scmp.eq.s32.totalorder 0, 0
    // Predicated region
    $region26: #{hierarchical_decoder_forward.4} parent=1 // pred_check
      %p56 = pneg %p55
    $region27: #{hierarchical_decoder_forward.4} parent=1 // pred_check_branch
      %58 = sbr.rel (%p56) target = $region29
    $region28: #{hierarchical_decoder_forward.4} parent=1 // pred_region
      %59 = vst [vmem:[#allocation2] sm:$0xff] 0.0
      %60 = vst [vmem:[#allocation2 + $0x8] sm:$0xff] 0.0
      %61 = vst [vmem:[#allocation2 + $0x10] sm:$0xff] 0.0
      %62 = vst [vmem:[#allocation2 + $0x18] sm:$0xff] 0.0
      %63 = vst [vmem:[#allocation2 + $0x20] sm:$0xff] 0.0
      %64 = vst [vmem:[#allocation2 + $0x28] sm:$0xff] 0.0
      %65 = vst [vmem:[#allocation2 + $0x30] sm:$0xff] 0.0
      %66 = vst [vmem:[#allocation2 + $0x38] sm:$0xff] 0.0
      %67 = vst [vmem:[#allocation2 + $0x40] sm:$0xff] 0.0
      %68 = vst [vmem:[#allocation2 + $0x48] sm:$0xff] 0.0
      %69 = vst [vmem:[#allocation2 + $0x50] sm:$0xff] 0.0
      %70 = vst [vmem:[#allocation2 + $0x58] sm:$0xff] 0.0
      %71 = vst [vmem:[#allocation2 + $0x60] sm:$0xff] 0.0
      %72 = vst [vmem:[#allocation2 + $0x68] sm:$0xff] 0.0
      %73 = vst [vmem:[#allocation2 + $0x70] sm:$0xff] 0.0
      %74 = vst [vmem:[#allocation2 + $0x78] sm:$0xff] 0.0
    $region29: #{hierarchical_decoder_forward.4} parent=1 // pred_fallthru
      _
    %v75 = vld [vmem:[#allocation2] sm:$0xff]
    %v76 = vld [vmem:[#allocation2 + $0x8] sm:$0xff]
    %v77 = vld [vmem:[#allocation2 + $0x10] sm:$0xff]
    %v78 = vld [vmem:[#allocation2 + $0x18] sm:$0xff]
    %v79 = vld [vmem:[#allocation2 + $0x20] sm:$0xff]
    %v80 = vld [vmem:[#allocation2 + $0x28] sm:$0xff]
    %v81 = vld [vmem:[#allocation2 + $0x30] sm:$0xff]
    %v82 = vld [vmem:[#allocation2 + $0x38] sm:$0xff]
    %v83 = vld [vmem:[#allocation2 + $0x40] sm:$0xff]
    %v84 = vld [vmem:[#allocation2 + $0x48] sm:$0xff]
    %v85 = vld [vmem:[#allocation2 + $0x50] sm:$0xff]
    %v86 = vld [vmem:[#allocation2 + $0x58] sm:$0xff]
    %v87 = vld [vmem:[#allocation2 + $0x60] sm:$0xff]
    %v88 = vld [vmem:[#allocation2 + $0x68] sm:$0xff]
    %v89 = vld [vmem:[#allocation2 + $0x70] sm:$0xff]
    %v90 = vld [vmem:[#allocation2 + $0x78] sm:$0xff]
    %v91 = vld [vmem:[#allocation3] sm:$0xf]
    %v92 = vld [vmem:[#allocation3 + $0x4] sm:$0xf]
    %v93 = vld [vmem:[#allocation3 + $0x8] sm:$0xf]
    %v94 = vld [vmem:[#allocation3 + $0xc] sm:$0xf]
    %v95 = vld [vmem:[#allocation3 + $0x10] sm:$0xf]
    %v96 = vld [vmem:[#allocation3 + $0x14] sm:$0xf]
    %v97 = vld [vmem:[#allocation3 + $0x18] sm:$0xf]
    %v98 = vld [vmem:[#allocation3 + $0x1c] sm:$0xf]
    %v99 = vld [vmem:[#allocation3 + $0x20] sm:$0xf]
    %v100 = vld [vmem:[#allocation3 + $0x24] sm:$0xf]
    %v101 = vld [vmem:[#allocation3 + $0x28] sm:$0xf]
    %v102 = vld [vmem:[#allocation3 + $0x2c] sm:$0xf]
    %v103 = vld [vmem:[#allocation3 + $0x30] sm:$0xf]
    %v104 = vld [vmem:[#allocation3 + $0x34] sm:$0xf]
    %v105 = vld [vmem:[#allocation3 + $0x38] sm:$0xf]
    %v106 = vld [vmem:[#allocation3 + $0x3c] sm:$0xf]
    %v107 = vld [vmem:[#allocation6] sm:$0xf]
    %v108 = vld [vmem:[#allocation6 + $0x4] sm:$0xf]
    %v109 = vld [vmem:[#allocation6 + $0x8] sm:$0xf]
    %v110 = vld [vmem:[#allocation6 + $0xc] sm:$0xf]
    %v111 = vld [vmem:[#allocation6 + $0x10] sm:$0xf]
    %v112 = vld [vmem:[#allocation6 + $0x14] sm:$0xf]
    %v113 = vld [vmem:[#allocation6 + $0x18] sm:$0xf]
    %v114 = vld [vmem:[#allocation6 + $0x1c] sm:$0xf]
    %v115 = vld [vmem:[#allocation6 + $0x20] sm:$0xf]
    %v116 = vld [vmem:[#allocation6 + $0x24] sm:$0xf]
    %v117 = vld [vmem:[#allocation6 + $0x28] sm:$0xf]
    %v118 = vld [vmem:[#allocation6 + $0x2c] sm:$0xf]
    %v119 = vld [vmem:[#allocation6 + $0x30] sm:$0xf]
    %v120 = vld [vmem:[#allocation6 + $0x34] sm:$0xf]
    %v121 = vld [vmem:[#allocation6 + $0x38] sm:$0xf]
    %v122 = vld [vmem:[#allocation6 + $0x3c] sm:$0xf]
    %v139 = vunpack.c.l.b16 %v91
    %v140 = vunpack.c.l.b16 %v92
    %v141 = vunpack.c.l.b16 %v93
    %v142 = vunpack.c.l.b16 %v94
    %v143 = vunpack.c.l.b16 %v95
    %v144 = vunpack.c.l.b16 %v96
    %v145 = vunpack.c.l.b16 %v97
    %v146 = vunpack.c.l.b16 %v98
    %v147 = vunpack.c.l.b16 %v99
    %v148 = vunpack.c.l.b16 %v100
    %v149 = vunpack.c.l.b16 %v101
    %v150 = vunpack.c.l.b16 %v102
    %v151 = vunpack.c.l.b16 %v103
    %v152 = vunpack.c.l.b16 %v104
    %v153 = vunpack.c.l.b16 %v105
    %v154 = vunpack.c.l.b16 %v106
    %v155 = vpack.c.b16 %v140, %v139
    %v156 = vpack.c.b16 %v142, %v141
    %v157 = vpack.c.b16 %v144, %v143
    %v158 = vpack.c.b16 %v146, %v145
    %v159 = vpack.c.b16 %v148, %v147
    %v160 = vpack.c.b16 %v150, %v149
    %v161 = vpack.c.b16 %v152, %v151
    %v162 = vpack.c.b16 %v154, %v153
    %v187 = vunpack.c.l.b16 %v107
    %v188 = vunpack.c.l.b16 %v108
    %v189 = vunpack.c.l.b16 %v109
    %v190 = vunpack.c.l.b16 %v110
    %v191 = vunpack.c.l.b16 %v111
    %v192 = vunpack.c.l.b16 %v112
    %v193 = vunpack.c.l.b16 %v113
    %v194 = vunpack.c.l.b16 %v114
    %v195 = vunpack.c.l.b16 %v115
    %v196 = vunpack.c.l.b16 %v116
    %v197 = vunpack.c.l.b16 %v117
    %v198 = vunpack.c.l.b16 %v118
    %v199 = vunpack.c.l.b16 %v119
    %v200 = vunpack.c.l.b16 %v120
    %v201 = vunpack.c.l.b16 %v121
    %v202 = vunpack.c.l.b16 %v122
    %v203 = vpack.c.b16 %v188, %v187
    %v204 = vpack.c.b16 %v190, %v189
    %v205 = vpack.c.b16 %v192, %v191
    %v206 = vpack.c.b16 %v194, %v193
    %v207 = vpack.c.b16 %v196, %v195
    %v208 = vpack.c.b16 %v198, %v197
    %v209 = vpack.c.b16 %v200, %v199
    %v210 = vpack.c.b16 %v202, %v201
    %219 = vmatprep.subr.bf16.mxu0 0
    %220 = vmatpush1.bf16.msra.mxu0 %v203
    %221 = vmatprep.subr.bf16.mxu0 0
    %222 = vmatpush1.bf16.msra.mxu0 %v204
    %223 = vmatprep.subr.bf16.mxu0 0
    %224 = vmatpush1.bf16.msra.mxu0 %v205
    %225 = vmatprep.subr.bf16.mxu0 0
    %226 = vmatpush1.bf16.msra.mxu0 %v206
    %227 = vmatprep.subr.bf16.mxu0 0
    %228 = vmatpush1.bf16.msra.mxu0 %v207
    %229 = vmatprep.subr.bf16.mxu0 0
    %230 = vmatpush1.bf16.msra.mxu0 %v208
    %231 = vmatprep.subr.bf16.mxu0 0
    %232 = vmatpush1.bf16.msra.mxu0 %v209
    %233 = vmatprep.subr.bf16.mxu0 0
    %234 = vmatpush1.bf16.msra.mxu0 %v210
    %235 = vmatprep.subr.bf16.mxu0 0
    %236 = vmatpush1.bf16.msra.mxu0 0
    %237 = vmatprep.subr.bf16.mxu0 0
    %238 = vmatpush1.bf16.msra.mxu0 0
    %239 = vmatprep.subr.bf16.mxu0 0
    %240 = vmatpush1.bf16.msra.mxu0 0
    %241 = vmatprep.subr.bf16.mxu0 0
    %242 = vmatpush1.bf16.msra.mxu0 0
    %243 = vmatprep.subr.bf16.mxu0 0
    %244 = vmatpush1.bf16.msra.mxu0 0
    %245 = vmatprep.subr.bf16.mxu0 0
    %246 = vmatpush1.bf16.msra.mxu0 0
    %247 = vmatprep.subr.bf16.mxu0 0
    %248 = vmatpush1.bf16.msra.mxu0 0
    %249 = vmatprep.subr.bf16.mxu0 0
    %250 = vmatpush1.bf16.msra.mxu0 0
    %251 = vmatprep.mubr.bf16.mxu0 0
    %252 = vmatmul.mubr.bf16.gmra.mrb[0].mxu0 %v155
    %v253 = vpop.f32.mrb[0].mxu0
    %v254 = vadd.f32 0.0, %v253
    %v255 = vpop.f32.mrb[0].mxu0
    %v256 = vpop.f32.mrb[0].mxu0
    %v257 = vadd.f32 0.0, %v256
    %v258 = vpop.f32.mrb[0].mxu0
    %259 = vmatprep.mubr.bf16.mxu0 0
    %260 = vmatmul.mubr.bf16.gmra.mrb[0].mxu0 %v156
    %v261 = vpop.f32.mrb[0].mxu0
    %v262 = vadd.f32 0.0, %v261
    %v263 = vpop.f32.mrb[0].mxu0
    %v264 = vpop.f32.mrb[0].mxu0
    %v265 = vadd.f32 0.0, %v264
    %v266 = vpop.f32.mrb[0].mxu0
    %267 = vmatprep.mubr.bf16.mxu0 0
    %268 = vmatmul.mubr.bf16.gmra.mrb[0].mxu0 %v157
    %v269 = vpop.f32.mrb[0].mxu0
    %v270 = vadd.f32 0.0, %v269
    %v271 = vpop.f32.mrb[0].mxu0
    %v272 = vpop.f32.mrb[0].mxu0
    %v273 = vadd.f32 0.0, %v272
    %v274 = vpop.f32.mrb[0].mxu0
    %275 = vmatprep.mubr.bf16.mxu0 0
    %276 = vmatmul.mubr.bf16.gmra.mrb[0].mxu0 %v158
    %v277 = vpop.f32.mrb[0].mxu0
    %v278 = vadd.f32 0.0, %v277
    %v279 = vpop.f32.mrb[0].mxu0
    %v280 = vpop.f32.mrb[0].mxu0
    %v281 = vadd.f32 0.0, %v280
    %v282 = vpop.f32.mrb[0].mxu0
    %283 = vmatprep.mubr.bf16.mxu0 0
    %284 = vmatmul.mubr.bf16.gmra.mrb[0].mxu0 %v159
    %v285 = vpop.f32.mrb[0].mxu0
    %v286 = vadd.f32 0.0, %v285
    %v287 = vpop.f32.mrb[0].mxu0
    %v288 = vpop.f32.mrb[0].mxu0
    %v289 = vadd.f32 0.0, %v288
    %v290 = vpop.f32.mrb[0].mxu0
    %291 = vmatprep.mubr.bf16.mxu0 0
    %292 = vmatmul.mubr.bf16.gmra.mrb[0].mxu0 %v160
    %v293 = vpop.f32.mrb[0].mxu0
    %v294 = vadd.f32 0.0, %v293
    %v295 = vpop.f32.mrb[0].mxu0
    %v296 = vpop.f32.mrb[0].mxu0
    %v297 = vadd.f32 0.0, %v296
    %v298 = vpop.f32.mrb[0].mxu0
    %299 = vmatprep.mubr.bf16.mxu0 0
    %300 = vmatmul.mubr.bf16.gmra.mrb[0].mxu0 %v161
    %v301 = vpop.f32.mrb[0].mxu0
    %v302 = vadd.f32 0.0, %v301
    %v303 = vpop.f32.mrb[0].mxu0
    %v304 = vpop.f32.mrb[0].mxu0
    %v305 = vadd.f32 0.0, %v304
    %v306 = vpop.f32.mrb[0].mxu0
    %307 = vmatprep.mubr.bf16.mxu0 0
    %308 = vmatmul.mubr.bf16.gmra.mrb[0].mxu0 %v162
    %v309 = vpop.f32.mrb[0].mxu0
    %v310 = vadd.f32 0.0, %v309
    %v311 = vpop.f32.mrb[0].mxu0
    %v312 = vpop.f32.mrb[0].mxu0
    %v313 = vadd.f32 0.0, %v312
    %v314 = vpop.f32.mrb[0].mxu0
    %315 = vdwg.mxu0
    %v316 = vadd.f32 %v75, %v254
    %v317 = vadd.f32 %v76, %v257
    %v318 = vadd.f32 %v77, %v262
    %v319 = vadd.f32 %v78, %v265
    %v320 = vadd.f32 %v79, %v270
    %v321 = vadd.f32 %v80, %v273
    %v322 = vadd.f32 %v81, %v278
    %v323 = vadd.f32 %v82, %v281
    %v324 = vadd.f32 %v83, %v286
    %v325 = vadd.f32 %v84, %v289
    %v326 = vadd.f32 %v85, %v294
    %v327 = vadd.f32 %v86, %v297
    %v328 = vadd.f32 %v87, %v302
    %v329 = vadd.f32 %v88, %v305
    %v330 = vadd.f32 %v89, %v310
    %v331 = vadd.f32 %v90, %v313
    %332 = vst [vmem:[#allocation2] sm:$0xff] %v316
    %333 = vst [vmem:[#allocation2 + $0x8] sm:$0xff] %v317
    %334 = vst [vmem:[#allocation2 + $0x10] sm:$0xff] %v318
    %335 = vst [vmem:[#allocation2 + $0x18] sm:$0xff] %v319
    %336 = vst [vmem:[#allocation2 + $0x20] sm:$0xff] %v320
    %337 = vst [vmem:[#allocation2 + $0x28] sm:$0xff] %v321
    %338 = vst [vmem:[#allocation2 + $0x30] sm:$0xff] %v322
    %339 = vst [vmem:[#allocation2 + $0x38] sm:$0xff] %v323
    %340 = vst [vmem:[#allocation2 + $0x40] sm:$0xff] %v324
    %341 = vst [vmem:[#allocation2 + $0x48] sm:$0xff] %v325
    %342 = vst [vmem:[#allocation2 + $0x50] sm:$0xff] %v326
    %343 = vst [vmem:[#allocation2 + $0x58] sm:$0xff] %v327
    %344 = vst [vmem:[#allocation2 + $0x60] sm:$0xff] %v328
    %345 = vst [vmem:[#allocation2 + $0x68] sm:$0xff] %v329
    %346 = vst [vmem:[#allocation2 + $0x70] sm:$0xff] %v330
    %347 = vst [vmem:[#allocation2 + $0x78] sm:$0xff] %v331
    // Predicated region
    $region30: #{hierarchical_decoder_forward.4} parent=1 // pred_check
      %p348 = pneg %p55
    $region31: #{hierarchical_decoder_forward.4} parent=1 // pred_check_branch
      %350 = sbr.rel (%p348) target = $region33
    $region32: #{hierarchical_decoder_forward.4} parent=1 // pred_region
      %v351 = vld [vmem:[#allocation2] sm:$0xff]
      %v352 = vld [vmem:[#allocation2 + $0x8] sm:$0xff]
      %v353 = vld [vmem:[#allocation2 + $0x10] sm:$0xff]
      %v354 = vld [vmem:[#allocation2 + $0x18] sm:$0xff]
      %v355 = vld [vmem:[#allocation2 + $0x20] sm:$0xff]
      %v356 = vld [vmem:[#allocation2 + $0x28] sm:$0xff]
      %v357 = vld [vmem:[#allocation2 + $0x30] sm:$0xff]
      %v358 = vld [vmem:[#allocation2 + $0x38] sm:$0xff]
      %v359 = vld [vmem:[#allocation2 + $0x40] sm:$0xff]
      %v360 = vld [vmem:[#allocation2 + $0x48] sm:$0xff]
      %v361 = vld [vmem:[#allocation2 + $0x50] sm:$0xff]
      %v362 = vld [vmem:[#allocation2 + $0x58] sm:$0xff]
      %v363 = vld [vmem:[#allocation2 + $0x60] sm:$0xff]
      %v364 = vld [vmem:[#allocation2 + $0x68] sm:$0xff]
      %v365 = vld [vmem:[#allocation2 + $0x70] sm:$0xff]
      %v366 = vld [vmem:[#allocation2 + $0x78] sm:$0xff]
      %v367 = vld [vmem:[#allocation8] sm:$0x1]
      %v369 = vlaneseq
      %v370 = vshrl.u32 %v369, 7
      %v371 = vsub.s32 0, %v370
      %v372 = vrot.slane %v367, %v371
      %v374 = vadd.f32 %v351, %v372
      %v375 = vadd.f32 %v352, %v372
      %v376 = vadd.f32 %v353, %v372
      %v377 = vadd.f32 %v354, %v372
      %v378 = vadd.f32 %v355, %v372
      %v379 = vadd.f32 %v356, %v372
      %v380 = vadd.f32 %v357, %v372
      %v381 = vadd.f32 %v358, %v372
      %v382 = vadd.f32 %v359, %v372
      %v383 = vadd.f32 %v360, %v372
      %v384 = vadd.f32 %v361, %v372
      %v385 = vadd.f32 %v362, %v372
      %v386 = vadd.f32 %v363, %v372
      %v387 = vadd.f32 %v364, %v372
      %v388 = vadd.f32 %v365, %v372
      %v389 = vadd.f32 %v366, %v372
      %390 = vst [vmem:[#allocation9] sm:$0xff] %v374
      %391 = vst [vmem:[#allocation9 + $0x8] sm:$0xff] %v375
      %392 = vst [vmem:[#allocation9 + $0x10] sm:$0xff] %v376
      %393 = vst [vmem:[#allocation9 + $0x18] sm:$0xff] %v377
      %394 = vst [vmem:[#allocation9 + $0x20] sm:$0xff] %v378
      %395 = vst [vmem:[#allocation9 + $0x28] sm:$0xff] %v379
      %396 = vst [vmem:[#allocation9 + $0x30] sm:$0xff] %v380
      %397 = vst [vmem:[#allocation9 + $0x38] sm:$0xff] %v381
      %398 = vst [vmem:[#allocation9 + $0x40] sm:$0xff] %v382
      %399 = vst [vmem:[#allocation9 + $0x48] sm:$0xff] %v383
      %400 = vst [vmem:[#allocation9 + $0x50] sm:$0xff] %v384
      %401 = vst [vmem:[#allocation9 + $0x58] sm:$0xff] %v385
      %402 = vst [vmem:[#allocation9 + $0x60] sm:$0xff] %v386
      %403 = vst [vmem:[#allocation9 + $0x68] sm:$0xff] %v387
      %404 = vst [vmem:[#allocation9 + $0x70] sm:$0xff] %v388
      %405 = vst [vmem:[#allocation9 + $0x78] sm:$0xff] %v389
    $region33: #{hierarchical_decoder_forward.4} parent=1 // pred_fallthru
      _
    // Predicated region
    $region34: #{hierarchical_decoder_forward.4} parent=1 // pred_check
      _
    $region35: #{hierarchical_decoder_forward.4} parent=1 // pred_check_branch
      %407 = sbr.rel (0) target = $region37
    $region36: #{hierarchical_decoder_forward.4} parent=1 // pred_region
      %s409 = ssub.s32 2048, 2048
      %410 = vsyncadd [#allocation5], %s409
      %s411 = sshll.u32 [#allocation9], 4
      %s412 = int_to_ptr.vmem [resolvable:$true] %s411
      %417 = dma.vmem_to_hbm [thread:$0]  %s412, 2048, %s3, [#allocation5], 128, 128, 8
    $region37: #{hierarchical_decoder_forward.4} parent=1 // pred_fallthru
      _
    // Predicated region
    $region38: #{hierarchical_decoder_forward.4} parent=1 // pred_check
      _
    $region39: #{hierarchical_decoder_forward.4} parent=1 // pred_check_branch
      %419 = sbr.rel (0) target = $region41
    $region40: #{hierarchical_decoder_forward.4} parent=1 // pred_region
      %420 = dma.done [#allocation5], 2048
    $region41: #{hierarchical_decoder_forward.4} parent=1 // pred_fallthru
      _
    %421 = vsyncpa [#allocation4], 1
    %422 = vsyncpa [#allocation7], 1
    %423 = vsyncpa [#allocation5], 1

// kernel: hierarchical_decoder_forward.5
$region0: #{hierarchical_decoder_forward.5}
  #allocation0 [shape = 'u32[]', space=smem, size = 0x4, offset = 0x4, fixed_abs, tag = 'smem constant byte address 0x4 - core index']
  #allocation1 [shape = 'u32[144,128]{1,0:T(1,128)}', space=vmem, size = 0x12000, scoped, tag = 'internal scratch']
  #allocation2 [shape = 'f32[120,512]{1,0:T(8,128)}', space=vmem, size = 0x3c000, scoped, tag = 'scratch operand']
  %s0 = inlined_call_operand.hbm [shape: bf16[120,128], index: 0, kind: input, shape index: {}]
  %s1 = inlined_call_operand.hbm [shape: bf16[128,512], index: 1, kind: input, shape index: {}]
  %s2 = inlined_call_operand.hbm [shape: f32[1,512], index: 2, kind: input, shape index: {}]
  %s3 = inlined_call_operand.hbm [shape: f32[120,512], index: 3, kind: output, shape index: {}]
  %s4 = sld [smem:[#allocation0]]
  $region42: #{hierarchical_decoder_forward.5} parent=0
    _
  %s6 = ssub.s32 1, %s4
  %s7 = scalar_select 0, %s6, %s4
  $region1: #{hierarchical_decoder_forward.5} parent=0
    #allocation3 [shape = 'u8[30720]{0}', space=vmem, size = 0x7800, scoped, tag = 'input window, operand 0, single buffered']
    #allocation4 [shape = 's32[1]{0}', space=sflag, size = 0x4, scoped, tag = 'scoped memory for hierarchical_decoder_forward.5']
    #allocation5 [shape = 's32[1]{0}', space=sflag, size = 0x4, scoped, tag = 'scoped memory for hierarchical_decoder_forward.5']
    #allocation6 [shape = 'u8[131072]{0}', space=vmem, size = 0x20000, scoped, tag = 'input window, operand 1, single buffered']
    #allocation7 [shape = 's32[1]{0}', space=sflag, size = 0x4, scoped, tag = 'scoped memory for hierarchical_decoder_forward.5']
    #allocation8 [shape = 'u8[2048]{0}', space=vmem, size = 0x800, scoped, tag = 'input window, operand 2, single buffered']
    #allocation9 [shape = 'u8[245760]{0}', space=vmem, size = 0x3c000, scoped, tag = 'output window, operand 0, single buffered']
    %8 = vsyncpa [#allocation4], 0
    %9 = vsyncpa [#allocation7], 0
    %10 = vsyncpa [#allocation5], 0
    // Predicated region
    $region2: #{hierarchical_decoder_forward.5} parent=1 // pred_check
      _
    $region3: #{hierarchical_decoder_forward.5} parent=1 // pred_check_branch
      %12 = sbr.rel (0) target = $region5
    $region4: #{hierarchical_decoder_forward.5} parent=1 // pred_region
      %s14 = ssub.s32 960, 960
      %15 = vsyncadd [#allocation4], %s14
      %s16 = sshll.u32 [#allocation3], 4
      %s17 = int_to_ptr.vmem [resolvable:$true] %s16
      %22 = dma.hbm_to_vmem [thread:$0]  %s0, 960, %s17, [#allocation4], 64, 64, 4
    $region5: #{hierarchical_decoder_forward.5} parent=1 // pred_fallthru
      _
    // Predicated region
    $region6: #{hierarchical_decoder_forward.5} parent=1 // pred_check
      _
    $region7: #{hierarchical_decoder_forward.5} parent=1 // pred_check_branch
      %24 = sbr.rel (0) target = $region9
    $region8: #{hierarchical_decoder_forward.5} parent=1 // pred_region
      %s26 = ssub.s32 4096, 4096
      %27 = vsyncadd [#allocation7], %s26
      %s28 = sshll.u32 [#allocation6], 4
      %s29 = int_to_ptr.vmem [resolvable:$true] %s28
      %34 = dma.hbm_to_vmem [thread:$0]  %s1, 4096, %s29, [#allocation7], 256, 256, 16
    $region9: #{hierarchical_decoder_forward.5} parent=1 // pred_fallthru
      _
    // Predicated region
    $region10: #{hierarchical_decoder_forward.5} parent=1 // pred_check
      _
    $region11: #{hierarchical_decoder_forward.5} parent=1 // pred_check_branch
      %36 = sbr.rel (0) target = $region13
    $region12: #{hierarchical_decoder_forward.5} parent=1 // pred_region
      %s38 = ssub.s32 64, 64
      %39 = vsyncadd [#allocation7], %s38
      %s41 = sshll.u32 [#allocation8], 4
      %s42 = int_to_ptr.vmem [resolvable:$true] %s41
      %44 = dma.hbm_to_vmem [thread:$0]  %s2, 64, %s42, [#allocation7]
    $region13: #{hierarchical_decoder_forward.5} parent=1 // pred_fallthru
      _
    // Predicated region
    $region14: #{hierarchical_decoder_forward.5} parent=1 // pred_check
      _
    $region15: #{hierarchical_decoder_forward.5} parent=1 // pred_check_branch
      %46 = sbr.rel (0) target = $region17
    $region16: #{hierarchical_decoder_forward.5} parent=1 // pred_region
      %47 = dma.done [#allocation4], 960
    $region17: #{hierarchical_decoder_forward.5} parent=1 // pred_fallthru
      _
    // Predicated region
    $region18: #{hierarchical_decoder_forward.5} parent=1 // pred_check
      _
    $region19: #{hierarchical_decoder_forward.5} parent=1 // pred_check_branch
      %49 = sbr.rel (0) target = $region21
    $region20: #{hierarchical_decoder_forward.5} parent=1 // pred_region
      %50 = dma.done [#allocation7], 4096
    $region21: #{hierarchical_decoder_forward.5} parent=1 // pred_fallthru
      _
    // Predicated region
    $region22: #{hierarchical_decoder_forward.5} parent=1 // pred_check
      _
    $region23: #{hierarchical_decoder_forward.5} parent=1 // pred_check_branch
      %52 = sbr.rel (0) target = $region25
    $region24: #{hierarchical_decoder_forward.5} parent=1 // pred_region
      %53 = dma.done [#allocation7], 64
    $region25: #{hierarchical_decoder_forward.5} parent=1 // pred_fallthru
      _
    %p55 = scmp.eq.s32.totalorder 0, 0
    // Predicated region
    $region26: #{hierarchical_decoder_forward.5} parent=1 // pred_check
      %p56 = pneg %p55
    $region27: #{hierarchical_decoder_forward.5} parent=1 // pred_check_branch
      %58 = sbr.rel (%p56) target = $region29
    $region28: #{hierarchical_decoder_forward.5} parent=1 // pred_region
      %59 = vst [vmem:[#allocation2] sm:$0xff] 0.0
      %60 = vst [vmem:[#allocation2 + $0x8] sm:$0xff] 0.0
      %61 = vst [vmem:[#allocation2 + $0x10] sm:$0xff] 0.0
      %62 = vst [vmem:[#allocation2 + $0x18] sm:$0xff] 0.0
      %63 = vst [vmem:[#allocation2 + $0x20] sm:$0xff] 0.0
      %64 = vst [vmem:[#allocation2 + $0x28] sm:$0xff] 0.0
      %65 = vst [vmem:[#allocation2 + $0x30] sm:$0xff] 0.0
      %66 = vst [vmem:[#allocation2 + $0x38] sm:$0xff] 0.0
      %67 = vst [vmem:[#allocation2 + $0x40] sm:$0xff] 0.0
      %68 = vst [vmem:[#allocation2 + $0x48] sm:$0xff] 0.0
      %69 = vst [vmem:[#allocation2 + $0x50] sm:$0xff] 0.0
      %70 = vst [vmem:[#allocation2 + $0x58] sm:$0xff] 0.0
      %71 = vst [vmem:[#allocation2 + $0x60] sm:$0xff] 0.0
      %72 = vst [vmem:[#allocation2 + $0x68] sm:$0xff] 0.0
      %73 = vst [vmem:[#allocation2 + $0x70] sm:$0xff] 0.0
      %74 = vst [vmem:[#allocation2 + $0x78] sm:$0xff] 0.0
      %75 = vst [vmem:[#allocation2 + $0x80] sm:$0xff] 0.0
      %76 = vst [vmem:[#allocation2 + $0x88] sm:$0xff] 0.0
      %77 = vst [vmem:[#allocation2 + $0x90] sm:$0xff] 0.0
      %78 = vst [vmem:[#allocation2 + $0x98] sm:$0xff] 0.0
      %79 = vst [vmem:[#allocation2 + $0xa0] sm:$0xff] 0.0
      %80 = vst [vmem:[#allocation2 + $0xa8] sm:$0xff] 0.0
      %81 = vst [vmem:[#allocation2 + $0xb0] sm:$0xff] 0.0
      %82 = vst [vmem:[#allocation2 + $0xb8] sm:$0xff] 0.0
      %83 = vst [vmem:[#allocation2 + $0xc0] sm:$0xff] 0.0
      %84 = vst [vmem:[#allocation2 + $0xc8] sm:$0xff] 0.0
      %85 = vst [vmem:[#allocation2 + $0xd0] sm:$0xff] 0.0
      %86 = vst [vmem:[#allocation2 + $0xd8] sm:$0xff] 0.0
      %87 = vst [vmem:[#allocation2 + $0xe0] sm:$0xff] 0.0
      %88 = vst [vmem:[#allocation2 + $0xe8] sm:$0xff] 0.0
      %89 = vst [vmem:[#allocation2 + $0xf0] sm:$0xff] 0.0
      %90 = vst [vmem:[#allocation2 + $0xf8] sm:$0xff] 0.0
      %91 = vst [vmem:[#allocation2 + $0x100] sm:$0xff] 0.0
      %92 = vst [vmem:[#allocation2 + $0x108] sm:$0xff] 0.0
      %93 = vst [vmem:[#allocation2 + $0x110] sm:$0xff] 0.0
      %94 = vst [vmem:[#allocation2 + $0x118] sm:$0xff] 0.0
      %95 = vst [vmem:[#allocation2 + $0x120] sm:$0xff] 0.0
      %96 = vst [vmem:[#allocation2 + $0x128] sm:$0xff] 0.0
      %97 = vst [vmem:[#allocation2 + $0x130] sm:$0xff] 0.0
      %98 = vst [vmem:[#allocation2 + $0x138] sm:$0xff] 0.0
      %99 = vst [vmem:[#allocation2 + $0x140] sm:$0xff] 0.0
      %100 = vst [vmem:[#allocation2 + $0x148] sm:$0xff] 0.0
      %101 = vst [vmem:[#allocation2 + $0x150] sm:$0xff] 0.0
      %102 = vst [vmem:[#allocation2 + $0x158] sm:$0xff] 0.0
      %103 = vst [vmem:[#allocation2 + $0x160] sm:$0xff] 0.0
      %104 = vst [vmem:[#allocation2 + $0x168] sm:$0xff] 0.0
      %105 = vst [vmem:[#allocation2 + $0x170] sm:$0xff] 0.0
      %106 = vst [vmem:[#allocation2 + $0x178] sm:$0xff] 0.0
      %107 = vst [vmem:[#allocation2 + $0x180] sm:$0xff] 0.0
      %108 = vst [vmem:[#allocation2 + $0x188] sm:$0xff] 0.0
      %109 = vst [vmem:[#allocation2 + $0x190] sm:$0xff] 0.0
      %110 = vst [vmem:[#allocation2 + $0x198] sm:$0xff] 0.0
      %111 = vst [vmem:[#allocation2 + $0x1a0] sm:$0xff] 0.0
      %112 = vst [vmem:[#allocation2 + $0x1a8] sm:$0xff] 0.0
      %113 = vst [vmem:[#allocation2 + $0x1b0] sm:$0xff] 0.0
      %114 = vst [vmem:[#allocation2 + $0x1b8] sm:$0xff] 0.0
      %115 = vst [vmem:[#allocation2 + $0x1c0] sm:$0xff] 0.0
      %116 = vst [vmem:[#allocation2 + $0x1c8] sm:$0xff] 0.0
      %117 = vst [vmem:[#allocation2 + $0x1d0] sm:$0xff] 0.0
      %118 = vst [vmem:[#allocation2 + $0x1d8] sm:$0xff] 0.0
    $region29: #{hierarchical_decoder_forward.5} parent=1 // pred_fallthru
      _
    %v119 = vld [vmem:[#allocation2] sm:$0xff]
    %v120 = vld [vmem:[#allocation2 + $0x8] sm:$0xff]
    %v121 = vld [vmem:[#allocation2 + $0x10] sm:$0xff]
    %v122 = vld [vmem:[#allocation2 + $0x18] sm:$0xff]
    %v123 = vld [vmem:[#allocation2 + $0x20] sm:$0xff]
    %v124 = vld [vmem:[#allocation2 + $0x28] sm:$0xff]
    %v125 = vld [vmem:[#allocation2 + $0x30] sm:$0xff]
    %v126 = vld [vmem:[#allocation2 + $0x38] sm:$0xff]
    %v127 = vld [vmem:[#allocation2 + $0x40] sm:$0xff]
    %v128 = vld [vmem:[#allocation2 + $0x48] sm:$0xff]
    %v129 = vld [vmem:[#allocation2 + $0x50] sm:$0xff]
    %v130 = vld [vmem:[#allocation2 + $0x58] sm:$0xff]
    %v131 = vld [vmem:[#allocation2 + $0x60] sm:$0xff]
    %v132 = vld [vmem:[#allocation2 + $0x68] sm:$0xff]
    %v133 = vld [vmem:[#allocation2 + $0x70] sm:$0xff]
    %v134 = vld [vmem:[#allocation2 + $0x78] sm:$0xff]
    %v135 = vld [vmem:[#allocation2 + $0x80] sm:$0xff]
    %v136 = vld [vmem:[#allocation2 + $0x88] sm:$0xff]
    %v137 = vld [vmem:[#allocation2 + $0x90] sm:$0xff]
    %v138 = vld [vmem:[#allocation2 + $0x98] sm:$0xff]
    %v139 = vld [vmem:[#allocation2 + $0xa0] sm:$0xff]
    %v140 = vld [vmem:[#allocation2 + $0xa8] sm:$0xff]
    %v141 = vld [vmem:[#allocation2 + $0xb0] sm:$0xff]
    %v142 = vld [vmem:[#allocation2 + $0xb8] sm:$0xff]
    %v143 = vld [vmem:[#allocation2 + $0xc0] sm:$0xff]
    %v144 = vld [vmem:[#allocation2 + $0xc8] sm:$0xff]
    %v145 = vld [vmem:[#allocation2 + $0xd0] sm:$0xff]
    %v146 = vld [vmem:[#allocation2 + $0xd8] sm:$0xff]
    %v147 = vld [vmem:[#allocation2 + $0xe0] sm:$0xff]
    %v148 = vld [vmem:[#allocation2 + $0xe8] sm:$0xff]
    %v149 = vld [vmem:[#allocation2 + $0xf0] sm:$0xff]
    %v150 = vld [vmem:[#allocation2 + $0xf8] sm:$0xff]
    %v151 = vld [vmem:[#allocation2 + $0x100] sm:$0xff]
    %v152 = vld [vmem:[#allocation2 + $0x108] sm:$0xff]
    %v153 = vld [vmem:[#allocation2 + $0x110] sm:$0xff]
    %v154 = vld [vmem:[#allocation2 + $0x118] sm:$0xff]
    %v155 = vld [vmem:[#allocation2 + $0x120] sm:$0xff]
    %v156 = vld [vmem:[#allocation2 + $0x128] sm:$0xff]
    %v157 = vld [vmem:[#allocation2 + $0x130] sm:$0xff]
    %v158 = vld [vmem:[#allocation2 + $0x138] sm:$0xff]
    %v159 = vld [vmem:[#allocation2 + $0x140] sm:$0xff]
    %v160 = vld [vmem:[#allocation2 + $0x148] sm:$0xff]
    %v161 = vld [vmem:[#allocation2 + $0x150] sm:$0xff]
    %v162 = vld [vmem:[#allocation2 + $0x158] sm:$0xff]
    %v163 = vld [vmem:[#allocation2 + $0x160] sm:$0xff]
    %v164 = vld [vmem:[#allocation2 + $0x168] sm:$0xff]
    %v165 = vld [vmem:[#allocation2 + $0x170] sm:$0xff]
    %v166 = vld [vmem:[#allocation2 + $0x178] sm:$0xff]
    %v167 = vld [vmem:[#allocation2 + $0x180] sm:$0xff]
    %v168 = vld [vmem:[#allocation2 + $0x188] sm:$0xff]
    %v169 = vld [vmem:[#allocation2 + $0x190] sm:$0xff]
    %v170 = vld [vmem:[#allocation2 + $0x198] sm:$0xff]
    %v171 = vld [vmem:[#allocation2 + $0x1a0] sm:$0xff]
    %v172 = vld [vmem:[#allocation2 + $0x1a8] sm:$0xff]
    %v173 = vld [vmem:[#allocation2 + $0x1b0] sm:$0xff]
    %v174 = vld [vmem:[#allocation2 + $0x1b8] sm:$0xff]
    %v175 = vld [vmem:[#allocation2 + $0x1c0] sm:$0xff]
    %v176 = vld [vmem:[#allocation2 + $0x1c8] sm:$0xff]
    %v177 = vld [vmem:[#allocation2 + $0x1d0] sm:$0xff]
    %v178 = vld [vmem:[#allocation2 + $0x1d8] sm:$0xff]
    %v179 = vld [vmem:[#allocation3] sm:$0xf]
    %v180 = vld [vmem:[#allocation3 + $0x4] sm:$0xf]
    %v181 = vld [vmem:[#allocation3 + $0x8] sm:$0xf]
    %v182 = vld [vmem:[#allocation3 + $0xc] sm:$0xf]
    %v183 = vld [vmem:[#allocation3 + $0x10] sm:$0xf]
    %v184 = vld [vmem:[#allocation3 + $0x14] sm:$0xf]
    %v185 = vld [vmem:[#allocation3 + $0x18] sm:$0xf]
    %v186 = vld [vmem:[#allocation3 + $0x1c] sm:$0xf]
    %v187 = vld [vmem:[#allocation3 + $0x20] sm:$0xf]
    %v188 = vld [vmem:[#allocation3 + $0x24] sm:$0xf]
    %v189 = vld [vmem:[#allocation3 + $0x28] sm:$0xf]
    %v190 = vld [vmem:[#allocation3 + $0x2c] sm:$0xf]
    %v191 = vld [vmem:[#allocation3 + $0x30] sm:$0xf]
    %v192 = vld [vmem:[#allocation3 + $0x34] sm:$0xf]
    %v193 = vld [vmem:[#allocation3 + $0x38] sm:$0xf]
    %v194 = vld [vmem:[#allocation6] sm:$0xff]
    %v195 = vld [vmem:[#allocation6 + $0x8] sm:$0xff]
    %v196 = vld [vmem:[#allocation6 + $0x10] sm:$0xff]
    %v197 = vld [vmem:[#allocation6 + $0x18] sm:$0xff]
    %v198 = vld [vmem:[#allocation6 + $0x20] sm:$0xff]
    %v199 = vld [vmem:[#allocation6 + $0x28] sm:$0xff]
    %v200 = vld [vmem:[#allocation6 + $0x30] sm:$0xff]
    %v201 = vld [vmem:[#allocation6 + $0x38] sm:$0xff]
    %v202 = vld [vmem:[#allocation6 + $0x40] sm:$0xff]
    %v203 = vld [vmem:[#allocation6 + $0x48] sm:$0xff]
    %v204 = vld [vmem:[#allocation6 + $0x50] sm:$0xff]
    %v205 = vld [vmem:[#allocation6 + $0x58] sm:$0xff]
    %v206 = vld [vmem:[#allocation6 + $0x60] sm:$0xff]
    %v207 = vld [vmem:[#allocation6 + $0x68] sm:$0xff]
    %v208 = vld [vmem:[#allocation6 + $0x70] sm:$0xff]
    %v209 = vld [vmem:[#allocation6 + $0x78] sm:$0xff]
    %v210 = vld [vmem:[#allocation6 + $0x80] sm:$0xff]
    %v211 = vld [vmem:[#allocation6 + $0x88] sm:$0xff]
    %v212 = vld [vmem:[#allocation6 + $0x90] sm:$0xff]
    %v213 = vld [vmem:[#allocation6 + $0x98] sm:$0xff]
    %v214 = vld [vmem:[#allocation6 + $0xa0] sm:$0xff]
    %v215 = vld [vmem:[#allocation6 + $0xa8] sm:$0xff]
    %v216 = vld [vmem:[#allocation6 + $0xb0] sm:$0xff]
    %v217 = vld [vmem:[#allocation6 + $0xb8] sm:$0xff]
    %v218 = vld [vmem:[#allocation6 + $0xc0] sm:$0xff]
    %v219 = vld [vmem:[#allocation6 + $0xc8] sm:$0xff]
    %v220 = vld [vmem:[#allocation6 + $0xd0] sm:$0xff]
    %v221 = vld [vmem:[#allocation6 + $0xd8] sm:$0xff]
    %v222 = vld [vmem:[#allocation6 + $0xe0] sm:$0xff]
    %v223 = vld [vmem:[#allocation6 + $0xe8] sm:$0xff]
    %v224 = vld [vmem:[#allocation6 + $0xf0] sm:$0xff]
    %v225 = vld [vmem:[#allocation6 + $0xf8] sm:$0xff]
    %v241 = vunpack.c.l.b16 %v179
    %v242 = vunpack.c.l.b16 %v180
    %v243 = vunpack.c.l.b16 %v181
    %v244 = vunpack.c.l.b16 %v182
    %v245 = vunpack.c.l.b16 %v183
    %v246 = vunpack.c.l.b16 %v184
    %v247 = vunpack.c.l.b16 %v185
    %v248 = vunpack.c.l.b16 %v186
    %v249 = vunpack.c.l.b16 %v187
    %v250 = vunpack.c.l.b16 %v188
    %v251 = vunpack.c.l.b16 %v189
    %v252 = vunpack.c.l.b16 %v190
    %v253 = vunpack.c.l.b16 %v191
    %v254 = vunpack.c.l.b16 %v192
    %v255 = vunpack.c.l.b16 %v193
    %v256 = vpack.c.b16 %v242, %v241
    %v257 = vpack.c.b16 %v244, %v243
    %v258 = vpack.c.b16 %v246, %v245
    %v259 = vpack.c.b16 %v248, %v247
    %v260 = vpack.c.b16 %v250, %v249
    %v261 = vpack.c.b16 %v252, %v251
    %v262 = vpack.c.b16 %v254, %v253
    %v263 = vpack.c.b16 %v255, %v255
    %v304 = vunpack.c.l.b16 %v194
    %v305 = vunpack.c.h.b16 %v194
    %v306 = vunpack.c.l.b16 %v195
    %v307 = vunpack.c.h.b16 %v195
    %v308 = vunpack.c.l.b16 %v196
    %v309 = vunpack.c.h.b16 %v196
    %v310 = vunpack.c.l.b16 %v197
    %v311 = vunpack.c.h.b16 %v197
    %v312 = vunpack.c.l.b16 %v198
    %v313 = vunpack.c.h.b16 %v198
    %v314 = vunpack.c.l.b16 %v199
    %v315 = vunpack.c.h.b16 %v199
    %v316 = vunpack.c.l.b16 %v200
    %v317 = vunpack.c.h.b16 %v200
    %v318 = vunpack.c.l.b16 %v201
    %v319 = vunpack.c.h.b16 %v201
    %v320 = vunpack.c.l.b16 %v202
    %v321 = vunpack.c.h.b16 %v202
    %v322 = vunpack.c.l.b16 %v203
    %v323 = vunpack.c.h.b16 %v203
    %v324 = vunpack.c.l.b16 %v204
    %v325 = vunpack.c.h.b16 %v204
    %v326 = vunpack.c.l.b16 %v205
    %v327 = vunpack.c.h.b16 %v205
    %v328 = vunpack.c.l.b16 %v206
    %v329 = vunpack.c.h.b16 %v206
    %v330 = vunpack.c.l.b16 %v207
    %v331 = vunpack.c.h.b16 %v207
    %v332 = vunpack.c.l.b16 %v208
    %v333 = vunpack.c.h.b16 %v208
    %v334 = vunpack.c.l.b16 %v209
    %v335 = vunpack.c.h.b16 %v209
    %v336 = vunpack.c.l.b16 %v210
    %v337 = vunpack.c.h.b16 %v210
    %v338 = vunpack.c.l.b16 %v211
    %v339 = vunpack.c.h.b16 %v211
    %v340 = vunpack.c.l.b16 %v212
    %v341 = vunpack.c.h.b16 %v212
    %v342 = vunpack.c.l.b16 %v213
    %v343 = vunpack.c.h.b16 %v213
    %v344 = vunpack.c.l.b16 %v214
    %v345 = vunpack.c.h.b16 %v214
    %v346 = vunpack.c.l.b16 %v215
    %v347 = vunpack.c.h.b16 %v215
    %v348 = vunpack.c.l.b16 %v216
    %v349 = vunpack.c.h.b16 %v216
    %v350 = vunpack.c.l.b16 %v217
    %v351 = vunpack.c.h.b16 %v217
    %v352 = vunpack.c.l.b16 %v218
    %v353 = vunpack.c.h.b16 %v218
    %v354 = vunpack.c.l.b16 %v219
    %v355 = vunpack.c.h.b16 %v219
    %v356 = vunpack.c.l.b16 %v220
    %v357 = vunpack.c.h.b16 %v220
    %v358 = vunpack.c.l.b16 %v221
    %v359 = vunpack.c.h.b16 %v221
    %v360 = vunpack.c.l.b16 %v222
    %v361 = vunpack.c.h.b16 %v222
    %v362 = vunpack.c.l.b16 %v223
    %v363 = vunpack.c.h.b16 %v223
    %v364 = vunpack.c.l.b16 %v224
    %v365 = vunpack.c.h.b16 %v224
    %v366 = vunpack.c.l.b16 %v225
    %v367 = vunpack.c.h.b16 %v225
    %v368 = vpack.c.b16 %v308, %v304
    %v369 = vpack.c.b16 %v309, %v305
    %v370 = vpack.c.b16 %v310, %v306
    %v371 = vpack.c.b16 %v311, %v307
    %v372 = vpack.c.b16 %v316, %v312
    %v373 = vpack.c.b16 %v317, %v313
    %v374 = vpack.c.b16 %v318, %v314
    %v375 = vpack.c.b16 %v319, %v315
    %v376 = vpack.c.b16 %v324, %v320
    %v377 = vpack.c.b16 %v325, %v321
    %v378 = vpack.c.b16 %v326, %v322
    %v379 = vpack.c.b16 %v327, %v323
    %v380 = vpack.c.b16 %v332, %v328
    %v381 = vpack.c.b16 %v333, %v329
    %v382 = vpack.c.b16 %v334, %v330
    %v383 = vpack.c.b16 %v335, %v331
    %v384 = vpack.c.b16 %v340, %v336
    %v385 = vpack.c.b16 %v341, %v337
    %v386 = vpack.c.b16 %v342, %v338
    %v387 = vpack.c.b16 %v343, %v339
    %v388 = vpack.c.b16 %v348, %v344
    %v389 = vpack.c.b16 %v349, %v345
    %v390 = vpack.c.b16 %v350, %v346
    %v391 = vpack.c.b16 %v351, %v347
    %v392 = vpack.c.b16 %v356, %v352
    %v393 = vpack.c.b16 %v357, %v353
    %v394 = vpack.c.b16 %v358, %v354
    %v395 = vpack.c.b16 %v359, %v355
    %v396 = vpack.c.b16 %v364, %v360
    %v397 = vpack.c.b16 %v365, %v361
    %v398 = vpack.c.b16 %v366, %v362
    %v399 = vpack.c.b16 %v367, %v363
    %432 = vmatprep.subr.bf16.mxu0 %v369
    %433 = vmatpush1.bf16.msra.mxu0 %v368
    %434 = vmatprep.subr.bf16.mxu0 %v373
    %435 = vmatpush1.bf16.msra.mxu0 %v372
    %436 = vmatprep.subr.bf16.mxu0 %v377
    %437 = vmatpush1.bf16.msra.mxu0 %v376
    %438 = vmatprep.subr.bf16.mxu0 %v381
    %439 = vmatpush1.bf16.msra.mxu0 %v380
    %440 = vmatprep.subr.bf16.mxu0 %v385
    %441 = vmatpush1.bf16.msra.mxu0 %v384
    %442 = vmatprep.subr.bf16.mxu0 %v389
    %443 = vmatpush1.bf16.msra.mxu0 %v388
    %444 = vmatprep.subr.bf16.mxu0 %v393
    %445 = vmatpush1.bf16.msra.mxu0 %v392
    %446 = vmatprep.subr.bf16.mxu0 %v397
    %447 = vmatpush1.bf16.msra.mxu0 %v396
    %448 = vmatprep.subr.bf16.mxu0 0
    %449 = vmatpush1.bf16.msra.mxu0 0
    %450 = vmatprep.subr.bf16.mxu0 0
    %451 = vmatpush1.bf16.msra.mxu0 0
    %452 = vmatprep.subr.bf16.mxu0 0
    %453 = vmatpush1.bf16.msra.mxu0 0
    %454 = vmatprep.subr.bf16.mxu0 0
    %455 = vmatpush1.bf16.msra.mxu0 0
    %456 = vmatprep.subr.bf16.mxu0 0
    %457 = vmatpush1.bf16.msra.mxu0 0
    %458 = vmatprep.subr.bf16.mxu0 0
    %459 = vmatpush1.bf16.msra.mxu0 0
    %460 = vmatprep.subr.bf16.mxu0 0
    %461 = vmatpush1.bf16.msra.mxu0 0
    %462 = vmatprep.subr.bf16.mxu0 0
    %463 = vmatpush1.bf16.msra.mxu0 0
    %464 = vmatprep.mubr.bf16.mxu0 0
    %465 = vmatmul.mubr.bf16.gmra.mrb[0].mxu0 %v256
    %v466 = vpop.f32.mrb[0].mxu0
    %v467 = vadd.f32 0.0, %v466
    %v468 = vpop.f32.mrb[0].mxu0
    %v469 = vadd.f32 0.0, %v468
    %v470 = vpop.f32.mrb[0].mxu0
    %v471 = vadd.f32 0.0, %v470
    %v472 = vpop.f32.mrb[0].mxu0
    %v473 = vadd.f32 0.0, %v472
    %474 = vmatprep.mubr.bf16.mxu0 0
    %475 = vmatmul.mubr.bf16.gmra.mrb[0].mxu0 %v257
    %v476 = vpop.f32.mrb[0].mxu0
    %v477 = vadd.f32 0.0, %v476
    %v478 = vpop.f32.mrb[0].mxu0
    %v479 = vadd.f32 0.0, %v478
    %v480 = vpop.f32.mrb[0].mxu0
    %v481 = vadd.f32 0.0, %v480
    %v482 = vpop.f32.mrb[0].mxu0
    %v483 = vadd.f32 0.0, %v482
    %484 = vmatprep.mubr.bf16.mxu0 0
    %485 = vmatmul.mubr.bf16.gmra.mrb[0].mxu0 %v258
    %v486 = vpop.f32.mrb[0].mxu0
    %v487 = vadd.f32 0.0, %v486
    %v488 = vpop.f32.mrb[0].mxu0
    %v489 = vadd.f32 0.0, %v488
    %v490 = vpop.f32.mrb[0].mxu0
    %v491 = vadd.f32 0.0, %v490
    %v492 = vpop.f32.mrb[0].mxu0
    %v493 = vadd.f32 0.0, %v492
    %494 = vmatprep.mubr.bf16.mxu0 0
    %495 = vmatmul.mubr.bf16.gmra.mrb[0].mxu0 %v259
    %v496 = vpop.f32.mrb[0].mxu0
    %v497 = vadd.f32 0.0, %v496
    %v498 = vpop.f32.mrb[0].mxu0
    %v499 = vadd.f32 0.0, %v498
    %v500 = vpop.f32.mrb[0].mxu0
    %v501 = vadd.f32 0.0, %v500
    %v502 = vpop.f32.mrb[0].mxu0
    %v503 = vadd.f32 0.0, %v502
    %504 = vmatprep.mubr.bf16.mxu0 0
    %505 = vmatmul.mubr.bf16.gmra.mrb[0].mxu0 %v260
    %v506 = vpop.f32.mrb[0].mxu0
    %v507 = vadd.f32 0.0, %v506
    %v508 = vpop.f32.mrb[0].mxu0
    %v509 = vadd.f32 0.0, %v508
    %v510 = vpop.f32.mrb[0].mxu0
    %v511 = vadd.f32 0.0, %v510
    %v512 = vpop.f32.mrb[0].mxu0
    %v513 = vadd.f32 0.0, %v512
    %514 = vmatprep.mubr.bf16.mxu0 0
    %515 = vmatmul.mubr.bf16.gmra.mrb[0].mxu0 %v261
    %v516 = vpop.f32.mrb[0].mxu0
    %v517 = vadd.f32 0.0, %v516
    %v518 = vpop.f32.mrb[0].mxu0
    %v519 = vadd.f32 0.0, %v518
    %v520 = vpop.f32.mrb[0].mxu0
    %v521 = vadd.f32 0.0, %v520
    %v522 = vpop.f32.mrb[0].mxu0
    %v523 = vadd.f32 0.0, %v522
    %524 = vmatprep.mubr.bf16.mxu0 0
    %525 = vmatmul.mubr.bf16.gmra.mrb[0].mxu0 %v262
    %v526 = vpop.f32.mrb[0].mxu0
    %v527 = vadd.f32 0.0, %v526
    %v528 = vpop.f32.mrb[0].mxu0
    %v529 = vadd.f32 0.0, %v528
    %v530 = vpop.f32.mrb[0].mxu0
    %v531 = vadd.f32 0.0, %v530
    %v532 = vpop.f32.mrb[0].mxu0
    %v533 = vadd.f32 0.0, %v532
    %534 = vmatprep.mubr.bf16.mxu0 0
    %535 = vmatmul.mubr.bf16.gmra.mrb[0].mxu0 %v263
    %v536 = vpop.f32.mrb[0].mxu0
    %v537 = vadd.f32 0.0, %v536
    %v538 = vpop.f32.mrb[0].mxu0
    %v539 = vadd.f32 0.0, %v538
    %v540 = vpop.f32.mrb[0].mxu0
    %v541 = vpop.f32.mrb[0].mxu0
    %542 = vdwg.mxu0
    %543 = vmatprep.subr.bf16.mxu0 %v371
    %544 = vmatpush1.bf16.msra.mxu0 %v370
    %545 = vmatprep.subr.bf16.mxu0 %v375
    %546 = vmatpush1.bf16.msra.mxu0 %v374
    %547 = vmatprep.subr.bf16.mxu0 %v379
    %548 = vmatpush1.bf16.msra.mxu0 %v378
    %549 = vmatprep.subr.bf16.mxu0 %v383
    %550 = vmatpush1.bf16.msra.mxu0 %v382
    %551 = vmatprep.subr.bf16.mxu0 %v387
    %552 = vmatpush1.bf16.msra.mxu0 %v386
    %553 = vmatprep.subr.bf16.mxu0 %v391
    %554 = vmatpush1.bf16.msra.mxu0 %v390
    %555 = vmatprep.subr.bf16.mxu0 %v395
    %556 = vmatpush1.bf16.msra.mxu0 %v394
    %557 = vmatprep.subr.bf16.mxu0 %v399
    %558 = vmatpush1.bf16.msra.mxu0 %v398
    %559 = vmatprep.subr.bf16.mxu0 0
    %560 = vmatpush1.bf16.msra.mxu0 0
    %561 = vmatprep.subr.bf16.mxu0 0
    %562 = vmatpush1.bf16.msra.mxu0 0
    %563 = vmatprep.subr.bf16.mxu0 0
    %564 = vmatpush1.bf16.msra.mxu0 0
    %565 = vmatprep.subr.bf16.mxu0 0
    %566 = vmatpush1.bf16.msra.mxu0 0
    %567 = vmatprep.subr.bf16.mxu0 0
    %568 = vmatpush1.bf16.msra.mxu0 0
    %569 = vmatprep.subr.bf16.mxu0 0
    %570 = vmatpush1.bf16.msra.mxu0 0
    %571 = vmatprep.subr.bf16.mxu0 0
    %572 = vmatpush1.bf16.msra.mxu0 0
    %573 = vmatprep.subr.bf16.mxu0 0
    %574 = vmatpush1.bf16.msra.mxu0 0
    %575 = vmatprep.mubr.bf16.mxu0 0
    %576 = vmatmul.mubr.bf16.gmra.mrb[0].mxu0 %v256
    %v577 = vpop.f32.mrb[0].mxu0
    %v578 = vadd.f32 0.0, %v577
    %v579 = vpop.f32.mrb[0].mxu0
    %v580 = vadd.f32 0.0, %v579
    %v581 = vpop.f32.mrb[0].mxu0
    %v582 = vadd.f32 0.0, %v581
    %v583 = vpop.f32.mrb[0].mxu0
    %v584 = vadd.f32 0.0, %v583
    %585 = vmatprep.mubr.bf16.mxu0 0
    %586 = vmatmul.mubr.bf16.gmra.mrb[0].mxu0 %v257
    %v587 = vpop.f32.mrb[0].mxu0
    %v588 = vadd.f32 0.0, %v587
    %v589 = vpop.f32.mrb[0].mxu0
    %v590 = vadd.f32 0.0, %v589
    %v591 = vpop.f32.mrb[0].mxu0
    %v592 = vadd.f32 0.0, %v591
    %v593 = vpop.f32.mrb[0].mxu0
    %v594 = vadd.f32 0.0, %v593
    %595 = vmatprep.mubr.bf16.mxu0 0
    %596 = vmatmul.mubr.bf16.gmra.mrb[0].mxu0 %v258
    %v597 = vpop.f32.mrb[0].mxu0
    %v598 = vadd.f32 0.0, %v597
    %v599 = vpop.f32.mrb[0].mxu0
    %v600 = vadd.f32 0.0, %v599
    %v601 = vpop.f32.mrb[0].mxu0
    %v602 = vadd.f32 0.0, %v601
    %v603 = vpop.f32.mrb[0].mxu0
    %v604 = vadd.f32 0.0, %v603
    %605 = vmatprep.mubr.bf16.mxu0 0
    %606 = vmatmul.mubr.bf16.gmra.mrb[0].mxu0 %v259
    %v607 = vpop.f32.mrb[0].mxu0
    %v608 = vadd.f32 0.0, %v607
    %v609 = vpop.f32.mrb[0].mxu0
    %v610 = vadd.f32 0.0, %v609
    %v611 = vpop.f32.mrb[0].mxu0
    %v612 = vadd.f32 0.0, %v611
    %v613 = vpop.f32.mrb[0].mxu0
    %v614 = vadd.f32 0.0, %v613
    %615 = vmatprep.mubr.bf16.mxu0 0
    %616 = vmatmul.mubr.bf16.gmra.mrb[0].mxu0 %v260
    %v617 = vpop.f32.mrb[0].mxu0
    %v618 = vadd.f32 0.0, %v617
    %v619 = vpop.f32.mrb[0].mxu0
    %v620 = vadd.f32 0.0, %v619
    %v621 = vpop.f32.mrb[0].mxu0
    %v622 = vadd.f32 0.0, %v621
    %v623 = vpop.f32.mrb[0].mxu0
    %v624 = vadd.f32 0.0, %v623
    %625 = vmatprep.mubr.bf16.mxu0 0
    %626 = vmatmul.mubr.bf16.gmra.mrb[0].mxu0 %v261
    %v627 = vpop.f32.mrb[0].mxu0
    %v628 = vadd.f32 0.0, %v627
    %v629 = vpop.f32.mrb[0].mxu0
    %v630 = vadd.f32 0.0, %v629
    %v631 = vpop.f32.mrb[0].mxu0
    %v632 = vadd.f32 0.0, %v631
    %v633 = vpop.f32.mrb[0].mxu0
    %v634 = vadd.f32 0.0, %v633
    %635 = vmatprep.mubr.bf16.mxu0 0
    %636 = vmatmul.mubr.bf16.gmra.mrb[0].mxu0 %v262
    %v637 = vpop.f32.mrb[0].mxu0
    %v638 = vadd.f32 0.0, %v637
    %v639 = vpop.f32.mrb[0].mxu0
    %v640 = vadd.f32 0.0, %v639
    %v641 = vpop.f32.mrb[0].mxu0
    %v642 = vadd.f32 0.0, %v641
    %v643 = vpop.f32.mrb[0].mxu0
    %v644 = vadd.f32 0.0, %v643
    %645 = vmatprep.mubr.bf16.mxu0 0
    %646 = vmatmul.mubr.bf16.gmra.mrb[0].mxu0 %v263
    %v647 = vpop.f32.mrb[0].mxu0
    %v648 = vadd.f32 0.0, %v647
    %v649 = vpop.f32.mrb[0].mxu0
    %v650 = vadd.f32 0.0, %v649
    %v651 = vpop.f32.mrb[0].mxu0
    %v652 = vpop.f32.mrb[0].mxu0
    %653 = vdwg.mxu0
    %v654 = vadd.f32 %v119, %v467
    %v655 = vadd.f32 %v120, %v469
    %v656 = vadd.f32 %v121, %v578
    %v657 = vadd.f32 %v122, %v580
    %v658 = vadd.f32 %v123, %v471
    %v659 = vadd.f32 %v124, %v473
    %v660 = vadd.f32 %v125, %v582
    %v661 = vadd.f32 %v126, %v584
    %v662 = vadd.f32 %v127, %v477
    %v663 = vadd.f32 %v128, %v479
    %v664 = vadd.f32 %v129, %v588
    %v665 = vadd.f32 %v130, %v590
    %v666 = vadd.f32 %v131, %v481
    %v667 = vadd.f32 %v132, %v483
    %v668 = vadd.f32 %v133, %v592
    %v669 = vadd.f32 %v134, %v594
    %v670 = vadd.f32 %v135, %v487
    %v671 = vadd.f32 %v136, %v489
    %v672 = vadd.f32 %v137, %v598
    %v673 = vadd.f32 %v138, %v600
    %v674 = vadd.f32 %v139, %v491
    %v675 = vadd.f32 %v140, %v493
    %v676 = vadd.f32 %v141, %v602
    %v677 = vadd.f32 %v142, %v604
    %v678 = vadd.f32 %v143, %v497
    %v679 = vadd.f32 %v144, %v499
    %v680 = vadd.f32 %v145, %v608
    %v681 = vadd.f32 %v146, %v610
    %v682 = vadd.f32 %v147, %v501
    %v683 = vadd.f32 %v148, %v503
    %v684 = vadd.f32 %v149, %v612
    %v685 = vadd.f32 %v150, %v614
    %v686 = vadd.f32 %v151, %v507
    %v687 = vadd.f32 %v152, %v509
    %v688 = vadd.f32 %v153, %v618
    %v689 = vadd.f32 %v154, %v620
    %v690 = vadd.f32 %v155, %v511
    %v691 = vadd.f32 %v156, %v513
    %v692 = vadd.f32 %v157, %v622
    %v693 = vadd.f32 %v158, %v624
    %v694 = vadd.f32 %v159, %v517
    %v695 = vadd.f32 %v160, %v519
    %v696 = vadd.f32 %v161, %v628
    %v697 = vadd.f32 %v162, %v630
    %v698 = vadd.f32 %v163, %v521
    %v699 = vadd.f32 %v164, %v523
    %v700 = vadd.f32 %v165, %v632
    %v701 = vadd.f32 %v166, %v634
    %v702 = vadd.f32 %v167, %v527
    %v703 = vadd.f32 %v168, %v529
    %v704 = vadd.f32 %v169, %v638
    %v705 = vadd.f32 %v170, %v640
    %v706 = vadd.f32 %v171, %v531
    %v707 = vadd.f32 %v172, %v533
    %v708 = vadd.f32 %v173, %v642
    %v709 = vadd.f32 %v174, %v644
    %v710 = vadd.f32 %v175, %v537
    %v711 = vadd.f32 %v176, %v539
    %v712 = vadd.f32 %v177, %v648
    %v713 = vadd.f32 %v178, %v650
    %714 = vst [vmem:[#allocation2] sm:$0xff] %v654
    %715 = vst [vmem:[#allocation2 + $0x8] sm:$0xff] %v655
    %716 = vst [vmem:[#allocation2 + $0x10] sm:$0xff] %v656
    %717 = vst [vmem:[#allocation2 + $0x18] sm:$0xff] %v657
    %718 = vst [vmem:[#allocation2 + $0x20] sm:$0xff] %v658
    %719 = vst [vmem:[#allocation2 + $0x28] sm:$0xff] %v659
    %720 = vst [vmem:[#allocation2 + $0x30] sm:$0xff] %v660
    %721 = vst [vmem:[#allocation2 + $0x38] sm:$0xff] %v661
    %722 = vst [vmem:[#allocation2 + $0x40] sm:$0xff] %v662
    %723 = vst [vmem:[#allocation2 + $0x48] sm:$0xff] %v663
    %724 = vst [vmem:[#allocation2 + $0x50] sm:$0xff] %v664
    %725 = vst [vmem:[#allocation2 + $0x58] sm:$0xff] %v665
    %726 = vst [vmem:[#allocation2 + $0x60] sm:$0xff] %v666
    %727 = vst [vmem:[#allocation2 + $0x68] sm:$0xff] %v667
    %728 = vst [vmem:[#allocation2 + $0x70] sm:$0xff] %v668
    %729 = vst [vmem:[#allocation2 + $0x78] sm:$0xff] %v669
    %730 = vst [vmem:[#allocation2 + $0x80] sm:$0xff] %v670
    %731 = vst [vmem:[#allocation2 + $0x88] sm:$0xff] %v671
    %732 = vst [vmem:[#allocation2 + $0x90] sm:$0xff] %v672
    %733 = vst [vmem:[#allocation2 + $0x98] sm:$0xff] %v673
    %734 = vst [vmem:[#allocation2 + $0xa0] sm:$0xff] %v674
    %735 = vst [vmem:[#allocation2 + $0xa8] sm:$0xff] %v675
    %736 = vst [vmem:[#allocation2 + $0xb0] sm:$0xff] %v676
    %737 = vst [vmem:[#allocation2 + $0xb8] sm:$0xff] %v677
    %738 = vst [vmem:[#allocation2 + $0xc0] sm:$0xff] %v678
    %739 = vst [vmem:[#allocation2 + $0xc8] sm:$0xff] %v679
    %740 = vst [vmem:[#allocation2 + $0xd0] sm:$0xff] %v680
    %741 = vst [vmem:[#allocation2 + $0xd8] sm:$0xff] %v681
    %742 = vst [vmem:[#allocation2 + $0xe0] sm:$0xff] %v682
    %743 = vst [vmem:[#allocation2 + $0xe8] sm:$0xff] %v683
    %744 = vst [vmem:[#allocation2 + $0xf0] sm:$0xff] %v684
    %745 = vst [vmem:[#allocation2 + $0xf8] sm:$0xff] %v685
    %746 = vst [vmem:[#allocation2 + $0x100] sm:$0xff] %v686
    %747 = vst [vmem:[#allocation2 + $0x108] sm:$0xff] %v687
    %748 = vst [vmem:[#allocation2 + $0x110] sm:$0xff] %v688
    %749 = vst [vmem:[#allocation2 + $0x118] sm:$0xff] %v689
    %750 = vst [vmem:[#allocation2 + $0x120] sm:$0xff] %v690
    %751 = vst [vmem:[#allocation2 + $0x128] sm:$0xff] %v691
    %752 = vst [vmem:[#allocation2 + $0x130] sm:$0xff] %v692
    %753 = vst [vmem:[#allocation2 + $0x138] sm:$0xff] %v693
    %754 = vst [vmem:[#allocation2 + $0x140] sm:$0xff] %v694
    %755 = vst [vmem:[#allocation2 + $0x148] sm:$0xff] %v695
    %756 = vst [vmem:[#allocation2 + $0x150] sm:$0xff] %v696
    %757 = vst [vmem:[#allocation2 + $0x158] sm:$0xff] %v697
    %758 = vst [vmem:[#allocation2 + $0x160] sm:$0xff] %v698
    %759 = vst [vmem:[#allocation2 + $0x168] sm:$0xff] %v699
    %760 = vst [vmem:[#allocation2 + $0x170] sm:$0xff] %v700
    %761 = vst [vmem:[#allocation2 + $0x178] sm:$0xff] %v701
    %762 = vst [vmem:[#allocation2 + $0x180] sm:$0xff] %v702
    %763 = vst [vmem:[#allocation2 + $0x188] sm:$0xff] %v703
    %764 = vst [vmem:[#allocation2 + $0x190] sm:$0xff] %v704
    %765 = vst [vmem:[#allocation2 + $0x198] sm:$0xff] %v705
    %766 = vst [vmem:[#allocation2 + $0x1a0] sm:$0xff] %v706
    %767 = vst [vmem:[#allocation2 + $0x1a8] sm:$0xff] %v707
    %768 = vst [vmem:[#allocation2 + $0x1b0] sm:$0xff] %v708
    %769 = vst [vmem:[#allocation2 + $0x1b8] sm:$0xff] %v709
    %770 = vst [vmem:[#allocation2 + $0x1c0] sm:$0xff] %v710
    %771 = vst [vmem:[#allocation2 + $0x1c8] sm:$0xff] %v711
    %772 = vst [vmem:[#allocation2 + $0x1d0] sm:$0xff] %v712
    %773 = vst [vmem:[#allocation2 + $0x1d8] sm:$0xff] %v713
    // Predicated region
    $region30: #{hierarchical_decoder_forward.5} parent=1 // pred_check
      %p774 = pneg %p55
    $region31: #{hierarchical_decoder_forward.5} parent=1 // pred_check_branch
      %776 = sbr.rel (%p774) target = $region33
    $region32: #{hierarchical_decoder_forward.5} parent=1 // pred_region
      %v777 = vld [vmem:[#allocation2] sm:$0xff]
      %v778 = vld [vmem:[#allocation2 + $0x8] sm:$0xff]
      %v779 = vld [vmem:[#allocation2 + $0x10] sm:$0xff]
      %v780 = vld [vmem:[#allocation2 + $0x18] sm:$0xff]
      %v781 = vld [vmem:[#allocation2 + $0x20] sm:$0xff]
      %v782 = vld [vmem:[#allocation2 + $0x28] sm:$0xff]
      %v783 = vld [vmem:[#allocation2 + $0x30] sm:$0xff]
      %v784 = vld [vmem:[#allocation2 + $0x38] sm:$0xff]
      %v785 = vld [vmem:[#allocation2 + $0x40] sm:$0xff]
      %v786 = vld [vmem:[#allocation2 + $0x48] sm:$0xff]
      %v787 = vld [vmem:[#allocation2 + $0x50] sm:$0xff]
      %v788 = vld [vmem:[#allocation2 + $0x58] sm:$0xff]
      %v789 = vld [vmem:[#allocation2 + $0x60] sm:$0xff]
      %v790 = vld [vmem:[#allocation2 + $0x68] sm:$0xff]
      %v791 = vld [vmem:[#allocation2 + $0x70] sm:$0xff]
      %v792 = vld [vmem:[#allocation2 + $0x78] sm:$0xff]
      %v793 = vld [vmem:[#allocation2 + $0x80] sm:$0xff]
      %v794 = vld [vmem:[#allocation2 + $0x88] sm:$0xff]
      %v795 = vld [vmem:[#allocation2 + $0x90] sm:$0xff]
      %v796 = vld [vmem:[#allocation2 + $0x98] sm:$0xff]
      %v797 = vld [vmem:[#allocation2 + $0xa0] sm:$0xff]
      %v798 = vld [vmem:[#allocation2 + $0xa8] sm:$0xff]
      %v799 = vld [vmem:[#allocation2 + $0xb0] sm:$0xff]
      %v800 = vld [vmem:[#allocation2 + $0xb8] sm:$0xff]
      %v801 = vld [vmem:[#allocation2 + $0xc0] sm:$0xff]
      %v802 = vld [vmem:[#allocation2 + $0xc8] sm:$0xff]
      %v803 = vld [vmem:[#allocation2 + $0xd0] sm:$0xff]
      %v804 = vld [vmem:[#allocation2 + $0xd8] sm:$0xff]
      %v805 = vld [vmem:[#allocation2 + $0xe0] sm:$0xff]
      %v806 = vld [vmem:[#allocation2 + $0xe8] sm:$0xff]
      %v807 = vld [vmem:[#allocation2 + $0xf0] sm:$0xff]
      %v808 = vld [vmem:[#allocation2 + $0xf8] sm:$0xff]
      %v809 = vld [vmem:[#allocation2 + $0x100] sm:$0xff]
      %v810 = vld [vmem:[#allocation2 + $0x108] sm:$0xff]
      %v811 = vld [vmem:[#allocation2 + $0x110] sm:$0xff]
      %v812 = vld [vmem:[#allocation2 + $0x118] sm:$0xff]
      %v813 = vld [vmem:[#allocation2 + $0x120] sm:$0xff]
      %v814 = vld [vmem:[#allocation2 + $0x128] sm:$0xff]
      %v815 = vld [vmem:[#allocation2 + $0x130] sm:$0xff]
      %v816 = vld [vmem:[#allocation2 + $0x138] sm:$0xff]
      %v817 = vld [vmem:[#allocation2 + $0x140] sm:$0xff]
      %v818 = vld [vmem:[#allocation2 + $0x148] sm:$0xff]
      %v819 = vld [vmem:[#allocation2 + $0x150] sm:$0xff]
      %v820 = vld [vmem:[#allocation2 + $0x158] sm:$0xff]
      %v821 = vld [vmem:[#allocation2 + $0x160] sm:$0xff]
      %v822 = vld [vmem:[#allocation2 + $0x168] sm:$0xff]
      %v823 = vld [vmem:[#allocation2 + $0x170] sm:$0xff]
      %v824 = vld [vmem:[#allocation2 + $0x178] sm:$0xff]
      %v825 = vld [vmem:[#allocation2 + $0x180] sm:$0xff]
      %v826 = vld [vmem:[#allocation2 + $0x188] sm:$0xff]
      %v827 = vld [vmem:[#allocation2 + $0x190] sm:$0xff]
      %v828 = vld [vmem:[#allocation2 + $0x198] sm:$0xff]
      %v829 = vld [vmem:[#allocation2 + $0x1a0] sm:$0xff]
      %v830 = vld [vmem:[#allocation2 + $0x1a8] sm:$0xff]
      %v831 = vld [vmem:[#allocation2 + $0x1b0] sm:$0xff]
      %v832 = vld [vmem:[#allocation2 + $0x1b8] sm:$0xff]
      %v833 = vld [vmem:[#allocation2 + $0x1c0] sm:$0xff]
      %v834 = vld [vmem:[#allocation2 + $0x1c8] sm:$0xff]
      %v835 = vld [vmem:[#allocation2 + $0x1d0] sm:$0xff]
      %v836 = vld [vmem:[#allocation2 + $0x1d8] sm:$0xff]
      %v837 = vld [vmem:[#allocation8] sm:$0xf]
      %v839 = vlaneseq
      %v840 = vshrl.u32 %v839, 7
      %v841 = vsub.s32 0, %v840
      %v842 = vrot.slane %v837, %v841
      %v843 = vlaneseq
      %v844 = vshrl.u32 %v843, 7
      %v845 = vsub.s32 1, %v844
      %v846 = vrot.slane %v837, %v845
      %v847 = vlaneseq
      %v848 = vshrl.u32 %v847, 7
      %v849 = vsub.s32 2, %v848
      %v850 = vrot.slane %v837, %v849
      %v851 = vlaneseq
      %v852 = vshrl.u32 %v851, 7
      %v853 = vsub.s32 3, %v852
      %v854 = vrot.slane %v837, %v853
      %v859 = vadd.f32 %v777, %v842
      %v860 = vadd.f32 %v778, %v846
      %v861 = vadd.f32 %v779, %v850
      %v862 = vadd.f32 %v780, %v854
      %v863 = vadd.f32 %v781, %v842
      %v864 = vadd.f32 %v782, %v846
      %v865 = vadd.f32 %v783, %v850
      %v866 = vadd.f32 %v784, %v854
      %v867 = vadd.f32 %v785, %v842
      %v868 = vadd.f32 %v786, %v846
      %v869 = vadd.f32 %v787, %v850
      %v870 = vadd.f32 %v788, %v854
      %v871 = vadd.f32 %v789, %v842
      %v872 = vadd.f32 %v790, %v846
      %v873 = vadd.f32 %v791, %v850
      %v874 = vadd.f32 %v792, %v854
      %v875 = vadd.f32 %v793, %v842
      %v876 = vadd.f32 %v794, %v846
      %v877 = vadd.f32 %v795, %v850
      %v878 = vadd.f32 %v796, %v854
      %v879 = vadd.f32 %v797, %v842
      %v880 = vadd.f32 %v798, %v846
      %v881 = vadd.f32 %v799, %v850
      %v882 = vadd.f32 %v800, %v854
      %v883 = vadd.f32 %v801, %v842
      %v884 = vadd.f32 %v802, %v846
      %v885 = vadd.f32 %v803, %v850
      %v886 = vadd.f32 %v804, %v854
      %v887 = vadd.f32 %v805, %v842
      %v888 = vadd.f32 %v806, %v846
      %v889 = vadd.f32 %v807, %v850
      %v890 = vadd.f32 %v808, %v854
      %v891 = vadd.f32 %v809, %v842
      %v892 = vadd.f32 %v810, %v846
      %v893 = vadd.f32 %v811, %v850
      %v894 = vadd.f32 %v812, %v854
      %v895 = vadd.f32 %v813, %v842
      %v896 = vadd.f32 %v814, %v846
      %v897 = vadd.f32 %v815, %v850
      %v898 = vadd.f32 %v816, %v854
      %v899 = vadd.f32 %v817, %v842
      %v900 = vadd.f32 %v818, %v846
      %v901 = vadd.f32 %v819, %v850
      %v902 = vadd.f32 %v820, %v854
      %v903 = vadd.f32 %v821, %v842
      %v904 = vadd.f32 %v822, %v846
      %v905 = vadd.f32 %v823, %v850
      %v906 = vadd.f32 %v824, %v854
      %v907 = vadd.f32 %v825, %v842
      %v908 = vadd.f32 %v826, %v846
      %v909 = vadd.f32 %v827, %v850
      %v910 = vadd.f32 %v828, %v854
      %v911 = vadd.f32 %v829, %v842
      %v912 = vadd.f32 %v830, %v846
      %v913 = vadd.f32 %v831, %v850
      %v914 = vadd.f32 %v832, %v854
      %v915 = vadd.f32 %v833, %v842
      %v916 = vadd.f32 %v834, %v846
      %v917 = vadd.f32 %v835, %v850
      %v918 = vadd.f32 %v836, %v854
      %919 = vst [vmem:[#allocation9] sm:$0xff] %v859
      %920 = vst [vmem:[#allocation9 + $0x8] sm:$0xff] %v860
      %921 = vst [vmem:[#allocation9 + $0x10] sm:$0xff] %v861
      %922 = vst [vmem:[#allocation9 + $0x18] sm:$0xff] %v862
      %923 = vst [vmem:[#allocation9 + $0x20] sm:$0xff] %v863
      %924 = vst [vmem:[#allocation9 + $0x28] sm:$0xff] %v864
      %925 = vst [vmem:[#allocation9 + $0x30] sm:$0xff] %v865
      %926 = vst [vmem:[#allocation9 + $0x38] sm:$0xff] %v866
      %927 = vst [vmem:[#allocation9 + $0x40] sm:$0xff] %v867
      %928 = vst [vmem:[#allocation9 + $0x48] sm:$0xff] %v868
      %929 = vst [vmem:[#allocation9 + $0x50] sm:$0xff] %v869
      %930 = vst [vmem:[#allocation9 + $0x58] sm:$0xff] %v870
      %931 = vst [vmem:[#allocation9 + $0x60] sm:$0xff] %v871
      %932 = vst [vmem:[#allocation9 + $0x68] sm:$0xff] %v872
      %933 = vst [vmem:[#allocation9 + $0x70] sm:$0xff] %v873
      %934 = vst [vmem:[#allocation9 + $0x78] sm:$0xff] %v874
      %935 = vst [vmem:[#allocation9 + $0x80] sm:$0xff] %v875
      %936 = vst [vmem:[#allocation9 + $0x88] sm:$0xff] %v876
      %937 = vst [vmem:[#allocation9 + $0x90] sm:$0xff] %v877
      %938 = vst [vmem:[#allocation9 + $0x98] sm:$0xff] %v878
      %939 = vst [vmem:[#allocation9 + $0xa0] sm:$0xff] %v879
      %940 = vst [vmem:[#allocation9 + $0xa8] sm:$0xff] %v880
      %941 = vst [vmem:[#allocation9 + $0xb0] sm:$0xff] %v881
      %942 = vst [vmem:[#allocation9 + $0xb8] sm:$0xff] %v882
      %943 = vst [vmem:[#allocation9 + $0xc0] sm:$0xff] %v883
      %944 = vst [vmem:[#allocation9 + $0xc8] sm:$0xff] %v884
      %945 = vst [vmem:[#allocation9 + $0xd0] sm:$0xff] %v885
      %946 = vst [vmem:[#allocation9 + $0xd8] sm:$0xff] %v886
      %947 = vst [vmem:[#allocation9 + $0xe0] sm:$0xff] %v887
      %948 = vst [vmem:[#allocation9 + $0xe8] sm:$0xff] %v888
      %949 = vst [vmem:[#allocation9 + $0xf0] sm:$0xff] %v889
      %950 = vst [vmem:[#allocation9 + $0xf8] sm:$0xff] %v890
      %951 = vst [vmem:[#allocation9 + $0x100] sm:$0xff] %v891
      %952 = vst [vmem:[#allocation9 + $0x108] sm:$0xff] %v892
      %953 = vst [vmem:[#allocation9 + $0x110] sm:$0xff] %v893
      %954 = vst [vmem:[#allocation9 + $0x118] sm:$0xff] %v894
      %955 = vst [vmem:[#allocation9 + $0x120] sm:$0xff] %v895
      %956 = vst [vmem:[#allocation9 + $0x128] sm:$0xff] %v896
      %957 = vst [vmem:[#allocation9 + $0x130] sm:$0xff] %v897
      %958 = vst [vmem:[#allocation9 + $0x138] sm:$0xff] %v898
      %959 = vst [vmem:[#allocation9 + $0x140] sm:$0xff] %v899
      %960 = vst [vmem:[#allocation9 + $0x148] sm:$0xff] %v900
      %961 = vst [vmem:[#allocation9 + $0x150] sm:$0xff] %v901
      %962 = vst [vmem:[#allocation9 + $0x158] sm:$0xff] %v902
      %963 = vst [vmem:[#allocation9 + $0x160] sm:$0xff] %v903
      %964 = vst [vmem:[#allocation9 + $0x168] sm:$0xff] %v904
      %965 = vst [vmem:[#allocation9 + $0x170] sm:$0xff] %v905
      %966 = vst [vmem:[#allocation9 + $0x178] sm:$0xff] %v906
      %967 = vst [vmem:[#allocation9 + $0x180] sm:$0xff] %v907
      %968 = vst [vmem:[#allocation9 + $0x188] sm:$0xff] %v908
      %969 = vst [vmem:[#allocation9 + $0x190] sm:$0xff] %v909
      %970 = vst [vmem:[#allocation9 + $0x198] sm:$0xff] %v910
      %971 = vst [vmem:[#allocation9 + $0x1a0] sm:$0xff] %v911
      %972 = vst [vmem:[#allocation9 + $0x1a8] sm:$0xff] %v912
      %973 = vst [vmem:[#allocation9 + $0x1b0] sm:$0xff] %v913
      %974 = vst [vmem:[#allocation9 + $0x1b8] sm:$0xff] %v914
      %975 = vst [vmem:[#allocation9 + $0x1c0] sm:$0xff] %v915
      %976 = vst [vmem:[#allocation9 + $0x1c8] sm:$0xff] %v916
      %977 = vst [vmem:[#allocation9 + $0x1d0] sm:$0xff] %v917
      %978 = vst [vmem:[#allocation9 + $0x1d8] sm:$0xff] %v918
    $region33: #{hierarchical_decoder_forward.5} parent=1 // pred_fallthru
      _
    // Predicated region
    $region34: #{hierarchical_decoder_forward.5} parent=1 // pred_check
      _
    $region35: #{hierarchical_decoder_forward.5} parent=1 // pred_check_branch
      %980 = sbr.rel (0) target = $region37
    $region36: #{hierarchical_decoder_forward.5} parent=1 // pred_region
      %s982 = ssub.s32 7680, 7680
      %983 = vsyncadd [#allocation5], %s982
      %s984 = sshll.u32 [#allocation9], 4
      %s985 = int_to_ptr.vmem [resolvable:$true] %s984
      %990 = dma.vmem_to_hbm [thread:$0]  %s985, 7680, %s3, [#allocation5], 512, 512, 32
    $region37: #{hierarchical_decoder_forward.5} parent=1 // pred_fallthru
      _
    // Predicated region
    $region38: #{hierarchical_decoder_forward.5} parent=1 // pred_check
      _
    $region39: #{hierarchical_decoder_forward.5} parent=1 // pred_check_branch
      %992 = sbr.rel (0) target = $region41
    $region40: #{hierarchical_decoder_forward.5} parent=1 // pred_region
      %993 = dma.done [#allocation5], 7680
    $region41: #{hierarchical_decoder_forward.5} parent=1 // pred_fallthru
      _
    %994 = vsyncpa [#allocation4], 1
    %995 = vsyncpa [#allocation7], 1
    %996 = vsyncpa [#allocation5], 1

// kernel: hierarchical_decoder_forward.7
$region0: #{hierarchical_decoder_forward.7}
  #allocation0 [shape = 'u32[]', space=smem, size = 0x4, offset = 0x4, fixed_abs, tag = 'smem constant byte address 0x4 - core index']
  #allocation1 [shape = 'u32[144,128]{1,0:T(1,128)}', space=vmem, size = 0x12000, scoped, tag = 'internal scratch']
  #allocation2 [shape = 'f32[120,128]{1,0:T(8,128)}', space=vmem, size = 0xf000, scoped, tag = 'scratch operand']
  %s0 = inlined_call_operand.hbm [shape: bf16[120,128], index: 0, kind: input, shape index: {}]
  %s1 = inlined_call_operand.hbm [shape: bf16[128,128], index: 1, kind: input, shape index: {}]
  %s2 = inlined_call_operand.hbm [shape: f32[1,128], index: 2, kind: input, shape index: {}]
  %s3 = inlined_call_operand.hbm [shape: f32[120,128], index: 3, kind: output, shape index: {}]
  %s4 = sld [smem:[#allocation0]]
  $region42: #{hierarchical_decoder_forward.7} parent=0
    _
  %s6 = ssub.s32 1, %s4
  %s7 = scalar_select 0, %s6, %s4
  $region1: #{hierarchical_decoder_forward.7} parent=0
    #allocation3 [shape = 'u8[30720]{0}', space=vmem, size = 0x7800, scoped, tag = 'input window, operand 0, single buffered']
    #allocation4 [shape = 's32[1]{0}', space=sflag, size = 0x4, scoped, tag = 'scoped memory for hierarchical_decoder_forward.7']
    #allocation5 [shape = 's32[1]{0}', space=sflag, size = 0x4, scoped, tag = 'scoped memory for hierarchical_decoder_forward.7']
    #allocation6 [shape = 'u8[32768]{0}', space=vmem, size = 0x8000, scoped, tag = 'input window, operand 1, single buffered']
    #allocation7 [shape = 's32[1]{0}', space=sflag, size = 0x4, scoped, tag = 'scoped memory for hierarchical_decoder_forward.7']
    #allocation8 [shape = 'u8[512]{0}', space=vmem, size = 0x400, scoped, tag = 'input window, operand 2, single buffered']
    #allocation9 [shape = 'u8[61440]{0}', space=vmem, size = 0xf000, scoped, tag = 'output window, operand 0, single buffered']
    %8 = vsyncpa [#allocation4], 0
    %9 = vsyncpa [#allocation7], 0
    %10 = vsyncpa [#allocation5], 0
    // Predicated region
    $region2: #{hierarchical_decoder_forward.7} parent=1 // pred_check
      _
    $region3: #{hierarchical_decoder_forward.7} parent=1 // pred_check_branch
      %12 = sbr.rel (0) target = $region5
    $region4: #{hierarchical_decoder_forward.7} parent=1 // pred_region
      %s14 = ssub.s32 960, 960
      %15 = vsyncadd [#allocation4], %s14
      %s16 = sshll.u32 [#allocation3], 4
      %s17 = int_to_ptr.vmem [resolvable:$true] %s16
      %22 = dma.hbm_to_vmem [thread:$0]  %s0, 960, %s17, [#allocation4], 64, 64, 4
    $region5: #{hierarchical_decoder_forward.7} parent=1 // pred_fallthru
      _
    // Predicated region
    $region6: #{hierarchical_decoder_forward.7} parent=1 // pred_check
      _
    $region7: #{hierarchical_decoder_forward.7} parent=1 // pred_check_branch
      %24 = sbr.rel (0) target = $region9
    $region8: #{hierarchical_decoder_forward.7} parent=1 // pred_region
      %s26 = ssub.s32 1024, 1024
      %27 = vsyncadd [#allocation7], %s26
      %s28 = sshll.u32 [#allocation6], 4
      %s29 = int_to_ptr.vmem [resolvable:$true] %s28
      %34 = dma.hbm_to_vmem [thread:$0]  %s1, 1024, %s29, [#allocation7], 64, 64, 4
    $region9: #{hierarchical_decoder_forward.7} parent=1 // pred_fallthru
      _
    // Predicated region
    $region10: #{hierarchical_decoder_forward.7} parent=1 // pred_check
      _
    $region11: #{hierarchical_decoder_forward.7} parent=1 // pred_check_branch
      %36 = sbr.rel (0) target = $region13
    $region12: #{hierarchical_decoder_forward.7} parent=1 // pred_region
      %s38 = ssub.s32 16, 16
      %39 = vsyncadd [#allocation7], %s38
      %s41 = sshll.u32 [#allocation8], 4
      %s42 = int_to_ptr.vmem [resolvable:$true] %s41
      %44 = dma.hbm_to_vmem [thread:$0]  %s2, 16, %s42, [#allocation7]
    $region13: #{hierarchical_decoder_forward.7} parent=1 // pred_fallthru
      _
    // Predicated region
    $region14: #{hierarchical_decoder_forward.7} parent=1 // pred_check
      _
    $region15: #{hierarchical_decoder_forward.7} parent=1 // pred_check_branch
      %46 = sbr.rel (0) target = $region17
    $region16: #{hierarchical_decoder_forward.7} parent=1 // pred_region
      %47 = dma.done [#allocation4], 960
    $region17: #{hierarchical_decoder_forward.7} parent=1 // pred_fallthru
      _
    // Predicated region
    $region18: #{hierarchical_decoder_forward.7} parent=1 // pred_check
      _
    $region19: #{hierarchical_decoder_forward.7} parent=1 // pred_check_branch
      %49 = sbr.rel (0) target = $region21
    $region20: #{hierarchical_decoder_forward.7} parent=1 // pred_region
      %50 = dma.done [#allocation7], 1024
    $region21: #{hierarchical_decoder_forward.7} parent=1 // pred_fallthru
      _
    // Predicated region
    $region22: #{hierarchical_decoder_forward.7} parent=1 // pred_check
      _
    $region23: #{hierarchical_decoder_forward.7} parent=1 // pred_check_branch
      %52 = sbr.rel (0) target = $region25
    $region24: #{hierarchical_decoder_forward.7} parent=1 // pred_region
      %53 = dma.done [#allocation7], 16
    $region25: #{hierarchical_decoder_forward.7} parent=1 // pred_fallthru
      _
    %p55 = scmp.eq.s32.totalorder 0, 0
    // Predicated region
    $region26: #{hierarchical_decoder_forward.7} parent=1 // pred_check
      %p56 = pneg %p55
    $region27: #{hierarchical_decoder_forward.7} parent=1 // pred_check_branch
      %58 = sbr.rel (%p56) target = $region29
    $region28: #{hierarchical_decoder_forward.7} parent=1 // pred_region
      %59 = vst [vmem:[#allocation2] sm:$0xff] 0.0
      %60 = vst [vmem:[#allocation2 + $0x8] sm:$0xff] 0.0
      %61 = vst [vmem:[#allocation2 + $0x10] sm:$0xff] 0.0
      %62 = vst [vmem:[#allocation2 + $0x18] sm:$0xff] 0.0
      %63 = vst [vmem:[#allocation2 + $0x20] sm:$0xff] 0.0
      %64 = vst [vmem:[#allocation2 + $0x28] sm:$0xff] 0.0
      %65 = vst [vmem:[#allocation2 + $0x30] sm:$0xff] 0.0
      %66 = vst [vmem:[#allocation2 + $0x38] sm:$0xff] 0.0
      %67 = vst [vmem:[#allocation2 + $0x40] sm:$0xff] 0.0
      %68 = vst [vmem:[#allocation2 + $0x48] sm:$0xff] 0.0
      %69 = vst [vmem:[#allocation2 + $0x50] sm:$0xff] 0.0
      %70 = vst [vmem:[#allocation2 + $0x58] sm:$0xff] 0.0
      %71 = vst [vmem:[#allocation2 + $0x60] sm:$0xff] 0.0
      %72 = vst [vmem:[#allocation2 + $0x68] sm:$0xff] 0.0
      %73 = vst [vmem:[#allocation2 + $0x70] sm:$0xff] 0.0
    $region29: #{hierarchical_decoder_forward.7} parent=1 // pred_fallthru
      _
    %v74 = vld [vmem:[#allocation2] sm:$0xff]
    %v75 = vld [vmem:[#allocation2 + $0x8] sm:$0xff]
    %v76 = vld [vmem:[#allocation2 + $0x10] sm:$0xff]
    %v77 = vld [vmem:[#allocation2 + $0x18] sm:$0xff]
    %v78 = vld [vmem:[#allocation2 + $0x20] sm:$0xff]
    %v79 = vld [vmem:[#allocation2 + $0x28] sm:$0xff]
    %v80 = vld [vmem:[#allocation2 + $0x30] sm:$0xff]
    %v81 = vld [vmem:[#allocation2 + $0x38] sm:$0xff]
    %v82 = vld [vmem:[#allocation2 + $0x40] sm:$0xff]
    %v83 = vld [vmem:[#allocation2 + $0x48] sm:$0xff]
    %v84 = vld [vmem:[#allocation2 + $0x50] sm:$0xff]
    %v85 = vld [vmem:[#allocation2 + $0x58] sm:$0xff]
    %v86 = vld [vmem:[#allocation2 + $0x60] sm:$0xff]
    %v87 = vld [vmem:[#allocation2 + $0x68] sm:$0xff]
    %v88 = vld [vmem:[#allocation2 + $0x70] sm:$0xff]
    %v89 = vld [vmem:[#allocation3] sm:$0xf]
    %v90 = vld [vmem:[#allocation3 + $0x4] sm:$0xf]
    %v91 = vld [vmem:[#allocation3 + $0x8] sm:$0xf]
    %v92 = vld [vmem:[#allocation3 + $0xc] sm:$0xf]
    %v93 = vld [vmem:[#allocation3 + $0x10] sm:$0xf]
    %v94 = vld [vmem:[#allocation3 + $0x14] sm:$0xf]
    %v95 = vld [vmem:[#allocation3 + $0x18] sm:$0xf]
    %v96 = vld [vmem:[#allocation3 + $0x1c] sm:$0xf]
    %v97 = vld [vmem:[#allocation3 + $0x20] sm:$0xf]
    %v98 = vld [vmem:[#allocation3 + $0x24] sm:$0xf]
    %v99 = vld [vmem:[#allocation3 + $0x28] sm:$0xf]
    %v100 = vld [vmem:[#allocation3 + $0x2c] sm:$0xf]
    %v101 = vld [vmem:[#allocation3 + $0x30] sm:$0xf]
    %v102 = vld [vmem:[#allocation3 + $0x34] sm:$0xf]
    %v103 = vld [vmem:[#allocation3 + $0x38] sm:$0xf]
    %v104 = vld [vmem:[#allocation6] sm:$0xf]
    %v105 = vld [vmem:[#allocation6 + $0x4] sm:$0xf]
    %v106 = vld [vmem:[#allocation6 + $0x8] sm:$0xf]
    %v107 = vld [vmem:[#allocation6 + $0xc] sm:$0xf]
    %v108 = vld [vmem:[#allocation6 + $0x10] sm:$0xf]
    %v109 = vld [vmem:[#allocation6 + $0x14] sm:$0xf]
    %v110 = vld [vmem:[#allocation6 + $0x18] sm:$0xf]
    %v111 = vld [vmem:[#allocation6 + $0x1c] sm:$0xf]
    %v112 = vld [vmem:[#allocation6 + $0x20] sm:$0xf]
    %v113 = vld [vmem:[#allocation6 + $0x24] sm:$0xf]
    %v114 = vld [vmem:[#allocation6 + $0x28] sm:$0xf]
    %v115 = vld [vmem:[#allocation6 + $0x2c] sm:$0xf]
    %v116 = vld [vmem:[#allocation6 + $0x30] sm:$0xf]
    %v117 = vld [vmem:[#allocation6 + $0x34] sm:$0xf]
    %v118 = vld [vmem:[#allocation6 + $0x38] sm:$0xf]
    %v119 = vld [vmem:[#allocation6 + $0x3c] sm:$0xf]
    %v135 = vunpack.c.l.b16 %v89
    %v136 = vunpack.c.l.b16 %v90
    %v137 = vunpack.c.l.b16 %v91
    %v138 = vunpack.c.l.b16 %v92
    %v139 = vunpack.c.l.b16 %v93
    %v140 = vunpack.c.l.b16 %v94
    %v141 = vunpack.c.l.b16 %v95
    %v142 = vunpack.c.l.b16 %v96
    %v143 = vunpack.c.l.b16 %v97
    %v144 = vunpack.c.l.b16 %v98
    %v145 = vunpack.c.l.b16 %v99
    %v146 = vunpack.c.l.b16 %v100
    %v147 = vunpack.c.l.b16 %v101
    %v148 = vunpack.c.l.b16 %v102
    %v149 = vunpack.c.l.b16 %v103
    %v150 = vpack.c.b16 %v136, %v135
    %v151 = vpack.c.b16 %v138, %v137
    %v152 = vpack.c.b16 %v140, %v139
    %v153 = vpack.c.b16 %v142, %v141
    %v154 = vpack.c.b16 %v144, %v143
    %v155 = vpack.c.b16 %v146, %v145
    %v156 = vpack.c.b16 %v148, %v147
    %v157 = vpack.c.b16 %v149, %v149
    %v182 = vunpack.c.l.b16 %v104
    %v183 = vunpack.c.l.b16 %v105
    %v184 = vunpack.c.l.b16 %v106
    %v185 = vunpack.c.l.b16 %v107
    %v186 = vunpack.c.l.b16 %v108
    %v187 = vunpack.c.l.b16 %v109
    %v188 = vunpack.c.l.b16 %v110
    %v189 = vunpack.c.l.b16 %v111
    %v190 = vunpack.c.l.b16 %v112
    %v191 = vunpack.c.l.b16 %v113
    %v192 = vunpack.c.l.b16 %v114
    %v193 = vunpack.c.l.b16 %v115
    %v194 = vunpack.c.l.b16 %v116
    %v195 = vunpack.c.l.b16 %v117
    %v196 = vunpack.c.l.b16 %v118
    %v197 = vunpack.c.l.b16 %v119
    %v198 = vpack.c.b16 %v183, %v182
    %v199 = vpack.c.b16 %v185, %v184
    %v200 = vpack.c.b16 %v187, %v186
    %v201 = vpack.c.b16 %v189, %v188
    %v202 = vpack.c.b16 %v191, %v190
    %v203 = vpack.c.b16 %v193, %v192
    %v204 = vpack.c.b16 %v195, %v194
    %v205 = vpack.c.b16 %v197, %v196
    %214 = vmatprep.subr.bf16.mxu0 0
    %215 = vmatpush1.bf16.msra.mxu0 %v198
    %216 = vmatprep.subr.bf16.mxu0 0
    %217 = vmatpush1.bf16.msra.mxu0 %v199
    %218 = vmatprep.subr.bf16.mxu0 0
    %219 = vmatpush1.bf16.msra.mxu0 %v200
    %220 = vmatprep.subr.bf16.mxu0 0
    %221 = vmatpush1.bf16.msra.mxu0 %v201
    %222 = vmatprep.subr.bf16.mxu0 0
    %223 = vmatpush1.bf16.msra.mxu0 %v202
    %224 = vmatprep.subr.bf16.mxu0 0
    %225 = vmatpush1.bf16.msra.mxu0 %v203
    %226 = vmatprep.subr.bf16.mxu0 0
    %227 = vmatpush1.bf16.msra.mxu0 %v204
    %228 = vmatprep.subr.bf16.mxu0 0
    %229 = vmatpush1.bf16.msra.mxu0 %v205
    %230 = vmatprep.subr.bf16.mxu0 0
    %231 = vmatpush1.bf16.msra.mxu0 0
    %232 = vmatprep.subr.bf16.mxu0 0
    %233 = vmatpush1.bf16.msra.mxu0 0
    %234 = vmatprep.subr.bf16.mxu0 0
    %235 = vmatpush1.bf16.msra.mxu0 0
    %236 = vmatprep.subr.bf16.mxu0 0
    %237 = vmatpush1.bf16.msra.mxu0 0
    %238 = vmatprep.subr.bf16.mxu0 0
    %239 = vmatpush1.bf16.msra.mxu0 0
    %240 = vmatprep.subr.bf16.mxu0 0
    %241 = vmatpush1.bf16.msra.mxu0 0
    %242 = vmatprep.subr.bf16.mxu0 0
    %243 = vmatpush1.bf16.msra.mxu0 0
    %244 = vmatprep.subr.bf16.mxu0 0
    %245 = vmatpush1.bf16.msra.mxu0 0
    %246 = vmatprep.mubr.bf16.mxu0 0
    %247 = vmatmul.mubr.bf16.gmra.mrb[0].mxu0 %v150
    %v248 = vpop.f32.mrb[0].mxu0
    %v249 = vadd.f32 0.0, %v248
    %v250 = vpop.f32.mrb[0].mxu0
    %v251 = vpop.f32.mrb[0].mxu0
    %v252 = vadd.f32 0.0, %v251
    %v253 = vpop.f32.mrb[0].mxu0
    %254 = vmatprep.mubr.bf16.mxu0 0
    %255 = vmatmul.mubr.bf16.gmra.mrb[0].mxu0 %v151
    %v256 = vpop.f32.mrb[0].mxu0
    %v257 = vadd.f32 0.0, %v256
    %v258 = vpop.f32.mrb[0].mxu0
    %v259 = vpop.f32.mrb[0].mxu0
    %v260 = vadd.f32 0.0, %v259
    %v261 = vpop.f32.mrb[0].mxu0
    %262 = vmatprep.mubr.bf16.mxu0 0
    %263 = vmatmul.mubr.bf16.gmra.mrb[0].mxu0 %v152
    %v264 = vpop.f32.mrb[0].mxu0
    %v265 = vadd.f32 0.0, %v264
    %v266 = vpop.f32.mrb[0].mxu0
    %v267 = vpop.f32.mrb[0].mxu0
    %v268 = vadd.f32 0.0, %v267
    %v269 = vpop.f32.mrb[0].mxu0
    %270 = vmatprep.mubr.bf16.mxu0 0
    %271 = vmatmul.mubr.bf16.gmra.mrb[0].mxu0 %v153
    %v272 = vpop.f32.mrb[0].mxu0
    %v273 = vadd.f32 0.0, %v272
    %v274 = vpop.f32.mrb[0].mxu0
    %v275 = vpop.f32.mrb[0].mxu0
    %v276 = vadd.f32 0.0, %v275
    %v277 = vpop.f32.mrb[0].mxu0
    %278 = vmatprep.mubr.bf16.mxu0 0
    %279 = vmatmul.mubr.bf16.gmra.mrb[0].mxu0 %v154
    %v280 = vpop.f32.mrb[0].mxu0
    %v281 = vadd.f32 0.0, %v280
    %v282 = vpop.f32.mrb[0].mxu0
    %v283 = vpop.f32.mrb[0].mxu0
    %v284 = vadd.f32 0.0, %v283
    %v285 = vpop.f32.mrb[0].mxu0
    %286 = vmatprep.mubr.bf16.mxu0 0
    %287 = vmatmul.mubr.bf16.gmra.mrb[0].mxu0 %v155
    %v288 = vpop.f32.mrb[0].mxu0
    %v289 = vadd.f32 0.0, %v288
    %v290 = vpop.f32.mrb[0].mxu0
    %v291 = vpop.f32.mrb[0].mxu0
    %v292 = vadd.f32 0.0, %v291
    %v293 = vpop.f32.mrb[0].mxu0
    %294 = vmatprep.mubr.bf16.mxu0 0
    %295 = vmatmul.mubr.bf16.gmra.mrb[0].mxu0 %v156
    %v296 = vpop.f32.mrb[0].mxu0
    %v297 = vadd.f32 0.0, %v296
    %v298 = vpop.f32.mrb[0].mxu0
    %v299 = vpop.f32.mrb[0].mxu0
    %v300 = vadd.f32 0.0, %v299
    %v301 = vpop.f32.mrb[0].mxu0
    %302 = vmatprep.mubr.bf16.mxu0 0
    %303 = vmatmul.mubr.bf16.gmra.mrb[0].mxu0 %v157
    %v304 = vpop.f32.mrb[0].mxu0
    %v305 = vadd.f32 0.0, %v304
    %v306 = vpop.f32.mrb[0].mxu0
    %v307 = vpop.f32.mrb[0].mxu0
    %v308 = vpop.f32.mrb[0].mxu0
    %309 = vdwg.mxu0
    %v310 = vadd.f32 %v74, %v249
    %v311 = vadd.f32 %v75, %v252
    %v312 = vadd.f32 %v76, %v257
    %v313 = vadd.f32 %v77, %v260
    %v314 = vadd.f32 %v78, %v265
    %v315 = vadd.f32 %v79, %v268
    %v316 = vadd.f32 %v80, %v273
    %v317 = vadd.f32 %v81, %v276
    %v318 = vadd.f32 %v82, %v281
    %v319 = vadd.f32 %v83, %v284
    %v320 = vadd.f32 %v84, %v289
    %v321 = vadd.f32 %v85, %v292
    %v322 = vadd.f32 %v86, %v297
    %v323 = vadd.f32 %v87, %v300
    %v324 = vadd.f32 %v88, %v305
    %325 = vst [vmem:[#allocation2] sm:$0xff] %v310
    %326 = vst [vmem:[#allocation2 + $0x8] sm:$0xff] %v311
    %327 = vst [vmem:[#allocation2 + $0x10] sm:$0xff] %v312
    %328 = vst [vmem:[#allocation2 + $0x18] sm:$0xff] %v313
    %329 = vst [vmem:[#allocation2 + $0x20] sm:$0xff] %v314
    %330 = vst [vmem:[#allocation2 + $0x28] sm:$0xff] %v315
    %331 = vst [vmem:[#allocation2 + $0x30] sm:$0xff] %v316
    %332 = vst [vmem:[#allocation2 + $0x38] sm:$0xff] %v317
    %333 = vst [vmem:[#allocation2 + $0x40] sm:$0xff] %v318
    %334 = vst [vmem:[#allocation2 + $0x48] sm:$0xff] %v319
    %335 = vst [vmem:[#allocation2 + $0x50] sm:$0xff] %v320
    %336 = vst [vmem:[#allocation2 + $0x58] sm:$0xff] %v321
    %337 = vst [vmem:[#allocation2 + $0x60] sm:$0xff] %v322
    %338 = vst [vmem:[#allocation2 + $0x68] sm:$0xff] %v323
    %339 = vst [vmem:[#allocation2 + $0x70] sm:$0xff] %v324
    // Predicated region
    $region30: #{hierarchical_decoder_forward.7} parent=1 // pred_check
      %p340 = pneg %p55
    $region31: #{hierarchical_decoder_forward.7} parent=1 // pred_check_branch
      %342 = sbr.rel (%p340) target = $region33
    $region32: #{hierarchical_decoder_forward.7} parent=1 // pred_region
      %v343 = vld [vmem:[#allocation2] sm:$0xff]
      %v344 = vld [vmem:[#allocation2 + $0x8] sm:$0xff]
      %v345 = vld [vmem:[#allocation2 + $0x10] sm:$0xff]
      %v346 = vld [vmem:[#allocation2 + $0x18] sm:$0xff]
      %v347 = vld [vmem:[#allocation2 + $0x20] sm:$0xff]
      %v348 = vld [vmem:[#allocation2 + $0x28] sm:$0xff]
      %v349 = vld [vmem:[#allocation2 + $0x30] sm:$0xff]
      %v350 = vld [vmem:[#allocation2 + $0x38] sm:$0xff]
      %v351 = vld [vmem:[#allocation2 + $0x40] sm:$0xff]
      %v352 = vld [vmem:[#allocation2 + $0x48] sm:$0xff]
      %v353 = vld [vmem:[#allocation2 + $0x50] sm:$0xff]
      %v354 = vld [vmem:[#allocation2 + $0x58] sm:$0xff]
      %v355 = vld [vmem:[#allocation2 + $0x60] sm:$0xff]
      %v356 = vld [vmem:[#allocation2 + $0x68] sm:$0xff]
      %v357 = vld [vmem:[#allocation2 + $0x70] sm:$0xff]
      %v358 = vld [vmem:[#allocation8] sm:$0x1]
      %v360 = vlaneseq
      %v361 = vshrl.u32 %v360, 7
      %v362 = vsub.s32 0, %v361
      %v363 = vrot.slane %v358, %v362
      %v365 = vadd.f32 %v343, %v363
      %v366 = vadd.f32 %v344, %v363
      %v367 = vadd.f32 %v345, %v363
      %v368 = vadd.f32 %v346, %v363
      %v369 = vadd.f32 %v347, %v363
      %v370 = vadd.f32 %v348, %v363
      %v371 = vadd.f32 %v349, %v363
      %v372 = vadd.f32 %v350, %v363
      %v373 = vadd.f32 %v351, %v363
      %v374 = vadd.f32 %v352, %v363
      %v375 = vadd.f32 %v353, %v363
      %v376 = vadd.f32 %v354, %v363
      %v377 = vadd.f32 %v355, %v363
      %v378 = vadd.f32 %v356, %v363
      %v379 = vadd.f32 %v357, %v363
      %380 = vst [vmem:[#allocation9] sm:$0xff] %v365
      %381 = vst [vmem:[#allocation9 + $0x8] sm:$0xff] %v366
      %382 = vst [vmem:[#allocation9 + $0x10] sm:$0xff] %v367
      %383 = vst [vmem:[#allocation9 + $0x18] sm:$0xff] %v368
      %384 = vst [vmem:[#allocation9 + $0x20] sm:$0xff] %v369
      %385 = vst [vmem:[#allocation9 + $0x28] sm:$0xff] %v370
      %386 = vst [vmem:[#allocation9 + $0x30] sm:$0xff] %v371
      %387 = vst [vmem:[#allocation9 + $0x38] sm:$0xff] %v372
      %388 = vst [vmem:[#allocation9 + $0x40] sm:$0xff] %v373
      %389 = vst [vmem:[#allocation9 + $0x48] sm:$0xff] %v374
      %390 = vst [vmem:[#allocation9 + $0x50] sm:$0xff] %v375
      %391 = vst [vmem:[#allocation9 + $0x58] sm:$0xff] %v376
      %392 = vst [vmem:[#allocation9 + $0x60] sm:$0xff] %v377
      %393 = vst [vmem:[#allocation9 + $0x68] sm:$0xff] %v378
      %394 = vst [vmem:[#allocation9 + $0x70] sm:$0xff] %v379
    $region33: #{hierarchical_decoder_forward.7} parent=1 // pred_fallthru
      _
    // Predicated region
    $region34: #{hierarchical_decoder_forward.7} parent=1 // pred_check
      _
    $region35: #{hierarchical_decoder_forward.7} parent=1 // pred_check_branch
      %396 = sbr.rel (0) target = $region37
    $region36: #{hierarchical_decoder_forward.7} parent=1 // pred_region
      %s398 = ssub.s32 1920, 1920
      %399 = vsyncadd [#allocation5], %s398
      %s400 = sshll.u32 [#allocation9], 4
      %s401 = int_to_ptr.vmem [resolvable:$true] %s400
      %406 = dma.vmem_to_hbm [thread:$0]  %s401, 1920, %s3, [#allocation5], 128, 128, 8
    $region37: #{hierarchical_decoder_forward.7} parent=1 // pred_fallthru
      _
    // Predicated region
    $region38: #{hierarchical_decoder_forward.7} parent=1 // pred_check
      _
    $region39: #{hierarchical_decoder_forward.7} parent=1 // pred_check_branch
      %408 = sbr.rel (0) target = $region41
    $region40: #{hierarchical_decoder_forward.7} parent=1 // pred_region
      %409 = dma.done [#allocation5], 1920
    $region41: #{hierarchical_decoder_forward.7} parent=1 // pred_fallthru
      _
    %410 = vsyncpa [#allocation4], 1
    %411 = vsyncpa [#allocation7], 1
    %412 = vsyncpa [#allocation5], 1

// kernel: hierarchical_decoder_forward.6
$region0: #{hierarchical_decoder_forward.6}
  #allocation0 [shape = 'u32[]', space=smem, size = 0x4, offset = 0x4, fixed_abs, tag = 'smem constant byte address 0x4 - core index']
  #allocation1 [shape = 'u32[144,128]{1,0:T(1,128)}', space=vmem, size = 0x12000, scoped, tag = 'internal scratch']
  #allocation2 [shape = 'f32[8,128]{1,0:T(8,128)}', space=vmem, size = 0x1000, scoped, tag = 'scratch operand']
  #allocation3 [shape = 'f32[8,128]{1,0:T(8,128)}', space=vmem, size = 0x1000, scoped, tag = 'scratch operand']
  #allocation4 [shape = 'f32[8,128]{1,0:T(8,128)}', space=vmem, size = 0x1000, scoped, tag = 'scratch operand']
  %s0 = inlined_call_operand.hbm [shape: f32[3,5,8,512], index: 0, kind: input, shape index: {}]
  %s1 = inlined_call_operand.hbm [shape: f32[8,16,128], index: 1, kind: input, shape index: {}]
  %s2 = inlined_call_operand.hbm [shape: f32[8,16,128], index: 2, kind: input, shape index: {}]
  %s3 = inlined_call_operand.hbm [shape: bf16[128,128], index: 3, kind: input, shape index: {}]
  %s4 = inlined_call_operand.hbm [shape: f32[1,128], index: 4, kind: input, shape index: {}]
  %s5 = inlined_call_operand.hbm [shape: bf16[128,512], index: 5, kind: input, shape index: {}]
  %s6 = inlined_call_operand.hbm [shape: bf16[128,512], index: 6, kind: input, shape index: {}]
  %s7 = inlined_call_operand.hbm [shape: f32[1,512], index: 7, kind: input, shape index: {}]
  %s8 = inlined_call_operand.hbm [shape: f32[128,128], index: 8, kind: input, shape index: {}]
  %s9 = inlined_call_operand.hbm [shape: f32[1,128], index: 9, kind: input, shape index: {}]
  %s10 = inlined_call_operand.hbm [shape: bf16[128,512], index: 10, kind: input, shape index: {}]
  %s11 = inlined_call_operand.hbm [shape: bf16[3,5,8,128], index: 11, kind: output, shape index: {0}]
  %s12 = inlined_call_operand.hbm [shape: f32[3,8,128], index: 12, kind: output, shape index: {1}]
  %s13 = inlined_call_operand.hbm [shape: f32[3,8,16], index: 13, kind: output, shape index: {2}]
  %14 = xla_tuple %s11, %s12, %s13
  %s15 = sld [smem:[#allocation0]]
  $region145: #{hierarchical_decoder_forward.6} parent=0
    _
  %s17 = ssub.s32 1, %s15
  %s18 = scalar_select 0, %s17, %s15
  $region1: #{hierarchical_decoder_forward.6} parent=0
    #allocation5 [shape = 'u8[163840]{0}', space=vmem, size = 0x28000, scoped, tag = 'input window, operand 0']
    #allocation6 [shape = 's32[2]{0}', space=sflag, size = 0x8, scoped, tag = 'scoped memory for hierarchical_decoder_forward.6']
    #allocation7 [shape = 's32[2]{0}', space=sflag, size = 0x8, scoped, tag = 'scoped memory for hierarchical_decoder_forward.6']
    #allocation8 [shape = 'u8[65536]{0}', space=vmem, size = 0x10000, scoped, tag = 'input window, operand 1, single buffered']
    #allocation9 [shape = 's32[1]{0}', space=sflag, size = 0x4, scoped, tag = 'scoped memory for hierarchical_decoder_forward.6']
    #allocation10 [shape = 'u8[65536]{0}', space=vmem, size = 0x10000, scoped, tag = 'input window, operand 2, single buffered']
    #allocation11 [shape = 'u8[32768]{0}', space=vmem, size = 0x8000, scoped, tag = 'input window, operand 3, single buffered']
    #allocation12 [shape = 's32[1]{0}', space=sflag, size = 0x4, scoped, tag = 'scoped memory for hierarchical_decoder_forward.6']
    #allocation13 [shape = 'u8[512]{0}', space=vmem, size = 0x400, scoped, tag = 'input window, operand 4, single buffered']
    #allocation14 [shape = 'u8[131072]{0}', space=vmem, size = 0x20000, scoped, tag = 'input window, operand 5, single buffered']
    #allocation15 [shape = 's32[1]{0}', space=sflag, size = 0x4, scoped, tag = 'scoped memory for hierarchical_decoder_forward.6']
    #allocation16 [shape = 'u8[131072]{0}', space=vmem, size = 0x20000, scoped, tag = 'input window, operand 6, single buffered']
    #allocation17 [shape = 'u8[2048]{0}', space=vmem, size = 0x800, scoped, tag = 'input window, operand 7, single buffered']
    #allocation18 [shape = 's32[1]{0}', space=sflag, size = 0x4, scoped, tag = 'scoped memory for hierarchical_decoder_forward.6']
    #allocation19 [shape = 'u8[65536]{0}', space=vmem, size = 0x10000, scoped, tag = 'input window, operand 8, single buffered']
    #allocation20 [shape = 'u8[512]{0}', space=vmem, size = 0x400, scoped, tag = 'input window, operand 9, single buffered']
    #allocation21 [shape = 's32[1]{0}', space=sflag, size = 0x4, scoped, tag = 'scoped memory for hierarchical_decoder_forward.6']
    #allocation22 [shape = 'u8[131072]{0}', space=vmem, size = 0x20000, scoped, tag = 'input window, operand 10, single buffered']
    #allocation23 [shape = 'u8[20480]{0}', space=vmem, size = 0x5000, scoped, tag = 'output window, operand 0']
    #allocation24 [shape = 'u8[8192]{0}', space=vmem, size = 0x2000, scoped, tag = 'output window, operand 1']
    #allocation25 [shape = 's32[2]{0}', space=sflag, size = 0x8, scoped, tag = 'scoped memory for hierarchical_decoder_forward.6']
    #allocation26 [shape = 'u8[8192]{0}', space=vmem, size = 0x2000, scoped, tag = 'output window, operand 2']
    %19 = vsyncpa [#allocation6], 0
    %s20 = scalar_lea.sflag [#allocation6], 1
    %21 = vsyncpa %s20, 0
    %22 = vsyncpa [#allocation9], 0
    %23 = vsyncpa [#allocation12], 0
    %24 = vsyncpa [#allocation15], 0
    %25 = vsyncpa [#allocation18], 0
    %26 = vsyncpa [#allocation21], 0
    %27 = vsyncpa [#allocation7], 0
    %s28 = scalar_lea.sflag [#allocation7], 1
    %29 = vsyncpa %s28, 0
    %30 = vsyncpa [#allocation25], 0
    %s31 = scalar_lea.sflag [#allocation25], 1
    %32 = vsyncpa %s31, 0
    loop: start=0, step=1, limit=5
    $region2: #{hierarchical_decoder_forward.6} parent=1 // loop_pre_header
      _
    $region3: #{hierarchical_decoder_forward.6} parent=1 // loop_header
      %s34 = sphi 0, %s38
      %p35 = scmp.ge.s32.totalorder %s34, 5
      %s41 = sphi 0, %s53
      %s42 = sphi 0, %s49
      %s43 = sphi 0, %s41
      %s44 = sphi 0, %s42
      %s45 = sphi 0, %s43
      %s46 = sphi 0, %s44
      %s58 = sphi 0, %s60
      %s61 = sphi 0, %s58
      %s62 = sphi 0, %s61
      %s78 = sphi 0, %s62
      %s84 = sphi 0, %s86
      %s87 = sphi 0, %s84
      %s88 = sphi 0, %s87
      %s104 = sphi 0, %s88
      %s110 = sphi 0, %s112
      %s113 = sphi 0, %s110
      %s114 = sphi 0, %s113
      %s130 = sphi 0, %s114
      %s134 = sphi 0, %s134
      %s136 = sphi 0, %s134
      %s137 = sphi 0, %s136
      %s151 = sphi 0, %s137
      %s155 = sphi 0, %s155
      %s157 = sphi 0, %s155
      %s158 = sphi 0, %s157
      %s172 = sphi 0, %s158
      %s176 = sphi 0, %s176
      %s178 = sphi 0, %s176
      %s179 = sphi 0, %s178
      %s193 = sphi 0, %s179
      %s197 = sphi 0, %s197
      %s199 = sphi 0, %s197
      %s200 = sphi 0, %s199
      %s214 = sphi 0, %s200
      %s218 = sphi 0, %s218
      %s220 = sphi 0, %s218
      %s221 = sphi 0, %s220
      %s235 = sphi 0, %s221
      %s239 = sphi 0, %s239
      %s241 = sphi 0, %s239
      %s242 = sphi 0, %s241
      %s256 = sphi 0, %s242
      %s260 = sphi 0, %s260
      %s262 = sphi 0, %s260
      %s263 = sphi 0, %s262
      %s277 = sphi 0, %s263
      %s281 = sphi 0, %s281
      %s283 = sphi 0, %s281
      %s284 = sphi 0, %s283
      %s298 = sphi 0, %s284
      %s306 = sphi 0, %s308
      %s309 = sphi 0, %s306
      %s310 = sphi 0, %s309
      %s326 = sphi 0, %s310
      %s334 = sphi 0, %s336
      %s337 = sphi 0, %s334
      %s338 = sphi 0, %s337
      %s354 = sphi 0, %s338
      %s362 = sphi 0, %s364
      %s365 = sphi 0, %s362
      %s366 = sphi 0, %s365
      %s382 = sphi 0, %s366
    $region4: #{hierarchical_decoder_forward.6} parent=1 // loop_header_branch
      %37 = sbr.rel (%p35) target = $region8
    $region5: #{hierarchical_decoder_forward.6} parent=1 // loop_body
      %s39 = ssub.s32 %s34, 1
      %s40 = ssub.s32 %s34, 2
      %s47 = sadd.s32 1, %s42
      %p48 = scmp.ge.s32.totalorder %s47, 3
      %s49 = scalar_select %p48, 0, %s47
      %s50 = sadd.s32 1, %s41
      %s51 = scalar_select %p48, %s50, %s41
      %p52 = scmp.ge.s32.totalorder %s51, 1
      %s53 = scalar_select %p52, 0, %s51
      %s54 = ssub.s32 %s42, %s49
      %s55 = ssub.s32 %s41, %s53
      %s56 = sor.u32 %s54, %s55
      %p57 = scmp.eq.s32.totalorder %s56, 0
      %s59 = sadd.s32 %s58, 1
      %s60 = scalar_select %p57, %s58, %s59
      %p63 = pneg %p57
      %p64 = scmp.eq.s32.totalorder %s34, 2
      %p65 = por %p63, %p64
      %p66 = scmp.ne.s32.totalorder %s58, %s61
      %p67 = scmp.eq.s32.totalorder %s34, 0
      %p68 = por %p66, %p67
      %p69 = scmp.ne.s32.totalorder %s58, %s61
      %p70 = scmp.eq.s32.totalorder %s39, 2
      %p71 = por %p69, %p70
      %p72 = scmp.ne.s32.totalorder %s61, %s62
      %p73 = scmp.eq.s32.totalorder %s39, 0
      %p74 = por %p72, %p73
      %p75 = scmp.ne.s32.totalorder %s61, %s62
      %p76 = scmp.eq.s32.totalorder %s40, 2
      %p77 = por %p75, %p76
      %p79 = scmp.ne.s32.totalorder %s62, %s78
      %p80 = scmp.eq.s32.totalorder %s40, 0
      %p81 = por %p79, %p80
      %s82 = ssub.s32 %s41, %s53
      %p83 = scmp.eq.s32.totalorder %s82, 0
      %s85 = sadd.s32 %s84, 1
      %s86 = scalar_select %p83, %s84, %s85
      %p89 = pneg %p83
      %p90 = scmp.eq.s32.totalorder %s34, 2
      %p91 = por %p89, %p90
      %p92 = scmp.ne.s32.totalorder %s84, %s87
      %p93 = scmp.eq.s32.totalorder %s34, 0
      %p94 = por %p92, %p93
      %p95 = scmp.ne.s32.totalorder %s84, %s87
      %p96 = scmp.eq.s32.totalorder %s39, 2
      %p97 = por %p95, %p96
      %p98 = scmp.ne.s32.totalorder %s87, %s88
      %p99 = scmp.eq.s32.totalorder %s39, 0
      %p100 = por %p98, %p99
      %p101 = scmp.ne.s32.totalorder %s87, %s88
      %p102 = scmp.eq.s32.totalorder %s40, 2
      %p103 = por %p101, %p102
      %p105 = scmp.ne.s32.totalorder %s88, %s104
      %p106 = scmp.eq.s32.totalorder %s40, 0
      %p107 = por %p105, %p106
      %s108 = ssub.s32 %s41, %s53
      %p109 = scmp.eq.s32.totalorder %s108, 0
      %s111 = sadd.s32 %s110, 1
      %s112 = scalar_select %p109, %s110, %s111
      %p115 = pneg %p109
      %p116 = scmp.eq.s32.totalorder %s34, 2
      %p117 = por %p115, %p116
      %p118 = scmp.ne.s32.totalorder %s110, %s113
      %p119 = scmp.eq.s32.totalorder %s34, 0
      %p120 = por %p118, %p119
      %p121 = scmp.ne.s32.totalorder %s110, %s113
      %p122 = scmp.eq.s32.totalorder %s39, 2
      %p123 = por %p121, %p122
      %p124 = scmp.ne.s32.totalorder %s113, %s114
      %p125 = scmp.eq.s32.totalorder %s39, 0
      %p126 = por %p124, %p125
      %p127 = scmp.ne.s32.totalorder %s113, %s114
      %p128 = scmp.eq.s32.totalorder %s40, 2
      %p129 = por %p127, %p128
      %p131 = scmp.ne.s32.totalorder %s114, %s130
      %p132 = scmp.eq.s32.totalorder %s40, 0
      %p133 = por %p131, %p132
      %s135 = sadd.s32 %s134, 1
      %p138 = scmp.eq.s32.totalorder %s34, 2
      %p139 = scmp.ne.s32.totalorder %s134, %s136
      %p140 = scmp.eq.s32.totalorder %s34, 0
      %p141 = por %p139, %p140
      %p142 = scmp.ne.s32.totalorder %s134, %s136
      %p143 = scmp.eq.s32.totalorder %s39, 2
      %p144 = por %p142, %p143
      %p145 = scmp.ne.s32.totalorder %s136, %s137
      %p146 = scmp.eq.s32.totalorder %s39, 0
      %p147 = por %p145, %p146
      %p148 = scmp.ne.s32.totalorder %s136, %s137
      %p149 = scmp.eq.s32.totalorder %s40, 2
      %p150 = por %p148, %p149
      %p152 = scmp.ne.s32.totalorder %s137, %s151
      %p153 = scmp.eq.s32.totalorder %s40, 0
      %p154 = por %p152, %p153
      %s156 = sadd.s32 %s155, 1
      %p159 = scmp.eq.s32.totalorder %s34, 2
      %p160 = scmp.ne.s32.totalorder %s155, %s157
      %p161 = scmp.eq.s32.totalorder %s34, 0
      %p162 = por %p160, %p161
      %p163 = scmp.ne.s32.totalorder %s155, %s157
      %p164 = scmp.eq.s32.totalorder %s39, 2
      %p165 = por %p163, %p164
      %p166 = scmp.ne.s32.totalorder %s157, %s158
      %p167 = scmp.eq.s32.totalorder %s39, 0
      %p168 = por %p166, %p167
      %p169 = scmp.ne.s32.totalorder %s157, %s158
      %p170 = scmp.eq.s32.totalorder %s40, 2
      %p171 = por %p169, %p170
      %p173 = scmp.ne.s32.totalorder %s158, %s172
      %p174 = scmp.eq.s32.totalorder %s40, 0
      %p175 = por %p173, %p174
      %s177 = sadd.s32 %s176, 1
      %p180 = scmp.eq.s32.totalorder %s34, 2
      %p181 = scmp.ne.s32.totalorder %s176, %s178
      %p182 = scmp.eq.s32.totalorder %s34, 0
      %p183 = por %p181, %p182
      %p184 = scmp.ne.s32.totalorder %s176, %s178
      %p185 = scmp.eq.s32.totalorder %s39, 2
      %p186 = por %p184, %p185
      %p187 = scmp.ne.s32.totalorder %s178, %s179
      %p188 = scmp.eq.s32.totalorder %s39, 0
      %p189 = por %p187, %p188
      %p190 = scmp.ne.s32.totalorder %s178, %s179
      %p191 = scmp.eq.s32.totalorder %s40, 2
      %p192 = por %p190, %p191
      %p194 = scmp.ne.s32.totalorder %s179, %s193
      %p195 = scmp.eq.s32.totalorder %s40, 0
      %p196 = por %p194, %p195
      %s198 = sadd.s32 %s197, 1
      %p201 = scmp.eq.s32.totalorder %s34, 2
      %p202 = scmp.ne.s32.totalorder %s197, %s199
      %p203 = scmp.eq.s32.totalorder %s34, 0
      %p204 = por %p202, %p203
      %p205 = scmp.ne.s32.totalorder %s197, %s199
      %p206 = scmp.eq.s32.totalorder %s39, 2
      %p207 = por %p205, %p206
      %p208 = scmp.ne.s32.totalorder %s199, %s200
      %p209 = scmp.eq.s32.totalorder %s39, 0
      %p210 = por %p208, %p209
      %p211 = scmp.ne.s32.totalorder %s199, %s200
      %p212 = scmp.eq.s32.totalorder %s40, 2
      %p213 = por %p211, %p212
      %p215 = scmp.ne.s32.totalorder %s200, %s214
      %p216 = scmp.eq.s32.totalorder %s40, 0
      %p217 = por %p215, %p216
      %s219 = sadd.s32 %s218, 1
      %p222 = scmp.eq.s32.totalorder %s34, 2
      %p223 = scmp.ne.s32.totalorder %s218, %s220
      %p224 = scmp.eq.s32.totalorder %s34, 0
      %p225 = por %p223, %p224
      %p226 = scmp.ne.s32.totalorder %s218, %s220
      %p227 = scmp.eq.s32.totalorder %s39, 2
      %p228 = por %p226, %p227
      %p229 = scmp.ne.s32.totalorder %s220, %s221
      %p230 = scmp.eq.s32.totalorder %s39, 0
      %p231 = por %p229, %p230
      %p232 = scmp.ne.s32.totalorder %s220, %s221
      %p233 = scmp.eq.s32.totalorder %s40, 2
      %p234 = por %p232, %p233
      %p236 = scmp.ne.s32.totalorder %s221, %s235
      %p237 = scmp.eq.s32.totalorder %s40, 0
      %p238 = por %p236, %p237
      %s240 = sadd.s32 %s239, 1
      %p243 = scmp.eq.s32.totalorder %s34, 2
      %p244 = scmp.ne.s32.totalorder %s239, %s241
      %p245 = scmp.eq.s32.totalorder %s34, 0
      %p246 = por %p244, %p245
      %p247 = scmp.ne.s32.totalorder %s239, %s241
      %p248 = scmp.eq.s32.totalorder %s39, 2
      %p249 = por %p247, %p248
      %p250 = scmp.ne.s32.totalorder %s241, %s242
      %p251 = scmp.eq.s32.totalorder %s39, 0
      %p252 = por %p250, %p251
      %p253 = scmp.ne.s32.totalorder %s241, %s242
      %p254 = scmp.eq.s32.totalorder %s40, 2
      %p255 = por %p253, %p254
      %p257 = scmp.ne.s32.totalorder %s242, %s256
      %p258 = scmp.eq.s32.totalorder %s40, 0
      %p259 = por %p257, %p258
      %s261 = sadd.s32 %s260, 1
      %p264 = scmp.eq.s32.totalorder %s34, 2
      %p265 = scmp.ne.s32.totalorder %s260, %s262
      %p266 = scmp.eq.s32.totalorder %s34, 0
      %p267 = por %p265, %p266
      %p268 = scmp.ne.s32.totalorder %s260, %s262
      %p269 = scmp.eq.s32.totalorder %s39, 2
      %p270 = por %p268, %p269
      %p271 = scmp.ne.s32.totalorder %s262, %s263
      %p272 = scmp.eq.s32.totalorder %s39, 0
      %p273 = por %p271, %p272
      %p274 = scmp.ne.s32.totalorder %s262, %s263
      %p275 = scmp.eq.s32.totalorder %s40, 2
      %p276 = por %p274, %p275
      %p278 = scmp.ne.s32.totalorder %s263, %s277
      %p279 = scmp.eq.s32.totalorder %s40, 0
      %p280 = por %p278, %p279
      %s282 = sadd.s32 %s281, 1
      %p285 = scmp.eq.s32.totalorder %s34, 2
      %p286 = scmp.ne.s32.totalorder %s281, %s283
      %p287 = scmp.eq.s32.totalorder %s34, 0
      %p288 = por %p286, %p287
      %p289 = scmp.ne.s32.totalorder %s281, %s283
      %p290 = scmp.eq.s32.totalorder %s39, 2
      %p291 = por %p289, %p290
      %p292 = scmp.ne.s32.totalorder %s283, %s284
      %p293 = scmp.eq.s32.totalorder %s39, 0
      %p294 = por %p292, %p293
      %p295 = scmp.ne.s32.totalorder %s283, %s284
      %p296 = scmp.eq.s32.totalorder %s40, 2
      %p297 = por %p295, %p296
      %p299 = scmp.ne.s32.totalorder %s284, %s298
      %p300 = scmp.eq.s32.totalorder %s40, 0
      %p301 = por %p299, %p300
      %s302 = ssub.s32 %s42, %s49
      %s303 = ssub.s32 %s41, %s53
      %s304 = sor.u32 %s302, %s303
      %p305 = scmp.eq.s32.totalorder %s304, 0
      %s307 = sadd.s32 %s306, 1
      %s308 = scalar_select %p305, %s306, %s307
      %p311 = pneg %p305
      %p312 = scmp.eq.s32.totalorder %s34, 2
      %p313 = por %p311, %p312
      %p314 = scmp.ne.s32.totalorder %s306, %s309
      %p315 = scmp.eq.s32.totalorder %s34, 0
      %p316 = por %p314, %p315
      %p317 = scmp.ne.s32.totalorder %s306, %s309
      %p318 = scmp.eq.s32.totalorder %s39, 2
      %p319 = por %p317, %p318
      %p320 = scmp.ne.s32.totalorder %s309, %s310
      %p321 = scmp.eq.s32.totalorder %s39, 0
      %p322 = por %p320, %p321
      %p323 = scmp.ne.s32.totalorder %s309, %s310
      %p324 = scmp.eq.s32.totalorder %s40, 2
      %p325 = por %p323, %p324
      %p327 = scmp.ne.s32.totalorder %s310, %s326
      %p328 = scmp.eq.s32.totalorder %s40, 0
      %p329 = por %p327, %p328
      %s330 = ssub.s32 %s42, %s49
      %s331 = ssub.s32 %s41, %s53
      %s332 = sor.u32 %s330, %s331
      %p333 = scmp.eq.s32.totalorder %s332, 0
      %s335 = sadd.s32 %s334, 1
      %s336 = scalar_select %p333, %s334, %s335
      %p339 = pneg %p333
      %p340 = scmp.eq.s32.totalorder %s34, 2
      %p341 = por %p339, %p340
      %p342 = scmp.ne.s32.totalorder %s334, %s337
      %p343 = scmp.eq.s32.totalorder %s34, 0
      %p344 = por %p342, %p343
      %p345 = scmp.ne.s32.totalorder %s334, %s337
      %p346 = scmp.eq.s32.totalorder %s39, 2
      %p347 = por %p345, %p346
      %p348 = scmp.ne.s32.totalorder %s337, %s338
      %p349 = scmp.eq.s32.totalorder %s39, 0
      %p350 = por %p348, %p349
      %p351 = scmp.ne.s32.totalorder %s337, %s338
      %p352 = scmp.eq.s32.totalorder %s40, 2
      %p353 = por %p351, %p352
      %p355 = scmp.ne.s32.totalorder %s338, %s354
      %p356 = scmp.eq.s32.totalorder %s40, 0
      %p357 = por %p355, %p356
      %s358 = ssub.s32 %s42, %s49
      %s359 = ssub.s32 %s41, %s53
      %s360 = sor.u32 %s358, %s359
      %p361 = scmp.eq.s32.totalorder %s360, 0
      %s363 = sadd.s32 %s362, 1
      %s364 = scalar_select %p361, %s362, %s363
      %p367 = pneg %p361
      %p368 = scmp.eq.s32.totalorder %s34, 2
      %p369 = por %p367, %p368
      %p370 = scmp.ne.s32.totalorder %s362, %s365
      %p371 = scmp.eq.s32.totalorder %s34, 0
      %p372 = por %p370, %p371
      %p373 = scmp.ne.s32.totalorder %s362, %s365
      %p374 = scmp.eq.s32.totalorder %s39, 2
      %p375 = por %p373, %p374
      %p376 = scmp.ne.s32.totalorder %s365, %s366
      %p377 = scmp.eq.s32.totalorder %s39, 0
      %p378 = por %p376, %p377
      %p379 = scmp.ne.s32.totalorder %s365, %s366
      %p380 = scmp.eq.s32.totalorder %s40, 2
      %p381 = por %p379, %p380
      %p383 = scmp.ne.s32.totalorder %s366, %s382
      %p384 = scmp.eq.s32.totalorder %s40, 0
      %p385 = por %p383, %p384
      %p386 = scmp.le.s32.totalorder 1, %s34
      %p387 = scmp.lt.s32.totalorder %s34, 4
      %p388 = pnand %p386, %p387
      %p389 = pneg %p388
      // Predicated region
      $region9: #{hierarchical_decoder_forward.6} parent=5 // pred_check
        _
      $region10: #{hierarchical_decoder_forward.6} parent=5 // pred_check_branch
        %391 = sbr.rel (%p388) target = $region12
      $region11: #{hierarchical_decoder_forward.6} parent=5 // pred_region
        %s392 = ssub.s32 %s34, 1
        // Predicated region
        $region13: #{hierarchical_decoder_forward.6} parent=11 // pred_check
          %p393 = pneg %p100
        $region14: #{hierarchical_decoder_forward.6} parent=11 // pred_check_branch
          %395 = sbr.rel (%p393) target = $region16
        $region15: #{hierarchical_decoder_forward.6} parent=11 // pred_region
          %s396 = smul.u32 8, %s43
          %s398 = ssub.s32 2048, 2048
          %399 = vsyncadd [#allocation9], %s398
          %s400 = smul.addr %s396, 2
          %s401 = smul.addr %s400, 128
          %s402 = scalar_lea.hbm %s1, %s401
          %s403 = sshll.u32 [#allocation8], 4
          %s404 = int_to_ptr.vmem [resolvable:$true] %s403
          %409 = dma.hbm_to_vmem [thread:$0]  %s402, 2048, %s404, [#allocation9], 128, 128, 8
        $region16: #{hierarchical_decoder_forward.6} parent=11 // pred_fallthru
          _
        // Predicated region
        $region17: #{hierarchical_decoder_forward.6} parent=11 // pred_check
          %p410 = pneg %p126
        $region18: #{hierarchical_decoder_forward.6} parent=11 // pred_check_branch
          %412 = sbr.rel (%p410) target = $region20
        $region19: #{hierarchical_decoder_forward.6} parent=11 // pred_region
          %s413 = smul.u32 8, %s43
          %s415 = ssub.s32 2048, 2048
          %416 = vsyncadd [#allocation9], %s415
          %s417 = smul.addr %s413, 2
          %s418 = smul.addr %s417, 128
          %s419 = scalar_lea.hbm %s2, %s418
          %s420 = sshll.u32 [#allocation10], 4
          %s421 = int_to_ptr.vmem [resolvable:$true] %s420
          %426 = dma.hbm_to_vmem [thread:$0]  %s419, 2048, %s421, [#allocation9], 128, 128, 8
        $region20: #{hierarchical_decoder_forward.6} parent=11 // pred_fallthru
          _
        // Predicated region
        $region21: #{hierarchical_decoder_forward.6} parent=11 // pred_check
          %p427 = pneg %p147
        $region22: #{hierarchical_decoder_forward.6} parent=11 // pred_check_branch
          %429 = sbr.rel (%p427) target = $region24
        $region23: #{hierarchical_decoder_forward.6} parent=11 // pred_region
          %s431 = ssub.s32 1024, 1024
          %432 = vsyncadd [#allocation12], %s431
          %s433 = sshll.u32 [#allocation11], 4
          %s434 = int_to_ptr.vmem [resolvable:$true] %s433
          %439 = dma.hbm_to_vmem [thread:$0]  %s3, 1024, %s434, [#allocation12], 64, 64, 4
        $region24: #{hierarchical_decoder_forward.6} parent=11 // pred_fallthru
          _
        // Predicated region
        $region25: #{hierarchical_decoder_forward.6} parent=11 // pred_check
          %p440 = pneg %p168
        $region26: #{hierarchical_decoder_forward.6} parent=11 // pred_check_branch
          %442 = sbr.rel (%p440) target = $region28
        $region27: #{hierarchical_decoder_forward.6} parent=11 // pred_region
          %s444 = ssub.s32 16, 16
          %445 = vsyncadd [#allocation12], %s444
          %s447 = sshll.u32 [#allocation13], 4
          %s448 = int_to_ptr.vmem [resolvable:$true] %s447
          %450 = dma.hbm_to_vmem [thread:$0]  %s4, 16, %s448, [#allocation12]
        $region28: #{hierarchical_decoder_forward.6} parent=11 // pred_fallthru
          _
        // Predicated region
        $region29: #{hierarchical_decoder_forward.6} parent=11 // pred_check
          %p451 = pneg %p189
        $region30: #{hierarchical_decoder_forward.6} parent=11 // pred_check_branch
          %453 = sbr.rel (%p451) target = $region32
        $region31: #{hierarchical_decoder_forward.6} parent=11 // pred_region
          %s455 = ssub.s32 4096, 4096
          %456 = vsyncadd [#allocation15], %s455
          %s457 = sshll.u32 [#allocation14], 4
          %s458 = int_to_ptr.vmem [resolvable:$true] %s457
          %463 = dma.hbm_to_vmem [thread:$0]  %s5, 4096, %s458, [#allocation15], 256, 256, 16
        $region32: #{hierarchical_decoder_forward.6} parent=11 // pred_fallthru
          _
        // Predicated region
        $region33: #{hierarchical_decoder_forward.6} parent=11 // pred_check
          %p464 = pneg %p210
        $region34: #{hierarchical_decoder_forward.6} parent=11 // pred_check_branch
          %466 = sbr.rel (%p464) target = $region36
        $region35: #{hierarchical_decoder_forward.6} parent=11 // pred_region
          %s468 = ssub.s32 4096, 4096
          %469 = vsyncadd [#allocation15], %s468
          %s470 = sshll.u32 [#allocation16], 4
          %s471 = int_to_ptr.vmem [resolvable:$true] %s470
          %476 = dma.hbm_to_vmem [thread:$0]  %s6, 4096, %s471, [#allocation15], 256, 256, 16
        $region36: #{hierarchical_decoder_forward.6} parent=11 // pred_fallthru
          _
        // Predicated region
        $region37: #{hierarchical_decoder_forward.6} parent=11 // pred_check
          %p477 = pneg %p231
        $region38: #{hierarchical_decoder_forward.6} parent=11 // pred_check_branch
          %479 = sbr.rel (%p477) target = $region40
        $region39: #{hierarchical_decoder_forward.6} parent=11 // pred_region
          %s481 = ssub.s32 64, 64
          %482 = vsyncadd [#allocation18], %s481
          %s484 = sshll.u32 [#allocation17], 4
          %s485 = int_to_ptr.vmem [resolvable:$true] %s484
          %487 = dma.hbm_to_vmem [thread:$0]  %s7, 64, %s485, [#allocation18]
        $region40: #{hierarchical_decoder_forward.6} parent=11 // pred_fallthru
          _
        // Predicated region
        $region41: #{hierarchical_decoder_forward.6} parent=11 // pred_check
          %p488 = pneg %p252
        $region42: #{hierarchical_decoder_forward.6} parent=11 // pred_check_branch
          %490 = sbr.rel (%p488) target = $region44
        $region43: #{hierarchical_decoder_forward.6} parent=11 // pred_region
          %s492 = ssub.s32 2048, 2048
          %493 = vsyncadd [#allocation18], %s492
          %s494 = sshll.u32 [#allocation19], 4
          %s495 = int_to_ptr.vmem [resolvable:$true] %s494
          %500 = dma.hbm_to_vmem [thread:$0]  %s8, 2048, %s495, [#allocation18], 128, 128, 8
        $region44: #{hierarchical_decoder_forward.6} parent=11 // pred_fallthru
          _
        // Predicated region
        $region45: #{hierarchical_decoder_forward.6} parent=11 // pred_check
          %p501 = pneg %p273
        $region46: #{hierarchical_decoder_forward.6} parent=11 // pred_check_branch
          %503 = sbr.rel (%p501) target = $region48
        $region47: #{hierarchical_decoder_forward.6} parent=11 // pred_region
          %s505 = ssub.s32 16, 16
          %506 = vsyncadd [#allocation21], %s505
          %s508 = sshll.u32 [#allocation20], 4
          %s509 = int_to_ptr.vmem [resolvable:$true] %s508
          %511 = dma.hbm_to_vmem [thread:$0]  %s9, 16, %s509, [#allocation21]
        $region48: #{hierarchical_decoder_forward.6} parent=11 // pred_fallthru
          _
        // Predicated region
        $region49: #{hierarchical_decoder_forward.6} parent=11 // pred_check
          %p512 = pneg %p294
        $region50: #{hierarchical_decoder_forward.6} parent=11 // pred_check_branch
          %514 = sbr.rel (%p512) target = $region52
        $region51: #{hierarchical_decoder_forward.6} parent=11 // pred_region
          %s516 = ssub.s32 4096, 4096
          %517 = vsyncadd [#allocation21], %s516
          %s518 = sshll.u32 [#allocation22], 4
          %s519 = int_to_ptr.vmem [resolvable:$true] %s518
          %524 = dma.hbm_to_vmem [thread:$0]  %s10, 4096, %s519, [#allocation21], 256, 256, 16
        $region52: #{hierarchical_decoder_forward.6} parent=11 // pred_fallthru
          _
      $region12: #{hierarchical_decoder_forward.6} parent=5 // pred_fallthru
        _
      %p525 = scmp.lt.s32.totalorder %s34, 3
      // Predicated region
      $region53: #{hierarchical_decoder_forward.6} parent=5 // pred_check
        %p526 = pneg %p525
      $region54: #{hierarchical_decoder_forward.6} parent=5 // pred_check_branch
        %528 = sbr.rel (%p526) target = $region56
      $region55: #{hierarchical_decoder_forward.6} parent=5 // pred_region
        // Predicated region
        $region57: #{hierarchical_decoder_forward.6} parent=55 // pred_check
          %p529 = pneg %p68
        $region58: #{hierarchical_decoder_forward.6} parent=55 // pred_check_branch
          %531 = sbr.rel (%p529) target = $region60
        $region59: #{hierarchical_decoder_forward.6} parent=55 // pred_region
          %s532 = sand.u32 %s58, 1
          %s533 = scalar_lea.sflag [#allocation6], %s532
          %s534 = sand.u32 %s58, 1
          %s535 = smul.addr %s534, 160
          %s536 = scalar_lea.vmem [#allocation5], %s535
          %s538 = ssub.s32 2560, 2560
          %539 = vsyncadd %s533, %s538
          %s540 = smul.addr %s41, 4
          %s541 = smul.addr %s42, 20
          %s542 = sadd.s32 %s540, %s541
          %s543 = smul.addr %s542, 128
          %s544 = scalar_lea.hbm %s0, %s543
          %s545 = sshll.u32 %s536, 4
          %s546 = int_to_ptr.vmem [resolvable:$true] %s545
          %551 = dma.hbm_to_vmem [thread:$0]  %s544, 2560, %s546, %s533, 512, 512, 32
        $region60: #{hierarchical_decoder_forward.6} parent=55 // pred_fallthru
          _
      $region56: #{hierarchical_decoder_forward.6} parent=5 // pred_fallthru
        _
      %p552 = scmp.le.s32.totalorder 1, %s34
      %p553 = scmp.lt.s32.totalorder %s34, 4
      %p554 = pnand %p552, %p553
      %p555 = pneg %p554
      // Predicated region
      $region61: #{hierarchical_decoder_forward.6} parent=5 // pred_check
        _
      $region62: #{hierarchical_decoder_forward.6} parent=5 // pred_check_branch
        %557 = sbr.rel (%p554) target = $region64
      $region63: #{hierarchical_decoder_forward.6} parent=5 // pred_region
        %s558 = ssub.s32 %s34, 1
        %s559 = sand.u32 %s61, 1
        %s560 = scalar_lea.sflag [#allocation6], %s559
        %s561 = sand.u32 %s61, 1
        %s562 = smul.addr %s561, 160
        %s563 = scalar_lea.vmem [#allocation5], %s562
        // Predicated region
        $region65: #{hierarchical_decoder_forward.6} parent=63 // pred_check
          %p564 = pneg %p74
        $region66: #{hierarchical_decoder_forward.6} parent=63 // pred_check_branch
          %566 = sbr.rel (%p564) target = $region68
        $region67: #{hierarchical_decoder_forward.6} parent=63 // pred_region
          %567 = dma.done %s560, 2560
        $region68: #{hierarchical_decoder_forward.6} parent=63 // pred_fallthru
          _
        // Predicated region
        $region69: #{hierarchical_decoder_forward.6} parent=63 // pred_check
          %p568 = pneg %p100
        $region70: #{hierarchical_decoder_forward.6} parent=63 // pred_check_branch
          %570 = sbr.rel (%p568) target = $region72
        $region71: #{hierarchical_decoder_forward.6} parent=63 // pred_region
          %571 = dma.done [#allocation9], 2048
        $region72: #{hierarchical_decoder_forward.6} parent=63 // pred_fallthru
          _
        // Predicated region
        $region73: #{hierarchical_decoder_forward.6} parent=63 // pred_check
          %p572 = pneg %p126
        $region74: #{hierarchical_decoder_forward.6} parent=63 // pred_check_branch
          %574 = sbr.rel (%p572) target = $region76
        $region75: #{hierarchical_decoder_forward.6} parent=63 // pred_region
          %575 = dma.done [#allocation9], 2048
        $region76: #{hierarchical_decoder_forward.6} parent=63 // pred_fallthru
          _
        // Predicated region
        $region77: #{hierarchical_decoder_forward.6} parent=63 // pred_check
          %p576 = pneg %p147
        $region78: #{hierarchical_decoder_forward.6} parent=63 // pred_check_branch
          %578 = sbr.rel (%p576) target = $region80
        $region79: #{hierarchical_decoder_forward.6} parent=63 // pred_region
          %579 = dma.done [#allocation12], 1024
        $region80: #{hierarchical_decoder_forward.6} parent=63 // pred_fallthru
          _
        // Predicated region
        $region81: #{hierarchical_decoder_forward.6} parent=63 // pred_check
          %p580 = pneg %p168
        $region82: #{hierarchical_decoder_forward.6} parent=63 // pred_check_branch
          %582 = sbr.rel (%p580) target = $region84
        $region83: #{hierarchical_decoder_forward.6} parent=63 // pred_region
          %583 = dma.done [#allocation12], 16
        $region84: #{hierarchical_decoder_forward.6} parent=63 // pred_fallthru
          _
        // Predicated region
        $region85: #{hierarchical_decoder_forward.6} parent=63 // pred_check
          %p584 = pneg %p189
        $region86: #{hierarchical_decoder_forward.6} parent=63 // pred_check_branch
          %586 = sbr.rel (%p584) target = $region88
        $region87: #{hierarchical_decoder_forward.6} parent=63 // pred_region
          %587 = dma.done [#allocation15], 4096
        $region88: #{hierarchical_decoder_forward.6} parent=63 // pred_fallthru
          _
        // Predicated region
        $region89: #{hierarchical_decoder_forward.6} parent=63 // pred_check
          %p588 = pneg %p210
        $region90: #{hierarchical_decoder_forward.6} parent=63 // pred_check_branch
          %590 = sbr.rel (%p588) target = $region92
        $region91: #{hierarchical_decoder_forward.6} parent=63 // pred_region
          %591 = dma.done [#allocation15], 4096
        $region92: #{hierarchical_decoder_forward.6} parent=63 // pred_fallthru
          _
        // Predicated region
        $region93: #{hierarchical_decoder_forward.6} parent=63 // pred_check
          %p592 = pneg %p231
        $region94: #{hierarchical_decoder_forward.6} parent=63 // pred_check_branch
          %594 = sbr.rel (%p592) target = $region96
        $region95: #{hierarchical_decoder_forward.6} parent=63 // pred_region
          %595 = dma.done [#allocation18], 64
        $region96: #{hierarchical_decoder_forward.6} parent=63 // pred_fallthru
          _
        // Predicated region
        $region97: #{hierarchical_decoder_forward.6} parent=63 // pred_check
          %p596 = pneg %p252
        $region98: #{hierarchical_decoder_forward.6} parent=63 // pred_check_branch
          %598 = sbr.rel (%p596) target = $region100
        $region99: #{hierarchical_decoder_forward.6} parent=63 // pred_region
          %599 = dma.done [#allocation18], 2048
        $region100: #{hierarchical_decoder_forward.6} parent=63 // pred_fallthru
          _
        // Predicated region
        $region101: #{hierarchical_decoder_forward.6} parent=63 // pred_check
          %p600 = pneg %p273
        $region102: #{hierarchical_decoder_forward.6} parent=63 // pred_check_branch
          %602 = sbr.rel (%p600) target = $region104
        $region103: #{hierarchical_decoder_forward.6} parent=63 // pred_region
          %603 = dma.done [#allocation21], 16
        $region104: #{hierarchical_decoder_forward.6} parent=63 // pred_fallthru
          _
        // Predicated region
        $region105: #{hierarchical_decoder_forward.6} parent=63 // pred_check
          %p604 = pneg %p294
        $region106: #{hierarchical_decoder_forward.6} parent=63 // pred_check_branch
          %606 = sbr.rel (%p604) target = $region108
        $region107: #{hierarchical_decoder_forward.6} parent=63 // pred_region
          %607 = dma.done [#allocation21], 4096
        $region108: #{hierarchical_decoder_forward.6} parent=63 // pred_fallthru
          _
        %s608 = sand.u32 %s61, 1
        %s609 = scalar_lea.sflag [#allocation6], %s608
        %s610 = sand.u32 %s61, 1
        %s611 = smul.addr %s610, 160
        %s612 = scalar_lea.vmem [#allocation5], %s611
        %p613 = pneg %p74
        %p614 = pneg %p71
        %p615 = pneg %p100
        %p616 = pneg %p97
        %p617 = pneg %p126
        %p618 = pneg %p123
        %p619 = pneg %p147
        %p620 = pneg %p144
        %p621 = pneg %p168
        %p622 = pneg %p165
        %p623 = pneg %p189
        %p624 = pneg %p186
        %p625 = pneg %p210
        %p626 = pneg %p207
        %p627 = pneg %p231
        %p628 = pneg %p228
        %p629 = pneg %p252
        %p630 = pneg %p249
        %p631 = pneg %p273
        %p632 = pneg %p270
        %p633 = pneg %p294
        %p634 = pneg %p291
        %p635 = pneg %p322
        %p636 = pneg %p319
        %s637 = sand.u32 %s309, 1
        %s638 = scalar_lea.sflag [#allocation7], %s637
        %s639 = sand.u32 %s309, 1
        %s640 = smul.addr %s639, 20
        %s641 = scalar_lea.vmem [#allocation23], %s640
        %p642 = pneg %p350
        %p643 = pneg %p347
        %s644 = sand.u32 %s39, 1
        %s645 = scalar_lea.sflag [#allocation25], %s644
        %s646 = sand.u32 %s337, 1
        %s647 = smul.addr %s646, 8
        %s648 = scalar_lea.vmem [#allocation24], %s647
        %p649 = pneg %p378
        %p650 = pneg %p375
        %s651 = sand.u32 %s39, 1
        %s652 = scalar_lea.sflag [#allocation25], %s651
        %s653 = sand.u32 %s365, 1
        %s654 = smul.addr %s653, 8
        %s655 = scalar_lea.vmem [#allocation26], %s654
        %s656 = smul.u32 8, %s43
        %s657 = smul.u32 8, %s43
        %p659 = scmp.eq.s32.totalorder %s44, 0
        // Predicated region
        $region109: #{hierarchical_decoder_forward.6} parent=63 // pred_check
          %p660 = pneg %p659
        $region110: #{hierarchical_decoder_forward.6} parent=63 // pred_check_branch
          %662 = sbr.rel (%p660) target = $region112
        $region111: #{hierarchical_decoder_forward.6} parent=63 // pred_region
          %663 = vst [vmem:[#allocation2] sm:$0xff] 0.0
          %664 = vst [vmem:[#allocation3] sm:$0xff] 0.0
          %v665 = vld [vmem:[#allocation11] sm:$0xf]
          %v666 = vld [vmem:[#allocation11 + $0x4] sm:$0xf]
          %v667 = vld [vmem:[#allocation11 + $0x8] sm:$0xf]
          %v668 = vld [vmem:[#allocation11 + $0xc] sm:$0xf]
          %v669 = vld [vmem:[#allocation11 + $0x10] sm:$0xf]
          %v670 = vld [vmem:[#allocation11 + $0x14] sm:$0xf]
          %v671 = vld [vmem:[#allocation11 + $0x18] sm:$0xf]
          %v672 = vld [vmem:[#allocation11 + $0x1c] sm:$0xf]
          %v673 = vld [vmem:[#allocation11 + $0x20] sm:$0xf]
          %v674 = vld [vmem:[#allocation11 + $0x24] sm:$0xf]
          %v675 = vld [vmem:[#allocation11 + $0x28] sm:$0xf]
          %v676 = vld [vmem:[#allocation11 + $0x2c] sm:$0xf]
          %v677 = vld [vmem:[#allocation11 + $0x30] sm:$0xf]
          %v678 = vld [vmem:[#allocation11 + $0x34] sm:$0xf]
          %v679 = vld [vmem:[#allocation11 + $0x38] sm:$0xf]
          %v680 = vld [vmem:[#allocation11 + $0x3c] sm:$0xf]
          %v697 = vunpack.c.l.b16 %v665
          %v698 = vunpack.c.l.b16 %v666
          %v699 = vunpack.c.l.b16 %v667
          %v700 = vunpack.c.l.b16 %v668
          %v701 = vunpack.c.l.b16 %v669
          %v702 = vunpack.c.l.b16 %v670
          %v703 = vunpack.c.l.b16 %v671
          %v704 = vunpack.c.l.b16 %v672
          %v705 = vunpack.c.l.b16 %v673
          %v706 = vunpack.c.l.b16 %v674
          %v707 = vunpack.c.l.b16 %v675
          %v708 = vunpack.c.l.b16 %v676
          %v709 = vunpack.c.l.b16 %v677
          %v710 = vunpack.c.l.b16 %v678
          %v711 = vunpack.c.l.b16 %v679
          %v712 = vunpack.c.l.b16 %v680
          %v713 = vpack.c.b16 %v698, %v697
          %v714 = vpack.c.b16 %v700, %v699
          %v715 = vpack.c.b16 %v702, %v701
          %v716 = vpack.c.b16 %v704, %v703
          %v717 = vpack.c.b16 %v706, %v705
          %v718 = vpack.c.b16 %v708, %v707
          %v719 = vpack.c.b16 %v710, %v709
          %v720 = vpack.c.b16 %v712, %v711
          %729 = vmatprep.subr.bf16.mxu0 0
          %730 = vmatpush1.bf16.msra.mxu0 %v713
          %731 = vmatprep.subr.bf16.mxu0 0
          %732 = vmatpush1.bf16.msra.mxu0 %v714
          %733 = vmatprep.subr.bf16.mxu0 0
          %734 = vmatpush1.bf16.msra.mxu0 %v715
          %735 = vmatprep.subr.bf16.mxu0 0
          %736 = vmatpush1.bf16.msra.mxu0 %v716
          %737 = vmatprep.subr.bf16.mxu0 0
          %738 = vmatpush1.bf16.msra.mxu0 %v717
          %739 = vmatprep.subr.bf16.mxu0 0
          %740 = vmatpush1.bf16.msra.mxu0 %v718
          %741 = vmatprep.subr.bf16.mxu0 0
          %742 = vmatpush1.bf16.msra.mxu0 %v719
          %743 = vmatprep.subr.bf16.mxu0 0
          %744 = vmatpush1.bf16.msra.mxu0 %v720
          %745 = vmatprep.subr.bf16.mxu0 0
          %746 = vmatpush1.bf16.msra.mxu0 0
          %747 = vmatprep.subr.bf16.mxu0 0
          %748 = vmatpush1.bf16.msra.mxu0 0
          %749 = vmatprep.subr.bf16.mxu0 0
          %750 = vmatpush1.bf16.msra.mxu0 0
          %751 = vmatprep.subr.bf16.mxu0 0
          %752 = vmatpush1.bf16.msra.mxu0 0
          %753 = vmatprep.subr.bf16.mxu0 0
          %754 = vmatpush1.bf16.msra.mxu0 0
          %755 = vmatprep.subr.bf16.mxu0 0
          %756 = vmatpush1.bf16.msra.mxu0 0
          %757 = vmatprep.subr.bf16.mxu0 0
          %758 = vmatpush1.bf16.msra.mxu0 0
          %759 = vmatprep.subr.bf16.mxu0 0
          %760 = vmatpush1.bf16.msra.mxu0 0
          %761 = vmatprep.mubr.bf16.mxu0 0
          %762 = vmatmul.mubr.bf16.gmra.mrb[0].mxu0 0
          %v763 = vpop.f32.mrb[0].mxu0
          %v764 = vadd.f32 0.0, %v763
          %v765 = vpop.f32.mrb[0].mxu0
          %v766 = vpop.f32.mrb[0].mxu0
          %v767 = vpop.f32.mrb[0].mxu0
          %768 = vdwg.mxu0
          %v769 = vld [vmem:[#allocation8] sm:$0xff]
          %v770 = vld [vmem:[#allocation8 + $0x8] sm:$0xff]
          %v771 = vld [vmem:[#allocation8 + $0x10] sm:$0xff]
          %v772 = vld [vmem:[#allocation8 + $0x18] sm:$0xff]
          %v773 = vld [vmem:[#allocation8 + $0x20] sm:$0xff]
          %v774 = vld [vmem:[#allocation8 + $0x28] sm:$0xff]
          %v775 = vld [vmem:[#allocation8 + $0x30] sm:$0xff]
          %v776 = vld [vmem:[#allocation8 + $0x38] sm:$0xff]
          %v777 = vld [vmem:[#allocation8 + $0x40] sm:$0xff]
          %v778 = vld [vmem:[#allocation8 + $0x48] sm:$0xff]
          %v779 = vld [vmem:[#allocation8 + $0x50] sm:$0xff]
          %v780 = vld [vmem:[#allocation8 + $0x58] sm:$0xff]
          %v781 = vld [vmem:[#allocation8 + $0x60] sm:$0xff]
          %v782 = vld [vmem:[#allocation8 + $0x68] sm:$0xff]
          %v783 = vld [vmem:[#allocation8 + $0x70] sm:$0xff]
          %v784 = vld [vmem:[#allocation8 + $0x78] sm:$0xff]
          %v786 = vcombine.high %v764, %v764
          %v788 = vunpack.c.l.s4 1966171168
          %v789 = vunpack.c.0.s8 %v788
          %v790 = vlaneseq
          %v791 = vshrl.u32 %v790, 7
          %v792 = vsub.s32 %v789, %v791
          %v793 = vrot.slane %v764, %v792
          %v795 = vunpack.c.l.s4 1966171168
          %v796 = vunpack.c.0.s8 %v795
          %v797 = vlaneseq
          %v798 = vshrl.u32 %v797, 7
          %v799 = vsub.s32 %v796, %v798
          %v800 = vrot.slane %v786, %v799
          %v801 = vcombine.high %v793, %v793
          %v802 = vcombine.high %v800, %v800
          %v804 = vunpack.c.l.s4 1966171168
          %v805 = vunpack.c.0.s8 %v804
          %v806 = vlaneseq
          %v807 = vshrl.u32 %v806, 7
          %v808 = vsub.s32 %v805, %v807
          %v809 = vrot.slane %v793, %v808
          %v811 = vunpack.c.l.s4 1966171168
          %v812 = vunpack.c.0.s8 %v811
          %v813 = vlaneseq
          %v814 = vshrl.u32 %v813, 7
          %v815 = vsub.s32 %v812, %v814
          %v816 = vrot.slane %v800, %v815
          %v818 = vunpack.c.l.s4 1966171168
          %v819 = vunpack.c.0.s8 %v818
          %v820 = vlaneseq
          %v821 = vshrl.u32 %v820, 7
          %v822 = vsub.s32 %v819, %v821
          %v823 = vrot.slane %v801, %v822
          %v825 = vunpack.c.l.s4 1966171168
          %v826 = vunpack.c.0.s8 %v825
          %v827 = vlaneseq
          %v828 = vshrl.u32 %v827, 7
          %v829 = vsub.s32 %v826, %v828
          %v830 = vrot.slane %v802, %v829
          %v831 = vcombine.high %v809, %v809
          %v832 = vcombine.high %v816, %v816
          %v833 = vcombine.high %v823, %v823
          %v834 = vcombine.high %v830, %v830
          %v835 = vlaneseq
          %v836 = vshrl.u32 %v835, 7
          %v837 = vsub.s32 0, %v836
          %v838 = vrot.slane %v809, %v837
          %v839 = vlaneseq
          %v840 = vshrl.u32 %v839, 7
          %v841 = vsub.s32 0, %v840
          %v842 = vrot.slane %v823, %v841
          %v843 = vlaneseq
          %v844 = vshrl.u32 %v843, 7
          %v845 = vsub.s32 0, %v844
          %v846 = vrot.slane %v831, %v845
          %v847 = vlaneseq
          %v848 = vshrl.u32 %v847, 7
          %v849 = vsub.s32 0, %v848
          %v850 = vrot.slane %v833, %v849
          %v851 = vlaneseq
          %v852 = vshrl.u32 %v851, 7
          %v853 = vsub.s32 0, %v852
          %v854 = vrot.slane %v816, %v853
          %v855 = vlaneseq
          %v856 = vshrl.u32 %v855, 7
          %v857 = vsub.s32 0, %v856
          %v858 = vrot.slane %v830, %v857
          %v859 = vlaneseq
          %v860 = vshrl.u32 %v859, 7
          %v861 = vsub.s32 0, %v860
          %v862 = vrot.slane %v832, %v861
          %v863 = vlaneseq
          %v864 = vshrl.u32 %v863, 7
          %v865 = vsub.s32 0, %v864
          %v866 = vrot.slane %v834, %v865
          %v875 = vadd.f32 %v769, %v838
          %v876 = vadd.f32 %v770, %v838
          %v877 = vadd.f32 %v771, %v842
          %v878 = vadd.f32 %v772, %v842
          %v879 = vadd.f32 %v773, %v846
          %v880 = vadd.f32 %v774, %v846
          %v881 = vadd.f32 %v775, %v850
          %v882 = vadd.f32 %v776, %v850
          %v883 = vadd.f32 %v777, %v854
          %v884 = vadd.f32 %v778, %v854
          %v885 = vadd.f32 %v779, %v858
          %v886 = vadd.f32 %v780, %v858
          %v887 = vadd.f32 %v781, %v862
          %v888 = vadd.f32 %v782, %v862
          %v889 = vadd.f32 %v783, %v866
          %v890 = vadd.f32 %v784, %v866
          %v891 = vtanh.pop %v875
          %v892 = vtanh.pop %v876
          %v893 = vtanh.pop %v877
          %v894 = vtanh.pop %v878
          %v895 = vtanh.pop %v879
          %v896 = vtanh.pop %v880
          %v897 = vtanh.pop %v881
          %v898 = vtanh.pop %v882
          %v899 = vtanh.pop %v883
          %v900 = vtanh.pop %v884
          %v901 = vtanh.pop %v885
          %v902 = vtanh.pop %v886
          %v903 = vtanh.pop %v887
          %v904 = vtanh.pop %v888
          %v905 = vtanh.pop %v889
          %v906 = vtanh.pop %v890
          %v907 = vld [vmem:[#allocation13] sm:$0x1]
          %v909 = vlaneseq
          %v910 = vshrl.u32 %v909, 7
          %v911 = vsub.s32 0, %v910
          %v912 = vrot.slane %v907, %v911
          %v914 = vmul.f32 %v891, %v912
          %v915 = vmul.f32 %v892, %v912
          %v916 = vmul.f32 %v893, %v912
          %v917 = vmul.f32 %v894, %v912
          %v918 = vmul.f32 %v895, %v912
          %v919 = vmul.f32 %v896, %v912
          %v920 = vmul.f32 %v897, %v912
          %v921 = vmul.f32 %v898, %v912
          %v922 = vmul.f32 %v899, %v912
          %v923 = vmul.f32 %v900, %v912
          %v924 = vmul.f32 %v901, %v912
          %v925 = vmul.f32 %v902, %v912
          %v926 = vmul.f32 %v903, %v912
          %v927 = vmul.f32 %v904, %v912
          %v928 = vmul.f32 %v905, %v912
          %v929 = vmul.f32 %v906, %v912
          %930 = vadd.xlane.f32.xlu0 %v914
          %v931 = vpop.xlane.xlu0 %930
          %932 = vadd.xlane.f32.xlu0 %v915
          %v933 = vpop.xlane.xlu0 %932
          %934 = vadd.xlane.f32.xlu0 %v916
          %v935 = vpop.xlane.xlu0 %934
          %936 = vadd.xlane.f32.xlu0 %v917
          %v937 = vpop.xlane.xlu0 %936
          %938 = vadd.xlane.f32.xlu0 %v918
          %v939 = vpop.xlane.xlu0 %938
          %940 = vadd.xlane.f32.xlu0 %v919
          %v941 = vpop.xlane.xlu0 %940
          %942 = vadd.xlane.f32.xlu0 %v920
          %v943 = vpop.xlane.xlu0 %942
          %944 = vadd.xlane.f32.xlu0 %v921
          %v945 = vpop.xlane.xlu0 %944
          %946 = vadd.xlane.f32.xlu0 %v922
          %v947 = vpop.xlane.xlu0 %946
          %948 = vadd.xlane.f32.xlu0 %v923
          %v949 = vpop.xlane.xlu0 %948
          %950 = vadd.xlane.f32.xlu0 %v924
          %v951 = vpop.xlane.xlu0 %950
          %952 = vadd.xlane.f32.xlu0 %v925
          %v953 = vpop.xlane.xlu0 %952
          %954 = vadd.xlane.f32.xlu0 %v926
          %v955 = vpop.xlane.xlu0 %954
          %956 = vadd.xlane.f32.xlu0 %v927
          %v957 = vpop.xlane.xlu0 %956
          %958 = vadd.xlane.f32.xlu0 %v928
          %v959 = vpop.xlane.xlu0 %958
          %960 = vadd.xlane.f32.xlu0 %v929
          %v961 = vpop.xlane.xlu0 %960
          %v978 = vlaneseq
          %v979 = vand.u32 %v978, 127
          %v980 = vlaneseq
          %v981 = vshrl.u32 %v980, 7
          %v982 = vsub.s32 %v979, %v981
          %v983 = vrot.slane %v931, %v982
          %v984 = vadd.s32 %v979, 4294967288
          %v985 = vlaneseq
          %v986 = vshrl.u32 %v985, 7
          %v987 = vsub.s32 %v984, %v986
          %v988 = vrot.slane %v933, %v987
          %vm989 = vcmask 130112
          %v990 = vsel %vm989, %v988, %v983
          %v991 = vlaneseq
          %v992 = vshrl.u32 %v991, 7
          %v993 = vsub.s32 %v979, %v992
          %v994 = vrot.slane %v935, %v993
          %v995 = vlaneseq
          %v996 = vshrl.u32 %v995, 7
          %v997 = vsub.s32 %v984, %v996
          %v998 = vrot.slane %v937, %v997
          %v999 = vsel %vm989, %v998, %v994
          %v1000 = vlaneseq
          %v1001 = vshrl.u32 %v1000, 7
          %v1002 = vsub.s32 %v979, %v1001
          %v1003 = vrot.slane %v939, %v1002
          %v1004 = vlaneseq
          %v1005 = vshrl.u32 %v1004, 7
          %v1006 = vsub.s32 %v984, %v1005
          %v1007 = vrot.slane %v941, %v1006
          %v1008 = vsel %vm989, %v1007, %v1003
          %v1009 = vlaneseq
          %v1010 = vshrl.u32 %v1009, 7
          %v1011 = vsub.s32 %v979, %v1010
          %v1012 = vrot.slane %v943, %v1011
          %v1013 = vlaneseq
          %v1014 = vshrl.u32 %v1013, 7
          %v1015 = vsub.s32 %v984, %v1014
          %v1016 = vrot.slane %v945, %v1015
          %v1017 = vsel %vm989, %v1016, %v1012
          %v1018 = vlaneseq
          %v1019 = vshrl.u32 %v1018, 7
          %v1020 = vsub.s32 %v979, %v1019
          %v1021 = vrot.slane %v947, %v1020
          %v1022 = vlaneseq
          %v1023 = vshrl.u32 %v1022, 7
          %v1024 = vsub.s32 %v984, %v1023
          %v1025 = vrot.slane %v949, %v1024
          %v1026 = vsel %vm989, %v1025, %v1021
          %v1027 = vlaneseq
          %v1028 = vshrl.u32 %v1027, 7
          %v1029 = vsub.s32 %v979, %v1028
          %v1030 = vrot.slane %v951, %v1029
          %v1031 = vlaneseq
          %v1032 = vshrl.u32 %v1031, 7
          %v1033 = vsub.s32 %v984, %v1032
          %v1034 = vrot.slane %v953, %v1033
          %v1035 = vsel %vm989, %v1034, %v1030
          %v1036 = vlaneseq
          %v1037 = vshrl.u32 %v1036, 7
          %v1038 = vsub.s32 %v979, %v1037
          %v1039 = vrot.slane %v955, %v1038
          %v1040 = vlaneseq
          %v1041 = vshrl.u32 %v1040, 7
          %v1042 = vsub.s32 %v984, %v1041
          %v1043 = vrot.slane %v957, %v1042
          %v1044 = vsel %vm989, %v1043, %v1039
          %v1045 = vlaneseq
          %v1046 = vshrl.u32 %v1045, 7
          %v1047 = vsub.s32 %v979, %v1046
          %v1048 = vrot.slane %v959, %v1047
          %v1049 = vlaneseq
          %v1050 = vshrl.u32 %v1049, 7
          %v1051 = vsub.s32 %v984, %v1050
          %v1052 = vrot.slane %v961, %v1051
          %v1053 = vsel %vm989, %v1052, %v1048
          %vm1054 = vcmask 1041409
          %v1055 = vsel %vm1054, %v999, %v990
          %vm1056 = vcmask 1042434
          %v1057 = vsel %vm1056, %v1008, %v1055
          %vm1058 = vcmask 1043459
          %v1059 = vsel %vm1058, %v1017, %v1057
          %vm1060 = vcmask 1044484
          %v1061 = vsel %vm1060, %v1026, %v1059
          %vm1062 = vcmask 1045509
          %v1063 = vsel %vm1062, %v1035, %v1061
          %vm1064 = vcmask 1046534
          %v1065 = vsel %vm1064, %v1044, %v1063
          %vm1066 = vcmask 1047559
          %v1067 = vsel %vm1066, %v1053, %v1065
          %vm1069 = vcmask 130048
          %v1070 = vsel %vm1069, %v1067, -inf
          %1071 = vmax.xlane.f32.xlu0 %v1070
          %v1072 = vpop.xlane.xlu0 %1071
          %v1074 = vlaneseq
          %v1075 = vshrl.u32 %v1074, 7
          %v1076 = vsub.s32 0, %v1075
          %v1077 = vrot.slane %v1072, %v1076
          %v1078 = vlaneseq
          %v1079 = vshrl.u32 %v1078, 7
          %v1080 = vsub.s32 1, %v1079
          %v1081 = vrot.slane %v1072, %v1080
          %v1082 = vlaneseq
          %v1083 = vshrl.u32 %v1082, 7
          %v1084 = vsub.s32 2, %v1083
          %v1085 = vrot.slane %v1072, %v1084
          %v1086 = vlaneseq
          %v1087 = vshrl.u32 %v1086, 7
          %v1088 = vsub.s32 3, %v1087
          %v1089 = vrot.slane %v1072, %v1088
          %v1090 = vlaneseq
          %v1091 = vshrl.u32 %v1090, 7
          %v1092 = vsub.s32 4, %v1091
          %v1093 = vrot.slane %v1072, %v1092
          %v1094 = vlaneseq
          %v1095 = vshrl.u32 %v1094, 7
          %v1096 = vsub.s32 5, %v1095
          %v1097 = vrot.slane %v1072, %v1096
          %v1098 = vlaneseq
          %v1099 = vshrl.u32 %v1098, 7
          %v1100 = vsub.s32 6, %v1099
          %v1101 = vrot.slane %v1072, %v1100
          %v1102 = vlaneseq
          %v1103 = vshrl.u32 %v1102, 7
          %v1104 = vsub.s32 7, %v1103
          %v1105 = vrot.slane %v1072, %v1104
          %v1114 = vsub.f32 %v931, %v1077
          %v1115 = vsub.f32 %v933, %v1077
          %v1116 = vsub.f32 %v935, %v1081
          %v1117 = vsub.f32 %v937, %v1081
          %v1118 = vsub.f32 %v939, %v1085
          %v1119 = vsub.f32 %v941, %v1085
          %v1120 = vsub.f32 %v943, %v1089
          %v1121 = vsub.f32 %v945, %v1089
          %v1122 = vsub.f32 %v947, %v1093
          %v1123 = vsub.f32 %v949, %v1093
          %v1124 = vsub.f32 %v951, %v1097
          %v1125 = vsub.f32 %v953, %v1097
          %v1126 = vsub.f32 %v955, %v1101
          %v1127 = vsub.f32 %v957, %v1101
          %v1128 = vsub.f32 %v959, %v1105
          %v1129 = vsub.f32 %v961, %v1105
          %v1130 = vmul.f32 %v1114, 1.442695
          %v1131 = vpow.pop %v1130
          %v1132 = vmul.f32 %v1115, 1.442695
          %v1133 = vpow.pop %v1132
          %v1134 = vmul.f32 %v1116, 1.442695
          %v1135 = vpow.pop %v1134
          %v1136 = vmul.f32 %v1117, 1.442695
          %v1137 = vpow.pop %v1136
          %v1138 = vmul.f32 %v1118, 1.442695
          %v1139 = vpow.pop %v1138
          %v1140 = vmul.f32 %v1119, 1.442695
          %v1141 = vpow.pop %v1140
          %v1142 = vmul.f32 %v1120, 1.442695
          %v1143 = vpow.pop %v1142
          %v1144 = vmul.f32 %v1121, 1.442695
          %v1145 = vpow.pop %v1144
          %v1146 = vmul.f32 %v1122, 1.442695
          %v1147 = vpow.pop %v1146
          %v1148 = vmul.f32 %v1123, 1.442695
          %v1149 = vpow.pop %v1148
          %v1150 = vmul.f32 %v1124, 1.442695
          %v1151 = vpow.pop %v1150
          %v1152 = vmul.f32 %v1125, 1.442695
          %v1153 = vpow.pop %v1152
          %v1154 = vmul.f32 %v1126, 1.442695
          %v1155 = vpow.pop %v1154
          %v1156 = vmul.f32 %v1127, 1.442695
          %v1157 = vpow.pop %v1156
          %v1158 = vmul.f32 %v1128, 1.442695
          %v1159 = vpow.pop %v1158
          %v1160 = vmul.f32 %v1129, 1.442695
          %v1161 = vpow.pop %v1160
          %1178 = vset.pattern.permute.xlu0 0
          %1179 = vperm.xlu0 %1178, %v1131
          %v1180 = vpop.permute.xlu0 %1179
          %1181 = vset.pattern.permute.xlu0 0
          %1182 = vperm.xlu0 %1181, %v1133
          %v1183 = vpop.permute.xlu0 %1182
          %1184 = vset.pattern.permute.xlu0 0
          %1185 = vperm.xlu0 %1184, %v1135
          %v1186 = vpop.permute.xlu0 %1185
          %1187 = vset.pattern.permute.xlu0 0
          %1188 = vperm.xlu0 %1187, %v1137
          %v1189 = vpop.permute.xlu0 %1188
          %1190 = vset.pattern.permute.xlu0 0
          %1191 = vperm.xlu0 %1190, %v1139
          %v1192 = vpop.permute.xlu0 %1191
          %1193 = vset.pattern.permute.xlu0 0
          %1194 = vperm.xlu0 %1193, %v1141
          %v1195 = vpop.permute.xlu0 %1194
          %1196 = vset.pattern.permute.xlu0 0
          %1197 = vperm.xlu0 %1196, %v1143
          %v1198 = vpop.permute.xlu0 %1197
          %1199 = vset.pattern.permute.xlu0 0
          %1200 = vperm.xlu0 %1199, %v1145
          %v1201 = vpop.permute.xlu0 %1200
          %1202 = vset.pattern.permute.xlu0 0
          %1203 = vperm.xlu0 %1202, %v1147
          %v1204 = vpop.permute.xlu0 %1203
          %1205 = vset.pattern.permute.xlu0 0
          %1206 = vperm.xlu0 %1205, %v1149
          %v1207 = vpop.permute.xlu0 %1206
          %1208 = vset.pattern.permute.xlu0 0
          %1209 = vperm.xlu0 %1208, %v1151
          %v1210 = vpop.permute.xlu0 %1209
          %1211 = vset.pattern.permute.xlu0 0
          %1212 = vperm.xlu0 %1211, %v1153
          %v1213 = vpop.permute.xlu0 %1212
          %1214 = vset.pattern.permute.xlu0 0
          %1215 = vperm.xlu0 %1214, %v1155
          %v1216 = vpop.permute.xlu0 %1215
          %1217 = vset.pattern.permute.xlu0 0
          %1218 = vperm.xlu0 %1217, %v1157
          %v1219 = vpop.permute.xlu0 %1218
          %1220 = vset.pattern.permute.xlu0 0
          %1221 = vperm.xlu0 %1220, %v1159
          %v1222 = vpop.permute.xlu0 %1221
          %1223 = vset.pattern.permute.xlu0 0
          %1224 = vperm.xlu0 %1223, %v1161
          %v1225 = vpop.permute.xlu0 %1224
          %v1226 = vlaneseq
          %v1227 = vshrl.u32 %v1226, 7
          %v1228 = vsub.s32 %v979, %v1227
          %v1229 = vrot.slane %v1180, %v1228
          %v1230 = vlaneseq
          %v1231 = vshrl.u32 %v1230, 7
          %v1232 = vsub.s32 %v984, %v1231
          %v1233 = vrot.slane %v1183, %v1232
          %v1234 = vsel %vm989, %v1233, %v1229
          %v1235 = vlaneseq
          %v1236 = vshrl.u32 %v1235, 7
          %v1237 = vsub.s32 %v979, %v1236
          %v1238 = vrot.slane %v1186, %v1237
          %v1239 = vlaneseq
          %v1240 = vshrl.u32 %v1239, 7
          %v1241 = vsub.s32 %v984, %v1240
          %v1242 = vrot.slane %v1189, %v1241
          %v1243 = vsel %vm989, %v1242, %v1238
          %v1244 = vlaneseq
          %v1245 = vshrl.u32 %v1244, 7
          %v1246 = vsub.s32 %v979, %v1245
          %v1247 = vrot.slane %v1192, %v1246
          %v1248 = vlaneseq
          %v1249 = vshrl.u32 %v1248, 7
          %v1250 = vsub.s32 %v984, %v1249
          %v1251 = vrot.slane %v1195, %v1250
          %v1252 = vsel %vm989, %v1251, %v1247
          %v1253 = vlaneseq
          %v1254 = vshrl.u32 %v1253, 7
          %v1255 = vsub.s32 %v979, %v1254
          %v1256 = vrot.slane %v1198, %v1255
          %v1257 = vlaneseq
          %v1258 = vshrl.u32 %v1257, 7
          %v1259 = vsub.s32 %v984, %v1258
          %v1260 = vrot.slane %v1201, %v1259
          %v1261 = vsel %vm989, %v1260, %v1256
          %v1262 = vlaneseq
          %v1263 = vshrl.u32 %v1262, 7
          %v1264 = vsub.s32 %v979, %v1263
          %v1265 = vrot.slane %v1204, %v1264
          %v1266 = vlaneseq
          %v1267 = vshrl.u32 %v1266, 7
          %v1268 = vsub.s32 %v984, %v1267
          %v1269 = vrot.slane %v1207, %v1268
          %v1270 = vsel %vm989, %v1269, %v1265
          %v1271 = vlaneseq
          %v1272 = vshrl.u32 %v1271, 7
          %v1273 = vsub.s32 %v979, %v1272
          %v1274 = vrot.slane %v1210, %v1273
          %v1275 = vlaneseq
          %v1276 = vshrl.u32 %v1275, 7
          %v1277 = vsub.s32 %v984, %v1276
          %v1278 = vrot.slane %v1213, %v1277
          %v1279 = vsel %vm989, %v1278, %v1274
          %v1280 = vlaneseq
          %v1281 = vshrl.u32 %v1280, 7
          %v1282 = vsub.s32 %v979, %v1281
          %v1283 = vrot.slane %v1216, %v1282
          %v1284 = vlaneseq
          %v1285 = vshrl.u32 %v1284, 7
          %v1286 = vsub.s32 %v984, %v1285
          %v1287 = vrot.slane %v1219, %v1286
          %v1288 = vsel %vm989, %v1287, %v1283
          %v1289 = vlaneseq
          %v1290 = vshrl.u32 %v1289, 7
          %v1291 = vsub.s32 %v979, %v1290
          %v1292 = vrot.slane %v1222, %v1291
          %v1293 = vlaneseq
          %v1294 = vshrl.u32 %v1293, 7
          %v1295 = vsub.s32 %v984, %v1294
          %v1296 = vrot.slane %v1225, %v1295
          %v1297 = vsel %vm989, %v1296, %v1292
          %v1298 = vsel %vm1054, %v1243, %v1234
          %v1299 = vsel %vm1056, %v1252, %v1298
          %v1300 = vsel %vm1058, %v1261, %v1299
          %v1301 = vsel %vm1060, %v1270, %v1300
          %v1302 = vsel %vm1062, %v1279, %v1301
          %v1303 = vsel %vm1064, %v1288, %v1302
          %v1304 = vsel %vm1066, %v1297, %v1303
          %v1306 = vsel %vm1069, %v1304, 0.0
          %1307 = vadd.xlane.f32.xlu0 %v1306
          %v1308 = vpop.xlane.xlu0 %1307
          %v1309 = vrcp.pop %v1308
          %v1311 = vlaneseq
          %v1312 = vshrl.u32 %v1311, 7
          %v1313 = vsub.s32 0, %v1312
          %v1314 = vrot.slane %v1309, %v1313
          %v1315 = vlaneseq
          %v1316 = vshrl.u32 %v1315, 7
          %v1317 = vsub.s32 1, %v1316
          %v1318 = vrot.slane %v1309, %v1317
          %v1319 = vlaneseq
          %v1320 = vshrl.u32 %v1319, 7
          %v1321 = vsub.s32 2, %v1320
          %v1322 = vrot.slane %v1309, %v1321
          %v1323 = vlaneseq
          %v1324 = vshrl.u32 %v1323, 7
          %v1325 = vsub.s32 3, %v1324
          %v1326 = vrot.slane %v1309, %v1325
          %v1327 = vlaneseq
          %v1328 = vshrl.u32 %v1327, 7
          %v1329 = vsub.s32 4, %v1328
          %v1330 = vrot.slane %v1309, %v1329
          %v1331 = vlaneseq
          %v1332 = vshrl.u32 %v1331, 7
          %v1333 = vsub.s32 5, %v1332
          %v1334 = vrot.slane %v1309, %v1333
          %v1335 = vlaneseq
          %v1336 = vshrl.u32 %v1335, 7
          %v1337 = vsub.s32 6, %v1336
          %v1338 = vrot.slane %v1309, %v1337
          %v1339 = vlaneseq
          %v1340 = vshrl.u32 %v1339, 7
          %v1341 = vsub.s32 7, %v1340
          %v1342 = vrot.slane %v1309, %v1341
          %v1351 = vmul.f32 %v1131, %v1314
          %v1352 = vmul.f32 %v1133, %v1314
          %v1353 = vmul.f32 %v1135, %v1318
          %v1354 = vmul.f32 %v1137, %v1318
          %v1355 = vmul.f32 %v1139, %v1322
          %v1356 = vmul.f32 %v1141, %v1322
          %v1357 = vmul.f32 %v1143, %v1326
          %v1358 = vmul.f32 %v1145, %v1326
          %v1359 = vmul.f32 %v1147, %v1330
          %v1360 = vmul.f32 %v1149, %v1330
          %v1361 = vmul.f32 %v1151, %v1334
          %v1362 = vmul.f32 %v1153, %v1334
          %v1363 = vmul.f32 %v1155, %v1338
          %v1364 = vmul.f32 %v1157, %v1338
          %v1365 = vmul.f32 %v1159, %v1342
          %v1366 = vmul.f32 %v1161, %v1342
          %v1367 = vld [vmem:[#allocation10] sm:$0xff]
          %v1368 = vld [vmem:[#allocation10 + $0x8] sm:$0xff]
          %v1369 = vld [vmem:[#allocation10 + $0x10] sm:$0xff]
          %v1370 = vld [vmem:[#allocation10 + $0x18] sm:$0xff]
          %v1371 = vld [vmem:[#allocation10 + $0x20] sm:$0xff]
          %v1372 = vld [vmem:[#allocation10 + $0x28] sm:$0xff]
          %v1373 = vld [vmem:[#allocation10 + $0x30] sm:$0xff]
          %v1374 = vld [vmem:[#allocation10 + $0x38] sm:$0xff]
          %v1375 = vld [vmem:[#allocation10 + $0x40] sm:$0xff]
          %v1376 = vld [vmem:[#allocation10 + $0x48] sm:$0xff]
          %v1377 = vld [vmem:[#allocation10 + $0x50] sm:$0xff]
          %v1378 = vld [vmem:[#allocation10 + $0x58] sm:$0xff]
          %v1379 = vld [vmem:[#allocation10 + $0x60] sm:$0xff]
          %v1380 = vld [vmem:[#allocation10 + $0x68] sm:$0xff]
          %v1381 = vld [vmem:[#allocation10 + $0x70] sm:$0xff]
          %v1382 = vld [vmem:[#allocation10 + $0x78] sm:$0xff]
          %1384 = vset.pattern.permute.xlu0 0
          %1385 = vperm.xlu0 %1384, %v1351
          %v1386 = vpop.permute.xlu0 %1385
          %1389 = vset.pattern.permute.xlu0 0
          %1390 = vperm.xlu0 %1389, %v1352
          %v1391 = vpop.permute.xlu0 %1390
          %1394 = vset.pattern.permute.xlu0 0
          %1395 = vperm.xlu0 %1394, %v1353
          %v1396 = vpop.permute.xlu0 %1395
          %1399 = vset.pattern.permute.xlu0 0
          %1400 = vperm.xlu0 %1399, %v1354
          %v1401 = vpop.permute.xlu0 %1400
          %1404 = vset.pattern.permute.xlu0 0
          %1405 = vperm.xlu0 %1404, %v1355
          %v1406 = vpop.permute.xlu0 %1405
          %1409 = vset.pattern.permute.xlu0 0
          %1410 = vperm.xlu0 %1409, %v1356
          %v1411 = vpop.permute.xlu0 %1410
          %1414 = vset.pattern.permute.xlu0 0
          %1415 = vperm.xlu0 %1414, %v1357
          %v1416 = vpop.permute.xlu0 %1415
          %1419 = vset.pattern.permute.xlu0 0
          %1420 = vperm.xlu0 %1419, %v1358
          %v1421 = vpop.permute.xlu0 %1420
          %1424 = vset.pattern.permute.xlu0 0
          %1425 = vperm.xlu0 %1424, %v1359
          %v1426 = vpop.permute.xlu0 %1425
          %1429 = vset.pattern.permute.xlu0 0
          %1430 = vperm.xlu0 %1429, %v1360
          %v1431 = vpop.permute.xlu0 %1430
          %1434 = vset.pattern.permute.xlu0 0
          %1435 = vperm.xlu0 %1434, %v1361
          %v1436 = vpop.permute.xlu0 %1435
          %1439 = vset.pattern.permute.xlu0 0
          %1440 = vperm.xlu0 %1439, %v1362
          %v1441 = vpop.permute.xlu0 %1440
          %1444 = vset.pattern.permute.xlu0 0
          %1445 = vperm.xlu0 %1444, %v1363
          %v1446 = vpop.permute.xlu0 %1445
          %1449 = vset.pattern.permute.xlu0 0
          %1450 = vperm.xlu0 %1449, %v1364
          %v1451 = vpop.permute.xlu0 %1450
          %1454 = vset.pattern.permute.xlu0 0
          %1455 = vperm.xlu0 %1454, %v1365
          %v1456 = vpop.permute.xlu0 %1455
          %1459 = vset.pattern.permute.xlu0 0
          %1460 = vperm.xlu0 %1459, %v1366
          %v1461 = vpop.permute.xlu0 %1460
          %v1463 = vmul.f32 %v1367, %v1386
          %v1464 = vmul.f32 %v1368, %v1391
          %v1465 = vmul.f32 %v1369, %v1396
          %v1466 = vmul.f32 %v1370, %v1401
          %v1467 = vmul.f32 %v1371, %v1406
          %v1468 = vmul.f32 %v1372, %v1411
          %v1469 = vmul.f32 %v1373, %v1416
          %v1470 = vmul.f32 %v1374, %v1421
          %v1471 = vmul.f32 %v1375, %v1426
          %v1472 = vmul.f32 %v1376, %v1431
          %v1473 = vmul.f32 %v1377, %v1436
          %v1474 = vmul.f32 %v1378, %v1441
          %v1475 = vmul.f32 %v1379, %v1446
          %v1476 = vmul.f32 %v1380, %v1451
          %v1477 = vmul.f32 %v1381, %v1456
          %v1478 = vmul.f32 %v1382, %v1461
          %v1479 = vadd.f32 %v1463, %v1464
          %v1480 = vrot.slane %v1479, 4
          %v1481 = vadd.f32 %v1479, %v1480
          %v1482 = vrot.slane %v1481, 2
          %v1483 = vadd.f32 %v1481, %v1482
          %v1484 = vrot.slane %v1483, 1
          %v1485 = vadd.f32 %v1483, %v1484
          %v1486 = vadd.f32 %v1465, %v1466
          %v1487 = vrot.slane %v1486, 4
          %v1488 = vadd.f32 %v1486, %v1487
          %v1489 = vrot.slane %v1488, 2
          %v1490 = vadd.f32 %v1488, %v1489
          %v1491 = vrot.slane %v1490, 1
          %v1492 = vadd.f32 %v1490, %v1491
          %v1493 = vadd.f32 %v1467, %v1468
          %v1494 = vrot.slane %v1493, 4
          %v1495 = vadd.f32 %v1493, %v1494
          %v1496 = vrot.slane %v1495, 2
          %v1497 = vadd.f32 %v1495, %v1496
          %v1498 = vrot.slane %v1497, 1
          %v1499 = vadd.f32 %v1497, %v1498
          %v1500 = vadd.f32 %v1469, %v1470
          %v1501 = vrot.slane %v1500, 4
          %v1502 = vadd.f32 %v1500, %v1501
          %v1503 = vrot.slane %v1502, 2
          %v1504 = vadd.f32 %v1502, %v1503
          %v1505 = vrot.slane %v1504, 1
          %v1506 = vadd.f32 %v1504, %v1505
          %v1507 = vadd.f32 %v1471, %v1472
          %v1508 = vrot.slane %v1507, 4
          %v1509 = vadd.f32 %v1507, %v1508
          %v1510 = vrot.slane %v1509, 2
          %v1511 = vadd.f32 %v1509, %v1510
          %v1512 = vrot.slane %v1511, 1
          %v1513 = vadd.f32 %v1511, %v1512
          %v1514 = vadd.f32 %v1473, %v1474
          %v1515 = vrot.slane %v1514, 4
          %v1516 = vadd.f32 %v1514, %v1515
          %v1517 = vrot.slane %v1516, 2
          %v1518 = vadd.f32 %v1516, %v1517
          %v1519 = vrot.slane %v1518, 1
          %v1520 = vadd.f32 %v1518, %v1519
          %v1521 = vadd.f32 %v1475, %v1476
          %v1522 = vrot.slane %v1521, 4
          %v1523 = vadd.f32 %v1521, %v1522
          %v1524 = vrot.slane %v1523, 2
          %v1525 = vadd.f32 %v1523, %v1524
          %v1526 = vrot.slane %v1525, 1
          %v1527 = vadd.f32 %v1525, %v1526
          %v1528 = vadd.f32 %v1477, %v1478
          %v1529 = vrot.slane %v1528, 4
          %v1530 = vadd.f32 %v1528, %v1529
          %v1531 = vrot.slane %v1530, 2
          %v1532 = vadd.f32 %v1530, %v1531
          %v1533 = vrot.slane %v1532, 1
          %v1534 = vadd.f32 %v1532, %v1533
          %v1543 = vsel %vm1054, %v1492, %v1485
          %v1544 = vsel %vm1056, %v1499, %v1543
          %v1545 = vsel %vm1058, %v1506, %v1544
          %v1546 = vsel %vm1060, %v1513, %v1545
          %v1547 = vsel %vm1062, %v1520, %v1546
          %v1548 = vsel %vm1064, %v1527, %v1547
          %v1549 = vsel %vm1066, %v1534, %v1548
          %1551 = vst [vmem:[#allocation4] sm:$0xff] %v1549
        $region112: #{hierarchical_decoder_forward.6} parent=63 // pred_fallthru
          _
        %v1552 = vld [vmem:[#allocation4] sm:$0xff]
        %v1553 = vld [vmem:[#allocation2] sm:$0xff]
        %v1554 = vpack.c.bf16 %v1552, %v1552
        %v1555 = vld [vmem:[#allocation14] sm:$0xff]
        %v1556 = vld [vmem:[#allocation14 + $0x8] sm:$0xff]
        %v1557 = vld [vmem:[#allocation14 + $0x10] sm:$0xff]
        %v1558 = vld [vmem:[#allocation14 + $0x18] sm:$0xff]
        %v1559 = vld [vmem:[#allocation14 + $0x20] sm:$0xff]
        %v1560 = vld [vmem:[#allocation14 + $0x28] sm:$0xff]
        %v1561 = vld [vmem:[#allocation14 + $0x30] sm:$0xff]
        %v1562 = vld [vmem:[#allocation14 + $0x38] sm:$0xff]
        %v1563 = vld [vmem:[#allocation14 + $0x40] sm:$0xff]
        %v1564 = vld [vmem:[#allocation14 + $0x48] sm:$0xff]
        %v1565 = vld [vmem:[#allocation14 + $0x50] sm:$0xff]
        %v1566 = vld [vmem:[#allocation14 + $0x58] sm:$0xff]
        %v1567 = vld [vmem:[#allocation14 + $0x60] sm:$0xff]
        %v1568 = vld [vmem:[#allocation14 + $0x68] sm:$0xff]
        %v1569 = vld [vmem:[#allocation14 + $0x70] sm:$0xff]
        %v1570 = vld [vmem:[#allocation14 + $0x78] sm:$0xff]
        %v1571 = vld [vmem:[#allocation14 + $0x80] sm:$0xff]
        %v1572 = vld [vmem:[#allocation14 + $0x88] sm:$0xff]
        %v1573 = vld [vmem:[#allocation14 + $0x90] sm:$0xff]
        %v1574 = vld [vmem:[#allocation14 + $0x98] sm:$0xff]
        %v1575 = vld [vmem:[#allocation14 + $0xa0] sm:$0xff]
        %v1576 = vld [vmem:[#allocation14 + $0xa8] sm:$0xff]
        %v1577 = vld [vmem:[#allocation14 + $0xb0] sm:$0xff]
        %v1578 = vld [vmem:[#allocation14 + $0xb8] sm:$0xff]
        %v1579 = vld [vmem:[#allocation14 + $0xc0] sm:$0xff]
        %v1580 = vld [vmem:[#allocation14 + $0xc8] sm:$0xff]
        %v1581 = vld [vmem:[#allocation14 + $0xd0] sm:$0xff]
        %v1582 = vld [vmem:[#allocation14 + $0xd8] sm:$0xff]
        %v1583 = vld [vmem:[#allocation14 + $0xe0] sm:$0xff]
        %v1584 = vld [vmem:[#allocation14 + $0xe8] sm:$0xff]
        %v1585 = vld [vmem:[#allocation14 + $0xf0] sm:$0xff]
        %v1586 = vld [vmem:[#allocation14 + $0xf8] sm:$0xff]
        %v1587 = vpack.c.bf16 %v1553, %v1553
        %v1588 = vld [vmem:[#allocation16] sm:$0xff]
        %v1589 = vld [vmem:[#allocation16 + $0x8] sm:$0xff]
        %v1590 = vld [vmem:[#allocation16 + $0x10] sm:$0xff]
        %v1591 = vld [vmem:[#allocation16 + $0x18] sm:$0xff]
        %v1592 = vld [vmem:[#allocation16 + $0x20] sm:$0xff]
        %v1593 = vld [vmem:[#allocation16 + $0x28] sm:$0xff]
        %v1594 = vld [vmem:[#allocation16 + $0x30] sm:$0xff]
        %v1595 = vld [vmem:[#allocation16 + $0x38] sm:$0xff]
        %v1596 = vld [vmem:[#allocation16 + $0x40] sm:$0xff]
        %v1597 = vld [vmem:[#allocation16 + $0x48] sm:$0xff]
        %v1598 = vld [vmem:[#allocation16 + $0x50] sm:$0xff]
        %v1599 = vld [vmem:[#allocation16 + $0x58] sm:$0xff]
        %v1600 = vld [vmem:[#allocation16 + $0x60] sm:$0xff]
        %v1601 = vld [vmem:[#allocation16 + $0x68] sm:$0xff]
        %v1602 = vld [vmem:[#allocation16 + $0x70] sm:$0xff]
        %v1603 = vld [vmem:[#allocation16 + $0x78] sm:$0xff]
        %v1604 = vld [vmem:[#allocation16 + $0x80] sm:$0xff]
        %v1605 = vld [vmem:[#allocation16 + $0x88] sm:$0xff]
        %v1606 = vld [vmem:[#allocation16 + $0x90] sm:$0xff]
        %v1607 = vld [vmem:[#allocation16 + $0x98] sm:$0xff]
        %v1608 = vld [vmem:[#allocation16 + $0xa0] sm:$0xff]
        %v1609 = vld [vmem:[#allocation16 + $0xa8] sm:$0xff]
        %v1610 = vld [vmem:[#allocation16 + $0xb0] sm:$0xff]
        %v1611 = vld [vmem:[#allocation16 + $0xb8] sm:$0xff]
        %v1612 = vld [vmem:[#allocation16 + $0xc0] sm:$0xff]
        %v1613 = vld [vmem:[#allocation16 + $0xc8] sm:$0xff]
        %v1614 = vld [vmem:[#allocation16 + $0xd0] sm:$0xff]
        %v1615 = vld [vmem:[#allocation16 + $0xd8] sm:$0xff]
        %v1616 = vld [vmem:[#allocation16 + $0xe0] sm:$0xff]
        %v1617 = vld [vmem:[#allocation16 + $0xe8] sm:$0xff]
        %v1618 = vld [vmem:[#allocation16 + $0xf0] sm:$0xff]
        %v1619 = vld [vmem:[#allocation16 + $0xf8] sm:$0xff]
        %v1652 = vunpack.c.l.b16 %v1588
        %v1653 = vunpack.c.h.b16 %v1588
        %v1654 = vunpack.c.l.b16 %v1589
        %v1655 = vunpack.c.h.b16 %v1589
        %v1656 = vunpack.c.l.b16 %v1590
        %v1657 = vunpack.c.h.b16 %v1590
        %v1658 = vunpack.c.l.b16 %v1591
        %v1659 = vunpack.c.h.b16 %v1591
        %v1660 = vunpack.c.l.b16 %v1592
        %v1661 = vunpack.c.h.b16 %v1592
        %v1662 = vunpack.c.l.b16 %v1593
        %v1663 = vunpack.c.h.b16 %v1593
        %v1664 = vunpack.c.l.b16 %v1594
        %v1665 = vunpack.c.h.b16 %v1594
        %v1666 = vunpack.c.l.b16 %v1595
        %v1667 = vunpack.c.h.b16 %v1595
        %v1668 = vunpack.c.l.b16 %v1596
        %v1669 = vunpack.c.h.b16 %v1596
        %v1670 = vunpack.c.l.b16 %v1597
        %v1671 = vunpack.c.h.b16 %v1597
        %v1672 = vunpack.c.l.b16 %v1598
        %v1673 = vunpack.c.h.b16 %v1598
        %v1674 = vunpack.c.l.b16 %v1599
        %v1675 = vunpack.c.h.b16 %v1599
        %v1676 = vunpack.c.l.b16 %v1600
        %v1677 = vunpack.c.h.b16 %v1600
        %v1678 = vunpack.c.l.b16 %v1601
        %v1679 = vunpack.c.h.b16 %v1601
        %v1680 = vunpack.c.l.b16 %v1602
        %v1681 = vunpack.c.h.b16 %v1602
        %v1682 = vunpack.c.l.b16 %v1603
        %v1683 = vunpack.c.h.b16 %v1603
        %v1684 = vunpack.c.l.b16 %v1604
        %v1685 = vunpack.c.h.b16 %v1604
        %v1686 = vunpack.c.l.b16 %v1605
        %v1687 = vunpack.c.h.b16 %v1605
        %v1688 = vunpack.c.l.b16 %v1606
        %v1689 = vunpack.c.h.b16 %v1606
        %v1690 = vunpack.c.l.b16 %v1607
        %v1691 = vunpack.c.h.b16 %v1607
        %v1692 = vunpack.c.l.b16 %v1608
        %v1693 = vunpack.c.h.b16 %v1608
        %v1694 = vunpack.c.l.b16 %v1609
        %v1695 = vunpack.c.h.b16 %v1609
        %v1696 = vunpack.c.l.b16 %v1610
        %v1697 = vunpack.c.h.b16 %v1610
        %v1698 = vunpack.c.l.b16 %v1611
        %v1699 = vunpack.c.h.b16 %v1611
        %v1700 = vunpack.c.l.b16 %v1612
        %v1701 = vunpack.c.h.b16 %v1612
        %v1702 = vunpack.c.l.b16 %v1613
        %v1703 = vunpack.c.h.b16 %v1613
        %v1704 = vunpack.c.l.b16 %v1614
        %v1705 = vunpack.c.h.b16 %v1614
        %v1706 = vunpack.c.l.b16 %v1615
        %v1707 = vunpack.c.h.b16 %v1615
        %v1708 = vunpack.c.l.b16 %v1616
        %v1709 = vunpack.c.h.b16 %v1616
        %v1710 = vunpack.c.l.b16 %v1617
        %v1711 = vunpack.c.h.b16 %v1617
        %v1712 = vunpack.c.l.b16 %v1618
        %v1713 = vunpack.c.h.b16 %v1618
        %v1714 = vunpack.c.l.b16 %v1619
        %v1715 = vunpack.c.h.b16 %v1619
        %v1716 = vpack.c.b16 %v1656, %v1652
        %v1717 = vpack.c.b16 %v1657, %v1653
        %v1718 = vpack.c.b16 %v1658, %v1654
        %v1719 = vpack.c.b16 %v1659, %v1655
        %v1720 = vpack.c.b16 %v1664, %v1660
        %v1721 = vpack.c.b16 %v1665, %v1661
        %v1722 = vpack.c.b16 %v1666, %v1662
        %v1723 = vpack.c.b16 %v1667, %v1663
        %v1724 = vpack.c.b16 %v1672, %v1668
        %v1725 = vpack.c.b16 %v1673, %v1669
        %v1726 = vpack.c.b16 %v1674, %v1670
        %v1727 = vpack.c.b16 %v1675, %v1671
        %v1728 = vpack.c.b16 %v1680, %v1676
        %v1729 = vpack.c.b16 %v1681, %v1677
        %v1730 = vpack.c.b16 %v1682, %v1678
        %v1731 = vpack.c.b16 %v1683, %v1679
        %v1732 = vpack.c.b16 %v1688, %v1684
        %v1733 = vpack.c.b16 %v1689, %v1685
        %v1734 = vpack.c.b16 %v1690, %v1686
        %v1735 = vpack.c.b16 %v1691, %v1687
        %v1736 = vpack.c.b16 %v1696, %v1692
        %v1737 = vpack.c.b16 %v1697, %v1693
        %v1738 = vpack.c.b16 %v1698, %v1694
        %v1739 = vpack.c.b16 %v1699, %v1695
        %v1740 = vpack.c.b16 %v1704, %v1700
        %v1741 = vpack.c.b16 %v1705, %v1701
        %v1742 = vpack.c.b16 %v1706, %v1702
        %v1743 = vpack.c.b16 %v1707, %v1703
        %v1744 = vpack.c.b16 %v1712, %v1708
        %v1745 = vpack.c.b16 %v1713, %v1709
        %v1746 = vpack.c.b16 %v1714, %v1710
        %v1747 = vpack.c.b16 %v1715, %v1711
        %1780 = vmatprep.subr.bf16.mxu0 %v1717
        %1781 = vmatpush1.bf16.msra.mxu0 %v1716
        %1782 = vmatprep.subr.bf16.mxu0 %v1721
        %1783 = vmatpush1.bf16.msra.mxu0 %v1720
        %1784 = vmatprep.subr.bf16.mxu0 %v1725
        %1785 = vmatpush1.bf16.msra.mxu0 %v1724
        %1786 = vmatprep.subr.bf16.mxu0 %v1729
        %1787 = vmatpush1.bf16.msra.mxu0 %v1728
        %1788 = vmatprep.subr.bf16.mxu0 %v1733
        %1789 = vmatpush1.bf16.msra.mxu0 %v1732
        %1790 = vmatprep.subr.bf16.mxu0 %v1737
        %1791 = vmatpush1.bf16.msra.mxu0 %v1736
        %1792 = vmatprep.subr.bf16.mxu0 %v1741
        %1793 = vmatpush1.bf16.msra.mxu0 %v1740
        %1794 = vmatprep.subr.bf16.mxu0 %v1745
        %1795 = vmatpush1.bf16.msra.mxu0 %v1744
        %1796 = vmatprep.subr.bf16.mxu0 0
        %1797 = vmatpush1.bf16.msra.mxu0 0
        %1798 = vmatprep.subr.bf16.mxu0 0
        %1799 = vmatpush1.bf16.msra.mxu0 0
        %1800 = vmatprep.subr.bf16.mxu0 0
        %1801 = vmatpush1.bf16.msra.mxu0 0
        %1802 = vmatprep.subr.bf16.mxu0 0
        %1803 = vmatpush1.bf16.msra.mxu0 0
        %1804 = vmatprep.subr.bf16.mxu0 0
        %1805 = vmatpush1.bf16.msra.mxu0 0
        %1806 = vmatprep.subr.bf16.mxu0 0
        %1807 = vmatpush1.bf16.msra.mxu0 0
        %1808 = vmatprep.subr.bf16.mxu0 0
        %1809 = vmatpush1.bf16.msra.mxu0 0
        %1810 = vmatprep.subr.bf16.mxu0 0
        %1811 = vmatpush1.bf16.msra.mxu0 0
        %1812 = vmatprep.mubr.bf16.mxu0 0
        %1813 = vmatmul.mubr.bf16.gmra.mrb[0].mxu0 %v1587
        %v1814 = vpop.f32.mrb[0].mxu0
        %v1815 = vadd.f32 0.0, %v1814
        %v1816 = vpop.f32.mrb[0].mxu0
        %v1817 = vadd.f32 0.0, %v1816
        %v1818 = vpop.f32.mrb[0].mxu0
        %v1819 = vpop.f32.mrb[0].mxu0
        %1820 = vdwg.mxu0
        %1821 = vmatprep.subr.bf16.mxu0 %v1719
        %1822 = vmatpush1.bf16.msra.mxu0 %v1718
        %1823 = vmatprep.subr.bf16.mxu0 %v1723
        %1824 = vmatpush1.bf16.msra.mxu0 %v1722
        %1825 = vmatprep.subr.bf16.mxu0 %v1727
        %1826 = vmatpush1.bf16.msra.mxu0 %v1726
        %1827 = vmatprep.subr.bf16.mxu0 %v1731
        %1828 = vmatpush1.bf16.msra.mxu0 %v1730
        %1829 = vmatprep.subr.bf16.mxu0 %v1735
        %1830 = vmatpush1.bf16.msra.mxu0 %v1734
        %1831 = vmatprep.subr.bf16.mxu0 %v1739
        %1832 = vmatpush1.bf16.msra.mxu0 %v1738
        %1833 = vmatprep.subr.bf16.mxu0 %v1743
        %1834 = vmatpush1.bf16.msra.mxu0 %v1742
        %1835 = vmatprep.subr.bf16.mxu0 %v1747
        %1836 = vmatpush1.bf16.msra.mxu0 %v1746
        %1837 = vmatprep.subr.bf16.mxu0 0
        %1838 = vmatpush1.bf16.msra.mxu0 0
        %1839 = vmatprep.subr.bf16.mxu0 0
        %1840 = vmatpush1.bf16.msra.mxu0 0
        %1841 = vmatprep.subr.bf16.mxu0 0
        %1842 = vmatpush1.bf16.msra.mxu0 0
        %1843 = vmatprep.subr.bf16.mxu0 0
        %1844 = vmatpush1.bf16.msra.mxu0 0
        %1845 = vmatprep.subr.bf16.mxu0 0
        %1846 = vmatpush1.bf16.msra.mxu0 0
        %1847 = vmatprep.subr.bf16.mxu0 0
        %1848 = vmatpush1.bf16.msra.mxu0 0
        %1849 = vmatprep.subr.bf16.mxu0 0
        %1850 = vmatpush1.bf16.msra.mxu0 0
        %1851 = vmatprep.subr.bf16.mxu0 0
        %1852 = vmatpush1.bf16.msra.mxu0 0
        %1853 = vmatprep.mubr.bf16.mxu0 0
        %1854 = vmatmul.mubr.bf16.gmra.mrb[0].mxu0 %v1587
        %v1855 = vpop.f32.mrb[0].mxu0
        %v1856 = vadd.f32 0.0, %v1855
        %v1857 = vpop.f32.mrb[0].mxu0
        %v1858 = vadd.f32 0.0, %v1857
        %v1859 = vpop.f32.mrb[0].mxu0
        %v1860 = vpop.f32.mrb[0].mxu0
        %1861 = vdwg.mxu0
        %v1894 = vunpack.c.l.b16 %v1555
        %v1895 = vunpack.c.h.b16 %v1555
        %v1896 = vunpack.c.l.b16 %v1556
        %v1897 = vunpack.c.h.b16 %v1556
        %v1898 = vunpack.c.l.b16 %v1557
        %v1899 = vunpack.c.h.b16 %v1557
        %v1900 = vunpack.c.l.b16 %v1558
        %v1901 = vunpack.c.h.b16 %v1558
        %v1902 = vunpack.c.l.b16 %v1559
        %v1903 = vunpack.c.h.b16 %v1559
        %v1904 = vunpack.c.l.b16 %v1560
        %v1905 = vunpack.c.h.b16 %v1560
        %v1906 = vunpack.c.l.b16 %v1561
        %v1907 = vunpack.c.h.b16 %v1561
        %v1908 = vunpack.c.l.b16 %v1562
        %v1909 = vunpack.c.h.b16 %v1562
        %v1910 = vunpack.c.l.b16 %v1563
        %v1911 = vunpack.c.h.b16 %v1563
        %v1912 = vunpack.c.l.b16 %v1564
        %v1913 = vunpack.c.h.b16 %v1564
        %v1914 = vunpack.c.l.b16 %v1565
        %v1915 = vunpack.c.h.b16 %v1565
        %v1916 = vunpack.c.l.b16 %v1566
        %v1917 = vunpack.c.h.b16 %v1566
        %v1918 = vunpack.c.l.b16 %v1567
        %v1919 = vunpack.c.h.b16 %v1567
        %v1920 = vunpack.c.l.b16 %v1568
        %v1921 = vunpack.c.h.b16 %v1568
        %v1922 = vunpack.c.l.b16 %v1569
        %v1923 = vunpack.c.h.b16 %v1569
        %v1924 = vunpack.c.l.b16 %v1570
        %v1925 = vunpack.c.h.b16 %v1570
        %v1926 = vunpack.c.l.b16 %v1571
        %v1927 = vunpack.c.h.b16 %v1571
        %v1928 = vunpack.c.l.b16 %v1572
        %v1929 = vunpack.c.h.b16 %v1572
        %v1930 = vunpack.c.l.b16 %v1573
        %v1931 = vunpack.c.h.b16 %v1573
        %v1932 = vunpack.c.l.b16 %v1574
        %v1933 = vunpack.c.h.b16 %v1574
        %v1934 = vunpack.c.l.b16 %v1575
        %v1935 = vunpack.c.h.b16 %v1575
        %v1936 = vunpack.c.l.b16 %v1576
        %v1937 = vunpack.c.h.b16 %v1576
        %v1938 = vunpack.c.l.b16 %v1577
        %v1939 = vunpack.c.h.b16 %v1577
        %v1940 = vunpack.c.l.b16 %v1578
        %v1941 = vunpack.c.h.b16 %v1578
        %v1942 = vunpack.c.l.b16 %v1579
        %v1943 = vunpack.c.h.b16 %v1579
        %v1944 = vunpack.c.l.b16 %v1580
        %v1945 = vunpack.c.h.b16 %v1580
        %v1946 = vunpack.c.l.b16 %v1581
        %v1947 = vunpack.c.h.b16 %v1581
        %v1948 = vunpack.c.l.b16 %v1582
        %v1949 = vunpack.c.h.b16 %v1582
        %v1950 = vunpack.c.l.b16 %v1583
        %v1951 = vunpack.c.h.b16 %v1583
        %v1952 = vunpack.c.l.b16 %v1584
        %v1953 = vunpack.c.h.b16 %v1584
        %v1954 = vunpack.c.l.b16 %v1585
        %v1955 = vunpack.c.h.b16 %v1585
        %v1956 = vunpack.c.l.b16 %v1586
        %v1957 = vunpack.c.h.b16 %v1586
        %v1958 = vpack.c.b16 %v1898, %v1894
        %v1959 = vpack.c.b16 %v1899, %v1895
        %v1960 = vpack.c.b16 %v1900, %v1896
        %v1961 = vpack.c.b16 %v1901, %v1897
        %v1962 = vpack.c.b16 %v1906, %v1902
        %v1963 = vpack.c.b16 %v1907, %v1903
        %v1964 = vpack.c.b16 %v1908, %v1904
        %v1965 = vpack.c.b16 %v1909, %v1905
        %v1966 = vpack.c.b16 %v1914, %v1910
        %v1967 = vpack.c.b16 %v1915, %v1911
        %v1968 = vpack.c.b16 %v1916, %v1912
        %v1969 = vpack.c.b16 %v1917, %v1913
        %v1970 = vpack.c.b16 %v1922, %v1918
        %v1971 = vpack.c.b16 %v1923, %v1919
        %v1972 = vpack.c.b16 %v1924, %v1920
        %v1973 = vpack.c.b16 %v1925, %v1921
        %v1974 = vpack.c.b16 %v1930, %v1926
        %v1975 = vpack.c.b16 %v1931, %v1927
        %v1976 = vpack.c.b16 %v1932, %v1928
        %v1977 = vpack.c.b16 %v1933, %v1929
        %v1978 = vpack.c.b16 %v1938, %v1934
        %v1979 = vpack.c.b16 %v1939, %v1935
        %v1980 = vpack.c.b16 %v1940, %v1936
        %v1981 = vpack.c.b16 %v1941, %v1937
        %v1982 = vpack.c.b16 %v1946, %v1942
        %v1983 = vpack.c.b16 %v1947, %v1943
        %v1984 = vpack.c.b16 %v1948, %v1944
        %v1985 = vpack.c.b16 %v1949, %v1945
        %v1986 = vpack.c.b16 %v1954, %v1950
        %v1987 = vpack.c.b16 %v1955, %v1951
        %v1988 = vpack.c.b16 %v1956, %v1952
        %v1989 = vpack.c.b16 %v1957, %v1953
        %2022 = vmatprep.subr.bf16.mxu0 %v1959
        %2023 = vmatpush1.bf16.msra.mxu0 %v1958
        %2024 = vmatprep.subr.bf16.mxu0 %v1963
        %2025 = vmatpush1.bf16.msra.mxu0 %v1962
        %2026 = vmatprep.subr.bf16.mxu0 %v1967
        %2027 = vmatpush1.bf16.msra.mxu0 %v1966
        %2028 = vmatprep.subr.bf16.mxu0 %v1971
        %2029 = vmatpush1.bf16.msra.mxu0 %v1970
        %2030 = vmatprep.subr.bf16.mxu0 %v1975
        %2031 = vmatpush1.bf16.msra.mxu0 %v1974
        %2032 = vmatprep.subr.bf16.mxu0 %v1979
        %2033 = vmatpush1.bf16.msra.mxu0 %v1978
        %2034 = vmatprep.subr.bf16.mxu0 %v1983
        %2035 = vmatpush1.bf16.msra.mxu0 %v1982
        %2036 = vmatprep.subr.bf16.mxu0 %v1987
        %2037 = vmatpush1.bf16.msra.mxu0 %v1986
        %2038 = vmatprep.subr.bf16.mxu0 0
        %2039 = vmatpush1.bf16.msra.mxu0 0
        %2040 = vmatprep.subr.bf16.mxu0 0
        %2041 = vmatpush1.bf16.msra.mxu0 0
        %2042 = vmatprep.subr.bf16.mxu0 0
        %2043 = vmatpush1.bf16.msra.mxu0 0
        %2044 = vmatprep.subr.bf16.mxu0 0
        %2045 = vmatpush1.bf16.msra.mxu0 0
        %2046 = vmatprep.subr.bf16.mxu0 0
        %2047 = vmatpush1.bf16.msra.mxu0 0
        %2048 = vmatprep.subr.bf16.mxu0 0
        %2049 = vmatpush1.bf16.msra.mxu0 0
        %2050 = vmatprep.subr.bf16.mxu0 0
        %2051 = vmatpush1.bf16.msra.mxu0 0
        %2052 = vmatprep.subr.bf16.mxu0 0
        %2053 = vmatpush1.bf16.msra.mxu0 0
        %2054 = vmatprep.mubr.bf16.mxu0 0
        %2055 = vmatmul.mubr.bf16.gmra.mrb[0].mxu0 %v1554
        %v2056 = vpop.f32.mrb[0].mxu0
        %v2057 = vadd.f32 %v1815, %v2056
        %v2058 = vpop.f32.mrb[0].mxu0
        %v2059 = vadd.f32 %v1817, %v2058
        %v2060 = vpop.f32.mrb[0].mxu0
        %v2061 = vpop.f32.mrb[0].mxu0
        %2062 = vdwg.mxu0
        %2063 = vmatprep.subr.bf16.mxu0 %v1961
        %2064 = vmatpush1.bf16.msra.mxu0 %v1960
        %2065 = vmatprep.subr.bf16.mxu0 %v1965
        %2066 = vmatpush1.bf16.msra.mxu0 %v1964
        %2067 = vmatprep.subr.bf16.mxu0 %v1969
        %2068 = vmatpush1.bf16.msra.mxu0 %v1968
        %2069 = vmatprep.subr.bf16.mxu0 %v1973
        %2070 = vmatpush1.bf16.msra.mxu0 %v1972
        %2071 = vmatprep.subr.bf16.mxu0 %v1977
        %2072 = vmatpush1.bf16.msra.mxu0 %v1976
        %2073 = vmatprep.subr.bf16.mxu0 %v1981
        %2074 = vmatpush1.bf16.msra.mxu0 %v1980
        %2075 = vmatprep.subr.bf16.mxu0 %v1985
        %2076 = vmatpush1.bf16.msra.mxu0 %v1984
        %2077 = vmatprep.subr.bf16.mxu0 %v1989
        %2078 = vmatpush1.bf16.msra.mxu0 %v1988
        %2079 = vmatprep.subr.bf16.mxu0 0
        %2080 = vmatpush1.bf16.msra.mxu0 0
        %2081 = vmatprep.subr.bf16.mxu0 0
        %2082 = vmatpush1.bf16.msra.mxu0 0
        %2083 = vmatprep.subr.bf16.mxu0 0
        %2084 = vmatpush1.bf16.msra.mxu0 0
        %2085 = vmatprep.subr.bf16.mxu0 0
        %2086 = vmatpush1.bf16.msra.mxu0 0
        %2087 = vmatprep.subr.bf16.mxu0 0
        %2088 = vmatpush1.bf16.msra.mxu0 0
        %2089 = vmatprep.subr.bf16.mxu0 0
        %2090 = vmatpush1.bf16.msra.mxu0 0
        %2091 = vmatprep.subr.bf16.mxu0 0
        %2092 = vmatpush1.bf16.msra.mxu0 0
        %2093 = vmatprep.subr.bf16.mxu0 0
        %2094 = vmatpush1.bf16.msra.mxu0 0
        %2095 = vmatprep.mubr.bf16.mxu0 0
        %2096 = vmatmul.mubr.bf16.gmra.mrb[0].mxu0 %v1554
        %v2097 = vpop.f32.mrb[0].mxu0
        %v2098 = vadd.f32 %v1856, %v2097
        %v2099 = vpop.f32.mrb[0].mxu0
        %v2100 = vadd.f32 %v1858, %v2099
        %v2101 = vpop.f32.mrb[0].mxu0
        %v2102 = vpop.f32.mrb[0].mxu0
        %2103 = vdwg.mxu0
        %v2104 = vld [vmem:[#allocation17] sm:$0xf]
        %v2106 = vlaneseq
        %v2107 = vshrl.u32 %v2106, 7
        %v2108 = vsub.s32 0, %v2107
        %v2109 = vrot.slane %v2104, %v2108
        %v2110 = vlaneseq
        %v2111 = vshrl.u32 %v2110, 7
        %v2112 = vsub.s32 1, %v2111
        %v2113 = vrot.slane %v2104, %v2112
        %v2114 = vlaneseq
        %v2115 = vshrl.u32 %v2114, 7
        %v2116 = vsub.s32 2, %v2115
        %v2117 = vrot.slane %v2104, %v2116
        %v2118 = vlaneseq
        %v2119 = vshrl.u32 %v2118, 7
        %v2120 = vsub.s32 3, %v2119
        %v2121 = vrot.slane %v2104, %v2120
        %v2126 = vadd.f32 %v2057, %v2109
        %v2127 = vadd.f32 %v2059, %v2113
        %v2128 = vadd.f32 %v2098, %v2117
        %v2129 = vadd.f32 %v2100, %v2121
        %v2130 = vld [vmem:[#allocation3] sm:$0xff]
        %v2131 = vxor.u32 %v2126, 2147483648
        %v2132 = vmul.f32 %v2131, 1.442695
        %v2133 = vpow.pop %v2132
        %v2134 = vadd.f32 %v2133, 1.0
        %v2135 = vrcp.pop %v2134
        %v2136 = vmul.f32 1.0, %v2135
        %v2137 = vxor.u32 %v2127, 2147483648
        %v2138 = vmul.f32 %v2137, 1.442695
        %v2139 = vpow.pop %v2138
        %v2140 = vadd.f32 %v2139, 1.0
        %v2141 = vrcp.pop %v2140
        %v2142 = vmul.f32 1.0, %v2141
        %v2143 = vtanh.pop %v2128
        %v2144 = vxor.u32 %v2129, 2147483648
        %v2145 = vmul.f32 %v2144, 1.442695
        %v2146 = vpow.pop %v2145
        %v2147 = vadd.f32 %v2146, 1.0
        %v2148 = vrcp.pop %v2147
        %v2149 = vmul.f32 1.0, %v2148
        %v2150 = vmul.f32 %v2142, %v2130
        %v2151 = vmul.f32 %v2136, %v2143
        %v2152 = vadd.f32 %v2150, %v2151
        %v2153 = vtanh.pop %v2152
        %v2154 = vmul.f32 %v2149, %v2153
        %2155 = vst [vmem:[#allocation2] sm:$0xff] %v2154
        %2156 = vst [vmem:[#allocation3] sm:$0xff] %v2152
        %v2157 = vld [vmem:[#allocation19] sm:$0xff]
        %v2158 = vld [vmem:[#allocation19 + $0x8] sm:$0xff]
        %v2159 = vld [vmem:[#allocation19 + $0x10] sm:$0xff]
        %v2160 = vld [vmem:[#allocation19 + $0x18] sm:$0xff]
        %v2161 = vld [vmem:[#allocation19 + $0x20] sm:$0xff]
        %v2162 = vld [vmem:[#allocation19 + $0x28] sm:$0xff]
        %v2163 = vld [vmem:[#allocation19 + $0x30] sm:$0xff]
        %v2164 = vld [vmem:[#allocation19 + $0x38] sm:$0xff]
        %v2165 = vld [vmem:[#allocation19 + $0x40] sm:$0xff]
        %v2166 = vld [vmem:[#allocation19 + $0x48] sm:$0xff]
        %v2167 = vld [vmem:[#allocation19 + $0x50] sm:$0xff]
        %v2168 = vld [vmem:[#allocation19 + $0x58] sm:$0xff]
        %v2169 = vld [vmem:[#allocation19 + $0x60] sm:$0xff]
        %v2170 = vld [vmem:[#allocation19 + $0x68] sm:$0xff]
        %v2171 = vld [vmem:[#allocation19 + $0x70] sm:$0xff]
        %v2172 = vld [vmem:[#allocation19 + $0x78] sm:$0xff]
        %v2173 = vld [vmem:[#allocation20] sm:$0x1]
        %v2175 = vlaneseq
        %v2176 = vshrl.u32 %v2175, 7
        %v2177 = vsub.s32 0, %v2176
        %v2178 = vrot.slane %v2173, %v2177
        %2180 = vmatprep.subr.mxu0 0.0
        %2181 = vmatpush1.msra.mxu0 %v2157
        %2182 = vmatprep.subr.mxu0 0.0
        %2183 = vmatpush1.msra.mxu0 %v2158
        %2184 = vmatprep.subr.mxu0 0.0
        %2185 = vmatpush1.msra.mxu0 %v2159
        %2186 = vmatprep.subr.mxu0 0.0
        %2187 = vmatpush1.msra.mxu0 %v2160
        %2188 = vmatprep.subr.mxu0 0.0
        %2189 = vmatpush1.msra.mxu0 %v2161
        %2190 = vmatprep.subr.mxu0 0.0
        %2191 = vmatpush1.msra.mxu0 %v2162
        %2192 = vmatprep.subr.mxu0 0.0
        %2193 = vmatpush1.msra.mxu0 %v2163
        %2194 = vmatprep.subr.mxu0 0.0
        %2195 = vmatpush1.msra.mxu0 %v2164
        %2196 = vmatprep.subr.mxu0 0.0
        %2197 = vmatpush1.msra.mxu0 %v2165
        %2198 = vmatprep.subr.mxu0 0.0
        %2199 = vmatpush1.msra.mxu0 %v2166
        %2200 = vmatprep.subr.mxu0 0.0
        %2201 = vmatpush1.msra.mxu0 %v2167
        %2202 = vmatprep.subr.mxu0 0.0
        %2203 = vmatpush1.msra.mxu0 %v2168
        %2204 = vmatprep.subr.mxu0 0.0
        %2205 = vmatpush1.msra.mxu0 %v2169
        %2206 = vmatprep.subr.mxu0 0.0
        %2207 = vmatpush1.msra.mxu0 %v2170
        %2208 = vmatprep.subr.mxu0 0.0
        %2209 = vmatpush1.msra.mxu0 %v2171
        %2210 = vmatprep.subr.mxu0 0.0
        %2211 = vmatpush1.msra.mxu0 %v2172
        %2212 = vmatprep.subr.mxu0 0.0
        %2213 = vmatpush1.msra.mxu0 0.0
        %2214 = vmatprep.subr.mxu0 0.0
        %2215 = vmatpush1.msra.mxu0 0.0
        %2216 = vmatprep.subr.mxu0 0.0
        %2217 = vmatpush1.msra.mxu0 0.0
        %2218 = vmatprep.subr.mxu0 0.0
        %2219 = vmatpush1.msra.mxu0 0.0
        %2220 = vmatprep.subr.mxu0 0.0
        %2221 = vmatpush1.msra.mxu0 0.0
        %2222 = vmatprep.subr.mxu0 0.0
        %2223 = vmatpush1.msra.mxu0 0.0
        %2224 = vmatprep.subr.mxu0 0.0
        %2225 = vmatpush1.msra.mxu0 0.0
        %2226 = vmatprep.subr.mxu0 0.0
        %2227 = vmatpush1.msra.mxu0 0.0
        %2228 = vmatprep.subr.mxu0 0.0
        %2229 = vmatpush1.msra.mxu0 0.0
        %2230 = vmatprep.subr.mxu0 0.0
        %2231 = vmatpush1.msra.mxu0 0.0
        %2232 = vmatprep.subr.mxu0 0.0
        %2233 = vmatpush1.msra.mxu0 0.0
        %2234 = vmatprep.subr.mxu0 0.0
        %2235 = vmatpush1.msra.mxu0 0.0
        %2236 = vmatprep.subr.mxu0 0.0
        %2237 = vmatpush1.msra.mxu0 0.0
        %2238 = vmatprep.subr.mxu0 0.0
        %2239 = vmatpush1.msra.mxu0 0.0
        %2240 = vmatprep.subr.mxu0 0.0
        %2241 = vmatpush1.msra.mxu0 0.0
        %2242 = vmatprep.subr.mxu0 0.0
        %2243 = vmatpush1.msra.mxu0 0.0
        %2244 = vmatprep.mubr.f32.mxu0 0.0
        %2245 = vmatmul.mubr.f32.gmra.mrb[0].mxu0 %v2154
        %v2246 = vpop.f32.mrb[0].mxu0
        %v2247 = vadd.f32 %v2178, %v2246
        %v2248 = vpop.f32.mrb[0].mxu0
        %2249 = vdwg.mxu0
        %v2250 = vxor.u32 %v2247, 2147483648
        %v2251 = vmul.f32 %v2250, 1.442695
        %v2252 = vpow.pop %v2251
        %v2253 = vadd.f32 %v2252, 1.0
        %v2254 = vrcp.pop %v2253
        %v2255 = vmul.f32 1.0, %v2254
        %2256 = vst [vmem:[%s648] sm:$0xff] %v2255
        %v2257 = vld [vmem:[%s563] sm:$0xff]
        %v2258 = vld [vmem:[%s563 + $0x8] sm:$0xff]
        %v2259 = vld [vmem:[%s563 + $0x10] sm:$0xff]
        %v2260 = vld [vmem:[%s563 + $0x18] sm:$0xff]
        %v2261 = vpack.c.bf16 %v2154, %v2154
        %v2262 = vld [vmem:[#allocation22] sm:$0xff]
        %v2263 = vld [vmem:[#allocation22 + $0x8] sm:$0xff]
        %v2264 = vld [vmem:[#allocation22 + $0x10] sm:$0xff]
        %v2265 = vld [vmem:[#allocation22 + $0x18] sm:$0xff]
        %v2266 = vld [vmem:[#allocation22 + $0x20] sm:$0xff]
        %v2267 = vld [vmem:[#allocation22 + $0x28] sm:$0xff]
        %v2268 = vld [vmem:[#allocation22 + $0x30] sm:$0xff]
        %v2269 = vld [vmem:[#allocation22 + $0x38] sm:$0xff]
        %v2270 = vld [vmem:[#allocation22 + $0x40] sm:$0xff]
        %v2271 = vld [vmem:[#allocation22 + $0x48] sm:$0xff]
        %v2272 = vld [vmem:[#allocation22 + $0x50] sm:$0xff]
        %v2273 = vld [vmem:[#allocation22 + $0x58] sm:$0xff]
        %v2274 = vld [vmem:[#allocation22 + $0x60] sm:$0xff]
        %v2275 = vld [vmem:[#allocation22 + $0x68] sm:$0xff]
        %v2276 = vld [vmem:[#allocation22 + $0x70] sm:$0xff]
        %v2277 = vld [vmem:[#allocation22 + $0x78] sm:$0xff]
        %v2278 = vld [vmem:[#allocation22 + $0x80] sm:$0xff]
        %v2279 = vld [vmem:[#allocation22 + $0x88] sm:$0xff]
        %v2280 = vld [vmem:[#allocation22 + $0x90] sm:$0xff]
        %v2281 = vld [vmem:[#allocation22 + $0x98] sm:$0xff]
        %v2282 = vld [vmem:[#allocation22 + $0xa0] sm:$0xff]
        %v2283 = vld [vmem:[#allocation22 + $0xa8] sm:$0xff]
        %v2284 = vld [vmem:[#allocation22 + $0xb0] sm:$0xff]
        %v2285 = vld [vmem:[#allocation22 + $0xb8] sm:$0xff]
        %v2286 = vld [vmem:[#allocation22 + $0xc0] sm:$0xff]
        %v2287 = vld [vmem:[#allocation22 + $0xc8] sm:$0xff]
        %v2288 = vld [vmem:[#allocation22 + $0xd0] sm:$0xff]
        %v2289 = vld [vmem:[#allocation22 + $0xd8] sm:$0xff]
        %v2290 = vld [vmem:[#allocation22 + $0xe0] sm:$0xff]
        %v2291 = vld [vmem:[#allocation22 + $0xe8] sm:$0xff]
        %v2292 = vld [vmem:[#allocation22 + $0xf0] sm:$0xff]
        %v2293 = vld [vmem:[#allocation22 + $0xf8] sm:$0xff]
        %v2326 = vunpack.c.l.b16 %v2262
        %v2327 = vunpack.c.h.b16 %v2262
        %v2328 = vunpack.c.l.b16 %v2263
        %v2329 = vunpack.c.h.b16 %v2263
        %v2330 = vunpack.c.l.b16 %v2264
        %v2331 = vunpack.c.h.b16 %v2264
        %v2332 = vunpack.c.l.b16 %v2265
        %v2333 = vunpack.c.h.b16 %v2265
        %v2334 = vunpack.c.l.b16 %v2266
        %v2335 = vunpack.c.h.b16 %v2266
        %v2336 = vunpack.c.l.b16 %v2267
        %v2337 = vunpack.c.h.b16 %v2267
        %v2338 = vunpack.c.l.b16 %v2268
        %v2339 = vunpack.c.h.b16 %v2268
        %v2340 = vunpack.c.l.b16 %v2269
        %v2341 = vunpack.c.h.b16 %v2269
        %v2342 = vunpack.c.l.b16 %v2270
        %v2343 = vunpack.c.h.b16 %v2270
        %v2344 = vunpack.c.l.b16 %v2271
        %v2345 = vunpack.c.h.b16 %v2271
        %v2346 = vunpack.c.l.b16 %v2272
        %v2347 = vunpack.c.h.b16 %v2272
        %v2348 = vunpack.c.l.b16 %v2273
        %v2349 = vunpack.c.h.b16 %v2273
        %v2350 = vunpack.c.l.b16 %v2274
        %v2351 = vunpack.c.h.b16 %v2274
        %v2352 = vunpack.c.l.b16 %v2275
        %v2353 = vunpack.c.h.b16 %v2275
        %v2354 = vunpack.c.l.b16 %v2276
        %v2355 = vunpack.c.h.b16 %v2276
        %v2356 = vunpack.c.l.b16 %v2277
        %v2357 = vunpack.c.h.b16 %v2277
        %v2358 = vunpack.c.l.b16 %v2278
        %v2359 = vunpack.c.h.b16 %v2278
        %v2360 = vunpack.c.l.b16 %v2279
        %v2361 = vunpack.c.h.b16 %v2279
        %v2362 = vunpack.c.l.b16 %v2280
        %v2363 = vunpack.c.h.b16 %v2280
        %v2364 = vunpack.c.l.b16 %v2281
        %v2365 = vunpack.c.h.b16 %v2281
        %v2366 = vunpack.c.l.b16 %v2282
        %v2367 = vunpack.c.h.b16 %v2282
        %v2368 = vunpack.c.l.b16 %v2283
        %v2369 = vunpack.c.h.b16 %v2283
        %v2370 = vunpack.c.l.b16 %v2284
        %v2371 = vunpack.c.h.b16 %v2284
        %v2372 = vunpack.c.l.b16 %v2285
        %v2373 = vunpack.c.h.b16 %v2285
        %v2374 = vunpack.c.l.b16 %v2286
        %v2375 = vunpack.c.h.b16 %v2286
        %v2376 = vunpack.c.l.b16 %v2287
        %v2377 = vunpack.c.h.b16 %v2287
        %v2378 = vunpack.c.l.b16 %v2288
        %v2379 = vunpack.c.h.b16 %v2288
        %v2380 = vunpack.c.l.b16 %v2289
        %v2381 = vunpack.c.h.b16 %v2289
        %v2382 = vunpack.c.l.b16 %v2290
        %v2383 = vunpack.c.h.b16 %v2290
        %v2384 = vunpack.c.l.b16 %v2291
        %v2385 = vunpack.c.h.b16 %v2291
        %v2386 = vunpack.c.l.b16 %v2292
        %v2387 = vunpack.c.h.b16 %v2292
        %v2388 = vunpack.c.l.b16 %v2293
        %v2389 = vunpack.c.h.b16 %v2293
        %v2390 = vpack.c.b16 %v2330, %v2326
        %v2391 = vpack.c.b16 %v2331, %v2327
        %v2392 = vpack.c.b16 %v2332, %v2328
        %v2393 = vpack.c.b16 %v2333, %v2329
        %v2394 = vpack.c.b16 %v2338, %v2334
        %v2395 = vpack.c.b16 %v2339, %v2335
        %v2396 = vpack.c.b16 %v2340, %v2336
        %v2397 = vpack.c.b16 %v2341, %v2337
        %v2398 = vpack.c.b16 %v2346, %v2342
        %v2399 = vpack.c.b16 %v2347, %v2343
        %v2400 = vpack.c.b16 %v2348, %v2344
        %v2401 = vpack.c.b16 %v2349, %v2345
        %v2402 = vpack.c.b16 %v2354, %v2350
        %v2403 = vpack.c.b16 %v2355, %v2351
        %v2404 = vpack.c.b16 %v2356, %v2352
        %v2405 = vpack.c.b16 %v2357, %v2353
        %v2406 = vpack.c.b16 %v2362, %v2358
        %v2407 = vpack.c.b16 %v2363, %v2359
        %v2408 = vpack.c.b16 %v2364, %v2360
        %v2409 = vpack.c.b16 %v2365, %v2361
        %v2410 = vpack.c.b16 %v2370, %v2366
        %v2411 = vpack.c.b16 %v2371, %v2367
        %v2412 = vpack.c.b16 %v2372, %v2368
        %v2413 = vpack.c.b16 %v2373, %v2369
        %v2414 = vpack.c.b16 %v2378, %v2374
        %v2415 = vpack.c.b16 %v2379, %v2375
        %v2416 = vpack.c.b16 %v2380, %v2376
        %v2417 = vpack.c.b16 %v2381, %v2377
        %v2418 = vpack.c.b16 %v2386, %v2382
        %v2419 = vpack.c.b16 %v2387, %v2383
        %v2420 = vpack.c.b16 %v2388, %v2384
        %v2421 = vpack.c.b16 %v2389, %v2385
        %2454 = vmatprep.subr.bf16.mxu0 %v2391
        %2455 = vmatpush1.bf16.msra.mxu0 %v2390
        %2456 = vmatprep.subr.bf16.mxu0 %v2395
        %2457 = vmatpush1.bf16.msra.mxu0 %v2394
        %2458 = vmatprep.subr.bf16.mxu0 %v2399
        %2459 = vmatpush1.bf16.msra.mxu0 %v2398
        %2460 = vmatprep.subr.bf16.mxu0 %v2403
        %2461 = vmatpush1.bf16.msra.mxu0 %v2402
        %2462 = vmatprep.subr.bf16.mxu0 %v2407
        %2463 = vmatpush1.bf16.msra.mxu0 %v2406
        %2464 = vmatprep.subr.bf16.mxu0 %v2411
        %2465 = vmatpush1.bf16.msra.mxu0 %v2410
        %2466 = vmatprep.subr.bf16.mxu0 %v2415
        %2467 = vmatpush1.bf16.msra.mxu0 %v2414
        %2468 = vmatprep.subr.bf16.mxu0 %v2419
        %2469 = vmatpush1.bf16.msra.mxu0 %v2418
        %2470 = vmatprep.subr.bf16.mxu0 0
        %2471 = vmatpush1.bf16.msra.mxu0 0
        %2472 = vmatprep.subr.bf16.mxu0 0
        %2473 = vmatpush1.bf16.msra.mxu0 0
        %2474 = vmatprep.subr.bf16.mxu0 0
        %2475 = vmatpush1.bf16.msra.mxu0 0
        %2476 = vmatprep.subr.bf16.mxu0 0
        %2477 = vmatpush1.bf16.msra.mxu0 0
        %2478 = vmatprep.subr.bf16.mxu0 0
        %2479 = vmatpush1.bf16.msra.mxu0 0
        %2480 = vmatprep.subr.bf16.mxu0 0
        %2481 = vmatpush1.bf16.msra.mxu0 0
        %2482 = vmatprep.subr.bf16.mxu0 0
        %2483 = vmatpush1.bf16.msra.mxu0 0
        %2484 = vmatprep.subr.bf16.mxu0 0
        %2485 = vmatpush1.bf16.msra.mxu0 0
        %2486 = vmatprep.mubr.bf16.mxu0 0
        %2487 = vmatmul.mubr.bf16.gmra.mrb[0].mxu0 %v2261
        %v2488 = vpop.f32.mrb[0].mxu0
        %v2489 = vadd.f32 0.0, %v2488
        %v2490 = vpop.f32.mrb[0].mxu0
        %v2491 = vadd.f32 0.0, %v2490
        %v2492 = vpop.f32.mrb[0].mxu0
        %v2493 = vpop.f32.mrb[0].mxu0
        %2494 = vdwg.mxu0
        %2495 = vmatprep.subr.bf16.mxu0 %v2393
        %2496 = vmatpush1.bf16.msra.mxu0 %v2392
        %2497 = vmatprep.subr.bf16.mxu0 %v2397
        %2498 = vmatpush1.bf16.msra.mxu0 %v2396
        %2499 = vmatprep.subr.bf16.mxu0 %v2401
        %2500 = vmatpush1.bf16.msra.mxu0 %v2400
        %2501 = vmatprep.subr.bf16.mxu0 %v2405
        %2502 = vmatpush1.bf16.msra.mxu0 %v2404
        %2503 = vmatprep.subr.bf16.mxu0 %v2409
        %2504 = vmatpush1.bf16.msra.mxu0 %v2408
        %2505 = vmatprep.subr.bf16.mxu0 %v2413
        %2506 = vmatpush1.bf16.msra.mxu0 %v2412
        %2507 = vmatprep.subr.bf16.mxu0 %v2417
        %2508 = vmatpush1.bf16.msra.mxu0 %v2416
        %2509 = vmatprep.subr.bf16.mxu0 %v2421
        %2510 = vmatpush1.bf16.msra.mxu0 %v2420
        %2511 = vmatprep.subr.bf16.mxu0 0
        %2512 = vmatpush1.bf16.msra.mxu0 0
        %2513 = vmatprep.subr.bf16.mxu0 0
        %2514 = vmatpush1.bf16.msra.mxu0 0
        %2515 = vmatprep.subr.bf16.mxu0 0
        %2516 = vmatpush1.bf16.msra.mxu0 0
        %2517 = vmatprep.subr.bf16.mxu0 0
        %2518 = vmatpush1.bf16.msra.mxu0 0
        %2519 = vmatprep.subr.bf16.mxu0 0
        %2520 = vmatpush1.bf16.msra.mxu0 0
        %2521 = vmatprep.subr.bf16.mxu0 0
        %2522 = vmatpush1.bf16.msra.mxu0 0
        %2523 = vmatprep.subr.bf16.mxu0 0
        %2524 = vmatpush1.bf16.msra.mxu0 0
        %2525 = vmatprep.subr.bf16.mxu0 0
        %2526 = vmatpush1.bf16.msra.mxu0 0
        %2527 = vmatprep.mubr.bf16.mxu0 0
        %2528 = vmatmul.mubr.bf16.gmra.mrb[0].mxu0 %v2261
        %v2529 = vpop.f32.mrb[0].mxu0
        %v2530 = vadd.f32 0.0, %v2529
        %v2531 = vpop.f32.mrb[0].mxu0
        %v2532 = vadd.f32 0.0, %v2531
        %v2533 = vpop.f32.mrb[0].mxu0
        %v2534 = vpop.f32.mrb[0].mxu0
        %2535 = vdwg.mxu0
        %v2536 = vadd.f32 %v2257, %v2489
        %v2537 = vadd.f32 %v2258, %v2491
        %v2538 = vadd.f32 %v2259, %v2530
        %v2539 = vadd.f32 %v2260, %v2532
        %v2540 = vxor.u32 %v2536, 2147483648
        %v2541 = vmul.f32 %v2540, 1.442695
        %v2542 = vpow.pop %v2541
        %v2543 = vadd.f32 %v2542, 1.0
        %v2544 = vrcp.pop %v2543
        %v2545 = vmul.f32 1.0, %v2544
        %v2546 = vxor.u32 %v2537, 2147483648
        %v2547 = vmul.f32 %v2546, 1.442695
        %v2548 = vpow.pop %v2547
        %v2549 = vadd.f32 %v2548, 1.0
        %v2550 = vrcp.pop %v2549
        %v2551 = vmul.f32 1.0, %v2550
        %v2552 = vtanh.pop %v2538
        %v2553 = vxor.u32 %v2539, 2147483648
        %v2554 = vmul.f32 %v2553, 1.442695
        %v2555 = vpow.pop %v2554
        %v2556 = vadd.f32 %v2555, 1.0
        %v2557 = vrcp.pop %v2556
        %v2558 = vmul.f32 1.0, %v2557
        %v2559 = vmul.f32 %v2551, 0.0
        %v2560 = vmul.f32 %v2545, %v2552
        %v2561 = vadd.f32 %v2559, %v2560
        %v2562 = vtanh.pop %v2561
        %v2563 = vmul.f32 %v2558, %v2562
        %v2564 = vpack.c.bf16 %v2563, %v2563
        %2565 = vst [vmem:[%s641] sm:$0xf] %v2564
        %s2566 = scalar_lea.vmem %s563, 32 [#allocation5]
        %v2567 = vld [vmem:[%s2566] sm:$0xff]
        %v2568 = vld [vmem:[%s2566 + $0x8] sm:$0xff]
        %v2569 = vld [vmem:[%s2566 + $0x10] sm:$0xff]
        %v2570 = vld [vmem:[%s2566 + $0x18] sm:$0xff]
        %v2571 = vld [vmem:[#allocation22] sm:$0xff]
        %v2572 = vld [vmem:[#allocation22 + $0x8] sm:$0xff]
        %v2573 = vld [vmem:[#allocation22 + $0x10] sm:$0xff]
        %v2574 = vld [vmem:[#allocation22 + $0x18] sm:$0xff]
        %v2575 = vld [vmem:[#allocation22 + $0x20] sm:$0xff]
        %v2576 = vld [vmem:[#allocation22 + $0x28] sm:$0xff]
        %v2577 = vld [vmem:[#allocation22 + $0x30] sm:$0xff]
        %v2578 = vld [vmem:[#allocation22 + $0x38] sm:$0xff]
        %v2579 = vld [vmem:[#allocation22 + $0x40] sm:$0xff]
        %v2580 = vld [vmem:[#allocation22 + $0x48] sm:$0xff]
        %v2581 = vld [vmem:[#allocation22 + $0x50] sm:$0xff]
        %v2582 = vld [vmem:[#allocation22 + $0x58] sm:$0xff]
        %v2583 = vld [vmem:[#allocation22 + $0x60] sm:$0xff]
        %v2584 = vld [vmem:[#allocation22 + $0x68] sm:$0xff]
        %v2585 = vld [vmem:[#allocation22 + $0x70] sm:$0xff]
        %v2586 = vld [vmem:[#allocation22 + $0x78] sm:$0xff]
        %v2587 = vld [vmem:[#allocation22 + $0x80] sm:$0xff]
        %v2588 = vld [vmem:[#allocation22 + $0x88] sm:$0xff]
        %v2589 = vld [vmem:[#allocation22 + $0x90] sm:$0xff]
        %v2590 = vld [vmem:[#allocation22 + $0x98] sm:$0xff]
        %v2591 = vld [vmem:[#allocation22 + $0xa0] sm:$0xff]
        %v2592 = vld [vmem:[#allocation22 + $0xa8] sm:$0xff]
        %v2593 = vld [vmem:[#allocation22 + $0xb0] sm:$0xff]
        %v2594 = vld [vmem:[#allocation22 + $0xb8] sm:$0xff]
        %v2595 = vld [vmem:[#allocation22 + $0xc0] sm:$0xff]
        %v2596 = vld [vmem:[#allocation22 + $0xc8] sm:$0xff]
        %v2597 = vld [vmem:[#allocation22 + $0xd0] sm:$0xff]
        %v2598 = vld [vmem:[#allocation22 + $0xd8] sm:$0xff]
        %v2599 = vld [vmem:[#allocation22 + $0xe0] sm:$0xff]
        %v2600 = vld [vmem:[#allocation22 + $0xe8] sm:$0xff]
        %v2601 = vld [vmem:[#allocation22 + $0xf0] sm:$0xff]
        %v2602 = vld [vmem:[#allocation22 + $0xf8] sm:$0xff]
        %v2635 = vunpack.c.l.b16 %v2571
        %v2636 = vunpack.c.h.b16 %v2571
        %v2637 = vunpack.c.l.b16 %v2572
        %v2638 = vunpack.c.h.b16 %v2572
        %v2639 = vunpack.c.l.b16 %v2573
        %v2640 = vunpack.c.h.b16 %v2573
        %v2641 = vunpack.c.l.b16 %v2574
        %v2642 = vunpack.c.h.b16 %v2574
        %v2643 = vunpack.c.l.b16 %v2575
        %v2644 = vunpack.c.h.b16 %v2575
        %v2645 = vunpack.c.l.b16 %v2576
        %v2646 = vunpack.c.h.b16 %v2576
        %v2647 = vunpack.c.l.b16 %v2577
        %v2648 = vunpack.c.h.b16 %v2577
        %v2649 = vunpack.c.l.b16 %v2578
        %v2650 = vunpack.c.h.b16 %v2578
        %v2651 = vunpack.c.l.b16 %v2579
        %v2652 = vunpack.c.h.b16 %v2579
        %v2653 = vunpack.c.l.b16 %v2580
        %v2654 = vunpack.c.h.b16 %v2580
        %v2655 = vunpack.c.l.b16 %v2581
        %v2656 = vunpack.c.h.b16 %v2581
        %v2657 = vunpack.c.l.b16 %v2582
        %v2658 = vunpack.c.h.b16 %v2582
        %v2659 = vunpack.c.l.b16 %v2583
        %v2660 = vunpack.c.h.b16 %v2583
        %v2661 = vunpack.c.l.b16 %v2584
        %v2662 = vunpack.c.h.b16 %v2584
        %v2663 = vunpack.c.l.b16 %v2585
        %v2664 = vunpack.c.h.b16 %v2585
        %v2665 = vunpack.c.l.b16 %v2586
        %v2666 = vunpack.c.h.b16 %v2586
        %v2667 = vunpack.c.l.b16 %v2587
        %v2668 = vunpack.c.h.b16 %v2587
        %v2669 = vunpack.c.l.b16 %v2588
        %v2670 = vunpack.c.h.b16 %v2588
        %v2671 = vunpack.c.l.b16 %v2589
        %v2672 = vunpack.c.h.b16 %v2589
        %v2673 = vunpack.c.l.b16 %v2590
        %v2674 = vunpack.c.h.b16 %v2590
        %v2675 = vunpack.c.l.b16 %v2591
        %v2676 = vunpack.c.h.b16 %v2591
        %v2677 = vunpack.c.l.b16 %v2592
        %v2678 = vunpack.c.h.b16 %v2592
        %v2679 = vunpack.c.l.b16 %v2593
        %v2680 = vunpack.c.h.b16 %v2593
        %v2681 = vunpack.c.l.b16 %v2594
        %v2682 = vunpack.c.h.b16 %v2594
        %v2683 = vunpack.c.l.b16 %v2595
        %v2684 = vunpack.c.h.b16 %v2595
        %v2685 = vunpack.c.l.b16 %v2596
        %v2686 = vunpack.c.h.b16 %v2596
        %v2687 = vunpack.c.l.b16 %v2597
        %v2688 = vunpack.c.h.b16 %v2597
        %v2689 = vunpack.c.l.b16 %v2598
        %v2690 = vunpack.c.h.b16 %v2598
        %v2691 = vunpack.c.l.b16 %v2599
        %v2692 = vunpack.c.h.b16 %v2599
        %v2693 = vunpack.c.l.b16 %v2600
        %v2694 = vunpack.c.h.b16 %v2600
        %v2695 = vunpack.c.l.b16 %v2601
        %v2696 = vunpack.c.h.b16 %v2601
        %v2697 = vunpack.c.l.b16 %v2602
        %v2698 = vunpack.c.h.b16 %v2602
        %v2699 = vpack.c.b16 %v2639, %v2635
        %v2700 = vpack.c.b16 %v2640, %v2636
        %v2701 = vpack.c.b16 %v2641, %v2637
        %v2702 = vpack.c.b16 %v2642, %v2638
        %v2703 = vpack.c.b16 %v2647, %v2643
        %v2704 = vpack.c.b16 %v2648, %v2644
        %v2705 = vpack.c.b16 %v2649, %v2645
        %v2706 = vpack.c.b16 %v2650, %v2646
        %v2707 = vpack.c.b16 %v2655, %v2651
        %v2708 = vpack.c.b16 %v2656, %v2652
        %v2709 = vpack.c.b16 %v2657, %v2653
        %v2710 = vpack.c.b16 %v2658, %v2654
        %v2711 = vpack.c.b16 %v2663, %v2659
        %v2712 = vpack.c.b16 %v2664, %v2660
        %v2713 = vpack.c.b16 %v2665, %v2661
        %v2714 = vpack.c.b16 %v2666, %v2662
        %v2715 = vpack.c.b16 %v2671, %v2667
        %v2716 = vpack.c.b16 %v2672, %v2668
        %v2717 = vpack.c.b16 %v2673, %v2669
        %v2718 = vpack.c.b16 %v2674, %v2670
        %v2719 = vpack.c.b16 %v2679, %v2675
        %v2720 = vpack.c.b16 %v2680, %v2676
        %v2721 = vpack.c.b16 %v2681, %v2677
        %v2722 = vpack.c.b16 %v2682, %v2678
        %v2723 = vpack.c.b16 %v2687, %v2683
        %v2724 = vpack.c.b16 %v2688, %v2684
        %v2725 = vpack.c.b16 %v2689, %v2685
        %v2726 = vpack.c.b16 %v2690, %v2686
        %v2727 = vpack.c.b16 %v2695, %v2691
        %v2728 = vpack.c.b16 %v2696, %v2692
        %v2729 = vpack.c.b16 %v2697, %v2693
        %v2730 = vpack.c.b16 %v2698, %v2694
        %2763 = vmatprep.subr.bf16.mxu0 %v2700
        %2764 = vmatpush1.bf16.msra.mxu0 %v2699
        %2765 = vmatprep.subr.bf16.mxu0 %v2704
        %2766 = vmatpush1.bf16.msra.mxu0 %v2703
        %2767 = vmatprep.subr.bf16.mxu0 %v2708
        %2768 = vmatpush1.bf16.msra.mxu0 %v2707
        %2769 = vmatprep.subr.bf16.mxu0 %v2712
        %2770 = vmatpush1.bf16.msra.mxu0 %v2711
        %2771 = vmatprep.subr.bf16.mxu0 %v2716
        %2772 = vmatpush1.bf16.msra.mxu0 %v2715
        %2773 = vmatprep.subr.bf16.mxu0 %v2720
        %2774 = vmatpush1.bf16.msra.mxu0 %v2719
        %2775 = vmatprep.subr.bf16.mxu0 %v2724
        %2776 = vmatpush1.bf16.msra.mxu0 %v2723
        %2777 = vmatprep.subr.bf16.mxu0 %v2728
        %2778 = vmatpush1.bf16.msra.mxu0 %v2727
        %2779 = vmatprep.subr.bf16.mxu0 0
        %2780 = vmatpush1.bf16.msra.mxu0 0
        %2781 = vmatprep.subr.bf16.mxu0 0
        %2782 = vmatpush1.bf16.msra.mxu0 0
        %2783 = vmatprep.subr.bf16.mxu0 0
        %2784 = vmatpush1.bf16.msra.mxu0 0
        %2785 = vmatprep.subr.bf16.mxu0 0
        %2786 = vmatpush1.bf16.msra.mxu0 0
        %2787 = vmatprep.subr.bf16.mxu0 0
        %2788 = vmatpush1.bf16.msra.mxu0 0
        %2789 = vmatprep.subr.bf16.mxu0 0
        %2790 = vmatpush1.bf16.msra.mxu0 0
        %2791 = vmatprep.subr.bf16.mxu0 0
        %2792 = vmatpush1.bf16.msra.mxu0 0
        %2793 = vmatprep.subr.bf16.mxu0 0
        %2794 = vmatpush1.bf16.msra.mxu0 0
        %2795 = vmatprep.mubr.bf16.mxu0 0
        %2796 = vmatmul.mubr.bf16.gmra.mrb[0].mxu0 %v2564
        %v2797 = vpop.f32.mrb[0].mxu0
        %v2798 = vadd.f32 0.0, %v2797
        %v2799 = vpop.f32.mrb[0].mxu0
        %v2800 = vadd.f32 0.0, %v2799
        %v2801 = vpop.f32.mrb[0].mxu0
        %v2802 = vpop.f32.mrb[0].mxu0
        %2803 = vdwg.mxu0
        %2804 = vmatprep.subr.bf16.mxu0 %v2702
        %2805 = vmatpush1.bf16.msra.mxu0 %v2701
        %2806 = vmatprep.subr.bf16.mxu0 %v2706
        %2807 = vmatpush1.bf16.msra.mxu0 %v2705
        %2808 = vmatprep.subr.bf16.mxu0 %v2710
        %2809 = vmatpush1.bf16.msra.mxu0 %v2709
        %2810 = vmatprep.subr.bf16.mxu0 %v2714
        %2811 = vmatpush1.bf16.msra.mxu0 %v2713
        %2812 = vmatprep.subr.bf16.mxu0 %v2718
        %2813 = vmatpush1.bf16.msra.mxu0 %v2717
        %2814 = vmatprep.subr.bf16.mxu0 %v2722
        %2815 = vmatpush1.bf16.msra.mxu0 %v2721
        %2816 = vmatprep.subr.bf16.mxu0 %v2726
        %2817 = vmatpush1.bf16.msra.mxu0 %v2725
        %2818 = vmatprep.subr.bf16.mxu0 %v2730
        %2819 = vmatpush1.bf16.msra.mxu0 %v2729
        %2820 = vmatprep.subr.bf16.mxu0 0
        %2821 = vmatpush1.bf16.msra.mxu0 0
        %2822 = vmatprep.subr.bf16.mxu0 0
        %2823 = vmatpush1.bf16.msra.mxu0 0
        %2824 = vmatprep.subr.bf16.mxu0 0
        %2825 = vmatpush1.bf16.msra.mxu0 0
        %2826 = vmatprep.subr.bf16.mxu0 0
        %2827 = vmatpush1.bf16.msra.mxu0 0
        %2828 = vmatprep.subr.bf16.mxu0 0
        %2829 = vmatpush1.bf16.msra.mxu0 0
        %2830 = vmatprep.subr.bf16.mxu0 0
        %2831 = vmatpush1.bf16.msra.mxu0 0
        %2832 = vmatprep.subr.bf16.mxu0 0
        %2833 = vmatpush1.bf16.msra.mxu0 0
        %2834 = vmatprep.subr.bf16.mxu0 0
        %2835 = vmatpush1.bf16.msra.mxu0 0
        %2836 = vmatprep.mubr.bf16.mxu0 0
        %2837 = vmatmul.mubr.bf16.gmra.mrb[0].mxu0 %v2564
        %v2838 = vpop.f32.mrb[0].mxu0
        %v2839 = vadd.f32 0.0, %v2838
        %v2840 = vpop.f32.mrb[0].mxu0
        %v2841 = vadd.f32 0.0, %v2840
        %v2842 = vpop.f32.mrb[0].mxu0
        %v2843 = vpop.f32.mrb[0].mxu0
        %2844 = vdwg.mxu0
        %v2845 = vadd.f32 %v2567, %v2798
        %v2846 = vadd.f32 %v2568, %v2800
        %v2847 = vadd.f32 %v2569, %v2839
        %v2848 = vadd.f32 %v2570, %v2841
        %v2849 = vxor.u32 %v2845, 2147483648
        %v2850 = vmul.f32 %v2849, 1.442695
        %v2851 = vpow.pop %v2850
        %v2852 = vadd.f32 %v2851, 1.0
        %v2853 = vrcp.pop %v2852
        %v2854 = vmul.f32 1.0, %v2853
        %v2855 = vxor.u32 %v2846, 2147483648
        %v2856 = vmul.f32 %v2855, 1.442695
        %v2857 = vpow.pop %v2856
        %v2858 = vadd.f32 %v2857, 1.0
        %v2859 = vrcp.pop %v2858
        %v2860 = vmul.f32 1.0, %v2859
        %v2861 = vtanh.pop %v2847
        %v2862 = vxor.u32 %v2848, 2147483648
        %v2863 = vmul.f32 %v2862, 1.442695
        %v2864 = vpow.pop %v2863
        %v2865 = vadd.f32 %v2864, 1.0
        %v2866 = vrcp.pop %v2865
        %v2867 = vmul.f32 1.0, %v2866
        %v2868 = vmul.f32 %v2860, %v2561
        %v2869 = vmul.f32 %v2854, %v2861
        %v2870 = vadd.f32 %v2868, %v2869
        %v2871 = vtanh.pop %v2870
        %v2872 = vmul.f32 %v2867, %v2871
        %v2873 = vpack.c.bf16 %v2872, %v2872
        %s2874 = scalar_lea.vmem %s641, 4 [#allocation23]
        %2875 = vst [vmem:[%s2874] sm:$0xf] %v2873
        %s2876 = scalar_lea.vmem %s563, 64 [#allocation5]
        %v2877 = vld [vmem:[%s2876] sm:$0xff]
        %v2878 = vld [vmem:[%s2876 + $0x8] sm:$0xff]
        %v2879 = vld [vmem:[%s2876 + $0x10] sm:$0xff]
        %v2880 = vld [vmem:[%s2876 + $0x18] sm:$0xff]
        %v2881 = vld [vmem:[#allocation22] sm:$0xff]
        %v2882 = vld [vmem:[#allocation22 + $0x8] sm:$0xff]
        %v2883 = vld [vmem:[#allocation22 + $0x10] sm:$0xff]
        %v2884 = vld [vmem:[#allocation22 + $0x18] sm:$0xff]
        %v2885 = vld [vmem:[#allocation22 + $0x20] sm:$0xff]
        %v2886 = vld [vmem:[#allocation22 + $0x28] sm:$0xff]
        %v2887 = vld [vmem:[#allocation22 + $0x30] sm:$0xff]
        %v2888 = vld [vmem:[#allocation22 + $0x38] sm:$0xff]
        %v2889 = vld [vmem:[#allocation22 + $0x40] sm:$0xff]
        %v2890 = vld [vmem:[#allocation22 + $0x48] sm:$0xff]
        %v2891 = vld [vmem:[#allocation22 + $0x50] sm:$0xff]
        %v2892 = vld [vmem:[#allocation22 + $0x58] sm:$0xff]
        %v2893 = vld [vmem:[#allocation22 + $0x60] sm:$0xff]
        %v2894 = vld [vmem:[#allocation22 + $0x68] sm:$0xff]
        %v2895 = vld [vmem:[#allocation22 + $0x70] sm:$0xff]
        %v2896 = vld [vmem:[#allocation22 + $0x78] sm:$0xff]
        %v2897 = vld [vmem:[#allocation22 + $0x80] sm:$0xff]
        %v2898 = vld [vmem:[#allocation22 + $0x88] sm:$0xff]
        %v2899 = vld [vmem:[#allocation22 + $0x90] sm:$0xff]
        %v2900 = vld [vmem:[#allocation22 + $0x98] sm:$0xff]
        %v2901 = vld [vmem:[#allocation22 + $0xa0] sm:$0xff]
        %v2902 = vld [vmem:[#allocation22 + $0xa8] sm:$0xff]
        %v2903 = vld [vmem:[#allocation22 + $0xb0] sm:$0xff]
        %v2904 = vld [vmem:[#allocation22 + $0xb8] sm:$0xff]
        %v2905 = vld [vmem:[#allocation22 + $0xc0] sm:$0xff]
        %v2906 = vld [vmem:[#allocation22 + $0xc8] sm:$0xff]
        %v2907 = vld [vmem:[#allocation22 + $0xd0] sm:$0xff]
        %v2908 = vld [vmem:[#allocation22 + $0xd8] sm:$0xff]
        %v2909 = vld [vmem:[#allocation22 + $0xe0] sm:$0xff]
        %v2910 = vld [vmem:[#allocation22 + $0xe8] sm:$0xff]
        %v2911 = vld [vmem:[#allocation22 + $0xf0] sm:$0xff]
        %v2912 = vld [vmem:[#allocation22 + $0xf8] sm:$0xff]
        %v2945 = vunpack.c.l.b16 %v2881
        %v2946 = vunpack.c.h.b16 %v2881
        %v2947 = vunpack.c.l.b16 %v2882
        %v2948 = vunpack.c.h.b16 %v2882
        %v2949 = vunpack.c.l.b16 %v2883
        %v2950 = vunpack.c.h.b16 %v2883
        %v2951 = vunpack.c.l.b16 %v2884
        %v2952 = vunpack.c.h.b16 %v2884
        %v2953 = vunpack.c.l.b16 %v2885
        %v2954 = vunpack.c.h.b16 %v2885
        %v2955 = vunpack.c.l.b16 %v2886
        %v2956 = vunpack.c.h.b16 %v2886
        %v2957 = vunpack.c.l.b16 %v2887
        %v2958 = vunpack.c.h.b16 %v2887
        %v2959 = vunpack.c.l.b16 %v2888
        %v2960 = vunpack.c.h.b16 %v2888
        %v2961 = vunpack.c.l.b16 %v2889
        %v2962 = vunpack.c.h.b16 %v2889
        %v2963 = vunpack.c.l.b16 %v2890
        %v2964 = vunpack.c.h.b16 %v2890
        %v2965 = vunpack.c.l.b16 %v2891
        %v2966 = vunpack.c.h.b16 %v2891
        %v2967 = vunpack.c.l.b16 %v2892
        %v2968 = vunpack.c.h.b16 %v2892
        %v2969 = vunpack.c.l.b16 %v2893
        %v2970 = vunpack.c.h.b16 %v2893
        %v2971 = vunpack.c.l.b16 %v2894
        %v2972 = vunpack.c.h.b16 %v2894
        %v2973 = vunpack.c.l.b16 %v2895
        %v2974 = vunpack.c.h.b16 %v2895
        %v2975 = vunpack.c.l.b16 %v2896
        %v2976 = vunpack.c.h.b16 %v2896
        %v2977 = vunpack.c.l.b16 %v2897
        %v2978 = vunpack.c.h.b16 %v2897
        %v2979 = vunpack.c.l.b16 %v2898
        %v2980 = vunpack.c.h.b16 %v2898
        %v2981 = vunpack.c.l.b16 %v2899
        %v2982 = vunpack.c.h.b16 %v2899
        %v2983 = vunpack.c.l.b16 %v2900
        %v2984 = vunpack.c.h.b16 %v2900
        %v2985 = vunpack.c.l.b16 %v2901
        %v2986 = vunpack.c.h.b16 %v2901
        %v2987 = vunpack.c.l.b16 %v2902
        %v2988 = vunpack.c.h.b16 %v2902
        %v2989 = vunpack.c.l.b16 %v2903
        %v2990 = vunpack.c.h.b16 %v2903
        %v2991 = vunpack.c.l.b16 %v2904
        %v2992 = vunpack.c.h.b16 %v2904
        %v2993 = vunpack.c.l.b16 %v2905
        %v2994 = vunpack.c.h.b16 %v2905
        %v2995 = vunpack.c.l.b16 %v2906
        %v2996 = vunpack.c.h.b16 %v2906
        %v2997 = vunpack.c.l.b16 %v2907
        %v2998 = vunpack.c.h.b16 %v2907
        %v2999 = vunpack.c.l.b16 %v2908
        %v3000 = vunpack.c.h.b16 %v2908
        %v3001 = vunpack.c.l.b16 %v2909
        %v3002 = vunpack.c.h.b16 %v2909
        %v3003 = vunpack.c.l.b16 %v2910
        %v3004 = vunpack.c.h.b16 %v2910
        %v3005 = vunpack.c.l.b16 %v2911
        %v3006 = vunpack.c.h.b16 %v2911
        %v3007 = vunpack.c.l.b16 %v2912
        %v3008 = vunpack.c.h.b16 %v2912
        %v3009 = vpack.c.b16 %v2949, %v2945
        %v3010 = vpack.c.b16 %v2950, %v2946
        %v3011 = vpack.c.b16 %v2951, %v2947
        %v3012 = vpack.c.b16 %v2952, %v2948
        %v3013 = vpack.c.b16 %v2957, %v2953
        %v3014 = vpack.c.b16 %v2958, %v2954
        %v3015 = vpack.c.b16 %v2959, %v2955
        %v3016 = vpack.c.b16 %v2960, %v2956
        %v3017 = vpack.c.b16 %v2965, %v2961
        %v3018 = vpack.c.b16 %v2966, %v2962
        %v3019 = vpack.c.b16 %v2967, %v2963
        %v3020 = vpack.c.b16 %v2968, %v2964
        %v3021 = vpack.c.b16 %v2973, %v2969
        %v3022 = vpack.c.b16 %v2974, %v2970
        %v3023 = vpack.c.b16 %v2975, %v2971
        %v3024 = vpack.c.b16 %v2976, %v2972
        %v3025 = vpack.c.b16 %v2981, %v2977
        %v3026 = vpack.c.b16 %v2982, %v2978
        %v3027 = vpack.c.b16 %v2983, %v2979
        %v3028 = vpack.c.b16 %v2984, %v2980
        %v3029 = vpack.c.b16 %v2989, %v2985
        %v3030 = vpack.c.b16 %v2990, %v2986
        %v3031 = vpack.c.b16 %v2991, %v2987
        %v3032 = vpack.c.b16 %v2992, %v2988
        %v3033 = vpack.c.b16 %v2997, %v2993
        %v3034 = vpack.c.b16 %v2998, %v2994
        %v3035 = vpack.c.b16 %v2999, %v2995
        %v3036 = vpack.c.b16 %v3000, %v2996
        %v3037 = vpack.c.b16 %v3005, %v3001
        %v3038 = vpack.c.b16 %v3006, %v3002
        %v3039 = vpack.c.b16 %v3007, %v3003
        %v3040 = vpack.c.b16 %v3008, %v3004
        %3073 = vmatprep.subr.bf16.mxu0 %v3010
        %3074 = vmatpush1.bf16.msra.mxu0 %v3009
        %3075 = vmatprep.subr.bf16.mxu0 %v3014
        %3076 = vmatpush1.bf16.msra.mxu0 %v3013
        %3077 = vmatprep.subr.bf16.mxu0 %v3018
        %3078 = vmatpush1.bf16.msra.mxu0 %v3017
        %3079 = vmatprep.subr.bf16.mxu0 %v3022
        %3080 = vmatpush1.bf16.msra.mxu0 %v3021
        %3081 = vmatprep.subr.bf16.mxu0 %v3026
        %3082 = vmatpush1.bf16.msra.mxu0 %v3025
        %3083 = vmatprep.subr.bf16.mxu0 %v3030
        %3084 = vmatpush1.bf16.msra.mxu0 %v3029
        %3085 = vmatprep.subr.bf16.mxu0 %v3034
        %3086 = vmatpush1.bf16.msra.mxu0 %v3033
        %3087 = vmatprep.subr.bf16.mxu0 %v3038
        %3088 = vmatpush1.bf16.msra.mxu0 %v3037
        %3089 = vmatprep.subr.bf16.mxu0 0
        %3090 = vmatpush1.bf16.msra.mxu0 0
        %3091 = vmatprep.subr.bf16.mxu0 0
        %3092 = vmatpush1.bf16.msra.mxu0 0
        %3093 = vmatprep.subr.bf16.mxu0 0
        %3094 = vmatpush1.bf16.msra.mxu0 0
        %3095 = vmatprep.subr.bf16.mxu0 0
        %3096 = vmatpush1.bf16.msra.mxu0 0
        %3097 = vmatprep.subr.bf16.mxu0 0
        %3098 = vmatpush1.bf16.msra.mxu0 0
        %3099 = vmatprep.subr.bf16.mxu0 0
        %3100 = vmatpush1.bf16.msra.mxu0 0
        %3101 = vmatprep.subr.bf16.mxu0 0
        %3102 = vmatpush1.bf16.msra.mxu0 0
        %3103 = vmatprep.subr.bf16.mxu0 0
        %3104 = vmatpush1.bf16.msra.mxu0 0
        %3105 = vmatprep.mubr.bf16.mxu0 0
        %3106 = vmatmul.mubr.bf16.gmra.mrb[0].mxu0 %v2873
        %v3107 = vpop.f32.mrb[0].mxu0
        %v3108 = vadd.f32 0.0, %v3107
        %v3109 = vpop.f32.mrb[0].mxu0
        %v3110 = vadd.f32 0.0, %v3109
        %v3111 = vpop.f32.mrb[0].mxu0
        %v3112 = vpop.f32.mrb[0].mxu0
        %3113 = vdwg.mxu0
        %3114 = vmatprep.subr.bf16.mxu0 %v3012
        %3115 = vmatpush1.bf16.msra.mxu0 %v3011
        %3116 = vmatprep.subr.bf16.mxu0 %v3016
        %3117 = vmatpush1.bf16.msra.mxu0 %v3015
        %3118 = vmatprep.subr.bf16.mxu0 %v3020
        %3119 = vmatpush1.bf16.msra.mxu0 %v3019
        %3120 = vmatprep.subr.bf16.mxu0 %v3024
        %3121 = vmatpush1.bf16.msra.mxu0 %v3023
        %3122 = vmatprep.subr.bf16.mxu0 %v3028
        %3123 = vmatpush1.bf16.msra.mxu0 %v3027
        %3124 = vmatprep.subr.bf16.mxu0 %v3032
        %3125 = vmatpush1.bf16.msra.mxu0 %v3031
        %3126 = vmatprep.subr.bf16.mxu0 %v3036
        %3127 = vmatpush1.bf16.msra.mxu0 %v3035
        %3128 = vmatprep.subr.bf16.mxu0 %v3040
        %3129 = vmatpush1.bf16.msra.mxu0 %v3039
        %3130 = vmatprep.subr.bf16.mxu0 0
        %3131 = vmatpush1.bf16.msra.mxu0 0
        %3132 = vmatprep.subr.bf16.mxu0 0
        %3133 = vmatpush1.bf16.msra.mxu0 0
        %3134 = vmatprep.subr.bf16.mxu0 0
        %3135 = vmatpush1.bf16.msra.mxu0 0
        %3136 = vmatprep.subr.bf16.mxu0 0
        %3137 = vmatpush1.bf16.msra.mxu0 0
        %3138 = vmatprep.subr.bf16.mxu0 0
        %3139 = vmatpush1.bf16.msra.mxu0 0
        %3140 = vmatprep.subr.bf16.mxu0 0
        %3141 = vmatpush1.bf16.msra.mxu0 0
        %3142 = vmatprep.subr.bf16.mxu0 0
        %3143 = vmatpush1.bf16.msra.mxu0 0
        %3144 = vmatprep.subr.bf16.mxu0 0
        %3145 = vmatpush1.bf16.msra.mxu0 0
        %3146 = vmatprep.mubr.bf16.mxu0 0
        %3147 = vmatmul.mubr.bf16.gmra.mrb[0].mxu0 %v2873
        %v3148 = vpop.f32.mrb[0].mxu0
        %v3149 = vadd.f32 0.0, %v3148
        %v3150 = vpop.f32.mrb[0].mxu0
        %v3151 = vadd.f32 0.0, %v3150
        %v3152 = vpop.f32.mrb[0].mxu0
        %v3153 = vpop.f32.mrb[0].mxu0
        %3154 = vdwg.mxu0
        %v3155 = vadd.f32 %v2877, %v3108
        %v3156 = vadd.f32 %v2878, %v3110
        %v3157 = vadd.f32 %v2879, %v3149
        %v3158 = vadd.f32 %v2880, %v3151
        %v3159 = vxor.u32 %v3155, 2147483648
        %v3160 = vmul.f32 %v3159, 1.442695
        %v3161 = vpow.pop %v3160
        %v3162 = vadd.f32 %v3161, 1.0
        %v3163 = vrcp.pop %v3162
        %v3164 = vmul.f32 1.0, %v3163
        %v3165 = vxor.u32 %v3156, 2147483648
        %v3166 = vmul.f32 %v3165, 1.442695
        %v3167 = vpow.pop %v3166
        %v3168 = vadd.f32 %v3167, 1.0
        %v3169 = vrcp.pop %v3168
        %v3170 = vmul.f32 1.0, %v3169
        %v3171 = vtanh.pop %v3157
        %v3172 = vxor.u32 %v3158, 2147483648
        %v3173 = vmul.f32 %v3172, 1.442695
        %v3174 = vpow.pop %v3173
        %v3175 = vadd.f32 %v3174, 1.0
        %v3176 = vrcp.pop %v3175
        %v3177 = vmul.f32 1.0, %v3176
        %v3178 = vmul.f32 %v3170, %v2870
        %v3179 = vmul.f32 %v3164, %v3171
        %v3180 = vadd.f32 %v3178, %v3179
        %v3181 = vtanh.pop %v3180
        %v3182 = vmul.f32 %v3177, %v3181
        %v3183 = vpack.c.bf16 %v3182, %v3182
        %s3184 = scalar_lea.vmem %s641, 8 [#allocation23]
        %3185 = vst [vmem:[%s3184] sm:$0xf] %v3183
        %s3186 = scalar_lea.vmem %s563, 96 [#allocation5]
        %v3187 = vld [vmem:[%s3186] sm:$0xff]
        %v3188 = vld [vmem:[%s3186 + $0x8] sm:$0xff]
        %v3189 = vld [vmem:[%s3186 + $0x10] sm:$0xff]
        %v3190 = vld [vmem:[%s3186 + $0x18] sm:$0xff]
        %v3191 = vld [vmem:[#allocation22] sm:$0xff]
        %v3192 = vld [vmem:[#allocation22 + $0x8] sm:$0xff]
        %v3193 = vld [vmem:[#allocation22 + $0x10] sm:$0xff]
        %v3194 = vld [vmem:[#allocation22 + $0x18] sm:$0xff]
        %v3195 = vld [vmem:[#allocation22 + $0x20] sm:$0xff]
        %v3196 = vld [vmem:[#allocation22 + $0x28] sm:$0xff]
        %v3197 = vld [vmem:[#allocation22 + $0x30] sm:$0xff]
        %v3198 = vld [vmem:[#allocation22 + $0x38] sm:$0xff]
        %v3199 = vld [vmem:[#allocation22 + $0x40] sm:$0xff]
        %v3200 = vld [vmem:[#allocation22 + $0x48] sm:$0xff]
        %v3201 = vld [vmem:[#allocation22 + $0x50] sm:$0xff]
        %v3202 = vld [vmem:[#allocation22 + $0x58] sm:$0xff]
        %v3203 = vld [vmem:[#allocation22 + $0x60] sm:$0xff]
        %v3204 = vld [vmem:[#allocation22 + $0x68] sm:$0xff]
        %v3205 = vld [vmem:[#allocation22 + $0x70] sm:$0xff]
        %v3206 = vld [vmem:[#allocation22 + $0x78] sm:$0xff]
        %v3207 = vld [vmem:[#allocation22 + $0x80] sm:$0xff]
        %v3208 = vld [vmem:[#allocation22 + $0x88] sm:$0xff]
        %v3209 = vld [vmem:[#allocation22 + $0x90] sm:$0xff]
        %v3210 = vld [vmem:[#allocation22 + $0x98] sm:$0xff]
        %v3211 = vld [vmem:[#allocation22 + $0xa0] sm:$0xff]
        %v3212 = vld [vmem:[#allocation22 + $0xa8] sm:$0xff]
        %v3213 = vld [vmem:[#allocation22 + $0xb0] sm:$0xff]
        %v3214 = vld [vmem:[#allocation22 + $0xb8] sm:$0xff]
        %v3215 = vld [vmem:[#allocation22 + $0xc0] sm:$0xff]
        %v3216 = vld [vmem:[#allocation22 + $0xc8] sm:$0xff]
        %v3217 = vld [vmem:[#allocation22 + $0xd0] sm:$0xff]
        %v3218 = vld [vmem:[#allocation22 + $0xd8] sm:$0xff]
        %v3219 = vld [vmem:[#allocation22 + $0xe0] sm:$0xff]
        %v3220 = vld [vmem:[#allocation22 + $0xe8] sm:$0xff]
        %v3221 = vld [vmem:[#allocation22 + $0xf0] sm:$0xff]
        %v3222 = vld [vmem:[#allocation22 + $0xf8] sm:$0xff]
        %v3255 = vunpack.c.l.b16 %v3191
        %v3256 = vunpack.c.h.b16 %v3191
        %v3257 = vunpack.c.l.b16 %v3192
        %v3258 = vunpack.c.h.b16 %v3192
        %v3259 = vunpack.c.l.b16 %v3193
        %v3260 = vunpack.c.h.b16 %v3193
        %v3261 = vunpack.c.l.b16 %v3194
        %v3262 = vunpack.c.h.b16 %v3194
        %v3263 = vunpack.c.l.b16 %v3195
        %v3264 = vunpack.c.h.b16 %v3195
        %v3265 = vunpack.c.l.b16 %v3196
        %v3266 = vunpack.c.h.b16 %v3196
        %v3267 = vunpack.c.l.b16 %v3197
        %v3268 = vunpack.c.h.b16 %v3197
        %v3269 = vunpack.c.l.b16 %v3198
        %v3270 = vunpack.c.h.b16 %v3198
        %v3271 = vunpack.c.l.b16 %v3199
        %v3272 = vunpack.c.h.b16 %v3199
        %v3273 = vunpack.c.l.b16 %v3200
        %v3274 = vunpack.c.h.b16 %v3200
        %v3275 = vunpack.c.l.b16 %v3201
        %v3276 = vunpack.c.h.b16 %v3201
        %v3277 = vunpack.c.l.b16 %v3202
        %v3278 = vunpack.c.h.b16 %v3202
        %v3279 = vunpack.c.l.b16 %v3203
        %v3280 = vunpack.c.h.b16 %v3203
        %v3281 = vunpack.c.l.b16 %v3204
        %v3282 = vunpack.c.h.b16 %v3204
        %v3283 = vunpack.c.l.b16 %v3205
        %v3284 = vunpack.c.h.b16 %v3205
        %v3285 = vunpack.c.l.b16 %v3206
        %v3286 = vunpack.c.h.b16 %v3206
        %v3287 = vunpack.c.l.b16 %v3207
        %v3288 = vunpack.c.h.b16 %v3207
        %v3289 = vunpack.c.l.b16 %v3208
        %v3290 = vunpack.c.h.b16 %v3208
        %v3291 = vunpack.c.l.b16 %v3209
        %v3292 = vunpack.c.h.b16 %v3209
        %v3293 = vunpack.c.l.b16 %v3210
        %v3294 = vunpack.c.h.b16 %v3210
        %v3295 = vunpack.c.l.b16 %v3211
        %v3296 = vunpack.c.h.b16 %v3211
        %v3297 = vunpack.c.l.b16 %v3212
        %v3298 = vunpack.c.h.b16 %v3212
        %v3299 = vunpack.c.l.b16 %v3213
        %v3300 = vunpack.c.h.b16 %v3213
        %v3301 = vunpack.c.l.b16 %v3214
        %v3302 = vunpack.c.h.b16 %v3214
        %v3303 = vunpack.c.l.b16 %v3215
        %v3304 = vunpack.c.h.b16 %v3215
        %v3305 = vunpack.c.l.b16 %v3216
        %v3306 = vunpack.c.h.b16 %v3216
        %v3307 = vunpack.c.l.b16 %v3217
        %v3308 = vunpack.c.h.b16 %v3217
        %v3309 = vunpack.c.l.b16 %v3218
        %v3310 = vunpack.c.h.b16 %v3218
        %v3311 = vunpack.c.l.b16 %v3219
        %v3312 = vunpack.c.h.b16 %v3219
        %v3313 = vunpack.c.l.b16 %v3220
        %v3314 = vunpack.c.h.b16 %v3220
        %v3315 = vunpack.c.l.b16 %v3221
        %v3316 = vunpack.c.h.b16 %v3221
        %v3317 = vunpack.c.l.b16 %v3222
        %v3318 = vunpack.c.h.b16 %v3222
        %v3319 = vpack.c.b16 %v3259, %v3255
        %v3320 = vpack.c.b16 %v3260, %v3256
        %v3321 = vpack.c.b16 %v3261, %v3257
        %v3322 = vpack.c.b16 %v3262, %v3258
        %v3323 = vpack.c.b16 %v3267, %v3263
        %v3324 = vpack.c.b16 %v3268, %v3264
        %v3325 = vpack.c.b16 %v3269, %v3265
        %v3326 = vpack.c.b16 %v3270, %v3266
        %v3327 = vpack.c.b16 %v3275, %v3271
        %v3328 = vpack.c.b16 %v3276, %v3272
        %v3329 = vpack.c.b16 %v3277, %v3273
        %v3330 = vpack.c.b16 %v3278, %v3274
        %v3331 = vpack.c.b16 %v3283, %v3279
        %v3332 = vpack.c.b16 %v3284, %v3280
        %v3333 = vpack.c.b16 %v3285, %v3281
        %v3334 = vpack.c.b16 %v3286, %v3282
        %v3335 = vpack.c.b16 %v3291, %v3287
        %v3336 = vpack.c.b16 %v3292, %v3288
        %v3337 = vpack.c.b16 %v3293, %v3289
        %v3338 = vpack.c.b16 %v3294, %v3290
        %v3339 = vpack.c.b16 %v3299, %v3295
        %v3340 = vpack.c.b16 %v3300, %v3296
        %v3341 = vpack.c.b16 %v3301, %v3297
        %v3342 = vpack.c.b16 %v3302, %v3298
        %v3343 = vpack.c.b16 %v3307, %v3303
        %v3344 = vpack.c.b16 %v3308, %v3304
        %v3345 = vpack.c.b16 %v3309, %v3305
        %v3346 = vpack.c.b16 %v3310, %v3306
        %v3347 = vpack.c.b16 %v3315, %v3311
        %v3348 = vpack.c.b16 %v3316, %v3312
        %v3349 = vpack.c.b16 %v3317, %v3313
        %v3350 = vpack.c.b16 %v3318, %v3314
        %3383 = vmatprep.subr.bf16.mxu0 %v3320
        %3384 = vmatpush1.bf16.msra.mxu0 %v3319
        %3385 = vmatprep.subr.bf16.mxu0 %v3324
        %3386 = vmatpush1.bf16.msra.mxu0 %v3323
        %3387 = vmatprep.subr.bf16.mxu0 %v3328
        %3388 = vmatpush1.bf16.msra.mxu0 %v3327
        %3389 = vmatprep.subr.bf16.mxu0 %v3332
        %3390 = vmatpush1.bf16.msra.mxu0 %v3331
        %3391 = vmatprep.subr.bf16.mxu0 %v3336
        %3392 = vmatpush1.bf16.msra.mxu0 %v3335
        %3393 = vmatprep.subr.bf16.mxu0 %v3340
        %3394 = vmatpush1.bf16.msra.mxu0 %v3339
        %3395 = vmatprep.subr.bf16.mxu0 %v3344
        %3396 = vmatpush1.bf16.msra.mxu0 %v3343
        %3397 = vmatprep.subr.bf16.mxu0 %v3348
        %3398 = vmatpush1.bf16.msra.mxu0 %v3347
        %3399 = vmatprep.subr.bf16.mxu0 0
        %3400 = vmatpush1.bf16.msra.mxu0 0
        %3401 = vmatprep.subr.bf16.mxu0 0
        %3402 = vmatpush1.bf16.msra.mxu0 0
        %3403 = vmatprep.subr.bf16.mxu0 0
        %3404 = vmatpush1.bf16.msra.mxu0 0
        %3405 = vmatprep.subr.bf16.mxu0 0
        %3406 = vmatpush1.bf16.msra.mxu0 0
        %3407 = vmatprep.subr.bf16.mxu0 0
        %3408 = vmatpush1.bf16.msra.mxu0 0
        %3409 = vmatprep.subr.bf16.mxu0 0
        %3410 = vmatpush1.bf16.msra.mxu0 0
        %3411 = vmatprep.subr.bf16.mxu0 0
        %3412 = vmatpush1.bf16.msra.mxu0 0
        %3413 = vmatprep.subr.bf16.mxu0 0
        %3414 = vmatpush1.bf16.msra.mxu0 0
        %3415 = vmatprep.mubr.bf16.mxu0 0
        %3416 = vmatmul.mubr.bf16.gmra.mrb[0].mxu0 %v3183
        %v3417 = vpop.f32.mrb[0].mxu0
        %v3418 = vadd.f32 0.0, %v3417
        %v3419 = vpop.f32.mrb[0].mxu0
        %v3420 = vadd.f32 0.0, %v3419
        %v3421 = vpop.f32.mrb[0].mxu0
        %v3422 = vpop.f32.mrb[0].mxu0
        %3423 = vdwg.mxu0
        %3424 = vmatprep.subr.bf16.mxu0 %v3322
        %3425 = vmatpush1.bf16.msra.mxu0 %v3321
        %3426 = vmatprep.subr.bf16.mxu0 %v3326
        %3427 = vmatpush1.bf16.msra.mxu0 %v3325
        %3428 = vmatprep.subr.bf16.mxu0 %v3330
        %3429 = vmatpush1.bf16.msra.mxu0 %v3329
        %3430 = vmatprep.subr.bf16.mxu0 %v3334
        %3431 = vmatpush1.bf16.msra.mxu0 %v3333
        %3432 = vmatprep.subr.bf16.mxu0 %v3338
        %3433 = vmatpush1.bf16.msra.mxu0 %v3337
        %3434 = vmatprep.subr.bf16.mxu0 %v3342
        %3435 = vmatpush1.bf16.msra.mxu0 %v3341
        %3436 = vmatprep.subr.bf16.mxu0 %v3346
        %3437 = vmatpush1.bf16.msra.mxu0 %v3345
        %3438 = vmatprep.subr.bf16.mxu0 %v3350
        %3439 = vmatpush1.bf16.msra.mxu0 %v3349
        %3440 = vmatprep.subr.bf16.mxu0 0
        %3441 = vmatpush1.bf16.msra.mxu0 0
        %3442 = vmatprep.subr.bf16.mxu0 0
        %3443 = vmatpush1.bf16.msra.mxu0 0
        %3444 = vmatprep.subr.bf16.mxu0 0
        %3445 = vmatpush1.bf16.msra.mxu0 0
        %3446 = vmatprep.subr.bf16.mxu0 0
        %3447 = vmatpush1.bf16.msra.mxu0 0
        %3448 = vmatprep.subr.bf16.mxu0 0
        %3449 = vmatpush1.bf16.msra.mxu0 0
        %3450 = vmatprep.subr.bf16.mxu0 0
        %3451 = vmatpush1.bf16.msra.mxu0 0
        %3452 = vmatprep.subr.bf16.mxu0 0
        %3453 = vmatpush1.bf16.msra.mxu0 0
        %3454 = vmatprep.subr.bf16.mxu0 0
        %3455 = vmatpush1.bf16.msra.mxu0 0
        %3456 = vmatprep.mubr.bf16.mxu0 0
        %3457 = vmatmul.mubr.bf16.gmra.mrb[0].mxu0 %v3183
        %v3458 = vpop.f32.mrb[0].mxu0
        %v3459 = vadd.f32 0.0, %v3458
        %v3460 = vpop.f32.mrb[0].mxu0
        %v3461 = vadd.f32 0.0, %v3460
        %v3462 = vpop.f32.mrb[0].mxu0
        %v3463 = vpop.f32.mrb[0].mxu0
        %3464 = vdwg.mxu0
        %v3465 = vadd.f32 %v3187, %v3418
        %v3466 = vadd.f32 %v3188, %v3420
        %v3467 = vadd.f32 %v3189, %v3459
        %v3468 = vadd.f32 %v3190, %v3461
        %v3469 = vxor.u32 %v3465, 2147483648
        %v3470 = vmul.f32 %v3469, 1.442695
        %v3471 = vpow.pop %v3470
        %v3472 = vadd.f32 %v3471, 1.0
        %v3473 = vrcp.pop %v3472
        %v3474 = vmul.f32 1.0, %v3473
        %v3475 = vxor.u32 %v3466, 2147483648
        %v3476 = vmul.f32 %v3475, 1.442695
        %v3477 = vpow.pop %v3476
        %v3478 = vadd.f32 %v3477, 1.0
        %v3479 = vrcp.pop %v3478
        %v3480 = vmul.f32 1.0, %v3479
        %v3481 = vtanh.pop %v3467
        %v3482 = vxor.u32 %v3468, 2147483648
        %v3483 = vmul.f32 %v3482, 1.442695
        %v3484 = vpow.pop %v3483
        %v3485 = vadd.f32 %v3484, 1.0
        %v3486 = vrcp.pop %v3485
        %v3487 = vmul.f32 1.0, %v3486
        %v3488 = vmul.f32 %v3480, %v3180
        %v3489 = vmul.f32 %v3474, %v3481
        %v3490 = vadd.f32 %v3488, %v3489
        %v3491 = vtanh.pop %v3490
        %v3492 = vmul.f32 %v3487, %v3491
        %v3493 = vpack.c.bf16 %v3492, %v3492
        %s3494 = scalar_lea.vmem %s641, 12 [#allocation23]
        %3495 = vst [vmem:[%s3494] sm:$0xf] %v3493
        %s3496 = scalar_lea.vmem %s563, 128 [#allocation5]
        %v3497 = vld [vmem:[%s3496] sm:$0xff]
        %v3498 = vld [vmem:[%s3496 + $0x8] sm:$0xff]
        %v3499 = vld [vmem:[%s3496 + $0x10] sm:$0xff]
        %v3500 = vld [vmem:[%s3496 + $0x18] sm:$0xff]
        %v3501 = vld [vmem:[#allocation22] sm:$0xff]
        %v3502 = vld [vmem:[#allocation22 + $0x8] sm:$0xff]
        %v3503 = vld [vmem:[#allocation22 + $0x10] sm:$0xff]
        %v3504 = vld [vmem:[#allocation22 + $0x18] sm:$0xff]
        %v3505 = vld [vmem:[#allocation22 + $0x20] sm:$0xff]
        %v3506 = vld [vmem:[#allocation22 + $0x28] sm:$0xff]
        %v3507 = vld [vmem:[#allocation22 + $0x30] sm:$0xff]
        %v3508 = vld [vmem:[#allocation22 + $0x38] sm:$0xff]
        %v3509 = vld [vmem:[#allocation22 + $0x40] sm:$0xff]
        %v3510 = vld [vmem:[#allocation22 + $0x48] sm:$0xff]
        %v3511 = vld [vmem:[#allocation22 + $0x50] sm:$0xff]
        %v3512 = vld [vmem:[#allocation22 + $0x58] sm:$0xff]
        %v3513 = vld [vmem:[#allocation22 + $0x60] sm:$0xff]
        %v3514 = vld [vmem:[#allocation22 + $0x68] sm:$0xff]
        %v3515 = vld [vmem:[#allocation22 + $0x70] sm:$0xff]
        %v3516 = vld [vmem:[#allocation22 + $0x78] sm:$0xff]
        %v3517 = vld [vmem:[#allocation22 + $0x80] sm:$0xff]
        %v3518 = vld [vmem:[#allocation22 + $0x88] sm:$0xff]
        %v3519 = vld [vmem:[#allocation22 + $0x90] sm:$0xff]
        %v3520 = vld [vmem:[#allocation22 + $0x98] sm:$0xff]
        %v3521 = vld [vmem:[#allocation22 + $0xa0] sm:$0xff]
        %v3522 = vld [vmem:[#allocation22 + $0xa8] sm:$0xff]
        %v3523 = vld [vmem:[#allocation22 + $0xb0] sm:$0xff]
        %v3524 = vld [vmem:[#allocation22 + $0xb8] sm:$0xff]
        %v3525 = vld [vmem:[#allocation22 + $0xc0] sm:$0xff]
        %v3526 = vld [vmem:[#allocation22 + $0xc8] sm:$0xff]
        %v3527 = vld [vmem:[#allocation22 + $0xd0] sm:$0xff]
        %v3528 = vld [vmem:[#allocation22 + $0xd8] sm:$0xff]
        %v3529 = vld [vmem:[#allocation22 + $0xe0] sm:$0xff]
        %v3530 = vld [vmem:[#allocation22 + $0xe8] sm:$0xff]
        %v3531 = vld [vmem:[#allocation22 + $0xf0] sm:$0xff]
        %v3532 = vld [vmem:[#allocation22 + $0xf8] sm:$0xff]
        %v3565 = vunpack.c.l.b16 %v3501
        %v3566 = vunpack.c.h.b16 %v3501
        %v3567 = vunpack.c.l.b16 %v3502
        %v3568 = vunpack.c.h.b16 %v3502
        %v3569 = vunpack.c.l.b16 %v3503
        %v3570 = vunpack.c.h.b16 %v3503
        %v3571 = vunpack.c.l.b16 %v3504
        %v3572 = vunpack.c.h.b16 %v3504
        %v3573 = vunpack.c.l.b16 %v3505
        %v3574 = vunpack.c.h.b16 %v3505
        %v3575 = vunpack.c.l.b16 %v3506
        %v3576 = vunpack.c.h.b16 %v3506
        %v3577 = vunpack.c.l.b16 %v3507
        %v3578 = vunpack.c.h.b16 %v3507
        %v3579 = vunpack.c.l.b16 %v3508
        %v3580 = vunpack.c.h.b16 %v3508
        %v3581 = vunpack.c.l.b16 %v3509
        %v3582 = vunpack.c.h.b16 %v3509
        %v3583 = vunpack.c.l.b16 %v3510
        %v3584 = vunpack.c.h.b16 %v3510
        %v3585 = vunpack.c.l.b16 %v3511
        %v3586 = vunpack.c.h.b16 %v3511
        %v3587 = vunpack.c.l.b16 %v3512
        %v3588 = vunpack.c.h.b16 %v3512
        %v3589 = vunpack.c.l.b16 %v3513
        %v3590 = vunpack.c.h.b16 %v3513
        %v3591 = vunpack.c.l.b16 %v3514
        %v3592 = vunpack.c.h.b16 %v3514
        %v3593 = vunpack.c.l.b16 %v3515
        %v3594 = vunpack.c.h.b16 %v3515
        %v3595 = vunpack.c.l.b16 %v3516
        %v3596 = vunpack.c.h.b16 %v3516
        %v3597 = vunpack.c.l.b16 %v3517
        %v3598 = vunpack.c.h.b16 %v3517
        %v3599 = vunpack.c.l.b16 %v3518
        %v3600 = vunpack.c.h.b16 %v3518
        %v3601 = vunpack.c.l.b16 %v3519
        %v3602 = vunpack.c.h.b16 %v3519
        %v3603 = vunpack.c.l.b16 %v3520
        %v3604 = vunpack.c.h.b16 %v3520
        %v3605 = vunpack.c.l.b16 %v3521
        %v3606 = vunpack.c.h.b16 %v3521
        %v3607 = vunpack.c.l.b16 %v3522
        %v3608 = vunpack.c.h.b16 %v3522
        %v3609 = vunpack.c.l.b16 %v3523
        %v3610 = vunpack.c.h.b16 %v3523
        %v3611 = vunpack.c.l.b16 %v3524
        %v3612 = vunpack.c.h.b16 %v3524
        %v3613 = vunpack.c.l.b16 %v3525
        %v3614 = vunpack.c.h.b16 %v3525
        %v3615 = vunpack.c.l.b16 %v3526
        %v3616 = vunpack.c.h.b16 %v3526
        %v3617 = vunpack.c.l.b16 %v3527
        %v3618 = vunpack.c.h.b16 %v3527
        %v3619 = vunpack.c.l.b16 %v3528
        %v3620 = vunpack.c.h.b16 %v3528
        %v3621 = vunpack.c.l.b16 %v3529
        %v3622 = vunpack.c.h.b16 %v3529
        %v3623 = vunpack.c.l.b16 %v3530
        %v3624 = vunpack.c.h.b16 %v3530
        %v3625 = vunpack.c.l.b16 %v3531
        %v3626 = vunpack.c.h.b16 %v3531
        %v3627 = vunpack.c.l.b16 %v3532
        %v3628 = vunpack.c.h.b16 %v3532
        %v3629 = vpack.c.b16 %v3569, %v3565
        %v3630 = vpack.c.b16 %v3570, %v3566
        %v3631 = vpack.c.b16 %v3571, %v3567
        %v3632 = vpack.c.b16 %v3572, %v3568
        %v3633 = vpack.c.b16 %v3577, %v3573
        %v3634 = vpack.c.b16 %v3578, %v3574
        %v3635 = vpack.c.b16 %v3579, %v3575
        %v3636 = vpack.c.b16 %v3580, %v3576
        %v3637 = vpack.c.b16 %v3585, %v3581
        %v3638 = vpack.c.b16 %v3586, %v3582
        %v3639 = vpack.c.b16 %v3587, %v3583
        %v3640 = vpack.c.b16 %v3588, %v3584
        %v3641 = vpack.c.b16 %v3593, %v3589
        %v3642 = vpack.c.b16 %v3594, %v3590
        %v3643 = vpack.c.b16 %v3595, %v3591
        %v3644 = vpack.c.b16 %v3596, %v3592
        %v3645 = vpack.c.b16 %v3601, %v3597
        %v3646 = vpack.c.b16 %v3602, %v3598
        %v3647 = vpack.c.b16 %v3603, %v3599
        %v3648 = vpack.c.b16 %v3604, %v3600
        %v3649 = vpack.c.b16 %v3609, %v3605
        %v3650 = vpack.c.b16 %v3610, %v3606
        %v3651 = vpack.c.b16 %v3611, %v3607
        %v3652 = vpack.c.b16 %v3612, %v3608
        %v3653 = vpack.c.b16 %v3617, %v3613
        %v3654 = vpack.c.b16 %v3618, %v3614
        %v3655 = vpack.c.b16 %v3619, %v3615
        %v3656 = vpack.c.b16 %v3620, %v3616
        %v3657 = vpack.c.b16 %v3625, %v3621
        %v3658 = vpack.c.b16 %v3626, %v3622
        %v3659 = vpack.c.b16 %v3627, %v3623
        %v3660 = vpack.c.b16 %v3628, %v3624
        %3693 = vmatprep.subr.bf16.mxu0 %v3630
        %3694 = vmatpush1.bf16.msra.mxu0 %v3629
        %3695 = vmatprep.subr.bf16.mxu0 %v3634
        %3696 = vmatpush1.bf16.msra.mxu0 %v3633
        %3697 = vmatprep.subr.bf16.mxu0 %v3638
        %3698 = vmatpush1.bf16.msra.mxu0 %v3637
        %3699 = vmatprep.subr.bf16.mxu0 %v3642
        %3700 = vmatpush1.bf16.msra.mxu0 %v3641
        %3701 = vmatprep.subr.bf16.mxu0 %v3646
        %3702 = vmatpush1.bf16.msra.mxu0 %v3645
        %3703 = vmatprep.subr.bf16.mxu0 %v3650
        %3704 = vmatpush1.bf16.msra.mxu0 %v3649
        %3705 = vmatprep.subr.bf16.mxu0 %v3654
        %3706 = vmatpush1.bf16.msra.mxu0 %v3653
        %3707 = vmatprep.subr.bf16.mxu0 %v3658
        %3708 = vmatpush1.bf16.msra.mxu0 %v3657
        %3709 = vmatprep.subr.bf16.mxu0 0
        %3710 = vmatpush1.bf16.msra.mxu0 0
        %3711 = vmatprep.subr.bf16.mxu0 0
        %3712 = vmatpush1.bf16.msra.mxu0 0
        %3713 = vmatprep.subr.bf16.mxu0 0
        %3714 = vmatpush1.bf16.msra.mxu0 0
        %3715 = vmatprep.subr.bf16.mxu0 0
        %3716 = vmatpush1.bf16.msra.mxu0 0
        %3717 = vmatprep.subr.bf16.mxu0 0
        %3718 = vmatpush1.bf16.msra.mxu0 0
        %3719 = vmatprep.subr.bf16.mxu0 0
        %3720 = vmatpush1.bf16.msra.mxu0 0
        %3721 = vmatprep.subr.bf16.mxu0 0
        %3722 = vmatpush1.bf16.msra.mxu0 0
        %3723 = vmatprep.subr.bf16.mxu0 0
        %3724 = vmatpush1.bf16.msra.mxu0 0
        %3725 = vmatprep.mubr.bf16.mxu0 0
        %3726 = vmatmul.mubr.bf16.gmra.mrb[0].mxu0 %v3493
        %v3727 = vpop.f32.mrb[0].mxu0
        %v3728 = vadd.f32 0.0, %v3727
        %v3729 = vpop.f32.mrb[0].mxu0
        %v3730 = vadd.f32 0.0, %v3729
        %v3731 = vpop.f32.mrb[0].mxu0
        %v3732 = vpop.f32.mrb[0].mxu0
        %3733 = vdwg.mxu0
        %3734 = vmatprep.subr.bf16.mxu0 %v3632
        %3735 = vmatpush1.bf16.msra.mxu0 %v3631
        %3736 = vmatprep.subr.bf16.mxu0 %v3636
        %3737 = vmatpush1.bf16.msra.mxu0 %v3635
        %3738 = vmatprep.subr.bf16.mxu0 %v3640
        %3739 = vmatpush1.bf16.msra.mxu0 %v3639
        %3740 = vmatprep.subr.bf16.mxu0 %v3644
        %3741 = vmatpush1.bf16.msra.mxu0 %v3643
        %3742 = vmatprep.subr.bf16.mxu0 %v3648
        %3743 = vmatpush1.bf16.msra.mxu0 %v3647
        %3744 = vmatprep.subr.bf16.mxu0 %v3652
        %3745 = vmatpush1.bf16.msra.mxu0 %v3651
        %3746 = vmatprep.subr.bf16.mxu0 %v3656
        %3747 = vmatpush1.bf16.msra.mxu0 %v3655
        %3748 = vmatprep.subr.bf16.mxu0 %v3660
        %3749 = vmatpush1.bf16.msra.mxu0 %v3659
        %3750 = vmatprep.subr.bf16.mxu0 0
        %3751 = vmatpush1.bf16.msra.mxu0 0
        %3752 = vmatprep.subr.bf16.mxu0 0
        %3753 = vmatpush1.bf16.msra.mxu0 0
        %3754 = vmatprep.subr.bf16.mxu0 0
        %3755 = vmatpush1.bf16.msra.mxu0 0
        %3756 = vmatprep.subr.bf16.mxu0 0
        %3757 = vmatpush1.bf16.msra.mxu0 0
        %3758 = vmatprep.subr.bf16.mxu0 0
        %3759 = vmatpush1.bf16.msra.mxu0 0
        %3760 = vmatprep.subr.bf16.mxu0 0
        %3761 = vmatpush1.bf16.msra.mxu0 0
        %3762 = vmatprep.subr.bf16.mxu0 0
        %3763 = vmatpush1.bf16.msra.mxu0 0
        %3764 = vmatprep.subr.bf16.mxu0 0
        %3765 = vmatpush1.bf16.msra.mxu0 0
        %3766 = vmatprep.mubr.bf16.mxu0 0
        %3767 = vmatmul.mubr.bf16.gmra.mrb[0].mxu0 %v3493
        %v3768 = vpop.f32.mrb[0].mxu0
        %v3769 = vadd.f32 0.0, %v3768
        %v3770 = vpop.f32.mrb[0].mxu0
        %v3771 = vadd.f32 0.0, %v3770
        %v3772 = vpop.f32.mrb[0].mxu0
        %v3773 = vpop.f32.mrb[0].mxu0
        %3774 = vdwg.mxu0
        %v3775 = vadd.f32 %v3497, %v3728
        %v3776 = vadd.f32 %v3498, %v3730
        %v3777 = vadd.f32 %v3499, %v3769
        %v3778 = vadd.f32 %v3500, %v3771
        %v3779 = vxor.u32 %v3775, 2147483648
        %v3780 = vmul.f32 %v3779, 1.442695
        %v3781 = vpow.pop %v3780
        %v3782 = vadd.f32 %v3781, 1.0
        %v3783 = vrcp.pop %v3782
        %v3784 = vmul.f32 1.0, %v3783
        %v3785 = vxor.u32 %v3776, 2147483648
        %v3786 = vmul.f32 %v3785, 1.442695
        %v3787 = vpow.pop %v3786
        %v3788 = vadd.f32 %v3787, 1.0
        %v3789 = vrcp.pop %v3788
        %v3790 = vmul.f32 1.0, %v3789
        %v3791 = vtanh.pop %v3777
        %v3792 = vxor.u32 %v3778, 2147483648
        %v3793 = vmul.f32 %v3792, 1.442695
        %v3794 = vpow.pop %v3793
        %v3795 = vadd.f32 %v3794, 1.0
        %v3796 = vrcp.pop %v3795
        %v3797 = vmul.f32 1.0, %v3796
        %v3798 = vmul.f32 %v3790, %v3490
        %v3799 = vmul.f32 %v3784, %v3791
        %v3800 = vadd.f32 %v3798, %v3799
        %v3801 = vtanh.pop %v3800
        %v3802 = vmul.f32 %v3797, %v3801
        %v3803 = vpack.c.bf16 %v3802, %v3802
        %s3804 = scalar_lea.vmem %s641, 16 [#allocation23]
        %3805 = vst [vmem:[%s3804] sm:$0xf] %v3803
        %v3806 = vld [vmem:[#allocation11] sm:$0xf]
        %v3807 = vld [vmem:[#allocation11 + $0x4] sm:$0xf]
        %v3808 = vld [vmem:[#allocation11 + $0x8] sm:$0xf]
        %v3809 = vld [vmem:[#allocation11 + $0xc] sm:$0xf]
        %v3810 = vld [vmem:[#allocation11 + $0x10] sm:$0xf]
        %v3811 = vld [vmem:[#allocation11 + $0x14] sm:$0xf]
        %v3812 = vld [vmem:[#allocation11 + $0x18] sm:$0xf]
        %v3813 = vld [vmem:[#allocation11 + $0x1c] sm:$0xf]
        %v3814 = vld [vmem:[#allocation11 + $0x20] sm:$0xf]
        %v3815 = vld [vmem:[#allocation11 + $0x24] sm:$0xf]
        %v3816 = vld [vmem:[#allocation11 + $0x28] sm:$0xf]
        %v3817 = vld [vmem:[#allocation11 + $0x2c] sm:$0xf]
        %v3818 = vld [vmem:[#allocation11 + $0x30] sm:$0xf]
        %v3819 = vld [vmem:[#allocation11 + $0x34] sm:$0xf]
        %v3820 = vld [vmem:[#allocation11 + $0x38] sm:$0xf]
        %v3821 = vld [vmem:[#allocation11 + $0x3c] sm:$0xf]
        %v3838 = vunpack.c.l.b16 %v3806
        %v3839 = vunpack.c.l.b16 %v3807
        %v3840 = vunpack.c.l.b16 %v3808
        %v3841 = vunpack.c.l.b16 %v3809
        %v3842 = vunpack.c.l.b16 %v3810
        %v3843 = vunpack.c.l.b16 %v3811
        %v3844 = vunpack.c.l.b16 %v3812
        %v3845 = vunpack.c.l.b16 %v3813
        %v3846 = vunpack.c.l.b16 %v3814
        %v3847 = vunpack.c.l.b16 %v3815
        %v3848 = vunpack.c.l.b16 %v3816
        %v3849 = vunpack.c.l.b16 %v3817
        %v3850 = vunpack.c.l.b16 %v3818
        %v3851 = vunpack.c.l.b16 %v3819
        %v3852 = vunpack.c.l.b16 %v3820
        %v3853 = vunpack.c.l.b16 %v3821
        %v3854 = vpack.c.b16 %v3839, %v3838
        %v3855 = vpack.c.b16 %v3841, %v3840
        %v3856 = vpack.c.b16 %v3843, %v3842
        %v3857 = vpack.c.b16 %v3845, %v3844
        %v3858 = vpack.c.b16 %v3847, %v3846
        %v3859 = vpack.c.b16 %v3849, %v3848
        %v3860 = vpack.c.b16 %v3851, %v3850
        %v3861 = vpack.c.b16 %v3853, %v3852
        %3870 = vmatprep.subr.bf16.mxu0 0
        %3871 = vmatpush1.bf16.msra.mxu0 %v3854
        %3872 = vmatprep.subr.bf16.mxu0 0
        %3873 = vmatpush1.bf16.msra.mxu0 %v3855
        %3874 = vmatprep.subr.bf16.mxu0 0
        %3875 = vmatpush1.bf16.msra.mxu0 %v3856
        %3876 = vmatprep.subr.bf16.mxu0 0
        %3877 = vmatpush1.bf16.msra.mxu0 %v3857
        %3878 = vmatprep.subr.bf16.mxu0 0
        %3879 = vmatpush1.bf16.msra.mxu0 %v3858
        %3880 = vmatprep.subr.bf16.mxu0 0
        %3881 = vmatpush1.bf16.msra.mxu0 %v3859
        %3882 = vmatprep.subr.bf16.mxu0 0
        %3883 = vmatpush1.bf16.msra.mxu0 %v3860
        %3884 = vmatprep.subr.bf16.mxu0 0
        %3885 = vmatpush1.bf16.msra.mxu0 %v3861
        %3886 = vmatprep.subr.bf16.mxu0 0
        %3887 = vmatpush1.bf16.msra.mxu0 0
        %3888 = vmatprep.subr.bf16.mxu0 0
        %3889 = vmatpush1.bf16.msra.mxu0 0
        %3890 = vmatprep.subr.bf16.mxu0 0
        %3891 = vmatpush1.bf16.msra.mxu0 0
        %3892 = vmatprep.subr.bf16.mxu0 0
        %3893 = vmatpush1.bf16.msra.mxu0 0
        %3894 = vmatprep.subr.bf16.mxu0 0
        %3895 = vmatpush1.bf16.msra.mxu0 0
        %3896 = vmatprep.subr.bf16.mxu0 0
        %3897 = vmatpush1.bf16.msra.mxu0 0
        %3898 = vmatprep.subr.bf16.mxu0 0
        %3899 = vmatpush1.bf16.msra.mxu0 0
        %3900 = vmatprep.subr.bf16.mxu0 0
        %3901 = vmatpush1.bf16.msra.mxu0 0
        %3902 = vmatprep.mubr.bf16.mxu0 0
        %3903 = vmatmul.mubr.bf16.gmra.mrb[0].mxu0 %v2261
        %v3904 = vpop.f32.mrb[0].mxu0
        %v3905 = vadd.f32 0.0, %v3904
        %v3906 = vpop.f32.mrb[0].mxu0
        %v3907 = vpop.f32.mrb[0].mxu0
        %v3908 = vpop.f32.mrb[0].mxu0
        %3909 = vdwg.mxu0
        %v3910 = vld [vmem:[#allocation8] sm:$0xff]
        %v3911 = vld [vmem:[#allocation8 + $0x8] sm:$0xff]
        %v3912 = vld [vmem:[#allocation8 + $0x10] sm:$0xff]
        %v3913 = vld [vmem:[#allocation8 + $0x18] sm:$0xff]
        %v3914 = vld [vmem:[#allocation8 + $0x20] sm:$0xff]
        %v3915 = vld [vmem:[#allocation8 + $0x28] sm:$0xff]
        %v3916 = vld [vmem:[#allocation8 + $0x30] sm:$0xff]
        %v3917 = vld [vmem:[#allocation8 + $0x38] sm:$0xff]
        %v3918 = vld [vmem:[#allocation8 + $0x40] sm:$0xff]
        %v3919 = vld [vmem:[#allocation8 + $0x48] sm:$0xff]
        %v3920 = vld [vmem:[#allocation8 + $0x50] sm:$0xff]
        %v3921 = vld [vmem:[#allocation8 + $0x58] sm:$0xff]
        %v3922 = vld [vmem:[#allocation8 + $0x60] sm:$0xff]
        %v3923 = vld [vmem:[#allocation8 + $0x68] sm:$0xff]
        %v3924 = vld [vmem:[#allocation8 + $0x70] sm:$0xff]
        %v3925 = vld [vmem:[#allocation8 + $0x78] sm:$0xff]
        %v3927 = vcombine.high %v3905, %v3905
        %v3929 = vunpack.c.l.s4 1966171168
        %v3930 = vunpack.c.0.s8 %v3929
        %v3931 = vlaneseq
        %v3932 = vshrl.u32 %v3931, 7
        %v3933 = vsub.s32 %v3930, %v3932
        %v3934 = vrot.slane %v3905, %v3933
        %v3936 = vunpack.c.l.s4 1966171168
        %v3937 = vunpack.c.0.s8 %v3936
        %v3938 = vlaneseq
        %v3939 = vshrl.u32 %v3938, 7
        %v3940 = vsub.s32 %v3937, %v3939
        %v3941 = vrot.slane %v3927, %v3940
        %v3942 = vcombine.high %v3934, %v3934
        %v3943 = vcombine.high %v3941, %v3941
        %v3945 = vunpack.c.l.s4 1966171168
        %v3946 = vunpack.c.0.s8 %v3945
        %v3947 = vlaneseq
        %v3948 = vshrl.u32 %v3947, 7
        %v3949 = vsub.s32 %v3946, %v3948
        %v3950 = vrot.slane %v3934, %v3949
        %v3952 = vunpack.c.l.s4 1966171168
        %v3953 = vunpack.c.0.s8 %v3952
        %v3954 = vlaneseq
        %v3955 = vshrl.u32 %v3954, 7
        %v3956 = vsub.s32 %v3953, %v3955
        %v3957 = vrot.slane %v3941, %v3956
        %v3959 = vunpack.c.l.s4 1966171168
        %v3960 = vunpack.c.0.s8 %v3959
        %v3961 = vlaneseq
        %v3962 = vshrl.u32 %v3961, 7
        %v3963 = vsub.s32 %v3960, %v3962
        %v3964 = vrot.slane %v3942, %v3963
        %v3966 = vunpack.c.l.s4 1966171168
        %v3967 = vunpack.c.0.s8 %v3966
        %v3968 = vlaneseq
        %v3969 = vshrl.u32 %v3968, 7
        %v3970 = vsub.s32 %v3967, %v3969
        %v3971 = vrot.slane %v3943, %v3970
        %v3972 = vcombine.high %v3950, %v3950
        %v3973 = vcombine.high %v3957, %v3957
        %v3974 = vcombine.high %v3964, %v3964
        %v3975 = vcombine.high %v3971, %v3971
        %v3976 = vlaneseq
        %v3977 = vshrl.u32 %v3976, 7
        %v3978 = vsub.s32 0, %v3977
        %v3979 = vrot.slane %v3950, %v3978
        %v3980 = vlaneseq
        %v3981 = vshrl.u32 %v3980, 7
        %v3982 = vsub.s32 0, %v3981
        %v3983 = vrot.slane %v3964, %v3982
        %v3984 = vlaneseq
        %v3985 = vshrl.u32 %v3984, 7
        %v3986 = vsub.s32 0, %v3985
        %v3987 = vrot.slane %v3972, %v3986
        %v3988 = vlaneseq
        %v3989 = vshrl.u32 %v3988, 7
        %v3990 = vsub.s32 0, %v3989
        %v3991 = vrot.slane %v3974, %v3990
        %v3992 = vlaneseq
        %v3993 = vshrl.u32 %v3992, 7
        %v3994 = vsub.s32 0, %v3993
        %v3995 = vrot.slane %v3957, %v3994
        %v3996 = vlaneseq
        %v3997 = vshrl.u32 %v3996, 7
        %v3998 = vsub.s32 0, %v3997
        %v3999 = vrot.slane %v3971, %v3998
        %v4000 = vlaneseq
        %v4001 = vshrl.u32 %v4000, 7
        %v4002 = vsub.s32 0, %v4001
        %v4003 = vrot.slane %v3973, %v4002
        %v4004 = vlaneseq
        %v4005 = vshrl.u32 %v4004, 7
        %v4006 = vsub.s32 0, %v4005
        %v4007 = vrot.slane %v3975, %v4006
        %v4016 = vadd.f32 %v3910, %v3979
        %v4017 = vadd.f32 %v3911, %v3979
        %v4018 = vadd.f32 %v3912, %v3983
        %v4019 = vadd.f32 %v3913, %v3983
        %v4020 = vadd.f32 %v3914, %v3987
        %v4021 = vadd.f32 %v3915, %v3987
        %v4022 = vadd.f32 %v3916, %v3991
        %v4023 = vadd.f32 %v3917, %v3991
        %v4024 = vadd.f32 %v3918, %v3995
        %v4025 = vadd.f32 %v3919, %v3995
        %v4026 = vadd.f32 %v3920, %v3999
        %v4027 = vadd.f32 %v3921, %v3999
        %v4028 = vadd.f32 %v3922, %v4003
        %v4029 = vadd.f32 %v3923, %v4003
        %v4030 = vadd.f32 %v3924, %v4007
        %v4031 = vadd.f32 %v3925, %v4007
        %v4032 = vtanh.pop %v4016
        %v4033 = vtanh.pop %v4017
        %v4034 = vtanh.pop %v4018
        %v4035 = vtanh.pop %v4019
        %v4036 = vtanh.pop %v4020
        %v4037 = vtanh.pop %v4021
        %v4038 = vtanh.pop %v4022
        %v4039 = vtanh.pop %v4023
        %v4040 = vtanh.pop %v4024
        %v4041 = vtanh.pop %v4025
        %v4042 = vtanh.pop %v4026
        %v4043 = vtanh.pop %v4027
        %v4044 = vtanh.pop %v4028
        %v4045 = vtanh.pop %v4029
        %v4046 = vtanh.pop %v4030
        %v4047 = vtanh.pop %v4031
        %v4048 = vld [vmem:[#allocation13] sm:$0x1]
        %v4050 = vlaneseq
        %v4051 = vshrl.u32 %v4050, 7
        %v4052 = vsub.s32 0, %v4051
        %v4053 = vrot.slane %v4048, %v4052
        %v4055 = vmul.f32 %v4032, %v4053
        %v4056 = vmul.f32 %v4033, %v4053
        %v4057 = vmul.f32 %v4034, %v4053
        %v4058 = vmul.f32 %v4035, %v4053
        %v4059 = vmul.f32 %v4036, %v4053
        %v4060 = vmul.f32 %v4037, %v4053
        %v4061 = vmul.f32 %v4038, %v4053
        %v4062 = vmul.f32 %v4039, %v4053
        %v4063 = vmul.f32 %v4040, %v4053
        %v4064 = vmul.f32 %v4041, %v4053
        %v4065 = vmul.f32 %v4042, %v4053
        %v4066 = vmul.f32 %v4043, %v4053
        %v4067 = vmul.f32 %v4044, %v4053
        %v4068 = vmul.f32 %v4045, %v4053
        %v4069 = vmul.f32 %v4046, %v4053
        %v4070 = vmul.f32 %v4047, %v4053
        %4071 = vadd.xlane.f32.xlu0 %v4055
        %v4072 = vpop.xlane.xlu0 %4071
        %4073 = vadd.xlane.f32.xlu0 %v4056
        %v4074 = vpop.xlane.xlu0 %4073
        %4075 = vadd.xlane.f32.xlu0 %v4057
        %v4076 = vpop.xlane.xlu0 %4075
        %4077 = vadd.xlane.f32.xlu0 %v4058
        %v4078 = vpop.xlane.xlu0 %4077
        %4079 = vadd.xlane.f32.xlu0 %v4059
        %v4080 = vpop.xlane.xlu0 %4079
        %4081 = vadd.xlane.f32.xlu0 %v4060
        %v4082 = vpop.xlane.xlu0 %4081
        %4083 = vadd.xlane.f32.xlu0 %v4061
        %v4084 = vpop.xlane.xlu0 %4083
        %4085 = vadd.xlane.f32.xlu0 %v4062
        %v4086 = vpop.xlane.xlu0 %4085
        %4087 = vadd.xlane.f32.xlu0 %v4063
        %v4088 = vpop.xlane.xlu0 %4087
        %4089 = vadd.xlane.f32.xlu0 %v4064
        %v4090 = vpop.xlane.xlu0 %4089
        %4091 = vadd.xlane.f32.xlu0 %v4065
        %v4092 = vpop.xlane.xlu0 %4091
        %4093 = vadd.xlane.f32.xlu0 %v4066
        %v4094 = vpop.xlane.xlu0 %4093
        %4095 = vadd.xlane.f32.xlu0 %v4067
        %v4096 = vpop.xlane.xlu0 %4095
        %4097 = vadd.xlane.f32.xlu0 %v4068
        %v4098 = vpop.xlane.xlu0 %4097
        %4099 = vadd.xlane.f32.xlu0 %v4069
        %v4100 = vpop.xlane.xlu0 %4099
        %4101 = vadd.xlane.f32.xlu0 %v4070
        %v4102 = vpop.xlane.xlu0 %4101
        %v4119 = vlaneseq
        %v4120 = vand.u32 %v4119, 127
        %v4121 = vlaneseq
        %v4122 = vshrl.u32 %v4121, 7
        %v4123 = vsub.s32 %v4120, %v4122
        %v4124 = vrot.slane %v4072, %v4123
        %v4125 = vadd.s32 %v4120, 4294967288
        %v4126 = vlaneseq
        %v4127 = vshrl.u32 %v4126, 7
        %v4128 = vsub.s32 %v4125, %v4127
        %v4129 = vrot.slane %v4074, %v4128
        %vm4130 = vcmask 130112
        %v4131 = vsel %vm4130, %v4129, %v4124
        %v4132 = vlaneseq
        %v4133 = vshrl.u32 %v4132, 7
        %v4134 = vsub.s32 %v4120, %v4133
        %v4135 = vrot.slane %v4076, %v4134
        %v4136 = vlaneseq
        %v4137 = vshrl.u32 %v4136, 7
        %v4138 = vsub.s32 %v4125, %v4137
        %v4139 = vrot.slane %v4078, %v4138
        %v4140 = vsel %vm4130, %v4139, %v4135
        %v4141 = vlaneseq
        %v4142 = vshrl.u32 %v4141, 7
        %v4143 = vsub.s32 %v4120, %v4142
        %v4144 = vrot.slane %v4080, %v4143
        %v4145 = vlaneseq
        %v4146 = vshrl.u32 %v4145, 7
        %v4147 = vsub.s32 %v4125, %v4146
        %v4148 = vrot.slane %v4082, %v4147
        %v4149 = vsel %vm4130, %v4148, %v4144
        %v4150 = vlaneseq
        %v4151 = vshrl.u32 %v4150, 7
        %v4152 = vsub.s32 %v4120, %v4151
        %v4153 = vrot.slane %v4084, %v4152
        %v4154 = vlaneseq
        %v4155 = vshrl.u32 %v4154, 7
        %v4156 = vsub.s32 %v4125, %v4155
        %v4157 = vrot.slane %v4086, %v4156
        %v4158 = vsel %vm4130, %v4157, %v4153
        %v4159 = vlaneseq
        %v4160 = vshrl.u32 %v4159, 7
        %v4161 = vsub.s32 %v4120, %v4160
        %v4162 = vrot.slane %v4088, %v4161
        %v4163 = vlaneseq
        %v4164 = vshrl.u32 %v4163, 7
        %v4165 = vsub.s32 %v4125, %v4164
        %v4166 = vrot.slane %v4090, %v4165
        %v4167 = vsel %vm4130, %v4166, %v4162
        %v4168 = vlaneseq
        %v4169 = vshrl.u32 %v4168, 7
        %v4170 = vsub.s32 %v4120, %v4169
        %v4171 = vrot.slane %v4092, %v4170
        %v4172 = vlaneseq
        %v4173 = vshrl.u32 %v4172, 7
        %v4174 = vsub.s32 %v4125, %v4173
        %v4175 = vrot.slane %v4094, %v4174
        %v4176 = vsel %vm4130, %v4175, %v4171
        %v4177 = vlaneseq
        %v4178 = vshrl.u32 %v4177, 7
        %v4179 = vsub.s32 %v4120, %v4178
        %v4180 = vrot.slane %v4096, %v4179
        %v4181 = vlaneseq
        %v4182 = vshrl.u32 %v4181, 7
        %v4183 = vsub.s32 %v4125, %v4182
        %v4184 = vrot.slane %v4098, %v4183
        %v4185 = vsel %vm4130, %v4184, %v4180
        %v4186 = vlaneseq
        %v4187 = vshrl.u32 %v4186, 7
        %v4188 = vsub.s32 %v4120, %v4187
        %v4189 = vrot.slane %v4100, %v4188
        %v4190 = vlaneseq
        %v4191 = vshrl.u32 %v4190, 7
        %v4192 = vsub.s32 %v4125, %v4191
        %v4193 = vrot.slane %v4102, %v4192
        %v4194 = vsel %vm4130, %v4193, %v4189
        %vm4195 = vcmask 1041409
        %v4196 = vsel %vm4195, %v4140, %v4131
        %vm4197 = vcmask 1042434
        %v4198 = vsel %vm4197, %v4149, %v4196
        %vm4199 = vcmask 1043459
        %v4200 = vsel %vm4199, %v4158, %v4198
        %vm4201 = vcmask 1044484
        %v4202 = vsel %vm4201, %v4167, %v4200
        %vm4203 = vcmask 1045509
        %v4204 = vsel %vm4203, %v4176, %v4202
        %vm4205 = vcmask 1046534
        %v4206 = vsel %vm4205, %v4185, %v4204
        %vm4207 = vcmask 1047559
        %v4208 = vsel %vm4207, %v4194, %v4206
        %vm4210 = vcmask 130048
        %v4211 = vsel %vm4210, %v4208, -inf
        %4212 = vmax.xlane.f32.xlu0 %v4211
        %v4213 = vpop.xlane.xlu0 %4212
        %v4215 = vlaneseq
        %v4216 = vshrl.u32 %v4215, 7
        %v4217 = vsub.s32 0, %v4216
        %v4218 = vrot.slane %v4213, %v4217
        %v4219 = vlaneseq
        %v4220 = vshrl.u32 %v4219, 7
        %v4221 = vsub.s32 1, %v4220
        %v4222 = vrot.slane %v4213, %v4221
        %v4223 = vlaneseq
        %v4224 = vshrl.u32 %v4223, 7
        %v4225 = vsub.s32 2, %v4224
        %v4226 = vrot.slane %v4213, %v4225
        %v4227 = vlaneseq
        %v4228 = vshrl.u32 %v4227, 7
        %v4229 = vsub.s32 3, %v4228
        %v4230 = vrot.slane %v4213, %v4229
        %v4231 = vlaneseq
        %v4232 = vshrl.u32 %v4231, 7
        %v4233 = vsub.s32 4, %v4232
        %v4234 = vrot.slane %v4213, %v4233
        %v4235 = vlaneseq
        %v4236 = vshrl.u32 %v4235, 7
        %v4237 = vsub.s32 5, %v4236
        %v4238 = vrot.slane %v4213, %v4237
        %v4239 = vlaneseq
        %v4240 = vshrl.u32 %v4239, 7
        %v4241 = vsub.s32 6, %v4240
        %v4242 = vrot.slane %v4213, %v4241
        %v4243 = vlaneseq
        %v4244 = vshrl.u32 %v4243, 7
        %v4245 = vsub.s32 7, %v4244
        %v4246 = vrot.slane %v4213, %v4245
        %v4255 = vsub.f32 %v4072, %v4218
        %v4256 = vsub.f32 %v4074, %v4218
        %v4257 = vsub.f32 %v4076, %v4222
        %v4258 = vsub.f32 %v4078, %v4222
        %v4259 = vsub.f32 %v4080, %v4226
        %v4260 = vsub.f32 %v4082, %v4226
        %v4261 = vsub.f32 %v4084, %v4230
        %v4262 = vsub.f32 %v4086, %v4230
        %v4263 = vsub.f32 %v4088, %v4234
        %v4264 = vsub.f32 %v4090, %v4234
        %v4265 = vsub.f32 %v4092, %v4238
        %v4266 = vsub.f32 %v4094, %v4238
        %v4267 = vsub.f32 %v4096, %v4242
        %v4268 = vsub.f32 %v4098, %v4242
        %v4269 = vsub.f32 %v4100, %v4246
        %v4270 = vsub.f32 %v4102, %v4246
        %v4271 = vmul.f32 %v4255, 1.442695
        %v4272 = vpow.pop %v4271
        %v4273 = vmul.f32 %v4256, 1.442695
        %v4274 = vpow.pop %v4273
        %v4275 = vmul.f32 %v4257, 1.442695
        %v4276 = vpow.pop %v4275
        %v4277 = vmul.f32 %v4258, 1.442695
        %v4278 = vpow.pop %v4277
        %v4279 = vmul.f32 %v4259, 1.442695
        %v4280 = vpow.pop %v4279
        %v4281 = vmul.f32 %v4260, 1.442695
        %v4282 = vpow.pop %v4281
        %v4283 = vmul.f32 %v4261, 1.442695
        %v4284 = vpow.pop %v4283
        %v4285 = vmul.f32 %v4262, 1.442695
        %v4286 = vpow.pop %v4285
        %v4287 = vmul.f32 %v4263, 1.442695
        %v4288 = vpow.pop %v4287
        %v4289 = vmul.f32 %v4264, 1.442695
        %v4290 = vpow.pop %v4289
        %v4291 = vmul.f32 %v4265, 1.442695
        %v4292 = vpow.pop %v4291
        %v4293 = vmul.f32 %v4266, 1.442695
        %v4294 = vpow.pop %v4293
        %v4295 = vmul.f32 %v4267, 1.442695
        %v4296 = vpow.pop %v4295
        %v4297 = vmul.f32 %v4268, 1.442695
        %v4298 = vpow.pop %v4297
        %v4299 = vmul.f32 %v4269, 1.442695
        %v4300 = vpow.pop %v4299
        %v4301 = vmul.f32 %v4270, 1.442695
        %v4302 = vpow.pop %v4301
        %4319 = vset.pattern.permute.xlu0 0
        %4320 = vperm.xlu0 %4319, %v4272
        %v4321 = vpop.permute.xlu0 %4320
        %4322 = vset.pattern.permute.xlu0 0
        %4323 = vperm.xlu0 %4322, %v4274
        %v4324 = vpop.permute.xlu0 %4323
        %4325 = vset.pattern.permute.xlu0 0
        %4326 = vperm.xlu0 %4325, %v4276
        %v4327 = vpop.permute.xlu0 %4326
        %4328 = vset.pattern.permute.xlu0 0
        %4329 = vperm.xlu0 %4328, %v4278
        %v4330 = vpop.permute.xlu0 %4329
        %4331 = vset.pattern.permute.xlu0 0
        %4332 = vperm.xlu0 %4331, %v4280
        %v4333 = vpop.permute.xlu0 %4332
        %4334 = vset.pattern.permute.xlu0 0
        %4335 = vperm.xlu0 %4334, %v4282
        %v4336 = vpop.permute.xlu0 %4335
        %4337 = vset.pattern.permute.xlu0 0
        %4338 = vperm.xlu0 %4337, %v4284
        %v4339 = vpop.permute.xlu0 %4338
        %4340 = vset.pattern.permute.xlu0 0
        %4341 = vperm.xlu0 %4340, %v4286
        %v4342 = vpop.permute.xlu0 %4341
        %4343 = vset.pattern.permute.xlu0 0
        %4344 = vperm.xlu0 %4343, %v4288
        %v4345 = vpop.permute.xlu0 %4344
        %4346 = vset.pattern.permute.xlu0 0
        %4347 = vperm.xlu0 %4346, %v4290
        %v4348 = vpop.permute.xlu0 %4347
        %4349 = vset.pattern.permute.xlu0 0
        %4350 = vperm.xlu0 %4349, %v4292
        %v4351 = vpop.permute.xlu0 %4350
        %4352 = vset.pattern.permute.xlu0 0
        %4353 = vperm.xlu0 %4352, %v4294
        %v4354 = vpop.permute.xlu0 %4353
        %4355 = vset.pattern.permute.xlu0 0
        %4356 = vperm.xlu0 %4355, %v4296
        %v4357 = vpop.permute.xlu0 %4356
        %4358 = vset.pattern.permute.xlu0 0
        %4359 = vperm.xlu0 %4358, %v4298
        %v4360 = vpop.permute.xlu0 %4359
        %4361 = vset.pattern.permute.xlu0 0
        %4362 = vperm.xlu0 %4361, %v4300
        %v4363 = vpop.permute.xlu0 %4362
        %4364 = vset.pattern.permute.xlu0 0
        %4365 = vperm.xlu0 %4364, %v4302
        %v4366 = vpop.permute.xlu0 %4365
        %v4367 = vlaneseq
        %v4368 = vshrl.u32 %v4367, 7
        %v4369 = vsub.s32 %v4120, %v4368
        %v4370 = vrot.slane %v4321, %v4369
        %v4371 = vlaneseq
        %v4372 = vshrl.u32 %v4371, 7
        %v4373 = vsub.s32 %v4125, %v4372
        %v4374 = vrot.slane %v4324, %v4373
        %v4375 = vsel %vm4130, %v4374, %v4370
        %v4376 = vlaneseq
        %v4377 = vshrl.u32 %v4376, 7
        %v4378 = vsub.s32 %v4120, %v4377
        %v4379 = vrot.slane %v4327, %v4378
        %v4380 = vlaneseq
        %v4381 = vshrl.u32 %v4380, 7
        %v4382 = vsub.s32 %v4125, %v4381
        %v4383 = vrot.slane %v4330, %v4382
        %v4384 = vsel %vm4130, %v4383, %v4379
        %v4385 = vlaneseq
        %v4386 = vshrl.u32 %v4385, 7
        %v4387 = vsub.s32 %v4120, %v4386
        %v4388 = vrot.slane %v4333, %v4387
        %v4389 = vlaneseq
        %v4390 = vshrl.u32 %v4389, 7
        %v4391 = vsub.s32 %v4125, %v4390
        %v4392 = vrot.slane %v4336, %v4391
        %v4393 = vsel %vm4130, %v4392, %v4388
        %v4394 = vlaneseq
        %v4395 = vshrl.u32 %v4394, 7
        %v4396 = vsub.s32 %v4120, %v4395
        %v4397 = vrot.slane %v4339, %v4396
        %v4398 = vlaneseq
        %v4399 = vshrl.u32 %v4398, 7
        %v4400 = vsub.s32 %v4125, %v4399
        %v4401 = vrot.slane %v4342, %v4400
        %v4402 = vsel %vm4130, %v4401, %v4397
        %v4403 = vlaneseq
        %v4404 = vshrl.u32 %v4403, 7
        %v4405 = vsub.s32 %v4120, %v4404
        %v4406 = vrot.slane %v4345, %v4405
        %v4407 = vlaneseq
        %v4408 = vshrl.u32 %v4407, 7
        %v4409 = vsub.s32 %v4125, %v4408
        %v4410 = vrot.slane %v4348, %v4409
        %v4411 = vsel %vm4130, %v4410, %v4406
        %v4412 = vlaneseq
        %v4413 = vshrl.u32 %v4412, 7
        %v4414 = vsub.s32 %v4120, %v4413
        %v4415 = vrot.slane %v4351, %v4414
        %v4416 = vlaneseq
        %v4417 = vshrl.u32 %v4416, 7
        %v4418 = vsub.s32 %v4125, %v4417
        %v4419 = vrot.slane %v4354, %v4418
        %v4420 = vsel %vm4130, %v4419, %v4415
        %v4421 = vlaneseq
        %v4422 = vshrl.u32 %v4421, 7
        %v4423 = vsub.s32 %v4120, %v4422
        %v4424 = vrot.slane %v4357, %v4423
        %v4425 = vlaneseq
        %v4426 = vshrl.u32 %v4425, 7
        %v4427 = vsub.s32 %v4125, %v4426
        %v4428 = vrot.slane %v4360, %v4427
        %v4429 = vsel %vm4130, %v4428, %v4424
        %v4430 = vlaneseq
        %v4431 = vshrl.u32 %v4430, 7
        %v4432 = vsub.s32 %v4120, %v4431
        %v4433 = vrot.slane %v4363, %v4432
        %v4434 = vlaneseq
        %v4435 = vshrl.u32 %v4434, 7
        %v4436 = vsub.s32 %v4125, %v4435
        %v4437 = vrot.slane %v4366, %v4436
        %v4438 = vsel %vm4130, %v4437, %v4433
        %v4439 = vsel %vm4195, %v4384, %v4375
        %v4440 = vsel %vm4197, %v4393, %v4439
        %v4441 = vsel %vm4199, %v4402, %v4440
        %v4442 = vsel %vm4201, %v4411, %v4441
        %v4443 = vsel %vm4203, %v4420, %v4442
        %v4444 = vsel %vm4205, %v4429, %v4443
        %v4445 = vsel %vm4207, %v4438, %v4444
        %v4447 = vsel %vm4210, %v4445, 0.0
        %4448 = vadd.xlane.f32.xlu0 %v4447
        %v4449 = vpop.xlane.xlu0 %4448
        %v4450 = vrcp.pop %v4449
        %v4452 = vlaneseq
        %v4453 = vshrl.u32 %v4452, 7
        %v4454 = vsub.s32 0, %v4453
        %v4455 = vrot.slane %v4450, %v4454
        %v4456 = vlaneseq
        %v4457 = vshrl.u32 %v4456, 7
        %v4458 = vsub.s32 1, %v4457
        %v4459 = vrot.slane %v4450, %v4458
        %v4460 = vlaneseq
        %v4461 = vshrl.u32 %v4460, 7
        %v4462 = vsub.s32 2, %v4461
        %v4463 = vrot.slane %v4450, %v4462
        %v4464 = vlaneseq
        %v4465 = vshrl.u32 %v4464, 7
        %v4466 = vsub.s32 3, %v4465
        %v4467 = vrot.slane %v4450, %v4466
        %v4468 = vlaneseq
        %v4469 = vshrl.u32 %v4468, 7
        %v4470 = vsub.s32 4, %v4469
        %v4471 = vrot.slane %v4450, %v4470
        %v4472 = vlaneseq
        %v4473 = vshrl.u32 %v4472, 7
        %v4474 = vsub.s32 5, %v4473
        %v4475 = vrot.slane %v4450, %v4474
        %v4476 = vlaneseq
        %v4477 = vshrl.u32 %v4476, 7
        %v4478 = vsub.s32 6, %v4477
        %v4479 = vrot.slane %v4450, %v4478
        %v4480 = vlaneseq
        %v4481 = vshrl.u32 %v4480, 7
        %v4482 = vsub.s32 7, %v4481
        %v4483 = vrot.slane %v4450, %v4482
        %v4492 = vmul.f32 %v4272, %v4455
        %v4493 = vmul.f32 %v4274, %v4455
        %v4494 = vmul.f32 %v4276, %v4459
        %v4495 = vmul.f32 %v4278, %v4459
        %v4496 = vmul.f32 %v4280, %v4463
        %v4497 = vmul.f32 %v4282, %v4463
        %v4498 = vmul.f32 %v4284, %v4467
        %v4499 = vmul.f32 %v4286, %v4467
        %v4500 = vmul.f32 %v4288, %v4471
        %v4501 = vmul.f32 %v4290, %v4471
        %v4502 = vmul.f32 %v4292, %v4475
        %v4503 = vmul.f32 %v4294, %v4475
        %v4504 = vmul.f32 %v4296, %v4479
        %v4505 = vmul.f32 %v4298, %v4479
        %v4506 = vmul.f32 %v4300, %v4483
        %v4507 = vmul.f32 %v4302, %v4483
        %4524 = vset.pattern.permute.xlu0 0
        %4525 = vperm.xlu0 %4524, %v4492
        %v4526 = vpop.permute.xlu0 %4525
        %4527 = vset.pattern.permute.xlu0 0
        %4528 = vperm.xlu0 %4527, %v4493
        %v4529 = vpop.permute.xlu0 %4528
        %4530 = vset.pattern.permute.xlu0 0
        %4531 = vperm.xlu0 %4530, %v4494
        %v4532 = vpop.permute.xlu0 %4531
        %4533 = vset.pattern.permute.xlu0 0
        %4534 = vperm.xlu0 %4533, %v4495
        %v4535 = vpop.permute.xlu0 %4534
        %4536 = vset.pattern.permute.xlu0 0
        %4537 = vperm.xlu0 %4536, %v4496
        %v4538 = vpop.permute.xlu0 %4537
        %4539 = vset.pattern.permute.xlu0 0
        %4540 = vperm.xlu0 %4539, %v4497
        %v4541 = vpop.permute.xlu0 %4540
        %4542 = vset.pattern.permute.xlu0 0
        %4543 = vperm.xlu0 %4542, %v4498
        %v4544 = vpop.permute.xlu0 %4543
        %4545 = vset.pattern.permute.xlu0 0
        %4546 = vperm.xlu0 %4545, %v4499
        %v4547 = vpop.permute.xlu0 %4546
        %4548 = vset.pattern.permute.xlu0 0
        %4549 = vperm.xlu0 %4548, %v4500
        %v4550 = vpop.permute.xlu0 %4549
        %4551 = vset.pattern.permute.xlu0 0
        %4552 = vperm.xlu0 %4551, %v4501
        %v4553 = vpop.permute.xlu0 %4552
        %4554 = vset.pattern.permute.xlu0 0
        %4555 = vperm.xlu0 %4554, %v4502
        %v4556 = vpop.permute.xlu0 %4555
        %4557 = vset.pattern.permute.xlu0 0
        %4558 = vperm.xlu0 %4557, %v4503
        %v4559 = vpop.permute.xlu0 %4558
        %4560 = vset.pattern.permute.xlu0 0
        %4561 = vperm.xlu0 %4560, %v4504
        %v4562 = vpop.permute.xlu0 %4561
        %4563 = vset.pattern.permute.xlu0 0
        %4564 = vperm.xlu0 %4563, %v4505
        %v4565 = vpop.permute.xlu0 %4564
        %4566 = vset.pattern.permute.xlu0 0
        %4567 = vperm.xlu0 %4566, %v4506
        %v4568 = vpop.permute.xlu0 %4567
        %4569 = vset.pattern.permute.xlu0 0
        %4570 = vperm.xlu0 %4569, %v4507
        %v4571 = vpop.permute.xlu0 %4570
        %v4572 = vlaneseq
        %v4573 = vshrl.u32 %v4572, 7
        %v4574 = vsub.s32 %v4120, %v4573
        %v4575 = vrot.slane %v4526, %v4574
        %v4576 = vlaneseq
        %v4577 = vshrl.u32 %v4576, 7
        %v4578 = vsub.s32 %v4125, %v4577
        %v4579 = vrot.slane %v4529, %v4578
        %v4580 = vsel %vm4130, %v4579, %v4575
        %v4581 = vlaneseq
        %v4582 = vshrl.u32 %v4581, 7
        %v4583 = vsub.s32 %v4120, %v4582
        %v4584 = vrot.slane %v4532, %v4583
        %v4585 = vlaneseq
        %v4586 = vshrl.u32 %v4585, 7
        %v4587 = vsub.s32 %v4125, %v4586
        %v4588 = vrot.slane %v4535, %v4587
        %v4589 = vsel %vm4130, %v4588, %v4584
        %v4590 = vlaneseq
        %v4591 = vshrl.u32 %v4590, 7
        %v4592 = vsub.s32 %v4120, %v4591
        %v4593 = vrot.slane %v4538, %v4592
        %v4594 = vlaneseq
        %v4595 = vshrl.u32 %v4594, 7
        %v4596 = vsub.s32 %v4125, %v4595
        %v4597 = vrot.slane %v4541, %v4596
        %v4598 = vsel %vm4130, %v4597, %v4593
        %v4599 = vlaneseq
        %v4600 = vshrl.u32 %v4599, 7
        %v4601 = vsub.s32 %v4120, %v4600
        %v4602 = vrot.slane %v4544, %v4601
        %v4603 = vlaneseq
        %v4604 = vshrl.u32 %v4603, 7
        %v4605 = vsub.s32 %v4125, %v4604
        %v4606 = vrot.slane %v4547, %v4605
        %v4607 = vsel %vm4130, %v4606, %v4602
        %v4608 = vlaneseq
        %v4609 = vshrl.u32 %v4608, 7
        %v4610 = vsub.s32 %v4120, %v4609
        %v4611 = vrot.slane %v4550, %v4610
        %v4612 = vlaneseq
        %v4613 = vshrl.u32 %v4612, 7
        %v4614 = vsub.s32 %v4125, %v4613
        %v4615 = vrot.slane %v4553, %v4614
        %v4616 = vsel %vm4130, %v4615, %v4611
        %v4617 = vlaneseq
        %v4618 = vshrl.u32 %v4617, 7
        %v4619 = vsub.s32 %v4120, %v4618
        %v4620 = vrot.slane %v4556, %v4619
        %v4621 = vlaneseq
        %v4622 = vshrl.u32 %v4621, 7
        %v4623 = vsub.s32 %v4125, %v4622
        %v4624 = vrot.slane %v4559, %v4623
        %v4625 = vsel %vm4130, %v4624, %v4620
        %v4626 = vlaneseq
        %v4627 = vshrl.u32 %v4626, 7
        %v4628 = vsub.s32 %v4120, %v4627
        %v4629 = vrot.slane %v4562, %v4628
        %v4630 = vlaneseq
        %v4631 = vshrl.u32 %v4630, 7
        %v4632 = vsub.s32 %v4125, %v4631
        %v4633 = vrot.slane %v4565, %v4632
        %v4634 = vsel %vm4130, %v4633, %v4629
        %v4635 = vlaneseq
        %v4636 = vshrl.u32 %v4635, 7
        %v4637 = vsub.s32 %v4120, %v4636
        %v4638 = vrot.slane %v4568, %v4637
        %v4639 = vlaneseq
        %v4640 = vshrl.u32 %v4639, 7
        %v4641 = vsub.s32 %v4125, %v4640
        %v4642 = vrot.slane %v4571, %v4641
        %v4643 = vsel %vm4130, %v4642, %v4638
        %v4644 = vsel %vm4195, %v4589, %v4580
        %v4645 = vsel %vm4197, %v4598, %v4644
        %v4646 = vsel %vm4199, %v4607, %v4645
        %v4647 = vsel %vm4201, %v4616, %v4646
        %v4648 = vsel %vm4203, %v4625, %v4647
        %v4649 = vsel %vm4205, %v4634, %v4648
        %v4650 = vsel %vm4207, %v4643, %v4649
        %4652 = vst.msk [vmem:[%s655] sm:$0xff] %vm4210, %v4650
        %s4653 = sadd.s32 %s44, 1
        %p4654 = scmp.lt.s32.totalorder %s4653, 3
        // Predicated region
        $region113: #{hierarchical_decoder_forward.6} parent=63 // pred_check
          %p4655 = pneg %p4654
        $region114: #{hierarchical_decoder_forward.6} parent=63 // pred_check_branch
          %4657 = sbr.rel (%p4655) target = $region116
        $region115: #{hierarchical_decoder_forward.6} parent=63 // pred_region
          %v4658 = vld [vmem:[#allocation10] sm:$0xff]
          %v4659 = vld [vmem:[#allocation10 + $0x8] sm:$0xff]
          %v4660 = vld [vmem:[#allocation10 + $0x10] sm:$0xff]
          %v4661 = vld [vmem:[#allocation10 + $0x18] sm:$0xff]
          %v4662 = vld [vmem:[#allocation10 + $0x20] sm:$0xff]
          %v4663 = vld [vmem:[#allocation10 + $0x28] sm:$0xff]
          %v4664 = vld [vmem:[#allocation10 + $0x30] sm:$0xff]
          %v4665 = vld [vmem:[#allocation10 + $0x38] sm:$0xff]
          %v4666 = vld [vmem:[#allocation10 + $0x40] sm:$0xff]
          %v4667 = vld [vmem:[#allocation10 + $0x48] sm:$0xff]
          %v4668 = vld [vmem:[#allocation10 + $0x50] sm:$0xff]
          %v4669 = vld [vmem:[#allocation10 + $0x58] sm:$0xff]
          %v4670 = vld [vmem:[#allocation10 + $0x60] sm:$0xff]
          %v4671 = vld [vmem:[#allocation10 + $0x68] sm:$0xff]
          %v4672 = vld [vmem:[#allocation10 + $0x70] sm:$0xff]
          %v4673 = vld [vmem:[#allocation10 + $0x78] sm:$0xff]
          %v4690 = vmul.f32 %v4658, %v4526
          %v4691 = vmul.f32 %v4659, %v4529
          %v4692 = vmul.f32 %v4660, %v4532
          %v4693 = vmul.f32 %v4661, %v4535
          %v4694 = vmul.f32 %v4662, %v4538
          %v4695 = vmul.f32 %v4663, %v4541
          %v4696 = vmul.f32 %v4664, %v4544
          %v4697 = vmul.f32 %v4665, %v4547
          %v4698 = vmul.f32 %v4666, %v4550
          %v4699 = vmul.f32 %v4667, %v4553
          %v4700 = vmul.f32 %v4668, %v4556
          %v4701 = vmul.f32 %v4669, %v4559
          %v4702 = vmul.f32 %v4670, %v4562
          %v4703 = vmul.f32 %v4671, %v4565
          %v4704 = vmul.f32 %v4672, %v4568
          %v4705 = vmul.f32 %v4673, %v4571
          %v4706 = vadd.f32 %v4690, %v4691
          %v4707 = vrot.slane %v4706, 4
          %v4708 = vadd.f32 %v4706, %v4707
          %v4709 = vrot.slane %v4708, 2
          %v4710 = vadd.f32 %v4708, %v4709
          %v4711 = vrot.slane %v4710, 1
          %v4712 = vadd.f32 %v4710, %v4711
          %v4713 = vadd.f32 %v4692, %v4693
          %v4714 = vrot.slane %v4713, 4
          %v4715 = vadd.f32 %v4713, %v4714
          %v4716 = vrot.slane %v4715, 2
          %v4717 = vadd.f32 %v4715, %v4716
          %v4718 = vrot.slane %v4717, 1
          %v4719 = vadd.f32 %v4717, %v4718
          %v4720 = vadd.f32 %v4694, %v4695
          %v4721 = vrot.slane %v4720, 4
          %v4722 = vadd.f32 %v4720, %v4721
          %v4723 = vrot.slane %v4722, 2
          %v4724 = vadd.f32 %v4722, %v4723
          %v4725 = vrot.slane %v4724, 1
          %v4726 = vadd.f32 %v4724, %v4725
          %v4727 = vadd.f32 %v4696, %v4697
          %v4728 = vrot.slane %v4727, 4
          %v4729 = vadd.f32 %v4727, %v4728
          %v4730 = vrot.slane %v4729, 2
          %v4731 = vadd.f32 %v4729, %v4730
          %v4732 = vrot.slane %v4731, 1
          %v4733 = vadd.f32 %v4731, %v4732
          %v4734 = vadd.f32 %v4698, %v4699
          %v4735 = vrot.slane %v4734, 4
          %v4736 = vadd.f32 %v4734, %v4735
          %v4737 = vrot.slane %v4736, 2
          %v4738 = vadd.f32 %v4736, %v4737
          %v4739 = vrot.slane %v4738, 1
          %v4740 = vadd.f32 %v4738, %v4739
          %v4741 = vadd.f32 %v4700, %v4701
          %v4742 = vrot.slane %v4741, 4
          %v4743 = vadd.f32 %v4741, %v4742
          %v4744 = vrot.slane %v4743, 2
          %v4745 = vadd.f32 %v4743, %v4744
          %v4746 = vrot.slane %v4745, 1
          %v4747 = vadd.f32 %v4745, %v4746
          %v4748 = vadd.f32 %v4702, %v4703
          %v4749 = vrot.slane %v4748, 4
          %v4750 = vadd.f32 %v4748, %v4749
          %v4751 = vrot.slane %v4750, 2
          %v4752 = vadd.f32 %v4750, %v4751
          %v4753 = vrot.slane %v4752, 1
          %v4754 = vadd.f32 %v4752, %v4753
          %v4755 = vadd.f32 %v4704, %v4705
          %v4756 = vrot.slane %v4755, 4
          %v4757 = vadd.f32 %v4755, %v4756
          %v4758 = vrot.slane %v4757, 2
          %v4759 = vadd.f32 %v4757, %v4758
          %v4760 = vrot.slane %v4759, 1
          %v4761 = vadd.f32 %v4759, %v4760
          %v4770 = vsel %vm4195, %v4719, %v4712
          %v4771 = vsel %vm4197, %v4726, %v4770
          %v4772 = vsel %vm4199, %v4733, %v4771
          %v4773 = vsel %vm4201, %v4740, %v4772
          %v4774 = vsel %vm4203, %v4747, %v4773
          %v4775 = vsel %vm4205, %v4754, %v4774
          %v4776 = vsel %vm4207, %v4761, %v4775
          %4778 = vst [vmem:[#allocation4] sm:$0xff] %v4776
        $region116: #{hierarchical_decoder_forward.6} parent=63 // pred_fallthru
          _
        %s4779 = sand.u32 %s309, 1
        %s4780 = scalar_lea.sflag [#allocation7], %s4779
        %s4781 = sand.u32 %s309, 1
        %s4782 = smul.addr %s4781, 20
        %s4783 = scalar_lea.vmem [#allocation23], %s4782
        %s4784 = sand.u32 %s39, 1
        %s4785 = scalar_lea.sflag [#allocation25], %s4784
        %s4786 = sand.u32 %s337, 1
        %s4787 = smul.addr %s4786, 8
        %s4788 = scalar_lea.vmem [#allocation24], %s4787
        %s4789 = sand.u32 %s39, 1
        %s4790 = scalar_lea.sflag [#allocation25], %s4789
        %s4791 = sand.u32 %s365, 1
        %s4792 = smul.addr %s4791, 8
        %s4793 = scalar_lea.vmem [#allocation26], %s4792
        // Predicated region
        $region117: #{hierarchical_decoder_forward.6} parent=63 // pred_check
          %p4794 = pneg %p319
        $region118: #{hierarchical_decoder_forward.6} parent=63 // pred_check_branch
          %4796 = sbr.rel (%p4794) target = $region120
        $region119: #{hierarchical_decoder_forward.6} parent=63 // pred_region
          %s4798 = ssub.s32 320, 320
          %4799 = vsyncadd %s4780, %s4798
          %s4800 = smul.addr %s44, 5
          %s4801 = sadd.s32 %s43, %s4800
          %s4802 = smul.addr %s4801, 64
          %s4803 = scalar_lea.hbm %s11, %s4802
          %s4804 = sshll.u32 %s4783, 4
          %s4805 = int_to_ptr.vmem [resolvable:$true] %s4804
          %4810 = dma.vmem_to_hbm [thread:$0]  %s4805, 320, %s4803, %s4780, 64, 64, 4
        $region120: #{hierarchical_decoder_forward.6} parent=63 // pred_fallthru
          _
        // Predicated region
        $region121: #{hierarchical_decoder_forward.6} parent=63 // pred_check
          %p4811 = pneg %p347
        $region122: #{hierarchical_decoder_forward.6} parent=63 // pred_check_branch
          %4813 = sbr.rel (%p4811) target = $region124
        $region123: #{hierarchical_decoder_forward.6} parent=63 // pred_region
          %s4815 = ssub.s32 128, 128
          %4816 = vsyncadd %s4785, %s4815
          %s4817 = sadd.s32 %s43, %s44
          %s4818 = smul.addr %s4817, 128
          %s4819 = scalar_lea.hbm %s12, %s4818
          %s4821 = sshll.u32 %s4788, 4
          %s4822 = int_to_ptr.vmem [resolvable:$true] %s4821
          %4824 = dma.vmem_to_hbm [thread:$0]  %s4822, 128, %s4819, %s4785
        $region124: #{hierarchical_decoder_forward.6} parent=63 // pred_fallthru
          _
        // Predicated region
        $region125: #{hierarchical_decoder_forward.6} parent=63 // pred_check
          %p4825 = pneg %p375
        $region126: #{hierarchical_decoder_forward.6} parent=63 // pred_check_branch
          %4827 = sbr.rel (%p4825) target = $region128
        $region127: #{hierarchical_decoder_forward.6} parent=63 // pred_region
          %s4829 = ssub.s32 128, 128
          %4830 = vsyncadd %s4790, %s4829
          %s4831 = sadd.s32 %s43, %s44
          %s4832 = smul.addr %s4831, 128
          %s4833 = scalar_lea.hbm %s13, %s4832
          %s4835 = sshll.u32 %s4793, 4
          %s4836 = int_to_ptr.vmem [resolvable:$true] %s4835
          %4838 = dma.vmem_to_hbm [thread:$0]  %s4836, 128, %s4833, %s4790
        $region128: #{hierarchical_decoder_forward.6} parent=63 // pred_fallthru
          _
      $region64: #{hierarchical_decoder_forward.6} parent=5 // pred_fallthru
        _
      %p4839 = scmp.le.s32.totalorder 2, %s34
      // Predicated region
      $region129: #{hierarchical_decoder_forward.6} parent=5 // pred_check
        %p4840 = pneg %p4839
      $region130: #{hierarchical_decoder_forward.6} parent=5 // pred_check_branch
        %4842 = sbr.rel (%p4840) target = $region132
      $region131: #{hierarchical_decoder_forward.6} parent=5 // pred_region
        %s4843 = ssub.s32 %s34, 2
        // Predicated region
        $region133: #{hierarchical_decoder_forward.6} parent=131 // pred_check
          %p4844 = pneg %p325
        $region134: #{hierarchical_decoder_forward.6} parent=131 // pred_check_branch
          %4846 = sbr.rel (%p4844) target = $region136
        $region135: #{hierarchical_decoder_forward.6} parent=131 // pred_region
          %s4847 = sand.u32 %s310, 1
          %s4848 = scalar_lea.sflag [#allocation7], %s4847
          %s4849 = sand.u32 %s310, 1
          %s4850 = smul.addr %s4849, 20
          %s4851 = scalar_lea.vmem [#allocation23], %s4850
          %4852 = dma.done %s4848, 320
        $region136: #{hierarchical_decoder_forward.6} parent=131 // pred_fallthru
          _
        // Predicated region
        $region137: #{hierarchical_decoder_forward.6} parent=131 // pred_check
          %p4853 = pneg %p353
        $region138: #{hierarchical_decoder_forward.6} parent=131 // pred_check_branch
          %4855 = sbr.rel (%p4853) target = $region140
        $region139: #{hierarchical_decoder_forward.6} parent=131 // pred_region
          %s4856 = sand.u32 %s40, 1
          %s4857 = scalar_lea.sflag [#allocation25], %s4856
          %s4858 = sand.u32 %s338, 1
          %s4859 = smul.addr %s4858, 8
          %s4860 = scalar_lea.vmem [#allocation24], %s4859
          %4861 = dma.done %s4857, 128
        $region140: #{hierarchical_decoder_forward.6} parent=131 // pred_fallthru
          _
        // Predicated region
        $region141: #{hierarchical_decoder_forward.6} parent=131 // pred_check
          %p4862 = pneg %p381
        $region142: #{hierarchical_decoder_forward.6} parent=131 // pred_check_branch
          %4864 = sbr.rel (%p4862) target = $region144
        $region143: #{hierarchical_decoder_forward.6} parent=131 // pred_region
          %s4865 = sand.u32 %s40, 1
          %s4866 = scalar_lea.sflag [#allocation25], %s4865
          %s4867 = sand.u32 %s366, 1
          %s4868 = smul.addr %s4867, 8
          %s4869 = scalar_lea.vmem [#allocation26], %s4868
          %4870 = dma.done %s4866, 128
        $region144: #{hierarchical_decoder_forward.6} parent=131 // pred_fallthru
          _
      $region132: #{hierarchical_decoder_forward.6} parent=5 // pred_fallthru
        _
    $region6: #{hierarchical_decoder_forward.6} parent=1 // loop_footer
      %s38 = sadd.s32 1, %s34
    $region7: #{hierarchical_decoder_forward.6} parent=1 // loop_footer_branch
      %33 = sbr.rel target = $region3
    $region8: #{hierarchical_decoder_forward.6} parent=1 // loop_exit
      _
    %4871 = vsyncpa [#allocation6], 1
    %s4872 = scalar_lea.sflag [#allocation6], 1
    %4873 = vsyncpa %s4872, 1
    %4874 = vsyncpa [#allocation9], 1
    %4875 = vsyncpa [#allocation12], 1
    %4876 = vsyncpa [#allocation15], 1
    %4877 = vsyncpa [#allocation18], 1
    %4878 = vsyncpa [#allocation21], 1
    %4879 = vsyncpa [#allocation7], 1
    %s4880 = scalar_lea.sflag [#allocation7], 1
    %4881 = vsyncpa %s4880, 1
    %4882 = vsyncpa [#allocation25], 1
    %s4883 = scalar_lea.sflag [#allocation25], 1
    %4884 = vsyncpa %s4883, 1

</llo_original>
